<compile_context>
chip_gen: v7x
topology: tpu7x:2x2x1
jax: 0.10.0
libtpu: 0.0.40
codegen_flags: <defaults>
</compile_context>

<pallas_src>
import jax
import jax.numpy as jnp
from jax.experimental import pallas as pl
from jax.experimental.pallas import tpu as pltpu

# ---------------------------------------------------------------------------
# Model constants (from hr_pose_generator.__init__ with encoder='gru')
# ---------------------------------------------------------------------------
SEQ = 50            # sequence length used in forward()
ENC_DIM = 256       # tmpsize for 'gru'
NOISE_DIM = 10
SIZE = ENC_DIM + NOISE_DIM      # 266
K_PAD = 384                     # SIZE padded to a multiple of 128
HIDDEN = 1024                   # linear_hidden default
OUT_DIM = 36
OUT_PAD = 128                   # OUT_DIM padded to a full lane width
N_RES_LINEARS = 6               # 3 res blocks x 2 linears each
BN_EPS = 1e-5
AUDIO_DIM = 16                  # synthetic audio feature dim (RNN class not given)


# ---------------------------------------------------------------------------
# Pallas kernel 1: layer0 -> 3 residual (Linear+BN+ReLU)x2 blocks -> final
# Linear -> tanh.  Grid iterates over the 6 residual linears; the big (H,H)
# bf16 weights are streamed one per grid step, everything else stays resident
# (constant index_map).  Activation/residual carries live in f32 VMEM scratch.
# ---------------------------------------------------------------------------
def _mlp_kernel(x_ref, w0_ref, b0_ref, wres_ref, sres_ref, tres_ref,
                wf_ref, bf_ref, out_ref, act_ref, res_ref):
    l = pl.program_id(0)

    # layer0: (Np, 384) @ (384, H) + b0  (bf16 operands, f32 accumulation)
    @pl.when(l == 0)
    def _():
        h0 = jnp.dot(x_ref[...], w0_ref[...],
                     preferred_element_type=jnp.float32) + b0_ref[...]
        act_ref[...] = h0
        res_ref[...] = h0

    # one residual-block linear: relu(BN(x @ W + b)) with BN folded to (s, t)
    a_bf16 = act_ref[...].astype(jnp.bfloat16)
    h = jnp.dot(a_bf16, wres_ref[0], preferred_element_type=jnp.float32)
    h = jnp.maximum(h * sres_ref[0] + tres_ref[0], 0.0)

    @pl.when(l % 2 == 0)          # first linear of a block
    def _():
        act_ref[...] = h

    @pl.when(l % 2 == 1)          # second linear of a block -> add residual
    def _():
        hn = h + res_ref[...]
        act_ref[...] = hn
        res_ref[...] = hn

    # final linear + tanh (dropout is identity in eval mode)
    @pl.when(l == pl.num_programs(0) - 1)
    def _():
        y = jnp.dot(act_ref[...].astype(jnp.bfloat16), wf_ref[...],
                    preferred_element_type=jnp.float32) + bf_ref[...]
        out_ref[...] = jnp.tanh(y)


def mlp_stack_pallas(x2d, w0_bf16, b0, wres_bf16, sres, tres, wf_bf16, bf_pad):
    """x2d: (N, SIZE) float32 -> (N, OUT_DIM) float32 (tanh-squashed)."""
    n = x2d.shape[0]
    n_pad = ((n + 15) // 16) * 16          # multiple of 16 (bf16 sublane pack)
    x_pad = jnp.pad(x2d, ((0, n_pad - n), (0, K_PAD - x2d.shape[1])))
    x_pad = x_pad.astype(jnp.bfloat16)

    grid_spec = pltpu.PrefetchScalarGridSpec(
        num_scalar_prefetch=0,
        grid=(N_RES_LINEARS,),
        in_specs=[
            pl.BlockSpec((n_pad, K_PAD), lambda l: (0, 0)),          # x (resident, bf16)
            pl.BlockSpec((K_PAD, HIDDEN), lambda l: (0, 0)),         # w0 (resident, bf16)
            pl.BlockSpec((1, HIDDEN), lambda l: (0, 0)),             # b0 (f32)
            pl.BlockSpec((1, HIDDEN, HIDDEN), lambda l: (l, 0, 0)),  # W_res[l] (streamed, bf16)
            pl.BlockSpec((1, 1, HIDDEN), lambda l: (l, 0, 0)),       # scale[l] (f32)
            pl.BlockSpec((1, 1, HIDDEN), lambda l: (l, 0, 0)),       # shift[l] (f32)
            pl.BlockSpec((HIDDEN, OUT_PAD), lambda l: (0, 0)),       # wf (resident, bf16)
            pl.BlockSpec((1, OUT_PAD), lambda l: (0, 0)),            # bf (f32)
        ],
        out_specs=pl.BlockSpec((n_pad, OUT_PAD), lambda l: (0, 0)),
        scratch_shapes=[
            pltpu.VMEM((n_pad, HIDDEN), jnp.float32),   # running activation
            pltpu.VMEM((n_pad, HIDDEN), jnp.float32),   # residual carry
        ],
    )

    out = pl.pallas_call(
        _mlp_kernel,
        out_shape=jax.ShapeDtypeStruct((n_pad, OUT_PAD), jnp.float32),
        grid_spec=grid_spec,
        compiler_params=pltpu.CompilerParams(
            dimension_semantics=("arbitrary",),        # layer axis is sequential
            vmem_limit_bytes=24 * 1024 * 1024,         # actual footprint ~8 MiB
        ),
    )(x_pad, w0_bf16, b0, wres_bf16, sres, tres, wf_bf16, bf_pad)
    return out[:n, :OUT_DIM]


# ---------------------------------------------------------------------------
# Pallas kernel 2: GRU recurrence for the audio encoder.  The input projection
# gi = x @ W_ih^T + b_ih is hoisted (one einsum over all timesteps); the kernel
# keeps W_hh (H, 3H) resident in VMEM and runs all T steps in one invocation.
# ---------------------------------------------------------------------------
def _gru_rec_kernel(gi_ref, whh_ref, bhh_ref, out_ref, h_ref):
    T = gi_ref.shape[0]
    H = whh_ref.shape[0]

    h_ref[...] = jnp.zeros_like(h_ref)

    @pl.loop(0, T)
    def _(t):
        h = h_ref[...]
        gh = jnp.dot(h, whh_ref[...],
                     preferred_element_type=jnp.float32) + bhh_ref[...]
        gi = gi_ref[t]                                    # (Bp, 3H)
        r = jax.nn.sigmoid(gi[:, :H] + gh[:, :H])
        z = jax.nn.sigmoid(gi[:, H:2 * H] + gh[:, H:2 * H])
        n = jnp.tanh(gi[:, 2 * H:] + r * gh[:, 2 * H:])
        h_new = (1.0 - z) * n + z * h
        h_ref[...] = h_new
        out_ref[t] = h_new


def gru_encoder_pallas(x, w_ih, w_hh, b_ih, b_hh):
    """PyTorch-semantics single-layer GRU, batch_first.  x: (B,T,In) -> (B,T,H)."""
    B, T, _ = x.shape
    H = w_hh.shape[1]
    # hoist input projection for all timesteps: (B, T, 3H)
    gi = jnp.einsum('bti,gi->btg', x, w_ih) + b_ih
    gi = jnp.swapaxes(gi, 0, 1)                           # (T, B, 3H)
    b_pad = ((B + 7) // 8) * 8
    gi = jnp.pad(gi, ((0, 0), (0, b_pad - B), (0, 0)))
    whh_t = jnp.transpose(w_hh)                           # (H, 3H)
    bhh2 = b_hh.reshape(1, 3 * H)

    out = pl.pallas_call(
        _gru_rec_kernel,
        out_shape=jax.ShapeDtypeStruct((T, b_pad, H), jnp.float32),
        grid_spec=pltpu.PrefetchScalarGridSpec(
            num_scalar_prefetch=0,
            grid=(1,),
            in_specs=[
                pl.BlockSpec((T, b_pad, 3 * H), lambda i: (0, 0, 0)),  # gi (resident)
                pl.BlockSpec((H, 3 * H), lambda i: (0, 0)),            # W_hh^T (resident)
                pl.BlockSpec((1, 3 * H), lambda i: (0, 0)),            # b_hh
            ],
            out_specs=pl.BlockSpec((T, b_pad, H), lambda i: (0, 0, 0)),
            scratch_shapes=[pltpu.VMEM((b_pad, H), jnp.float32)],      # hidden state
        ),
        compiler_params=pltpu.CompilerParams(
            dimension_semantics=("arbitrary",),
        ),
    )(gi, whh_t, bhh2)
    return jnp.swapaxes(out[:, :B, :], 0, 1)              # (B, T, H)


# ---------------------------------------------------------------------------
# Plain-JAX glue: tiny noise GRU (10 -> 10), input projection hoisted.
# ---------------------------------------------------------------------------
def gru_forward_small(x, w_ih, w_hh, b_ih, b_hh):
    B = x.shape[0]
    H = w_hh.shape[1]
    gi = jnp.einsum('bti,gi->btg', x, w_ih) + b_ih        # (B, T, 3H)
    gi = jnp.swapaxes(gi, 0, 1)                           # (T, B, 3H)
    h0 = jnp.zeros((B, H), jnp.float32)

    def step(h, gi_t):
        gh = h @ w_hh.T + b_hh
        i_r, i_z, i_n = jnp.split(gi_t, 3, axis=-1)
        h_r, h_z, h_n = jnp.split(gh, 3, axis=-1)
        r = jax.nn.sigmoid(i_r + h_r)
        z = jax.nn.sigmoid(i_z + h_z)
        n = jnp.tanh(i_n + r * h_n)
        h_new = (1.0 - z) * n + z * h
        return h_new, h_new

    _, ys = jax.lax.scan(step, h0, gi)
    return jnp.swapaxes(ys, 0, 1)                         # (B, T, H)


# ---------------------------------------------------------------------------
# Deterministic parameter initialization (synthetic; no checkpoint load).
# ---------------------------------------------------------------------------
def init_params(key):
    ks = iter(jax.random.split(key, 64))

    def nrm(shape, scale=0.05):
        return scale * jax.random.normal(next(ks), shape, dtype=jnp.float32)

    def uni(shape, lo, hi):
        return jax.random.uniform(next(ks), shape, jnp.float32, lo, hi)

    p = {}
    # audio encoder GRU: AUDIO_DIM -> ENC_DIM
    p["enc_w_ih"] = nrm((3 * ENC_DIM, AUDIO_DIM))
    p["enc_w_hh"] = nrm((3 * ENC_DIM, ENC_DIM))
    p["enc_b_ih"] = nrm((3 * ENC_DIM,))
    p["enc_b_hh"] = nrm((3 * ENC_DIM,))
    # rnn_noise GRU: 10 -> 10
    p["nz_w_ih"] = nrm((3 * NOISE_DIM, NOISE_DIM), 0.2)
    p["nz_w_hh"] = nrm((3 * NOISE_DIM, NOISE_DIM), 0.2)
    p["nz_b_ih"] = nrm((3 * NOISE_DIM,), 0.2)
    p["nz_b_hh"] = nrm((3 * NOISE_DIM,), 0.2)
    # layer0: 266 -> 1024   (stored (in,out))
    p["w0"] = nrm((SIZE, HIDDEN))
    p["b0"] = nrm((1, HIDDEN))
    # 6 residual linears: 1024 -> 1024, each followed by BatchNorm1d + ReLU
    p["wres"] = nrm((N_RES_LINEARS, HIDDEN, HIDDEN), 0.02)
    p["bres"] = nrm((N_RES_LINEARS, HIDDEN))
    p["bn_gamma"] = uni((N_RES_LINEARS, HIDDEN), 0.8, 1.2)
    p["bn_beta"] = nrm((N_RES_LINEARS, HIDDEN))
    p["bn_rmean"] = nrm((N_RES_LINEARS, HIDDEN))
    p["bn_rvar"] = uni((N_RES_LINEARS, HIDDEN), 0.5, 1.5)
    # final linear: 1024 -> 36
    p["wf"] = nrm((HIDDEN, OUT_DIM))
    p["bf"] = nrm((1, OUT_DIM))
    return p


def prepare_params(p):
    """Fold eval-mode BN into scale/shift and build padded bf16 kernel weights."""
    kp = dict(p)
    # BatchNorm1d (eval) folded AFTER the matmul: s*(x@W) + t
    s = p["bn_gamma"] / jnp.sqrt(p["bn_rvar"] + BN_EPS)            # (6, H)
    t = (p["bres"] - p["bn_rmean"]) * s + p["bn_beta"]             # (6, H)
    kp["sres"] = s.reshape(N_RES_LINEARS, 1, HIDDEN)
    kp["tres"] = t.reshape(N_RES_LINEARS, 1, HIDDEN)
    # bf16 streamed weights with MXU-friendly padded layouts
    w0p = jnp.zeros((K_PAD, HIDDEN), jnp.float32).at[:SIZE].set(p["w0"])
    kp["w0_bf16"] = w0p.astype(jnp.bfloat16)
    kp["wres_bf16"] = p["wres"].astype(jnp.bfloat16)
    wfp = jnp.zeros((HIDDEN, OUT_PAD), jnp.float32).at[:, :OUT_DIM].set(p["wf"])
    kp["wf_bf16"] = wfp.astype(jnp.bfloat16)
    kp["bf_pad"] = jnp.zeros((1, OUT_PAD), jnp.float32).at[:, :OUT_DIM].set(p["bf"])
    return kp


# ---------------------------------------------------------------------------
# Generator forward (encoder='gru', initp unused on this path)
# ---------------------------------------------------------------------------
@jax.jit
def generator_forward(params, audio, noise_key):
    B = audio.shape[0]

    # audio_encoder (RNN)  -> (B, 50, 256)   [Pallas GRU recurrence]
    enc = gru_encoder_pallas(audio, params["enc_w_ih"], params["enc_w_hh"],
                             params["enc_b_ih"], params["enc_b_hh"])

    # noise ~ N(0, 0.33), GRU(10,10), tanh  -> aux (B, 50, 10)
    noise = 0.33 * jax.random.normal(noise_key, (B, SEQ, NOISE_DIM), jnp.float32)
    aux = gru_forward_small(noise, params["nz_w_ih"], params["nz_w_hh"],
                            params["nz_b_ih"], params["nz_b_hh"])
    aux = jnp.tanh(aux)

    # concat along feature axis -> (B, 50, 266), flatten rows
    x = jnp.concatenate([enc, aux], axis=2).reshape(-1, SIZE)

    out2d = mlp_stack_pallas(x, params["w0_bf16"], params["b0"],
                             params["wres_bf16"], params["sres"], params["tres"],
                             params["wf_bf16"], params["bf_pad"])
    return out2d.reshape(B, SEQ, OUT_DIM)


# ---------------------------------------------------------------------------
if __name__ == "__main__":
    batch = 2
    key = jax.random.PRNGKey(0)
    k_param, k_audio, k_noise = jax.random.split(key, 3)

    params = prepare_params(init_params(k_param))
    audio = jax.random.normal(k_audio, (batch, SEQ, AUDIO_DIM), jnp.float32)

    out = generator_forward(params, audio, k_noise)
    out = jax.block_until_ready(out)

    assert out.shape == (batch, SEQ, OUT_DIM), out.shape
    assert out.dtype == jnp.float32
    assert bool(jnp.all(jnp.isfinite(out)))
    assert bool(jnp.all(jnp.abs(out) <= 1.0))   # tanh-squashed
    print("KERNEL_OK")
</pallas_src>

<mosaic_0001>
module attributes {stable_mosaic.version = 11 : i64} {
  func.func @_gru_rec_kernel(%arg0: i32, %arg1: memref<50x8x768xf32, #tpu.memory_space<vmem>>, %arg2: memref<256x768xf32, #tpu.memory_space<vmem>>, %arg3: memref<1x768xf32, #tpu.memory_space<vmem>>, %arg4: memref<50x8x256xf32, #tpu.memory_space<vmem>>, %arg5: memref<8x256xf32, #tpu.memory_space<vmem>>) attributes {dimension_semantics = [#tpu.dimension_semantics<arbitrary>], iteration_bounds = array<i64: 1>, scalar_prefetch = 0 : i64, scratch_operands = 1 : i64, tpu.core_type = #tpu.core_type<tc>, window_params = [{pipeline_mode = #tpu.pipeline_mode<synchronous>, transform_indices = @transform_0, window_bounds = array<i64: 50, 8, 768>}, {pipeline_mode = #tpu.pipeline_mode<synchronous>, transform_indices = @transform_1, window_bounds = array<i64: 256, 768>}, {pipeline_mode = #tpu.pipeline_mode<synchronous>, transform_indices = @transform_2, window_bounds = array<i64: 1, 768>}, {pipeline_mode = #tpu.pipeline_mode<synchronous>, transform_indices = @transform_3, window_bounds = array<i64: 50, 8, 256>}]} {
    %cst = arith.constant 0.000000e+00 : f32
    %0 = vector.broadcast %cst : f32 to vector<8x256xf32>
    %c0 = arith.constant 0 : index
    %c0_0 = arith.constant 0 : index
    %1 = vector.load %arg5[%c0, %c0_0] : memref<8x256xf32, #tpu.memory_space<vmem>>, vector<8x256xf32>
    tpu.vector_store %arg5[%c0, %c0_0], %0 {strides = array<i32>} : memref<8x256xf32, #tpu.memory_space<vmem>>, vector<8x256xf32>,
    %c0_i32 = arith.constant 0 : i32
    %c50_i32 = arith.constant 50 : i32
    %2 = arith.addi %c0_i32, %c50_i32 : i32
    %c1_i32 = arith.constant 1 : i32
    scf.for %arg6 = %c0_i32 to %2 step %c1_i32  : i32 {
      %c1_i32_2 = arith.constant 1 : i32
      %3 = arith.muli %arg6, %c1_i32_2 : i32
      %c0_i32_3 = arith.constant 0 : i32
      %4 = arith.addi %c0_i32_3, %3 : i32
      %c0_4 = arith.constant 0 : index
      %c0_5 = arith.constant 0 : index
      %5 = vector.load %arg5[%c0_4, %c0_5] : memref<8x256xf32, #tpu.memory_space<vmem>>, vector<8x256xf32>
      %c0_6 = arith.constant 0 : index
      %c0_7 = arith.constant 0 : index
      %6 = vector.load %arg2[%c0_6, %c0_7] : memref<256x768xf32, #tpu.memory_space<vmem>>, vector<256x768xf32>
      %cst_8 = arith.constant dense<0.000000e+00> : vector<8x768xf32>
      %7 = tpu.matmul %5, %6, %cst_8 {dimension_numbers = #tpu.dot_dimension_numbers<[1], [0], [0], [1], [0, 0, 1, 1], [], []>} : vector<8x256xf32>, vector<256x768xf32>, vector<8x768xf32> -> vector<8x768xf32>
      %c0_9 = arith.constant 0 : index
      %c0_10 = arith.constant 0 : index
      %8 = vector.load %arg3[%c0_9, %c0_10] : memref<1x768xf32, #tpu.memory_space<vmem>>, vector<1x768xf32>
      %9 = vector.broadcast %8 : vector<1x768xf32> to vector<8x768xf32>
      %10 = arith.addf %7, %9 : vector<8x768xf32>
      %11 = arith.index_cast %4 : i32 to index
      %c0_11 = arith.constant 0 : index
      %c0_12 = arith.constant 0 : index
      %12 = vector.load %arg1[%11, %c0_11, %c0_12] : memref<50x8x768xf32, #tpu.memory_space<vmem>>, vector<1x8x768xf32>
      %13 = vector.shape_cast %12 : vector<1x8x768xf32> to vector<8x768xf32>
      %14 = vector.extract_strided_slice %13 {offsets = [0, 0], sizes = [8, 256], strides = [1, 1]} : vector<8x768xf32> to vector<8x256xf32>
      %15 = vector.extract_strided_slice %10 {offsets = [0, 0], sizes = [8, 256], strides = [1, 1]} : vector<8x768xf32> to vector<8x256xf32>
      %16 = arith.addf %14, %15 : vector<8x256xf32>
      %17 = arith.negf %16 : vector<8x256xf32>
      %18 = math.exp %17 : vector<8x256xf32>
      %cst_13 = arith.constant 1.000000e+00 : f32
      %19 = vector.broadcast %cst_13 : f32 to vector<8x256xf32>
      %20 = arith.addf %19, %18 : vector<8x256xf32>
      %21 = arith.divf %19, %20 : vector<8x256xf32>
      %22 = vector.extract_strided_slice %13 {offsets = [0, 256], sizes = [8, 256], strides = [1, 1]} : vector<8x768xf32> to vector<8x256xf32>
      %23 = vector.extract_strided_slice %10 {offsets = [0, 256], sizes = [8, 256], strides = [1, 1]} : vector<8x768xf32> to vector<8x256xf32>
      %24 = arith.addf %22, %23 : vector<8x256xf32>
      %25 = arith.negf %24 : vector<8x256xf32>
      %26 = math.exp %25 : vector<8x256xf32>
      %cst_14 = arith.constant 1.000000e+00 : f32
      %27 = vector.broadcast %cst_14 : f32 to vector<8x256xf32>
      %28 = arith.addf %27, %26 : vector<8x256xf32>
      %29 = arith.divf %27, %28 : vector<8x256xf32>
      %30 = vector.extract_strided_slice %13 {offsets = [0, 512], sizes = [8, 256], strides = [1, 1]} : vector<8x768xf32> to vector<8x256xf32>
      %31 = vector.extract_strided_slice %10 {offsets = [0, 512], sizes = [8, 256], strides = [1, 1]} : vector<8x768xf32> to vector<8x256xf32>
      %32 = arith.mulf %21, %31 : vector<8x256xf32>
      %33 = arith.addf %30, %32 : vector<8x256xf32>
      %34 = math.tanh %33 : vector<8x256xf32>
      %cst_15 = arith.constant 1.000000e+00 : f32
      %35 = vector.broadcast %cst_15 : f32 to vector<8x256xf32>
      %36 = arith.subf %35, %29 : vector<8x256xf32>
      %37 = arith.mulf %36, %34 : vector<8x256xf32>
      %38 = arith.mulf %29, %5 : vector<8x256xf32>
      %39 = arith.addf %37, %38 : vector<8x256xf32>
      %c0_16 = arith.constant 0 : index
      %c0_17 = arith.constant 0 : index
      %40 = vector.load %arg5[%c0_16, %c0_17] : memref<8x256xf32, #tpu.memory_space<vmem>>, vector<8x256xf32>
      tpu.vector_store %arg5[%c0_16, %c0_17], %39 {strides = array<i32>} : memref<8x256xf32, #tpu.memory_space<vmem>>, vector<8x256xf32>,
      %41 = arith.index_cast %4 : i32 to index
      %c0_18 = arith.constant 0 : index
      %c0_19 = arith.constant 0 : index
      %42 = vector.load %arg4[%41, %c0_18, %c0_19] : memref<50x8x256xf32, #tpu.memory_space<vmem>>, vector<1x8x256xf32>
      %43 = vector.shape_cast %42 : vector<1x8x256xf32> to vector<8x256xf32>
      %44 = vector.shape_cast %39 : vector<8x256xf32> to vector<1x8x256xf32>
      tpu.vector_store %arg4[%41, %c0_18, %c0_19], %44 {strides = array<i32>} : memref<50x8x256xf32, #tpu.memory_space<vmem>>, vector<1x8x256xf32>,
    }
    %c50_i32_1 = arith.constant 50 : i32
    return
  }
  func.func @transform_0(%arg0: i32) -> (i32, i32, i32) {
    %c0_i32 = arith.constant 0 : i32
    %c0_i32_0 = arith.constant 0 : i32
    %c0_i32_1 = arith.constant 0 : i32
    %c0_i32_2 = arith.constant 0 : i32
    return %c0_i32, %c0_i32_0, %c0_i32_1 : i32, i32, i32
  }
  func.func @transform_1(%arg0: i32) -> (i32, i32) {
    %c0_i32 = arith.constant 0 : i32
    %c0_i32_0 = arith.constant 0 : i32
    %c0_i32_1 = arith.constant 0 : i32
    return %c0_i32, %c0_i32_0 : i32, i32
  }
  func.func @transform_2(%arg0: i32) -> (i32, i32) {
    %c0_i32 = arith.constant 0 : i32
    %c0_i32_0 = arith.constant 0 : i32
    %c0_i32_1 = arith.constant 0 : i32
    return %c0_i32, %c0_i32_0 : i32, i32
  }
  func.func @transform_3(%arg0: i32) -> (i32, i32, i32) {
    %c0_i32 = arith.constant 0 : i32
    %c0_i32_0 = arith.constant 0 : i32
    %c0_i32_1 = arith.constant 0 : i32
    %c0_i32_2 = arith.constant 0 : i32
    return %c0_i32, %c0_i32_0, %c0_i32_1 : i32, i32, i32
  }
}

module attributes {stable_mosaic.version = 11 : i64} {
  func.func @_mlp_kernel(%arg0: i32, %arg1: memref<112x384xbf16, #tpu.memory_space<vmem>>, %arg2: memref<384x1024xbf16, #tpu.memory_space<vmem>>, %arg3: memref<1x1024xf32, #tpu.memory_space<vmem>>, %arg4: memref<1x1024x1024xbf16, #tpu.memory_space<vmem>>, %arg5: memref<1x1x1024xf32, #tpu.memory_space<vmem>>, %arg6: memref<1x1x1024xf32, #tpu.memory_space<vmem>>, %arg7: memref<1024x128xbf16, #tpu.memory_space<vmem>>, %arg8: memref<1x128xf32, #tpu.memory_space<vmem>>, %arg9: memref<112x128xf32, #tpu.memory_space<vmem>>, %arg10: memref<112x1024xf32, #tpu.memory_space<vmem>>, %arg11: memref<112x1024xf32, #tpu.memory_space<vmem>>) attributes {dimension_semantics = [#tpu.dimension_semantics<arbitrary>], iteration_bounds = array<i64: 6>, scalar_prefetch = 0 : i64, scratch_operands = 2 : i64, tpu.core_type = #tpu.core_type<tc>, window_params = [{pipeline_mode = #tpu.pipeline_mode<synchronous>, transform_indices = @transform_0, window_bounds = array<i64: 112, 384>}, {pipeline_mode = #tpu.pipeline_mode<synchronous>, transform_indices = @transform_1, window_bounds = array<i64: 384, 1024>}, {pipeline_mode = #tpu.pipeline_mode<synchronous>, transform_indices = @transform_2, window_bounds = array<i64: 1, 1024>}, {transform_indices = @transform_3, window_bounds = array<i64: 1, 1024, 1024>}, {transform_indices = @transform_4, window_bounds = array<i64: 1, 1, 1024>}, {transform_indices = @transform_5, window_bounds = array<i64: 1, 1, 1024>}, {pipeline_mode = #tpu.pipeline_mode<synchronous>, transform_indices = @transform_6, window_bounds = array<i64: 1024, 128>}, {pipeline_mode = #tpu.pipeline_mode<synchronous>, transform_indices = @transform_7, window_bounds = array<i64: 1, 128>}, {pipeline_mode = #tpu.pipeline_mode<synchronous>, transform_indices = @transform_8, window_bounds = array<i64: 112, 128>}]} {
    %c0_i32 = arith.constant 0 : i32
    %0 = arith.cmpi eq, %arg0, %c0_i32 : i32
    %1 = arith.extui %0 : i1 to i32
    %c0_i32_0 = arith.constant 0 : i32
    %2 = arith.cmpi ne, %1, %c0_i32_0 : i32
    scf.if %2 {
      %c0_27 = arith.constant 0 : index
      %c0_28 = arith.constant 0 : index
      %47 = vector.load %arg1[%c0_27, %c0_28] : memref<112x384xbf16, #tpu.memory_space<vmem>>, vector<112x384xbf16>
      %c0_29 = arith.constant 0 : index
      %c0_30 = arith.constant 0 : index
      %48 = vector.load %arg2[%c0_29, %c0_30] : memref<384x1024xbf16, #tpu.memory_space<vmem>>, vector<384x1024xbf16>
      %cst_31 = arith.constant dense<0.000000e+00> : vector<112x1024xf32>
      %49 = tpu.matmul %47, %48, %cst_31 {dimension_numbers = #tpu.dot_dimension_numbers<[1], [0], [0], [1], [0, 0, 1, 1], [], []>} : vector<112x384xbf16>, vector<384x1024xbf16>, vector<112x1024xf32> -> vector<112x1024xf32>
      %c0_32 = arith.constant 0 : index
      %c0_33 = arith.constant 0 : index
      %50 = vector.load %arg3[%c0_32, %c0_33] : memref<1x1024xf32, #tpu.memory_space<vmem>>, vector<1x1024xf32>
      %51 = vector.broadcast %50 : vector<1x1024xf32> to vector<112x1024xf32>
      %52 = arith.addf %49, %51 : vector<112x1024xf32>
      %c0_34 = arith.constant 0 : index
      %c0_35 = arith.constant 0 : index
      %53 = vector.load %arg10[%c0_34, %c0_35] : memref<112x1024xf32, #tpu.memory_space<vmem>>, vector<112x1024xf32>
      tpu.vector_store %arg10[%c0_34, %c0_35], %52 {strides = array<i32>} : memref<112x1024xf32, #tpu.memory_space<vmem>>, vector<112x1024xf32>,
      %c0_36 = arith.constant 0 : index
      %c0_37 = arith.constant 0 : index
      %54 = vector.load %arg11[%c0_36, %c0_37] : memref<112x1024xf32, #tpu.memory_space<vmem>>, vector<112x1024xf32>
      tpu.vector_store %arg11[%c0_36, %c0_37], %52 {strides = array<i32>} : memref<112x1024xf32, #tpu.memory_space<vmem>>, vector<112x1024xf32>,
    } else {
    }
    %c0 = arith.constant 0 : index
    %c0_1 = arith.constant 0 : index
    %3 = vector.load %arg10[%c0, %c0_1] : memref<112x1024xf32, #tpu.memory_space<vmem>>, vector<112x1024xf32>
    %4 = arith.truncf %3 : vector<112x1024xf32> to vector<112x1024xbf16>
    %c0_2 = arith.constant 0 : index
    %c0_3 = arith.constant 0 : index
    %c0_4 = arith.constant 0 : index
    %5 = vector.load %arg4[%c0_2, %c0_3, %c0_4] : memref<1x1024x1024xbf16, #tpu.memory_space<vmem>>, vector<1x1024x1024xbf16>
    %6 = vector.shape_cast %5 : vector<1x1024x1024xbf16> to vector<1024x1024xbf16>
    %cst = arith.constant dense<0.000000e+00> : vector<112x1024xf32>
    %7 = tpu.matmul %4, %6, %cst {dimension_numbers = #tpu.dot_dimension_numbers<[1], [0], [0], [1], [0, 0, 1, 1], [], []>} : vector<112x1024xbf16>, vector<1024x1024xbf16>, vector<112x1024xf32> -> vector<112x1024xf32>
    %c0_5 = arith.constant 0 : index
    %c0_6 = arith.constant 0 : index
    %c0_7 = arith.constant 0 : index
    %8 = vector.load %arg5[%c0_5, %c0_6, %c0_7] : memref<1x1x1024xf32, #tpu.memory_space<vmem>>, vector<1x1x1024xf32>
    %9 = vector.shape_cast %8 : vector<1x1x1024xf32> to vector<1x1024xf32>
    %10 = vector.broadcast %9 : vector<1x1024xf32> to vector<112x1024xf32>
    %11 = arith.mulf %7, %10 : vector<112x1024xf32>
    %c0_8 = arith.constant 0 : index
    %c0_9 = arith.constant 0 : index
    %c0_10 = arith.constant 0 : index
    %12 = vector.load %arg6[%c0_8, %c0_9, %c0_10] : memref<1x1x1024xf32, #tpu.memory_space<vmem>>, vector<1x1x1024xf32>
    %13 = vector.shape_cast %12 : vector<1x1x1024xf32> to vector<1x1024xf32>
    %14 = vector.broadcast %13 : vector<1x1024xf32> to vector<112x1024xf32>
    %15 = arith.addf %11, %14 : vector<112x1024xf32>
    %cst_11 = arith.constant 0.000000e+00 : f32
    %16 = vector.broadcast %cst_11 : f32 to vector<112x1024xf32>
    %17 = arith.maximumf %15, %16 : vector<112x1024xf32>
    %c2_i32 = arith.constant 2 : i32
    %c0_i32_12 = arith.constant 0 : i32
    %18 = arith.cmpi eq, %c2_i32, %c0_i32_12 : i32
    %c1_i32 = arith.constant 1 : i32
    %19 = arith.select %18, %c1_i32, %c2_i32 : i32
    %20 = arith.remsi %arg0, %19 : i32
    %c0_i32_13 = arith.constant 0 : i32
    %21 = arith.cmpi ne, %20, %c0_i32_13 : i32
    %c0_i32_14 = arith.constant 0 : i32
    %22 = arith.cmpi slt, %20, %c0_i32_14 : i32
    %c0_i32_15 = arith.constant 0 : i32
    %23 = arith.cmpi slt, %19, %c0_i32_15 : i32
    %24 = arith.xori %22, %23 : i1
    %25 = arith.andi %24, %21 : i1
    %26 = arith.addi %20, %19 : i32
    %27 = arith.select %25, %26, %20 : i32
    %c0_i32_16 = arith.constant 0 : i32
    %28 = arith.cmpi eq, %27, %c0_i32_16 : i32
    %29 = arith.extui %28 : i1 to i32
    %c0_i32_17 = arith.constant 0 : i32
    %30 = arith.cmpi ne, %29, %c0_i32_17 : i32
    scf.if %30 {
      %c0_27 = arith.constant 0 : index
      %c0_28 = arith.constant 0 : index
      %47 = vector.load %arg10[%c0_27, %c0_28] : memref<112x1024xf32, #tpu.memory_space<vmem>>, vector<112x1024xf32>
      tpu.vector_store %arg10[%c0_27, %c0_28], %17 {strides = array<i32>} : memref<112x1024xf32, #tpu.memory_space<vmem>>, vector<112x1024xf32>,
    } else {
    }
    %c2_i32_18 = arith.constant 2 : i32
    %c0_i32_19 = arith.constant 0 : i32
    %31 = arith.cmpi eq, %c2_i32_18, %c0_i32_19 : i32
    %c1_i32_20 = arith.constant 1 : i32
    %32 = arith.select %31, %c1_i32_20, %c2_i32_18 : i32
    %33 = arith.remsi %arg0, %32 : i32
    %c0_i32_21 = arith.constant 0 : i32
    %34 = arith.cmpi ne, %33, %c0_i32_21 : i32
    %c0_i32_22 = arith.constant 0 : i32
    %35 = arith.cmpi slt, %33, %c0_i32_22 : i32
    %c0_i32_23 = arith.constant 0 : i32
    %36 = arith.cmpi slt, %32, %c0_i32_23 : i32
    %37 = arith.xori %35, %36 : i1
    %38 = arith.andi %37, %34 : i1
    %39 = arith.addi %33, %32 : i32
    %40 = arith.select %38, %39, %33 : i32
    %c1_i32_24 = arith.constant 1 : i32
    %41 = arith.cmpi eq, %40, %c1_i32_24 : i32
    %42 = arith.extui %41 : i1 to i32
    %c0_i32_25 = arith.constant 0 : i32
    %43 = arith.cmpi ne, %42, %c0_i32_25 : i32
    scf.if %43 {
      %c0_27 = arith.constant 0 : index
      %c0_28 = arith.constant 0 : index
      %47 = vector.load %arg11[%c0_27, %c0_28] : memref<112x1024xf32, #tpu.memory_space<vmem>>, vector<112x1024xf32>
      %48 = arith.addf %17, %47 : vector<112x1024xf32>
      %c0_29 = arith.constant 0 : index
      %c0_30 = arith.constant 0 : index
      %49 = vector.load %arg10[%c0_29, %c0_30] : memref<112x1024xf32, #tpu.memory_space<vmem>>, vector<112x1024xf32>
      tpu.vector_store %arg10[%c0_29, %c0_30], %48 {strides = array<i32>} : memref<112x1024xf32, #tpu.memory_space<vmem>>, vector<112x1024xf32>,
      %c0_31 = arith.constant 0 : index
      %c0_32 = arith.constant 0 : index
      %50 = vector.load %arg11[%c0_31, %c0_32] : memref<112x1024xf32, #tpu.memory_space<vmem>>, vector<112x1024xf32>
      tpu.vector_store %arg11[%c0_31, %c0_32], %48 {strides = array<i32>} : memref<112x1024xf32, #tpu.memory_space<vmem>>, vector<112x1024xf32>,
    } else {
    }
    %c5_i32 = arith.constant 5 : i32
    %44 = arith.cmpi eq, %arg0, %c5_i32 : i32
    %45 = arith.extui %44 : i1 to i32
    %c0_i32_26 = arith.constant 0 : i32
    %46 = arith.cmpi ne, %45, %c0_i32_26 : i32
    scf.if %46 {
      %c0_27 = arith.constant 0 : index
      %c0_28 = arith.constant 0 : index
      %47 = vector.load %arg10[%c0_27, %c0_28] : memref<112x1024xf32, #tpu.memory_space<vmem>>, vector<112x1024xf32>
      %48 = arith.truncf %47 : vector<112x1024xf32> to vector<112x1024xbf16>
      %c0_29 = arith.constant 0 : index
      %c0_30 = arith.constant 0 : index
      %49 = vector.load %arg7[%c0_29, %c0_30] : memref<1024x128xbf16, #tpu.memory_space<vmem>>, vector<1024x128xbf16>
      %cst_31 = arith.constant dense<0.000000e+00> : vector<112x128xf32>
      %50 = tpu.matmul %48, %49, %cst_31 {dimension_numbers = #tpu.dot_dimension_numbers<[1], [0], [0], [1], [0, 0, 1, 1], [], []>} : vector<112x1024xbf16>, vector<1024x128xbf16>, vector<112x128xf32> -> vector<112x128xf32>
      %c0_32 = arith.constant 0 : index
      %c0_33 = arith.constant 0 : index
      %51 = vector.load %arg8[%c0_32, %c0_33] : memref<1x128xf32, #tpu.memory_space<vmem>>, vector<1x128xf32>
      %52 = vector.broadcast %51 : vector<1x128xf32> to vector<112x128xf32>
      %53 = arith.addf %50, %52 : vector<112x128xf32>
      %54 = math.tanh %53 : vector<112x128xf32>
      %c0_34 = arith.constant 0 : index
      %c0_35 = arith.constant 0 : index
      %55 = vector.load %arg9[%c0_34, %c0_35] : memref<112x128xf32, #tpu.memory_space<vmem>>, vector<112x128xf32>
      tpu.vector_store %arg9[%c0_34, %c0_35], %54 {strides = array<i32>} : memref<112x128xf32, #tpu.memory_space<vmem>>, vector<112x128xf32>,
    } else {
    }
    return
  }
  func.func @transform_0(%arg0: i32) -> (i32, i32) {
    %c0_i32 = arith.constant 0 : i32
    %c0_i32_0 = arith.constant 0 : i32
    %c0_i32_1 = arith.constant 0 : i32
    return %c0_i32, %c0_i32_0 : i32, i32
  }
  func.func @transform_1(%arg0: i32) -> (i32, i32) {
    %c0_i32 = arith.constant 0 : i32
    %c0_i32_0 = arith.constant 0 : i32
    %c0_i32_1 = arith.constant 0 : i32
    return %c0_i32, %c0_i32_0 : i32, i32
  }
  func.func @transform_2(%arg0: i32) -> (i32, i32) {
    %c0_i32 = arith.constant 0 : i32
    %c0_i32_0 = arith.constant 0 : i32
    %c0_i32_1 = arith.constant 0 : i32
    return %c0_i32, %c0_i32_0 : i32, i32
  }
  func.func @transform_3(%arg0: i32) -> (i32, i32, i32) {
    %c0_i32 = arith.constant 0 : i32
    %c0_i32_0 = arith.constant 0 : i32
    %c0_i32_1 = arith.constant 0 : i32
    return %arg0, %c0_i32, %c0_i32_0 : i32, i32, i32
  }
  func.func @transform_4(%arg0: i32) -> (i32, i32, i32) {
    %c0_i32 = arith.constant 0 : i32
    %c0_i32_0 = arith.constant 0 : i32
    %c0_i32_1 = arith.constant 0 : i32
    return %arg0, %c0_i32, %c0_i32_0 : i32, i32, i32
  }
  func.func @transform_5(%arg0: i32) -> (i32, i32, i32) {
    %c0_i32 = arith.constant 0 : i32
    %c0_i32_0 = arith.constant 0 : i32
    %c0_i32_1 = arith.constant 0 : i32
    return %arg0, %c0_i32, %c0_i32_0 : i32, i32, i32
  }
  func.func @transform_6(%arg0: i32) -> (i32, i32) {
    %c0_i32 = arith.constant 0 : i32
    %c0_i32_0 = arith.constant 0 : i32
    %c0_i32_1 = arith.constant 0 : i32
    return %c0_i32, %c0_i32_0 : i32, i32
  }
  func.func @transform_7(%arg0: i32) -> (i32, i32) {
    %c0_i32 = arith.constant 0 : i32
    %c0_i32_0 = arith.constant 0 : i32
    %c0_i32_1 = arith.constant 0 : i32
    return %c0_i32, %c0_i32_0 : i32, i32
  }
  func.func @transform_8(%arg0: i32) -> (i32, i32) {
    %c0_i32 = arith.constant 0 : i32
    %c0_i32_0 = arith.constant 0 : i32
    %c0_i32_1 = arith.constant 0 : i32
    return %c0_i32, %c0_i32_0 : i32, i32
  }
}

</mosaic_0001>

<llo_original>
// kernel: custom-call
$region0: #{custom-call}
  %s0 = inlined_call_operand.vmem [shape: f32[2,10], index: 0, kind: output, shape index: {}]

// kernel: custom-call.1
$region0: #{custom-call.1}
  %s0 = inlined_call_operand.vmem [shape: f32[50,2,10], index: 0, kind: output, shape index: {}]

// kernel: generator_forward.2
$region0: #{generator_forward.2}
  #allocation0 [shape = 'u32[]', space=smem, size = 0x4, offset = 0x4, fixed_abs, tag = 'smem constant byte address 0x4 - core index']
  #allocation1 [shape = 'u32[144,128]{1,0:T(1,128)}', space=vmem, size = 0x12000, scoped, tag = 'internal scratch']
  #allocation2 [shape = 'f32[8,256]{1,0:T(8,128)}', space=vmem, size = 0x2000, scoped, tag = 'scratch operand']
  %s0 = inlined_call_operand.vmem [shape: f32[50,8,768], index: 0, kind: input, shape index: {}]
  %s1 = inlined_call_operand.vmem [shape: f32[256,768], index: 1, kind: input, shape index: {}]
  %s2 = inlined_call_operand.vmem [shape: f32[1,768], index: 2, kind: input, shape index: {}]
  %s3 = inlined_call_operand.vmem [shape: f32[50,8,256], index: 3, kind: output, shape index: {}]
  %s4 = sld [smem:[#allocation0]]
  $region29: #{generator_forward.2} parent=0
    _
  %s6 = ssub.s32 1, %s4
  %s7 = scalar_select 0, %s6, %s4
  // Predicated region
  $region2: #{generator_forward.2} parent=0 // pred_check
    _
  $region3: #{generator_forward.2} parent=0 // pred_check_branch
    %9 = sbr.rel (0) target = $region5
  $region4: #{generator_forward.2} parent=0 // pred_region
    _
  $region5: #{generator_forward.2} parent=0 // pred_fallthru
    _
  // Predicated region
  $region6: #{generator_forward.2} parent=0 // pred_check
    _
  $region7: #{generator_forward.2} parent=0 // pred_check_branch
    %11 = sbr.rel (0) target = $region9
  $region8: #{generator_forward.2} parent=0 // pred_region
    _
  $region9: #{generator_forward.2} parent=0 // pred_fallthru
    _
  // Predicated region
  $region10: #{generator_forward.2} parent=0 // pred_check
    _
  $region11: #{generator_forward.2} parent=0 // pred_check_branch
    %13 = sbr.rel (0) target = $region13
  $region12: #{generator_forward.2} parent=0 // pred_region
    _
  $region13: #{generator_forward.2} parent=0 // pred_fallthru
    _
  %14 = vst [vmem:[#allocation2] sm:$0xff] 0.0
  %15 = vst [vmem:[#allocation2 + $0x8] sm:$0xff] 0.0
  loop: start=0, step=1, limit=50
  $region14: #{generator_forward.2} parent=0 // loop_pre_header
    _
  $region15: #{generator_forward.2} parent=0 // loop_header
    %s17 = sphi 0, %s21
    %p18 = scmp.ge.s32.totalorder %s17, 50
  $region16: #{generator_forward.2} parent=0 // loop_header_branch
    %20 = sbr.rel (%p18) target = $region20
  $region17: #{generator_forward.2} parent=0 // loop_body
    %v22 = vld [vmem:[#allocation2] sm:$0xff]
    %v23 = vld [vmem:[#allocation2 + $0x8] sm:$0xff]
    %v24 = vld [vmem:[%s1] sm:$0xff]
    %v25 = vld [vmem:[%s1 + $0x8] sm:$0xff]
    %v26 = vld [vmem:[%s1 + $0x10] sm:$0xff]
    %v27 = vld [vmem:[%s1 + $0x18] sm:$0xff]
    %v28 = vld [vmem:[%s1 + $0x20] sm:$0xff]
    %v29 = vld [vmem:[%s1 + $0x28] sm:$0xff]
    %v30 = vld [vmem:[%s1 + $0x30] sm:$0xff]
    %v31 = vld [vmem:[%s1 + $0x38] sm:$0xff]
    %v32 = vld [vmem:[%s1 + $0x40] sm:$0xff]
    %v33 = vld [vmem:[%s1 + $0x48] sm:$0xff]
    %v34 = vld [vmem:[%s1 + $0x50] sm:$0xff]
    %v35 = vld [vmem:[%s1 + $0x58] sm:$0xff]
    %v36 = vld [vmem:[%s1 + $0x60] sm:$0xff]
    %v37 = vld [vmem:[%s1 + $0x68] sm:$0xff]
    %v38 = vld [vmem:[%s1 + $0x70] sm:$0xff]
    %v39 = vld [vmem:[%s1 + $0x78] sm:$0xff]
    %v40 = vld [vmem:[%s1 + $0x80] sm:$0xff]
    %v41 = vld [vmem:[%s1 + $0x88] sm:$0xff]
    %v42 = vld [vmem:[%s1 + $0x90] sm:$0xff]
    %v43 = vld [vmem:[%s1 + $0x98] sm:$0xff]
    %v44 = vld [vmem:[%s1 + $0xa0] sm:$0xff]
    %v45 = vld [vmem:[%s1 + $0xa8] sm:$0xff]
    %v46 = vld [vmem:[%s1 + $0xb0] sm:$0xff]
    %v47 = vld [vmem:[%s1 + $0xb8] sm:$0xff]
    %v48 = vld [vmem:[%s1 + $0xc0] sm:$0xff]
    %v49 = vld [vmem:[%s1 + $0xc8] sm:$0xff]
    %v50 = vld [vmem:[%s1 + $0xd0] sm:$0xff]
    %v51 = vld [vmem:[%s1 + $0xd8] sm:$0xff]
    %v52 = vld [vmem:[%s1 + $0xe0] sm:$0xff]
    %v53 = vld [vmem:[%s1 + $0xe8] sm:$0xff]
    %v54 = vld [vmem:[%s1 + $0xf0] sm:$0xff]
    %v55 = vld [vmem:[%s1 + $0xf8] sm:$0xff]
    %v56 = vld [vmem:[%s1 + $0x100] sm:$0xff]
    %v57 = vld [vmem:[%s1 + $0x108] sm:$0xff]
    %v58 = vld [vmem:[%s1 + $0x110] sm:$0xff]
    %v59 = vld [vmem:[%s1 + $0x118] sm:$0xff]
    %v60 = vld [vmem:[%s1 + $0x120] sm:$0xff]
    %v61 = vld [vmem:[%s1 + $0x128] sm:$0xff]
    %v62 = vld [vmem:[%s1 + $0x130] sm:$0xff]
    %v63 = vld [vmem:[%s1 + $0x138] sm:$0xff]
    %v64 = vld [vmem:[%s1 + $0x140] sm:$0xff]
    %v65 = vld [vmem:[%s1 + $0x148] sm:$0xff]
    %v66 = vld [vmem:[%s1 + $0x150] sm:$0xff]
    %v67 = vld [vmem:[%s1 + $0x158] sm:$0xff]
    %v68 = vld [vmem:[%s1 + $0x160] sm:$0xff]
    %v69 = vld [vmem:[%s1 + $0x168] sm:$0xff]
    %v70 = vld [vmem:[%s1 + $0x170] sm:$0xff]
    %v71 = vld [vmem:[%s1 + $0x178] sm:$0xff]
    %v72 = vld [vmem:[%s1 + $0x180] sm:$0xff]
    %v73 = vld [vmem:[%s1 + $0x188] sm:$0xff]
    %v74 = vld [vmem:[%s1 + $0x190] sm:$0xff]
    %v75 = vld [vmem:[%s1 + $0x198] sm:$0xff]
    %v76 = vld [vmem:[%s1 + $0x1a0] sm:$0xff]
    %v77 = vld [vmem:[%s1 + $0x1a8] sm:$0xff]
    %v78 = vld [vmem:[%s1 + $0x1b0] sm:$0xff]
    %v79 = vld [vmem:[%s1 + $0x1b8] sm:$0xff]
    %v80 = vld [vmem:[%s1 + $0x1c0] sm:$0xff]
    %v81 = vld [vmem:[%s1 + $0x1c8] sm:$0xff]
    %v82 = vld [vmem:[%s1 + $0x1d0] sm:$0xff]
    %v83 = vld [vmem:[%s1 + $0x1d8] sm:$0xff]
    %v84 = vld [vmem:[%s1 + $0x1e0] sm:$0xff]
    %v85 = vld [vmem:[%s1 + $0x1e8] sm:$0xff]
    %v86 = vld [vmem:[%s1 + $0x1f0] sm:$0xff]
    %v87 = vld [vmem:[%s1 + $0x1f8] sm:$0xff]
    %v88 = vld [vmem:[%s1 + $0x200] sm:$0xff]
    %v89 = vld [vmem:[%s1 + $0x208] sm:$0xff]
    %v90 = vld [vmem:[%s1 + $0x210] sm:$0xff]
    %v91 = vld [vmem:[%s1 + $0x218] sm:$0xff]
    %v92 = vld [vmem:[%s1 + $0x220] sm:$0xff]
    %v93 = vld [vmem:[%s1 + $0x228] sm:$0xff]
    %v94 = vld [vmem:[%s1 + $0x230] sm:$0xff]
    %v95 = vld [vmem:[%s1 + $0x238] sm:$0xff]
    %v96 = vld [vmem:[%s1 + $0x240] sm:$0xff]
    %v97 = vld [vmem:[%s1 + $0x248] sm:$0xff]
    %v98 = vld [vmem:[%s1 + $0x250] sm:$0xff]
    %v99 = vld [vmem:[%s1 + $0x258] sm:$0xff]
    %v100 = vld [vmem:[%s1 + $0x260] sm:$0xff]
    %v101 = vld [vmem:[%s1 + $0x268] sm:$0xff]
    %v102 = vld [vmem:[%s1 + $0x270] sm:$0xff]
    %v103 = vld [vmem:[%s1 + $0x278] sm:$0xff]
    %v104 = vld [vmem:[%s1 + $0x280] sm:$0xff]
    %v105 = vld [vmem:[%s1 + $0x288] sm:$0xff]
    %v106 = vld [vmem:[%s1 + $0x290] sm:$0xff]
    %v107 = vld [vmem:[%s1 + $0x298] sm:$0xff]
    %v108 = vld [vmem:[%s1 + $0x2a0] sm:$0xff]
    %v109 = vld [vmem:[%s1 + $0x2a8] sm:$0xff]
    %v110 = vld [vmem:[%s1 + $0x2b0] sm:$0xff]
    %v111 = vld [vmem:[%s1 + $0x2b8] sm:$0xff]
    %v112 = vld [vmem:[%s1 + $0x2c0] sm:$0xff]
    %v113 = vld [vmem:[%s1 + $0x2c8] sm:$0xff]
    %v114 = vld [vmem:[%s1 + $0x2d0] sm:$0xff]
    %v115 = vld [vmem:[%s1 + $0x2d8] sm:$0xff]
    %v116 = vld [vmem:[%s1 + $0x2e0] sm:$0xff]
    %v117 = vld [vmem:[%s1 + $0x2e8] sm:$0xff]
    %v118 = vld [vmem:[%s1 + $0x2f0] sm:$0xff]
    %v119 = vld [vmem:[%s1 + $0x2f8] sm:$0xff]
    %v120 = vld [vmem:[%s1 + $0x300] sm:$0xff]
    %v121 = vld [vmem:[%s1 + $0x308] sm:$0xff]
    %v122 = vld [vmem:[%s1 + $0x310] sm:$0xff]
    %v123 = vld [vmem:[%s1 + $0x318] sm:$0xff]
    %v124 = vld [vmem:[%s1 + $0x320] sm:$0xff]
    %v125 = vld [vmem:[%s1 + $0x328] sm:$0xff]
    %v126 = vld [vmem:[%s1 + $0x330] sm:$0xff]
    %v127 = vld [vmem:[%s1 + $0x338] sm:$0xff]
    %v128 = vld [vmem:[%s1 + $0x340] sm:$0xff]
    %v129 = vld [vmem:[%s1 + $0x348] sm:$0xff]
    %v130 = vld [vmem:[%s1 + $0x350] sm:$0xff]
    %v131 = vld [vmem:[%s1 + $0x358] sm:$0xff]
    %v132 = vld [vmem:[%s1 + $0x360] sm:$0xff]
    %v133 = vld [vmem:[%s1 + $0x368] sm:$0xff]
    %v134 = vld [vmem:[%s1 + $0x370] sm:$0xff]
    %v135 = vld [vmem:[%s1 + $0x378] sm:$0xff]
    %v136 = vld [vmem:[%s1 + $0x380] sm:$0xff]
    %v137 = vld [vmem:[%s1 + $0x388] sm:$0xff]
    %v138 = vld [vmem:[%s1 + $0x390] sm:$0xff]
    %v139 = vld [vmem:[%s1 + $0x398] sm:$0xff]
    %v140 = vld [vmem:[%s1 + $0x3a0] sm:$0xff]
    %v141 = vld [vmem:[%s1 + $0x3a8] sm:$0xff]
    %v142 = vld [vmem:[%s1 + $0x3b0] sm:$0xff]
    %v143 = vld [vmem:[%s1 + $0x3b8] sm:$0xff]
    %v144 = vld [vmem:[%s1 + $0x3c0] sm:$0xff]
    %v145 = vld [vmem:[%s1 + $0x3c8] sm:$0xff]
    %v146 = vld [vmem:[%s1 + $0x3d0] sm:$0xff]
    %v147 = vld [vmem:[%s1 + $0x3d8] sm:$0xff]
    %v148 = vld [vmem:[%s1 + $0x3e0] sm:$0xff]
    %v149 = vld [vmem:[%s1 + $0x3e8] sm:$0xff]
    %v150 = vld [vmem:[%s1 + $0x3f0] sm:$0xff]
    %v151 = vld [vmem:[%s1 + $0x3f8] sm:$0xff]
    %v152 = vld [vmem:[%s1 + $0x400] sm:$0xff]
    %v153 = vld [vmem:[%s1 + $0x408] sm:$0xff]
    %v154 = vld [vmem:[%s1 + $0x410] sm:$0xff]
    %v155 = vld [vmem:[%s1 + $0x418] sm:$0xff]
    %v156 = vld [vmem:[%s1 + $0x420] sm:$0xff]
    %v157 = vld [vmem:[%s1 + $0x428] sm:$0xff]
    %v158 = vld [vmem:[%s1 + $0x430] sm:$0xff]
    %v159 = vld [vmem:[%s1 + $0x438] sm:$0xff]
    %v160 = vld [vmem:[%s1 + $0x440] sm:$0xff]
    %v161 = vld [vmem:[%s1 + $0x448] sm:$0xff]
    %v162 = vld [vmem:[%s1 + $0x450] sm:$0xff]
    %v163 = vld [vmem:[%s1 + $0x458] sm:$0xff]
    %v164 = vld [vmem:[%s1 + $0x460] sm:$0xff]
    %v165 = vld [vmem:[%s1 + $0x468] sm:$0xff]
    %v166 = vld [vmem:[%s1 + $0x470] sm:$0xff]
    %v167 = vld [vmem:[%s1 + $0x478] sm:$0xff]
    %v168 = vld [vmem:[%s1 + $0x480] sm:$0xff]
    %v169 = vld [vmem:[%s1 + $0x488] sm:$0xff]
    %v170 = vld [vmem:[%s1 + $0x490] sm:$0xff]
    %v171 = vld [vmem:[%s1 + $0x498] sm:$0xff]
    %v172 = vld [vmem:[%s1 + $0x4a0] sm:$0xff]
    %v173 = vld [vmem:[%s1 + $0x4a8] sm:$0xff]
    %v174 = vld [vmem:[%s1 + $0x4b0] sm:$0xff]
    %v175 = vld [vmem:[%s1 + $0x4b8] sm:$0xff]
    %v176 = vld [vmem:[%s1 + $0x4c0] sm:$0xff]
    %v177 = vld [vmem:[%s1 + $0x4c8] sm:$0xff]
    %v178 = vld [vmem:[%s1 + $0x4d0] sm:$0xff]
    %v179 = vld [vmem:[%s1 + $0x4d8] sm:$0xff]
    %v180 = vld [vmem:[%s1 + $0x4e0] sm:$0xff]
    %v181 = vld [vmem:[%s1 + $0x4e8] sm:$0xff]
    %v182 = vld [vmem:[%s1 + $0x4f0] sm:$0xff]
    %v183 = vld [vmem:[%s1 + $0x4f8] sm:$0xff]
    %v184 = vld [vmem:[%s1 + $0x500] sm:$0xff]
    %v185 = vld [vmem:[%s1 + $0x508] sm:$0xff]
    %v186 = vld [vmem:[%s1 + $0x510] sm:$0xff]
    %v187 = vld [vmem:[%s1 + $0x518] sm:$0xff]
    %v188 = vld [vmem:[%s1 + $0x520] sm:$0xff]
    %v189 = vld [vmem:[%s1 + $0x528] sm:$0xff]
    %v190 = vld [vmem:[%s1 + $0x530] sm:$0xff]
    %v191 = vld [vmem:[%s1 + $0x538] sm:$0xff]
    %v192 = vld [vmem:[%s1 + $0x540] sm:$0xff]
    %v193 = vld [vmem:[%s1 + $0x548] sm:$0xff]
    %v194 = vld [vmem:[%s1 + $0x550] sm:$0xff]
    %v195 = vld [vmem:[%s1 + $0x558] sm:$0xff]
    %v196 = vld [vmem:[%s1 + $0x560] sm:$0xff]
    %v197 = vld [vmem:[%s1 + $0x568] sm:$0xff]
    %v198 = vld [vmem:[%s1 + $0x570] sm:$0xff]
    %v199 = vld [vmem:[%s1 + $0x578] sm:$0xff]
    %v200 = vld [vmem:[%s1 + $0x580] sm:$0xff]
    %v201 = vld [vmem:[%s1 + $0x588] sm:$0xff]
    %v202 = vld [vmem:[%s1 + $0x590] sm:$0xff]
    %v203 = vld [vmem:[%s1 + $0x598] sm:$0xff]
    %v204 = vld [vmem:[%s1 + $0x5a0] sm:$0xff]
    %v205 = vld [vmem:[%s1 + $0x5a8] sm:$0xff]
    %v206 = vld [vmem:[%s1 + $0x5b0] sm:$0xff]
    %v207 = vld [vmem:[%s1 + $0x5b8] sm:$0xff]
    %v208 = vld [vmem:[%s1 + $0x5c0] sm:$0xff]
    %v209 = vld [vmem:[%s1 + $0x5c8] sm:$0xff]
    %v210 = vld [vmem:[%s1 + $0x5d0] sm:$0xff]
    %v211 = vld [vmem:[%s1 + $0x5d8] sm:$0xff]
    %v212 = vld [vmem:[%s1 + $0x5e0] sm:$0xff]
    %v213 = vld [vmem:[%s1 + $0x5e8] sm:$0xff]
    %v214 = vld [vmem:[%s1 + $0x5f0] sm:$0xff]
    %v215 = vld [vmem:[%s1 + $0x5f8] sm:$0xff]
    %v216 = vld [vmem:[%s2] sm:$0x3f]
    %v218 = vlaneseq
    %v219 = vshrl.u32 %v218, 7
    %v220 = vsub.s32 0, %v219
    %v221 = vrot.slane %v216, %v220
    %v222 = vlaneseq
    %v223 = vshrl.u32 %v222, 7
    %v224 = vsub.s32 1, %v223
    %v225 = vrot.slane %v216, %v224
    %v226 = vlaneseq
    %v227 = vshrl.u32 %v226, 7
    %v228 = vsub.s32 2, %v227
    %v229 = vrot.slane %v216, %v228
    %v230 = vlaneseq
    %v231 = vshrl.u32 %v230, 7
    %v232 = vsub.s32 3, %v231
    %v233 = vrot.slane %v216, %v232
    %v234 = vlaneseq
    %v235 = vshrl.u32 %v234, 7
    %v236 = vsub.s32 4, %v235
    %v237 = vrot.slane %v216, %v236
    %v238 = vlaneseq
    %v239 = vshrl.u32 %v238, 7
    %v240 = vsub.s32 5, %v239
    %v241 = vrot.slane %v216, %v240
    %248 = vmatprep.subr.mxu0 %v25
    %249 = vmatpush1.msra.mxu0 %v24
    %250 = vmatprep.subr.mxu0 %v31
    %251 = vmatpush1.msra.mxu0 %v30
    %252 = vmatprep.subr.mxu0 %v37
    %253 = vmatpush1.msra.mxu0 %v36
    %254 = vmatprep.subr.mxu0 %v43
    %255 = vmatpush1.msra.mxu0 %v42
    %256 = vmatprep.subr.mxu0 %v49
    %257 = vmatpush1.msra.mxu0 %v48
    %258 = vmatprep.subr.mxu0 %v55
    %259 = vmatpush1.msra.mxu0 %v54
    %260 = vmatprep.subr.mxu0 %v61
    %261 = vmatpush1.msra.mxu0 %v60
    %262 = vmatprep.subr.mxu0 %v67
    %263 = vmatpush1.msra.mxu0 %v66
    %264 = vmatprep.subr.mxu0 %v73
    %265 = vmatpush1.msra.mxu0 %v72
    %266 = vmatprep.subr.mxu0 %v79
    %267 = vmatpush1.msra.mxu0 %v78
    %268 = vmatprep.subr.mxu0 %v85
    %269 = vmatpush1.msra.mxu0 %v84
    %270 = vmatprep.subr.mxu0 %v91
    %271 = vmatpush1.msra.mxu0 %v90
    %272 = vmatprep.subr.mxu0 %v97
    %273 = vmatpush1.msra.mxu0 %v96
    %274 = vmatprep.subr.mxu0 %v103
    %275 = vmatpush1.msra.mxu0 %v102
    %276 = vmatprep.subr.mxu0 %v109
    %277 = vmatpush1.msra.mxu0 %v108
    %278 = vmatprep.subr.mxu0 %v115
    %279 = vmatpush1.msra.mxu0 %v114
    %280 = vmatprep.subr.mxu0 %v121
    %281 = vmatpush1.msra.mxu0 %v120
    %282 = vmatprep.subr.mxu0 %v127
    %283 = vmatpush1.msra.mxu0 %v126
    %284 = vmatprep.subr.mxu0 %v133
    %285 = vmatpush1.msra.mxu0 %v132
    %286 = vmatprep.subr.mxu0 %v139
    %287 = vmatpush1.msra.mxu0 %v138
    %288 = vmatprep.subr.mxu0 %v145
    %289 = vmatpush1.msra.mxu0 %v144
    %290 = vmatprep.subr.mxu0 %v151
    %291 = vmatpush1.msra.mxu0 %v150
    %292 = vmatprep.subr.mxu0 %v157
    %293 = vmatpush1.msra.mxu0 %v156
    %294 = vmatprep.subr.mxu0 %v163
    %295 = vmatpush1.msra.mxu0 %v162
    %296 = vmatprep.subr.mxu0 %v169
    %297 = vmatpush1.msra.mxu0 %v168
    %298 = vmatprep.subr.mxu0 %v175
    %299 = vmatpush1.msra.mxu0 %v174
    %300 = vmatprep.subr.mxu0 %v181
    %301 = vmatpush1.msra.mxu0 %v180
    %302 = vmatprep.subr.mxu0 %v187
    %303 = vmatpush1.msra.mxu0 %v186
    %304 = vmatprep.subr.mxu0 %v193
    %305 = vmatpush1.msra.mxu0 %v192
    %306 = vmatprep.subr.mxu0 %v199
    %307 = vmatpush1.msra.mxu0 %v198
    %308 = vmatprep.subr.mxu0 %v205
    %309 = vmatpush1.msra.mxu0 %v204
    %310 = vmatprep.subr.mxu0 %v211
    %311 = vmatpush1.msra.mxu0 %v210
    %312 = vmatprep.mubr.f32.mxu0 %v23
    %313 = vmatmul.mubr.f32.gmra.mrb[0].mxu0 %v22
    %v314 = vpop.f32.mrb[0].mxu0
    %v315 = vadd.f32 %v221, %v314
    %v316 = vpop.f32.mrb[0].mxu0
    %v317 = vadd.f32 %v225, %v316
    %318 = vdwg.mxu0
    %319 = vmatprep.subr.mxu0 %v27
    %320 = vmatpush1.msra.mxu0 %v26
    %321 = vmatprep.subr.mxu0 %v33
    %322 = vmatpush1.msra.mxu0 %v32
    %323 = vmatprep.subr.mxu0 %v39
    %324 = vmatpush1.msra.mxu0 %v38
    %325 = vmatprep.subr.mxu0 %v45
    %326 = vmatpush1.msra.mxu0 %v44
    %327 = vmatprep.subr.mxu0 %v51
    %328 = vmatpush1.msra.mxu0 %v50
    %329 = vmatprep.subr.mxu0 %v57
    %330 = vmatpush1.msra.mxu0 %v56
    %331 = vmatprep.subr.mxu0 %v63
    %332 = vmatpush1.msra.mxu0 %v62
    %333 = vmatprep.subr.mxu0 %v69
    %334 = vmatpush1.msra.mxu0 %v68
    %335 = vmatprep.subr.mxu0 %v75
    %336 = vmatpush1.msra.mxu0 %v74
    %337 = vmatprep.subr.mxu0 %v81
    %338 = vmatpush1.msra.mxu0 %v80
    %339 = vmatprep.subr.mxu0 %v87
    %340 = vmatpush1.msra.mxu0 %v86
    %341 = vmatprep.subr.mxu0 %v93
    %342 = vmatpush1.msra.mxu0 %v92
    %343 = vmatprep.subr.mxu0 %v99
    %344 = vmatpush1.msra.mxu0 %v98
    %345 = vmatprep.subr.mxu0 %v105
    %346 = vmatpush1.msra.mxu0 %v104
    %347 = vmatprep.subr.mxu0 %v111
    %348 = vmatpush1.msra.mxu0 %v110
    %349 = vmatprep.subr.mxu0 %v117
    %350 = vmatpush1.msra.mxu0 %v116
    %351 = vmatprep.subr.mxu0 %v123
    %352 = vmatpush1.msra.mxu0 %v122
    %353 = vmatprep.subr.mxu0 %v129
    %354 = vmatpush1.msra.mxu0 %v128
    %355 = vmatprep.subr.mxu0 %v135
    %356 = vmatpush1.msra.mxu0 %v134
    %357 = vmatprep.subr.mxu0 %v141
    %358 = vmatpush1.msra.mxu0 %v140
    %359 = vmatprep.subr.mxu0 %v147
    %360 = vmatpush1.msra.mxu0 %v146
    %361 = vmatprep.subr.mxu0 %v153
    %362 = vmatpush1.msra.mxu0 %v152
    %363 = vmatprep.subr.mxu0 %v159
    %364 = vmatpush1.msra.mxu0 %v158
    %365 = vmatprep.subr.mxu0 %v165
    %366 = vmatpush1.msra.mxu0 %v164
    %367 = vmatprep.subr.mxu0 %v171
    %368 = vmatpush1.msra.mxu0 %v170
    %369 = vmatprep.subr.mxu0 %v177
    %370 = vmatpush1.msra.mxu0 %v176
    %371 = vmatprep.subr.mxu0 %v183
    %372 = vmatpush1.msra.mxu0 %v182
    %373 = vmatprep.subr.mxu0 %v189
    %374 = vmatpush1.msra.mxu0 %v188
    %375 = vmatprep.subr.mxu0 %v195
    %376 = vmatpush1.msra.mxu0 %v194
    %377 = vmatprep.subr.mxu0 %v201
    %378 = vmatpush1.msra.mxu0 %v200
    %379 = vmatprep.subr.mxu0 %v207
    %380 = vmatpush1.msra.mxu0 %v206
    %381 = vmatprep.subr.mxu0 %v213
    %382 = vmatpush1.msra.mxu0 %v212
    %383 = vmatprep.mubr.f32.mxu0 %v23
    %384 = vmatmul.mubr.f32.gmra.mrb[0].mxu0 %v22
    %v385 = vpop.f32.mrb[0].mxu0
    %v386 = vadd.f32 %v229, %v385
    %v387 = vpop.f32.mrb[0].mxu0
    %v388 = vadd.f32 %v233, %v387
    %389 = vdwg.mxu0
    %390 = vmatprep.subr.mxu0 %v29
    %391 = vmatpush1.msra.mxu0 %v28
    %392 = vmatprep.subr.mxu0 %v35
    %393 = vmatpush1.msra.mxu0 %v34
    %394 = vmatprep.subr.mxu0 %v41
    %395 = vmatpush1.msra.mxu0 %v40
    %396 = vmatprep.subr.mxu0 %v47
    %397 = vmatpush1.msra.mxu0 %v46
    %398 = vmatprep.subr.mxu0 %v53
    %399 = vmatpush1.msra.mxu0 %v52
    %400 = vmatprep.subr.mxu0 %v59
    %401 = vmatpush1.msra.mxu0 %v58
    %402 = vmatprep.subr.mxu0 %v65
    %403 = vmatpush1.msra.mxu0 %v64
    %404 = vmatprep.subr.mxu0 %v71
    %405 = vmatpush1.msra.mxu0 %v70
    %406 = vmatprep.subr.mxu0 %v77
    %407 = vmatpush1.msra.mxu0 %v76
    %408 = vmatprep.subr.mxu0 %v83
    %409 = vmatpush1.msra.mxu0 %v82
    %410 = vmatprep.subr.mxu0 %v89
    %411 = vmatpush1.msra.mxu0 %v88
    %412 = vmatprep.subr.mxu0 %v95
    %413 = vmatpush1.msra.mxu0 %v94
    %414 = vmatprep.subr.mxu0 %v101
    %415 = vmatpush1.msra.mxu0 %v100
    %416 = vmatprep.subr.mxu0 %v107
    %417 = vmatpush1.msra.mxu0 %v106
    %418 = vmatprep.subr.mxu0 %v113
    %419 = vmatpush1.msra.mxu0 %v112
    %420 = vmatprep.subr.mxu0 %v119
    %421 = vmatpush1.msra.mxu0 %v118
    %422 = vmatprep.subr.mxu0 %v125
    %423 = vmatpush1.msra.mxu0 %v124
    %424 = vmatprep.subr.mxu0 %v131
    %425 = vmatpush1.msra.mxu0 %v130
    %426 = vmatprep.subr.mxu0 %v137
    %427 = vmatpush1.msra.mxu0 %v136
    %428 = vmatprep.subr.mxu0 %v143
    %429 = vmatpush1.msra.mxu0 %v142
    %430 = vmatprep.subr.mxu0 %v149
    %431 = vmatpush1.msra.mxu0 %v148
    %432 = vmatprep.subr.mxu0 %v155
    %433 = vmatpush1.msra.mxu0 %v154
    %434 = vmatprep.subr.mxu0 %v161
    %435 = vmatpush1.msra.mxu0 %v160
    %436 = vmatprep.subr.mxu0 %v167
    %437 = vmatpush1.msra.mxu0 %v166
    %438 = vmatprep.subr.mxu0 %v173
    %439 = vmatpush1.msra.mxu0 %v172
    %440 = vmatprep.subr.mxu0 %v179
    %441 = vmatpush1.msra.mxu0 %v178
    %442 = vmatprep.subr.mxu0 %v185
    %443 = vmatpush1.msra.mxu0 %v184
    %444 = vmatprep.subr.mxu0 %v191
    %445 = vmatpush1.msra.mxu0 %v190
    %446 = vmatprep.subr.mxu0 %v197
    %447 = vmatpush1.msra.mxu0 %v196
    %448 = vmatprep.subr.mxu0 %v203
    %449 = vmatpush1.msra.mxu0 %v202
    %450 = vmatprep.subr.mxu0 %v209
    %451 = vmatpush1.msra.mxu0 %v208
    %452 = vmatprep.subr.mxu0 %v215
    %453 = vmatpush1.msra.mxu0 %v214
    %454 = vmatprep.mubr.f32.mxu0 %v23
    %455 = vmatmul.mubr.f32.gmra.mrb[0].mxu0 %v22
    %v456 = vpop.f32.mrb[0].mxu0
    %v457 = vadd.f32 %v237, %v456
    %v458 = vpop.f32.mrb[0].mxu0
    %v459 = vadd.f32 %v241, %v458
    %460 = vdwg.mxu0
    %s461 = smul.u32 %s17, 6
    %s462 = smul.addr %s461, 8
    %s463 = scalar_lea.vmem %s0, %s462
    %v464 = vld [vmem:[%s463] sm:$0xff]
    %v465 = vld [vmem:[%s463 + $0x8] sm:$0xff]
    %v466 = vld [vmem:[%s463 + $0x10] sm:$0xff]
    %v467 = vld [vmem:[%s463 + $0x18] sm:$0xff]
    %v468 = vld [vmem:[%s463 + $0x20] sm:$0xff]
    %v469 = vld [vmem:[%s463 + $0x28] sm:$0xff]
    %v470 = vadd.f32 %v464, %v315
    %v471 = vadd.f32 %v465, %v317
    %v472 = vxor.u32 %v470, 2147483648
    %v473 = vxor.u32 %v471, 2147483648
    %v474 = vmul.f32 %v472, 1.442695
    %v475 = vpow.pop %v474
    %v476 = vmul.f32 %v473, 1.442695
    %v477 = vpow.pop %v476
    %v478 = vadd.f32 %v475, 1.0
    %v479 = vadd.f32 %v477, 1.0
    %v480 = vrcp.pop %v478
    %v481 = vmul.f32 1.0, %v480
    %v482 = vrcp.pop %v479
    %v483 = vmul.f32 1.0, %v482
    %v484 = vadd.f32 %v466, %v386
    %v485 = vadd.f32 %v467, %v388
    %v486 = vxor.u32 %v484, 2147483648
    %v487 = vxor.u32 %v485, 2147483648
    %v488 = vmul.f32 %v486, 1.442695
    %v489 = vpow.pop %v488
    %v490 = vmul.f32 %v487, 1.442695
    %v491 = vpow.pop %v490
    %v492 = vadd.f32 %v489, 1.0
    %v493 = vadd.f32 %v491, 1.0
    %v494 = vrcp.pop %v492
    %v495 = vmul.f32 1.0, %v494
    %v496 = vrcp.pop %v493
    %v497 = vmul.f32 1.0, %v496
    %v498 = vmul.f32 %v481, %v457
    %v499 = vmul.f32 %v483, %v459
    %v500 = vadd.f32 %v468, %v498
    %v501 = vadd.f32 %v469, %v499
    %v502 = vtanh.pop %v500
    %v503 = vtanh.pop %v501
    %v504 = vsub.f32 1.0, %v495
    %v505 = vsub.f32 1.0, %v497
    %v506 = vmul.f32 %v504, %v502
    %v507 = vmul.f32 %v505, %v503
    %v508 = vmul.f32 %v495, %v22
    %v509 = vmul.f32 %v497, %v23
    %v510 = vadd.f32 %v506, %v508
    %v511 = vadd.f32 %v507, %v509
    %512 = vst [vmem:[#allocation2] sm:$0xff] %v510
    %513 = vst [vmem:[#allocation2 + $0x8] sm:$0xff] %v511
    %s514 = smul.u32 %s17, 2
    %s515 = smul.addr %s514, 8
    %s516 = scalar_lea.vmem %s3, %s515
    %517 = vst [vmem:[%s516] sm:$0xff] %v510
    %518 = vst [vmem:[%s516 + $0x8] sm:$0xff] %v511
  $region18: #{generator_forward.2} parent=0 // loop_footer
    %s21 = sadd.s32 1, %s17
  $region19: #{generator_forward.2} parent=0 // loop_footer_branch
    %16 = sbr.rel target = $region15
  $region20: #{generator_forward.2} parent=0 // loop_exit
    _
  // Predicated region
  $region21: #{generator_forward.2} parent=0 // pred_check
    _
  $region22: #{generator_forward.2} parent=0 // pred_check_branch
    %520 = sbr.rel (0) target = $region24
  $region23: #{generator_forward.2} parent=0 // pred_region
    _
  $region24: #{generator_forward.2} parent=0 // pred_fallthru
    _
  // Predicated region
  $region25: #{generator_forward.2} parent=0 // pred_check
    _
  $region26: #{generator_forward.2} parent=0 // pred_check_branch
    %522 = sbr.rel (0) target = $region28
  $region27: #{generator_forward.2} parent=0 // pred_region
    _
  $region28: #{generator_forward.2} parent=0 // pred_fallthru
    _

// kernel: generator_forward.3
$region0: #{generator_forward.3}
  #allocation0 [shape = 'u32[]', space=smem, size = 0x4, offset = 0x4, fixed_abs, tag = 'smem constant byte address 0x4 - core index']
  #allocation1 [shape = 'u32[144,128]{1,0:T(1,128)}', space=vmem, size = 0x12000, scoped, tag = 'internal scratch']
  #allocation2 [shape = 'f32[112,1024]{1,0:T(8,128)}', space=vmem, size = 0x70000, scoped, tag = 'scratch operand']
  #allocation3 [shape = 'f32[112,1024]{1,0:T(8,128)}', space=vmem, size = 0x70000, scoped, tag = 'scratch operand']
  %s0 = inlined_call_operand.vmem [shape: bf16[112,384], index: 0, kind: input, shape index: {}]
  %s1 = inlined_call_operand.hbm [shape: bf16[384,1024], index: 1, kind: input, shape index: {}]
  %s2 = inlined_call_operand.hbm [shape: f32[1,1024], index: 2, kind: input, shape index: {}]
  %s3 = inlined_call_operand.hbm [shape: bf16[6,1024,1024], index: 3, kind: input, shape index: {}]
  %s4 = inlined_call_operand.hbm [shape: f32[6,1,1024], index: 4, kind: input, shape index: {}]
  %s5 = inlined_call_operand.hbm [shape: f32[6,1,1024], index: 5, kind: input, shape index: {}]
  %s6 = inlined_call_operand.hbm [shape: bf16[1024,128], index: 6, kind: input, shape index: {}]
  %s7 = inlined_call_operand.hbm [shape: f32[1,128], index: 7, kind: input, shape index: {}]
  %s8 = inlined_call_operand.vmem [shape: f32[112,128], index: 8, kind: output, shape index: {}]
  %s9 = sld [smem:[#allocation0]]
  $region109: #{generator_forward.3} parent=0
    _
  %s11 = ssub.s32 1, %s9
  %s12 = scalar_select 0, %s11, %s9
  $region1: #{generator_forward.3} parent=0
    #allocation4 [shape = 'u8[786432]{0}', space=vmem, size = 0xc0000, scoped, tag = 'input window, operand 1, single buffered']
    #allocation5 [shape = 's32[2]{0}', space=sflag, size = 0x8, scoped, tag = 'scoped memory for generator_forward.3']
    #allocation6 [shape = 'u8[4096]{0}', space=vmem, size = 0x1000, scoped, tag = 'input window, operand 2, single buffered']
    #allocation7 [shape = 's32[1]{0}', space=sflag, size = 0x4, scoped, tag = 'scoped memory for generator_forward.3']
    #allocation8 [shape = 'u8[4194304]{0}', space=vmem, size = 0x400000, scoped, tag = 'input window, operand 3']
    #allocation9 [shape = 'u8[8192]{0}', space=vmem, size = 0x2000, scoped, tag = 'input window, operand 4']
    #allocation10 [shape = 'u8[8192]{0}', space=vmem, size = 0x2000, scoped, tag = 'input window, operand 5']
    #allocation11 [shape = 'u8[262144]{0}', space=vmem, size = 0x40000, scoped, tag = 'input window, operand 6, single buffered']
    #allocation12 [shape = 'u8[512]{0}', space=vmem, size = 0x400, scoped, tag = 'input window, operand 7, single buffered']
    #allocation13 [shape = 's32[1]{0}', space=sflag, size = 0x4, scoped, tag = 'scoped memory for generator_forward.3']
    %13 = vsyncpa [#allocation5], 0
    %14 = vsyncpa [#allocation7], 0
    %15 = vsyncpa [#allocation13], 0
    loop: start=0, step=1, limit=8
    $region2: #{generator_forward.3} parent=1 // loop_pre_header
      _
    $region3: #{generator_forward.3} parent=1 // loop_header
      %s17 = sphi 0, %s21
      %p18 = scmp.ge.s32.totalorder %s17, 8
      %s25 = sphi 0, %s25
      %s27 = sphi 0, %s25
      %s28 = sphi 0, %s27
      %s42 = sphi 0, %s28
      %s46 = sphi 0, %s46
      %s48 = sphi 0, %s46
      %s49 = sphi 0, %s48
      %s63 = sphi 0, %s49
      %s67 = sphi 0, %s67
      %s69 = sphi 0, %s67
      %s70 = sphi 0, %s69
      %s84 = sphi 0, %s70
      %s90 = sphi 0, %s92
      %s93 = sphi 0, %s90
      %s94 = sphi 0, %s93
      %s110 = sphi 0, %s94
      %s116 = sphi 0, %s118
      %s119 = sphi 0, %s116
      %s120 = sphi 0, %s119
      %s136 = sphi 0, %s120
      %s142 = sphi 0, %s144
      %s145 = sphi 0, %s142
      %s146 = sphi 0, %s145
      %s162 = sphi 0, %s146
      %s166 = sphi 0, %s166
      %s168 = sphi 0, %s166
      %s169 = sphi 0, %s168
      %s183 = sphi 0, %s169
      %s187 = sphi 0, %s187
      %s189 = sphi 0, %s187
      %s190 = sphi 0, %s189
      %s204 = sphi 0, %s190
      %s208 = sphi 0, %s208
      %s210 = sphi 0, %s208
      %s211 = sphi 0, %s210
      %s225 = sphi 0, %s211
    $region4: #{generator_forward.3} parent=1 // loop_header_branch
      %20 = sbr.rel (%p18) target = $region8
    $region5: #{generator_forward.3} parent=1 // loop_body
      %s22 = ssub.s32 %s17, 1
      %s23 = ssub.s32 %s17, 2
      %s24 = sadd.s32 %s17, 1
      %s26 = sadd.s32 %s25, 1
      %p29 = scmp.eq.s32.totalorder %s17, 5
      %p30 = scmp.ne.s32.totalorder %s25, %s27
      %p31 = scmp.eq.s32.totalorder %s17, 0
      %p32 = por %p30, %p31
      %p33 = scmp.ne.s32.totalorder %s25, %s27
      %p34 = scmp.eq.s32.totalorder %s22, 5
      %p35 = por %p33, %p34
      %p36 = scmp.ne.s32.totalorder %s27, %s28
      %p37 = scmp.eq.s32.totalorder %s22, 0
      %p38 = por %p36, %p37
      %p39 = scmp.ne.s32.totalorder %s27, %s28
      %p40 = scmp.eq.s32.totalorder %s23, 5
      %p41 = por %p39, %p40
      %p43 = scmp.ne.s32.totalorder %s28, %s42
      %p44 = scmp.eq.s32.totalorder %s23, 0
      %p45 = por %p43, %p44
      %s47 = sadd.s32 %s46, 1
      %p50 = scmp.eq.s32.totalorder %s17, 5
      %p51 = scmp.ne.s32.totalorder %s46, %s48
      %p52 = scmp.eq.s32.totalorder %s17, 0
      %p53 = por %p51, %p52
      %p54 = scmp.ne.s32.totalorder %s46, %s48
      %p55 = scmp.eq.s32.totalorder %s22, 5
      %p56 = por %p54, %p55
      %p57 = scmp.ne.s32.totalorder %s48, %s49
      %p58 = scmp.eq.s32.totalorder %s22, 0
      %p59 = por %p57, %p58
      %p60 = scmp.ne.s32.totalorder %s48, %s49
      %p61 = scmp.eq.s32.totalorder %s23, 5
      %p62 = por %p60, %p61
      %p64 = scmp.ne.s32.totalorder %s49, %s63
      %p65 = scmp.eq.s32.totalorder %s23, 0
      %p66 = por %p64, %p65
      %s68 = sadd.s32 %s67, 1
      %p71 = scmp.eq.s32.totalorder %s17, 5
      %p72 = scmp.ne.s32.totalorder %s67, %s69
      %p73 = scmp.eq.s32.totalorder %s17, 0
      %p74 = por %p72, %p73
      %p75 = scmp.ne.s32.totalorder %s67, %s69
      %p76 = scmp.eq.s32.totalorder %s22, 5
      %p77 = por %p75, %p76
      %p78 = scmp.ne.s32.totalorder %s69, %s70
      %p79 = scmp.eq.s32.totalorder %s22, 0
      %p80 = por %p78, %p79
      %p81 = scmp.ne.s32.totalorder %s69, %s70
      %p82 = scmp.eq.s32.totalorder %s23, 5
      %p83 = por %p81, %p82
      %p85 = scmp.ne.s32.totalorder %s70, %s84
      %p86 = scmp.eq.s32.totalorder %s23, 0
      %p87 = por %p85, %p86
      %s88 = ssub.s32 %s17, %s24
      %p89 = scmp.eq.s32.totalorder %s88, 0
      %s91 = sadd.s32 %s90, 1
      %s92 = scalar_select %p89, %s90, %s91
      %p95 = pneg %p89
      %p96 = scmp.eq.s32.totalorder %s17, 5
      %p97 = por %p95, %p96
      %p98 = scmp.ne.s32.totalorder %s90, %s93
      %p99 = scmp.eq.s32.totalorder %s17, 0
      %p100 = por %p98, %p99
      %p101 = scmp.ne.s32.totalorder %s90, %s93
      %p102 = scmp.eq.s32.totalorder %s22, 5
      %p103 = por %p101, %p102
      %p104 = scmp.ne.s32.totalorder %s93, %s94
      %p105 = scmp.eq.s32.totalorder %s22, 0
      %p106 = por %p104, %p105
      %p107 = scmp.ne.s32.totalorder %s93, %s94
      %p108 = scmp.eq.s32.totalorder %s23, 5
      %p109 = por %p107, %p108
      %p111 = scmp.ne.s32.totalorder %s94, %s110
      %p112 = scmp.eq.s32.totalorder %s23, 0
      %p113 = por %p111, %p112
      %s114 = ssub.s32 %s17, %s24
      %p115 = scmp.eq.s32.totalorder %s114, 0
      %s117 = sadd.s32 %s116, 1
      %s118 = scalar_select %p115, %s116, %s117
      %p121 = pneg %p115
      %p122 = scmp.eq.s32.totalorder %s17, 5
      %p123 = por %p121, %p122
      %p124 = scmp.ne.s32.totalorder %s116, %s119
      %p125 = scmp.eq.s32.totalorder %s17, 0
      %p126 = por %p124, %p125
      %p127 = scmp.ne.s32.totalorder %s116, %s119
      %p128 = scmp.eq.s32.totalorder %s22, 5
      %p129 = por %p127, %p128
      %p130 = scmp.ne.s32.totalorder %s119, %s120
      %p131 = scmp.eq.s32.totalorder %s22, 0
      %p132 = por %p130, %p131
      %p133 = scmp.ne.s32.totalorder %s119, %s120
      %p134 = scmp.eq.s32.totalorder %s23, 5
      %p135 = por %p133, %p134
      %p137 = scmp.ne.s32.totalorder %s120, %s136
      %p138 = scmp.eq.s32.totalorder %s23, 0
      %p139 = por %p137, %p138
      %s140 = ssub.s32 %s17, %s24
      %p141 = scmp.eq.s32.totalorder %s140, 0
      %s143 = sadd.s32 %s142, 1
      %s144 = scalar_select %p141, %s142, %s143
      %p147 = pneg %p141
      %p148 = scmp.eq.s32.totalorder %s17, 5
      %p149 = por %p147, %p148
      %p150 = scmp.ne.s32.totalorder %s142, %s145
      %p151 = scmp.eq.s32.totalorder %s17, 0
      %p152 = por %p150, %p151
      %p153 = scmp.ne.s32.totalorder %s142, %s145
      %p154 = scmp.eq.s32.totalorder %s22, 5
      %p155 = por %p153, %p154
      %p156 = scmp.ne.s32.totalorder %s145, %s146
      %p157 = scmp.eq.s32.totalorder %s22, 0
      %p158 = por %p156, %p157
      %p159 = scmp.ne.s32.totalorder %s145, %s146
      %p160 = scmp.eq.s32.totalorder %s23, 5
      %p161 = por %p159, %p160
      %p163 = scmp.ne.s32.totalorder %s146, %s162
      %p164 = scmp.eq.s32.totalorder %s23, 0
      %p165 = por %p163, %p164
      %s167 = sadd.s32 %s166, 1
      %p170 = scmp.eq.s32.totalorder %s17, 5
      %p171 = scmp.ne.s32.totalorder %s166, %s168
      %p172 = scmp.eq.s32.totalorder %s17, 0
      %p173 = por %p171, %p172
      %p174 = scmp.ne.s32.totalorder %s166, %s168
      %p175 = scmp.eq.s32.totalorder %s22, 5
      %p176 = por %p174, %p175
      %p177 = scmp.ne.s32.totalorder %s168, %s169
      %p178 = scmp.eq.s32.totalorder %s22, 0
      %p179 = por %p177, %p178
      %p180 = scmp.ne.s32.totalorder %s168, %s169
      %p181 = scmp.eq.s32.totalorder %s23, 5
      %p182 = por %p180, %p181
      %p184 = scmp.ne.s32.totalorder %s169, %s183
      %p185 = scmp.eq.s32.totalorder %s23, 0
      %p186 = por %p184, %p185
      %s188 = sadd.s32 %s187, 1
      %p191 = scmp.eq.s32.totalorder %s17, 5
      %p192 = scmp.ne.s32.totalorder %s187, %s189
      %p193 = scmp.eq.s32.totalorder %s17, 0
      %p194 = por %p192, %p193
      %p195 = scmp.ne.s32.totalorder %s187, %s189
      %p196 = scmp.eq.s32.totalorder %s22, 5
      %p197 = por %p195, %p196
      %p198 = scmp.ne.s32.totalorder %s189, %s190
      %p199 = scmp.eq.s32.totalorder %s22, 0
      %p200 = por %p198, %p199
      %p201 = scmp.ne.s32.totalorder %s189, %s190
      %p202 = scmp.eq.s32.totalorder %s23, 5
      %p203 = por %p201, %p202
      %p205 = scmp.ne.s32.totalorder %s190, %s204
      %p206 = scmp.eq.s32.totalorder %s23, 0
      %p207 = por %p205, %p206
      %s209 = sadd.s32 %s208, 1
      %p212 = scmp.eq.s32.totalorder %s17, 5
      %p213 = scmp.ne.s32.totalorder %s208, %s210
      %p214 = scmp.eq.s32.totalorder %s17, 0
      %p215 = por %p213, %p214
      %p216 = scmp.ne.s32.totalorder %s208, %s210
      %p217 = scmp.eq.s32.totalorder %s22, 5
      %p218 = por %p216, %p217
      %p219 = scmp.ne.s32.totalorder %s210, %s211
      %p220 = scmp.eq.s32.totalorder %s22, 0
      %p221 = por %p219, %p220
      %p222 = scmp.ne.s32.totalorder %s210, %s211
      %p223 = scmp.eq.s32.totalorder %s23, 5
      %p224 = por %p222, %p223
      %p226 = scmp.ne.s32.totalorder %s211, %s225
      %p227 = scmp.eq.s32.totalorder %s23, 0
      %p228 = por %p226, %p227
      %p229 = scmp.le.s32.totalorder 1, %s17
      %p230 = scmp.lt.s32.totalorder %s17, 7
      %p231 = pnand %p229, %p230
      %p232 = pneg %p231
      // Predicated region
      $region9: #{generator_forward.3} parent=5 // pred_check
        _
      $region10: #{generator_forward.3} parent=5 // pred_check_branch
        %234 = sbr.rel (%p231) target = $region12
      $region11: #{generator_forward.3} parent=5 // pred_region
        %s235 = ssub.s32 %s17, 1
        // Predicated region
        $region13: #{generator_forward.3} parent=11 // pred_check
          %p236 = pneg %p38
        $region14: #{generator_forward.3} parent=11 // pred_check_branch
          %238 = sbr.rel (%p236) target = $region16
        $region15: #{generator_forward.3} parent=11 // pred_region
          _
        $region16: #{generator_forward.3} parent=11 // pred_fallthru
          _
        // Predicated region
        $region17: #{generator_forward.3} parent=11 // pred_check
          %p239 = pneg %p59
        $region18: #{generator_forward.3} parent=11 // pred_check_branch
          %241 = sbr.rel (%p239) target = $region20
        $region19: #{generator_forward.3} parent=11 // pred_region
          %s243 = ssub.s32 24576, 24576
          %244 = vsyncadd [#allocation5], %s243
          %s245 = sshll.u32 [#allocation4], 4
          %s246 = int_to_ptr.vmem [resolvable:$true] %s245
          %251 = dma.hbm_to_vmem [thread:$0]  %s1, 24576, %s246, [#allocation5], 512, 512, 32
        $region20: #{generator_forward.3} parent=11 // pred_fallthru
          _
        // Predicated region
        $region21: #{generator_forward.3} parent=11 // pred_check
          %p252 = pneg %p80
        $region22: #{generator_forward.3} parent=11 // pred_check_branch
          %254 = sbr.rel (%p252) target = $region24
        $region23: #{generator_forward.3} parent=11 // pred_region
          %s256 = ssub.s32 128, 128
          %257 = vsyncadd [#allocation7], %s256
          %s259 = sshll.u32 [#allocation6], 4
          %s260 = int_to_ptr.vmem [resolvable:$true] %s259
          %262 = dma.hbm_to_vmem [thread:$0]  %s2, 128, %s260, [#allocation7]
        $region24: #{generator_forward.3} parent=11 // pred_fallthru
          _
        // Predicated region
        $region25: #{generator_forward.3} parent=11 // pred_check
          %p263 = pneg %p179
        $region26: #{generator_forward.3} parent=11 // pred_check_branch
          %265 = sbr.rel (%p263) target = $region28
        $region27: #{generator_forward.3} parent=11 // pred_region
          %s267 = ssub.s32 8192, 8192
          %268 = vsyncadd [#allocation7], %s267
          %s269 = sshll.u32 [#allocation11], 4
          %s270 = int_to_ptr.vmem [resolvable:$true] %s269
          %275 = dma.hbm_to_vmem [thread:$0]  %s6, 8192, %s270, [#allocation7], 64, 64, 4
        $region28: #{generator_forward.3} parent=11 // pred_fallthru
          _
        // Predicated region
        $region29: #{generator_forward.3} parent=11 // pred_check
          %p276 = pneg %p200
        $region30: #{generator_forward.3} parent=11 // pred_check_branch
          %278 = sbr.rel (%p276) target = $region32
        $region31: #{generator_forward.3} parent=11 // pred_region
          %s280 = ssub.s32 16, 16
          %281 = vsyncadd [#allocation13], %s280
          %s283 = sshll.u32 [#allocation12], 4
          %s284 = int_to_ptr.vmem [resolvable:$true] %s283
          %286 = dma.hbm_to_vmem [thread:$0]  %s7, 16, %s284, [#allocation13]
        $region32: #{generator_forward.3} parent=11 // pred_fallthru
          _
      $region12: #{generator_forward.3} parent=5 // pred_fallthru
        _
      %p287 = scmp.lt.s32.totalorder %s17, 6
      // Predicated region
      $region33: #{generator_forward.3} parent=5 // pred_check
        %p288 = pneg %p287
      $region34: #{generator_forward.3} parent=5 // pred_check_branch
        %290 = sbr.rel (%p288) target = $region36
      $region35: #{generator_forward.3} parent=5 // pred_region
        // Predicated region
        $region37: #{generator_forward.3} parent=35 // pred_check
          %p291 = pneg %p100
        $region38: #{generator_forward.3} parent=35 // pred_check_branch
          %293 = sbr.rel (%p291) target = $region40
        $region39: #{generator_forward.3} parent=35 // pred_region
          %s294 = sand.u32 %s17, 1
          %s295 = scalar_lea.sflag [#allocation5], %s294
          %s296 = sand.u32 %s90, 1
          %s297 = smul.addr %s296, 4096
          %s298 = scalar_lea.vmem [#allocation8], %s297
          %s300 = ssub.s32 65536, 65536
          %301 = vsyncadd %s295, %s300
          %s302 = smul.addr %s17, 1024
          %s303 = smul.addr %s302, 64
          %s304 = scalar_lea.hbm %s3, %s303
          %s305 = sshll.u32 %s298, 4
          %s306 = int_to_ptr.vmem [resolvable:$true] %s305
          %311 = dma.hbm_to_vmem [thread:$0]  %s304, 65536, %s306, %s295, 512, 512, 32
        $region40: #{generator_forward.3} parent=35 // pred_fallthru
          _
        // Predicated region
        $region41: #{generator_forward.3} parent=35 // pred_check
          %p312 = pneg %p126
        $region42: #{generator_forward.3} parent=35 // pred_check_branch
          %314 = sbr.rel (%p312) target = $region44
        $region43: #{generator_forward.3} parent=35 // pred_region
          %s315 = sand.u32 %s17, 1
          %s316 = scalar_lea.sflag [#allocation5], %s315
          %s317 = sand.u32 %s116, 1
          %s318 = smul.addr %s317, 8
          %s319 = scalar_lea.vmem [#allocation9], %s318
          %s321 = ssub.s32 128, 128
          %322 = vsyncadd %s316, %s321
          %s323 = smul.addr %s17, 8
          %s324 = smul.addr %s323, 16
          %s325 = scalar_lea.hbm %s4, %s324
          %s327 = sshll.u32 %s319, 4
          %s328 = int_to_ptr.vmem [resolvable:$true] %s327
          %330 = dma.hbm_to_vmem [thread:$0]  %s325, 128, %s328, %s316
        $region44: #{generator_forward.3} parent=35 // pred_fallthru
          _
        // Predicated region
        $region45: #{generator_forward.3} parent=35 // pred_check
          %p331 = pneg %p152
        $region46: #{generator_forward.3} parent=35 // pred_check_branch
          %333 = sbr.rel (%p331) target = $region48
        $region47: #{generator_forward.3} parent=35 // pred_region
          %s334 = sand.u32 %s17, 1
          %s335 = scalar_lea.sflag [#allocation5], %s334
          %s336 = sand.u32 %s142, 1
          %s337 = smul.addr %s336, 8
          %s338 = scalar_lea.vmem [#allocation10], %s337
          %s340 = ssub.s32 128, 128
          %341 = vsyncadd %s335, %s340
          %s342 = smul.addr %s17, 8
          %s343 = smul.addr %s342, 16
          %s344 = scalar_lea.hbm %s5, %s343
          %s346 = sshll.u32 %s338, 4
          %s347 = int_to_ptr.vmem [resolvable:$true] %s346
          %349 = dma.hbm_to_vmem [thread:$0]  %s344, 128, %s347, %s335
        $region48: #{generator_forward.3} parent=35 // pred_fallthru
          _
      $region36: #{generator_forward.3} parent=5 // pred_fallthru
        _
      %p350 = scmp.le.s32.totalorder 1, %s17
      %p351 = scmp.lt.s32.totalorder %s17, 7
      %p352 = pnand %p350, %p351
      %p353 = pneg %p352
      // Predicated region
      $region49: #{generator_forward.3} parent=5 // pred_check
        _
      $region50: #{generator_forward.3} parent=5 // pred_check_branch
        %355 = sbr.rel (%p352) target = $region52
      $region51: #{generator_forward.3} parent=5 // pred_region
        %s356 = ssub.s32 %s17, 1
        // Predicated region
        $region53: #{generator_forward.3} parent=51 // pred_check
          %p357 = pneg %p59
        $region54: #{generator_forward.3} parent=51 // pred_check_branch
          %359 = sbr.rel (%p357) target = $region56
        $region55: #{generator_forward.3} parent=51 // pred_region
          %360 = dma.done [#allocation5], 24576
        $region56: #{generator_forward.3} parent=51 // pred_fallthru
          _
        // Predicated region
        $region57: #{generator_forward.3} parent=51 // pred_check
          %p361 = pneg %p80
        $region58: #{generator_forward.3} parent=51 // pred_check_branch
          %363 = sbr.rel (%p361) target = $region60
        $region59: #{generator_forward.3} parent=51 // pred_region
          %364 = dma.done [#allocation7], 128
        $region60: #{generator_forward.3} parent=51 // pred_fallthru
          _
        %s365 = sand.u32 %s22, 1
        %s366 = scalar_lea.sflag [#allocation5], %s365
        %s367 = sand.u32 %s93, 1
        %s368 = smul.addr %s367, 4096
        %s369 = scalar_lea.vmem [#allocation8], %s368
        // Predicated region
        $region61: #{generator_forward.3} parent=51 // pred_check
          %p370 = pneg %p106
        $region62: #{generator_forward.3} parent=51 // pred_check_branch
          %372 = sbr.rel (%p370) target = $region64
        $region63: #{generator_forward.3} parent=51 // pred_region
          %373 = dma.done %s366, 65536
        $region64: #{generator_forward.3} parent=51 // pred_fallthru
          _
        %s374 = sand.u32 %s22, 1
        %s375 = scalar_lea.sflag [#allocation5], %s374
        %s376 = sand.u32 %s119, 1
        %s377 = smul.addr %s376, 8
        %s378 = scalar_lea.vmem [#allocation9], %s377
        // Predicated region
        $region65: #{generator_forward.3} parent=51 // pred_check
          %p379 = pneg %p132
        $region66: #{generator_forward.3} parent=51 // pred_check_branch
          %381 = sbr.rel (%p379) target = $region68
        $region67: #{generator_forward.3} parent=51 // pred_region
          %382 = dma.done %s375, 128
        $region68: #{generator_forward.3} parent=51 // pred_fallthru
          _
        %s383 = sand.u32 %s22, 1
        %s384 = scalar_lea.sflag [#allocation5], %s383
        %s385 = sand.u32 %s145, 1
        %s386 = smul.addr %s385, 8
        %s387 = scalar_lea.vmem [#allocation10], %s386
        // Predicated region
        $region69: #{generator_forward.3} parent=51 // pred_check
          %p388 = pneg %p158
        $region70: #{generator_forward.3} parent=51 // pred_check_branch
          %390 = sbr.rel (%p388) target = $region72
        $region71: #{generator_forward.3} parent=51 // pred_region
          %391 = dma.done %s384, 128
        $region72: #{generator_forward.3} parent=51 // pred_fallthru
          _
        // Predicated region
        $region73: #{generator_forward.3} parent=51 // pred_check
          %p392 = pneg %p179
        $region74: #{generator_forward.3} parent=51 // pred_check_branch
          %394 = sbr.rel (%p392) target = $region76
        $region75: #{generator_forward.3} parent=51 // pred_region
          %395 = dma.done [#allocation7], 8192
        $region76: #{generator_forward.3} parent=51 // pred_fallthru
          _
        // Predicated region
        $region77: #{generator_forward.3} parent=51 // pred_check
          %p396 = pneg %p200
        $region78: #{generator_forward.3} parent=51 // pred_check_branch
          %398 = sbr.rel (%p396) target = $region80
        $region79: #{generator_forward.3} parent=51 // pred_region
          %399 = dma.done [#allocation13], 16
        $region80: #{generator_forward.3} parent=51 // pred_fallthru
          _
        %p400 = pneg %p38
        %p401 = pneg %p35
        %p402 = pneg %p59
        %p403 = pneg %p56
        %p404 = pneg %p80
        %p405 = pneg %p77
        %s406 = sand.u32 %s22, 1
        %s407 = scalar_lea.sflag [#allocation5], %s406
        %s408 = sand.u32 %s93, 1
        %s409 = smul.addr %s408, 4096
        %s410 = scalar_lea.vmem [#allocation8], %s409
        %p411 = pneg %p106
        %p412 = pneg %p103
        %s413 = sand.u32 %s22, 1
        %s414 = scalar_lea.sflag [#allocation5], %s413
        %s415 = sand.u32 %s119, 1
        %s416 = smul.addr %s415, 8
        %s417 = scalar_lea.vmem [#allocation9], %s416
        %p418 = pneg %p132
        %p419 = pneg %p129
        %s420 = sand.u32 %s22, 1
        %s421 = scalar_lea.sflag [#allocation5], %s420
        %s422 = sand.u32 %s145, 1
        %s423 = smul.addr %s422, 8
        %s424 = scalar_lea.vmem [#allocation10], %s423
        %p425 = pneg %p158
        %p426 = pneg %p155
        %p427 = pneg %p179
        %p428 = pneg %p176
        %p429 = pneg %p200
        %p430 = pneg %p197
        %p431 = pneg %p221
        %p432 = pneg %p218
        %p434 = scmp.eq.s32.totalorder %s22, 0
        // Predicated region
        $region81: #{generator_forward.3} parent=51 // pred_check
          %p435 = pneg %p434
        $region82: #{generator_forward.3} parent=51 // pred_check_branch
          %437 = sbr.rel (%p435) target = $region84
        $region83: #{generator_forward.3} parent=51 // pred_region
          %v438 = vld [vmem:[%s0] sm:$0xff]
          %v439 = vld [vmem:[%s0 + $0x8] sm:$0xf]
          %v440 = vld [vmem:[%s0 + $0xc] sm:$0xff]
          %v441 = vld [vmem:[%s0 + $0x14] sm:$0xf]
          %v442 = vld [vmem:[%s0 + $0x18] sm:$0xff]
          %v443 = vld [vmem:[%s0 + $0x20] sm:$0xf]
          %v444 = vld [vmem:[%s0 + $0x24] sm:$0xff]
          %v445 = vld [vmem:[%s0 + $0x2c] sm:$0xf]
          %v446 = vld [vmem:[%s0 + $0x30] sm:$0xff]
          %v447 = vld [vmem:[%s0 + $0x38] sm:$0xf]
          %v448 = vld [vmem:[%s0 + $0x3c] sm:$0xff]
          %v449 = vld [vmem:[%s0 + $0x44] sm:$0xf]
          %v450 = vld [vmem:[%s0 + $0x48] sm:$0xff]
          %v451 = vld [vmem:[%s0 + $0x50] sm:$0xf]
          %v452 = vld [vmem:[%s0 + $0x54] sm:$0xff]
          %v453 = vld [vmem:[%s0 + $0x5c] sm:$0xf]
          %v454 = vld [vmem:[%s0 + $0x60] sm:$0xff]
          %v455 = vld [vmem:[%s0 + $0x68] sm:$0xf]
          %v456 = vld [vmem:[%s0 + $0x6c] sm:$0xff]
          %v457 = vld [vmem:[%s0 + $0x74] sm:$0xf]
          %v458 = vld [vmem:[%s0 + $0x78] sm:$0xff]
          %v459 = vld [vmem:[%s0 + $0x80] sm:$0xf]
          %v460 = vld [vmem:[%s0 + $0x84] sm:$0xff]
          %v461 = vld [vmem:[%s0 + $0x8c] sm:$0xf]
          %v462 = vld [vmem:[%s0 + $0x90] sm:$0xff]
          %v463 = vld [vmem:[%s0 + $0x98] sm:$0xf]
          %v464 = vld [vmem:[%s0 + $0x9c] sm:$0xff]
          %v465 = vld [vmem:[%s0 + $0xa4] sm:$0xf]
          %v466 = vld [vmem:[#allocation4] sm:$0xff]
          %v467 = vld [vmem:[#allocation4 + $0x8] sm:$0xff]
          %v468 = vld [vmem:[#allocation4 + $0x10] sm:$0xff]
          %v469 = vld [vmem:[#allocation4 + $0x18] sm:$0xff]
          %v470 = vld [vmem:[#allocation4 + $0x20] sm:$0xff]
          %v471 = vld [vmem:[#allocation4 + $0x28] sm:$0xff]
          %v472 = vld [vmem:[#allocation4 + $0x30] sm:$0xff]
          %v473 = vld [vmem:[#allocation4 + $0x38] sm:$0xff]
          %v474 = vld [vmem:[#allocation4 + $0x40] sm:$0xff]
          %v475 = vld [vmem:[#allocation4 + $0x48] sm:$0xff]
          %v476 = vld [vmem:[#allocation4 + $0x50] sm:$0xff]
          %v477 = vld [vmem:[#allocation4 + $0x58] sm:$0xff]
          %v478 = vld [vmem:[#allocation4 + $0x60] sm:$0xff]
          %v479 = vld [vmem:[#allocation4 + $0x68] sm:$0xff]
          %v480 = vld [vmem:[#allocation4 + $0x70] sm:$0xff]
          %v481 = vld [vmem:[#allocation4 + $0x78] sm:$0xff]
          %v482 = vld [vmem:[#allocation4 + $0x80] sm:$0xff]
          %v483 = vld [vmem:[#allocation4 + $0x88] sm:$0xff]
          %v484 = vld [vmem:[#allocation4 + $0x90] sm:$0xff]
          %v485 = vld [vmem:[#allocation4 + $0x98] sm:$0xff]
          %v486 = vld [vmem:[#allocation4 + $0xa0] sm:$0xff]
          %v487 = vld [vmem:[#allocation4 + $0xa8] sm:$0xff]
          %v488 = vld [vmem:[#allocation4 + $0xb0] sm:$0xff]
          %v489 = vld [vmem:[#allocation4 + $0xb8] sm:$0xff]
          %v490 = vld [vmem:[#allocation4 + $0xc0] sm:$0xff]
          %v491 = vld [vmem:[#allocation4 + $0xc8] sm:$0xff]
          %v492 = vld [vmem:[#allocation4 + $0xd0] sm:$0xff]
          %v493 = vld [vmem:[#allocation4 + $0xd8] sm:$0xff]
          %v494 = vld [vmem:[#allocation4 + $0xe0] sm:$0xff]
          %v495 = vld [vmem:[#allocation4 + $0xe8] sm:$0xff]
          %v496 = vld [vmem:[#allocation4 + $0xf0] sm:$0xff]
          %v497 = vld [vmem:[#allocation4 + $0xf8] sm:$0xff]
          %v498 = vld [vmem:[#allocation4 + $0x100] sm:$0xff]
          %v499 = vld [vmem:[#allocation4 + $0x108] sm:$0xff]
          %v500 = vld [vmem:[#allocation4 + $0x110] sm:$0xff]
          %v501 = vld [vmem:[#allocation4 + $0x118] sm:$0xff]
          %v502 = vld [vmem:[#allocation4 + $0x120] sm:$0xff]
          %v503 = vld [vmem:[#allocation4 + $0x128] sm:$0xff]
          %v504 = vld [vmem:[#allocation4 + $0x130] sm:$0xff]
          %v505 = vld [vmem:[#allocation4 + $0x138] sm:$0xff]
          %v506 = vld [vmem:[#allocation4 + $0x140] sm:$0xff]
          %v507 = vld [vmem:[#allocation4 + $0x148] sm:$0xff]
          %v508 = vld [vmem:[#allocation4 + $0x150] sm:$0xff]
          %v509 = vld [vmem:[#allocation4 + $0x158] sm:$0xff]
          %v510 = vld [vmem:[#allocation4 + $0x160] sm:$0xff]
          %v511 = vld [vmem:[#allocation4 + $0x168] sm:$0xff]
          %v512 = vld [vmem:[#allocation4 + $0x170] sm:$0xff]
          %v513 = vld [vmem:[#allocation4 + $0x178] sm:$0xff]
          %v514 = vld [vmem:[#allocation4 + $0x180] sm:$0xff]
          %v515 = vld [vmem:[#allocation4 + $0x188] sm:$0xff]
          %v516 = vld [vmem:[#allocation4 + $0x190] sm:$0xff]
          %v517 = vld [vmem:[#allocation4 + $0x198] sm:$0xff]
          %v518 = vld [vmem:[#allocation4 + $0x1a0] sm:$0xff]
          %v519 = vld [vmem:[#allocation4 + $0x1a8] sm:$0xff]
          %v520 = vld [vmem:[#allocation4 + $0x1b0] sm:$0xff]
          %v521 = vld [vmem:[#allocation4 + $0x1b8] sm:$0xff]
          %v522 = vld [vmem:[#allocation4 + $0x1c0] sm:$0xff]
          %v523 = vld [vmem:[#allocation4 + $0x1c8] sm:$0xff]
          %v524 = vld [vmem:[#allocation4 + $0x1d0] sm:$0xff]
          %v525 = vld [vmem:[#allocation4 + $0x1d8] sm:$0xff]
          %v526 = vld [vmem:[#allocation4 + $0x1e0] sm:$0xff]
          %v527 = vld [vmem:[#allocation4 + $0x1e8] sm:$0xff]
          %v528 = vld [vmem:[#allocation4 + $0x1f0] sm:$0xff]
          %v529 = vld [vmem:[#allocation4 + $0x1f8] sm:$0xff]
          %v530 = vld [vmem:[#allocation4 + $0x200] sm:$0xff]
          %v531 = vld [vmem:[#allocation4 + $0x208] sm:$0xff]
          %v532 = vld [vmem:[#allocation4 + $0x210] sm:$0xff]
          %v533 = vld [vmem:[#allocation4 + $0x218] sm:$0xff]
          %v534 = vld [vmem:[#allocation4 + $0x220] sm:$0xff]
          %v535 = vld [vmem:[#allocation4 + $0x228] sm:$0xff]
          %v536 = vld [vmem:[#allocation4 + $0x230] sm:$0xff]
          %v537 = vld [vmem:[#allocation4 + $0x238] sm:$0xff]
          %v538 = vld [vmem:[#allocation4 + $0x240] sm:$0xff]
          %v539 = vld [vmem:[#allocation4 + $0x248] sm:$0xff]
          %v540 = vld [vmem:[#allocation4 + $0x250] sm:$0xff]
          %v541 = vld [vmem:[#allocation4 + $0x258] sm:$0xff]
          %v542 = vld [vmem:[#allocation4 + $0x260] sm:$0xff]
          %v543 = vld [vmem:[#allocation4 + $0x268] sm:$0xff]
          %v544 = vld [vmem:[#allocation4 + $0x270] sm:$0xff]
          %v545 = vld [vmem:[#allocation4 + $0x278] sm:$0xff]
          %v546 = vld [vmem:[#allocation4 + $0x280] sm:$0xff]
          %v547 = vld [vmem:[#allocation4 + $0x288] sm:$0xff]
          %v548 = vld [vmem:[#allocation4 + $0x290] sm:$0xff]
          %v549 = vld [vmem:[#allocation4 + $0x298] sm:$0xff]
          %v550 = vld [vmem:[#allocation4 + $0x2a0] sm:$0xff]
          %v551 = vld [vmem:[#allocation4 + $0x2a8] sm:$0xff]
          %v552 = vld [vmem:[#allocation4 + $0x2b0] sm:$0xff]
          %v553 = vld [vmem:[#allocation4 + $0x2b8] sm:$0xff]
          %v554 = vld [vmem:[#allocation4 + $0x2c0] sm:$0xff]
          %v555 = vld [vmem:[#allocation4 + $0x2c8] sm:$0xff]
          %v556 = vld [vmem:[#allocation4 + $0x2d0] sm:$0xff]
          %v557 = vld [vmem:[#allocation4 + $0x2d8] sm:$0xff]
          %v558 = vld [vmem:[#allocation4 + $0x2e0] sm:$0xff]
          %v559 = vld [vmem:[#allocation4 + $0x2e8] sm:$0xff]
          %v560 = vld [vmem:[#allocation4 + $0x2f0] sm:$0xff]
          %v561 = vld [vmem:[#allocation4 + $0x2f8] sm:$0xff]
          %v562 = vld [vmem:[#allocation4 + $0x300] sm:$0xff]
          %v563 = vld [vmem:[#allocation4 + $0x308] sm:$0xff]
          %v564 = vld [vmem:[#allocation4 + $0x310] sm:$0xff]
          %v565 = vld [vmem:[#allocation4 + $0x318] sm:$0xff]
          %v566 = vld [vmem:[#allocation4 + $0x320] sm:$0xff]
          %v567 = vld [vmem:[#allocation4 + $0x328] sm:$0xff]
          %v568 = vld [vmem:[#allocation4 + $0x330] sm:$0xff]
          %v569 = vld [vmem:[#allocation4 + $0x338] sm:$0xff]
          %v570 = vld [vmem:[#allocation4 + $0x340] sm:$0xff]
          %v571 = vld [vmem:[#allocation4 + $0x348] sm:$0xff]
          %v572 = vld [vmem:[#allocation4 + $0x350] sm:$0xff]
          %v573 = vld [vmem:[#allocation4 + $0x358] sm:$0xff]
          %v574 = vld [vmem:[#allocation4 + $0x360] sm:$0xff]
          %v575 = vld [vmem:[#allocation4 + $0x368] sm:$0xff]
          %v576 = vld [vmem:[#allocation4 + $0x370] sm:$0xff]
          %v577 = vld [vmem:[#allocation4 + $0x378] sm:$0xff]
          %v578 = vld [vmem:[#allocation4 + $0x380] sm:$0xff]
          %v579 = vld [vmem:[#allocation4 + $0x388] sm:$0xff]
          %v580 = vld [vmem:[#allocation4 + $0x390] sm:$0xff]
          %v581 = vld [vmem:[#allocation4 + $0x398] sm:$0xff]
          %v582 = vld [vmem:[#allocation4 + $0x3a0] sm:$0xff]
          %v583 = vld [vmem:[#allocation4 + $0x3a8] sm:$0xff]
          %v584 = vld [vmem:[#allocation4 + $0x3b0] sm:$0xff]
          %v585 = vld [vmem:[#allocation4 + $0x3b8] sm:$0xff]
          %v586 = vld [vmem:[#allocation4 + $0x3c0] sm:$0xff]
          %v587 = vld [vmem:[#allocation4 + $0x3c8] sm:$0xff]
          %v588 = vld [vmem:[#allocation4 + $0x3d0] sm:$0xff]
          %v589 = vld [vmem:[#allocation4 + $0x3d8] sm:$0xff]
          %v590 = vld [vmem:[#allocation4 + $0x3e0] sm:$0xff]
          %v591 = vld [vmem:[#allocation4 + $0x3e8] sm:$0xff]
          %v592 = vld [vmem:[#allocation4 + $0x3f0] sm:$0xff]
          %v593 = vld [vmem:[#allocation4 + $0x3f8] sm:$0xff]
          %v594 = vld [vmem:[#allocation4 + $0x400] sm:$0xff]
          %v595 = vld [vmem:[#allocation4 + $0x408] sm:$0xff]
          %v596 = vld [vmem:[#allocation4 + $0x410] sm:$0xff]
          %v597 = vld [vmem:[#allocation4 + $0x418] sm:$0xff]
          %v598 = vld [vmem:[#allocation4 + $0x420] sm:$0xff]
          %v599 = vld [vmem:[#allocation4 + $0x428] sm:$0xff]
          %v600 = vld [vmem:[#allocation4 + $0x430] sm:$0xff]
          %v601 = vld [vmem:[#allocation4 + $0x438] sm:$0xff]
          %v602 = vld [vmem:[#allocation4 + $0x440] sm:$0xff]
          %v603 = vld [vmem:[#allocation4 + $0x448] sm:$0xff]
          %v604 = vld [vmem:[#allocation4 + $0x450] sm:$0xff]
          %v605 = vld [vmem:[#allocation4 + $0x458] sm:$0xff]
          %v606 = vld [vmem:[#allocation4 + $0x460] sm:$0xff]
          %v607 = vld [vmem:[#allocation4 + $0x468] sm:$0xff]
          %v608 = vld [vmem:[#allocation4 + $0x470] sm:$0xff]
          %v609 = vld [vmem:[#allocation4 + $0x478] sm:$0xff]
          %v610 = vld [vmem:[#allocation4 + $0x480] sm:$0xff]
          %v611 = vld [vmem:[#allocation4 + $0x488] sm:$0xff]
          %v612 = vld [vmem:[#allocation4 + $0x490] sm:$0xff]
          %v613 = vld [vmem:[#allocation4 + $0x498] sm:$0xff]
          %v614 = vld [vmem:[#allocation4 + $0x4a0] sm:$0xff]
          %v615 = vld [vmem:[#allocation4 + $0x4a8] sm:$0xff]
          %v616 = vld [vmem:[#allocation4 + $0x4b0] sm:$0xff]
          %v617 = vld [vmem:[#allocation4 + $0x4b8] sm:$0xff]
          %v618 = vld [vmem:[#allocation4 + $0x4c0] sm:$0xff]
          %v619 = vld [vmem:[#allocation4 + $0x4c8] sm:$0xff]
          %v620 = vld [vmem:[#allocation4 + $0x4d0] sm:$0xff]
          %v621 = vld [vmem:[#allocation4 + $0x4d8] sm:$0xff]
          %v622 = vld [vmem:[#allocation4 + $0x4e0] sm:$0xff]
          %v623 = vld [vmem:[#allocation4 + $0x4e8] sm:$0xff]
          %v624 = vld [vmem:[#allocation4 + $0x4f0] sm:$0xff]
          %v625 = vld [vmem:[#allocation4 + $0x4f8] sm:$0xff]
          %v626 = vld [vmem:[#allocation4 + $0x500] sm:$0xff]
          %v627 = vld [vmem:[#allocation4 + $0x508] sm:$0xff]
          %v628 = vld [vmem:[#allocation4 + $0x510] sm:$0xff]
          %v629 = vld [vmem:[#allocation4 + $0x518] sm:$0xff]
          %v630 = vld [vmem:[#allocation4 + $0x520] sm:$0xff]
          %v631 = vld [vmem:[#allocation4 + $0x528] sm:$0xff]
          %v632 = vld [vmem:[#allocation4 + $0x530] sm:$0xff]
          %v633 = vld [vmem:[#allocation4 + $0x538] sm:$0xff]
          %v634 = vld [vmem:[#allocation4 + $0x540] sm:$0xff]
          %v635 = vld [vmem:[#allocation4 + $0x548] sm:$0xff]
          %v636 = vld [vmem:[#allocation4 + $0x550] sm:$0xff]
          %v637 = vld [vmem:[#allocation4 + $0x558] sm:$0xff]
          %v638 = vld [vmem:[#allocation4 + $0x560] sm:$0xff]
          %v639 = vld [vmem:[#allocation4 + $0x568] sm:$0xff]
          %v640 = vld [vmem:[#allocation4 + $0x570] sm:$0xff]
          %v641 = vld [vmem:[#allocation4 + $0x578] sm:$0xff]
          %v642 = vld [vmem:[#allocation4 + $0x580] sm:$0xff]
          %v643 = vld [vmem:[#allocation4 + $0x588] sm:$0xff]
          %v644 = vld [vmem:[#allocation4 + $0x590] sm:$0xff]
          %v645 = vld [vmem:[#allocation4 + $0x598] sm:$0xff]
          %v646 = vld [vmem:[#allocation4 + $0x5a0] sm:$0xff]
          %v647 = vld [vmem:[#allocation4 + $0x5a8] sm:$0xff]
          %v648 = vld [vmem:[#allocation4 + $0x5b0] sm:$0xff]
          %v649 = vld [vmem:[#allocation4 + $0x5b8] sm:$0xff]
          %v650 = vld [vmem:[#allocation4 + $0x5c0] sm:$0xff]
          %v651 = vld [vmem:[#allocation4 + $0x5c8] sm:$0xff]
          %v652 = vld [vmem:[#allocation4 + $0x5d0] sm:$0xff]
          %v653 = vld [vmem:[#allocation4 + $0x5d8] sm:$0xff]
          %v654 = vld [vmem:[#allocation4 + $0x5e0] sm:$0xff]
          %v655 = vld [vmem:[#allocation4 + $0x5e8] sm:$0xff]
          %v656 = vld [vmem:[#allocation4 + $0x5f0] sm:$0xff]
          %v657 = vld [vmem:[#allocation4 + $0x5f8] sm:$0xff]
          %v658 = vld [vmem:[#allocation6] sm:$0xff]
          %v660 = vlaneseq
          %v661 = vshrl.u32 %v660, 7
          %v662 = vsub.s32 0, %v661
          %v663 = vrot.slane %v658, %v662
          %v664 = vlaneseq
          %v665 = vshrl.u32 %v664, 7
          %v666 = vsub.s32 1, %v665
          %v667 = vrot.slane %v658, %v666
          %v668 = vlaneseq
          %v669 = vshrl.u32 %v668, 7
          %v670 = vsub.s32 2, %v669
          %v671 = vrot.slane %v658, %v670
          %v672 = vlaneseq
          %v673 = vshrl.u32 %v672, 7
          %v674 = vsub.s32 3, %v673
          %v675 = vrot.slane %v658, %v674
          %v676 = vlaneseq
          %v677 = vshrl.u32 %v676, 7
          %v678 = vsub.s32 4, %v677
          %v679 = vrot.slane %v658, %v678
          %v680 = vlaneseq
          %v681 = vshrl.u32 %v680, 7
          %v682 = vsub.s32 5, %v681
          %v683 = vrot.slane %v658, %v682
          %v684 = vlaneseq
          %v685 = vshrl.u32 %v684, 7
          %v686 = vsub.s32 6, %v685
          %v687 = vrot.slane %v658, %v686
          %v688 = vlaneseq
          %v689 = vshrl.u32 %v688, 7
          %v690 = vsub.s32 7, %v689
          %v691 = vrot.slane %v658, %v690
          %v728 = vunpack.c.l.b16 %v438
          %v729 = vunpack.c.h.b16 %v438
          %v730 = vunpack.c.l.b16 %v439
          %v731 = vunpack.c.l.b16 %v440
          %v732 = vunpack.c.h.b16 %v440
          %v733 = vunpack.c.l.b16 %v441
          %v734 = vunpack.c.l.b16 %v442
          %v735 = vunpack.c.h.b16 %v442
          %v736 = vunpack.c.l.b16 %v443
          %v737 = vunpack.c.l.b16 %v444
          %v738 = vunpack.c.h.b16 %v444
          %v739 = vunpack.c.l.b16 %v445
          %v740 = vunpack.c.l.b16 %v446
          %v741 = vunpack.c.h.b16 %v446
          %v742 = vunpack.c.l.b16 %v447
          %v743 = vunpack.c.l.b16 %v448
          %v744 = vunpack.c.h.b16 %v448
          %v745 = vunpack.c.l.b16 %v449
          %v746 = vunpack.c.l.b16 %v450
          %v747 = vunpack.c.h.b16 %v450
          %v748 = vunpack.c.l.b16 %v451
          %v749 = vunpack.c.l.b16 %v452
          %v750 = vunpack.c.h.b16 %v452
          %v751 = vunpack.c.l.b16 %v453
          %v752 = vunpack.c.l.b16 %v454
          %v753 = vunpack.c.h.b16 %v454
          %v754 = vunpack.c.l.b16 %v455
          %v755 = vunpack.c.l.b16 %v456
          %v756 = vunpack.c.h.b16 %v456
          %v757 = vunpack.c.l.b16 %v457
          %v758 = vunpack.c.l.b16 %v458
          %v759 = vunpack.c.h.b16 %v458
          %v760 = vunpack.c.l.b16 %v459
          %v761 = vunpack.c.l.b16 %v460
          %v762 = vunpack.c.h.b16 %v460
          %v763 = vunpack.c.l.b16 %v461
          %v764 = vunpack.c.l.b16 %v462
          %v765 = vunpack.c.h.b16 %v462
          %v766 = vunpack.c.l.b16 %v463
          %v767 = vunpack.c.l.b16 %v464
          %v768 = vunpack.c.h.b16 %v464
          %v769 = vunpack.c.l.b16 %v465
          %v770 = vpack.c.b16 %v731, %v728
          %v771 = vpack.c.b16 %v732, %v729
          %v772 = vpack.c.b16 %v733, %v730
          %v773 = vpack.c.b16 %v737, %v734
          %v774 = vpack.c.b16 %v738, %v735
          %v775 = vpack.c.b16 %v739, %v736
          %v776 = vpack.c.b16 %v743, %v740
          %v777 = vpack.c.b16 %v744, %v741
          %v778 = vpack.c.b16 %v745, %v742
          %v779 = vpack.c.b16 %v749, %v746
          %v780 = vpack.c.b16 %v750, %v747
          %v781 = vpack.c.b16 %v751, %v748
          %v782 = vpack.c.b16 %v755, %v752
          %v783 = vpack.c.b16 %v756, %v753
          %v784 = vpack.c.b16 %v757, %v754
          %v785 = vpack.c.b16 %v761, %v758
          %v786 = vpack.c.b16 %v762, %v759
          %v787 = vpack.c.b16 %v763, %v760
          %v788 = vpack.c.b16 %v767, %v764
          %v789 = vpack.c.b16 %v768, %v765
          %v790 = vpack.c.b16 %v769, %v766
          %v1004 = vunpack.c.l.b16 %v466
          %v1005 = vunpack.c.h.b16 %v466
          %v1006 = vunpack.c.l.b16 %v467
          %v1007 = vunpack.c.h.b16 %v467
          %v1008 = vunpack.c.l.b16 %v468
          %v1009 = vunpack.c.h.b16 %v468
          %v1010 = vunpack.c.l.b16 %v469
          %v1011 = vunpack.c.h.b16 %v469
          %v1012 = vunpack.c.l.b16 %v470
          %v1013 = vunpack.c.h.b16 %v470
          %v1014 = vunpack.c.l.b16 %v471
          %v1015 = vunpack.c.h.b16 %v471
          %v1016 = vunpack.c.l.b16 %v472
          %v1017 = vunpack.c.h.b16 %v472
          %v1018 = vunpack.c.l.b16 %v473
          %v1019 = vunpack.c.h.b16 %v473
          %v1020 = vunpack.c.l.b16 %v474
          %v1021 = vunpack.c.h.b16 %v474
          %v1022 = vunpack.c.l.b16 %v475
          %v1023 = vunpack.c.h.b16 %v475
          %v1024 = vunpack.c.l.b16 %v476
          %v1025 = vunpack.c.h.b16 %v476
          %v1026 = vunpack.c.l.b16 %v477
          %v1027 = vunpack.c.h.b16 %v477
          %v1028 = vunpack.c.l.b16 %v478
          %v1029 = vunpack.c.h.b16 %v478
          %v1030 = vunpack.c.l.b16 %v479
          %v1031 = vunpack.c.h.b16 %v479
          %v1032 = vunpack.c.l.b16 %v480
          %v1033 = vunpack.c.h.b16 %v480
          %v1034 = vunpack.c.l.b16 %v481
          %v1035 = vunpack.c.h.b16 %v481
          %v1036 = vunpack.c.l.b16 %v482
          %v1037 = vunpack.c.h.b16 %v482
          %v1038 = vunpack.c.l.b16 %v483
          %v1039 = vunpack.c.h.b16 %v483
          %v1040 = vunpack.c.l.b16 %v484
          %v1041 = vunpack.c.h.b16 %v484
          %v1042 = vunpack.c.l.b16 %v485
          %v1043 = vunpack.c.h.b16 %v485
          %v1044 = vunpack.c.l.b16 %v486
          %v1045 = vunpack.c.h.b16 %v486
          %v1046 = vunpack.c.l.b16 %v487
          %v1047 = vunpack.c.h.b16 %v487
          %v1048 = vunpack.c.l.b16 %v488
          %v1049 = vunpack.c.h.b16 %v488
          %v1050 = vunpack.c.l.b16 %v489
          %v1051 = vunpack.c.h.b16 %v489
          %v1052 = vunpack.c.l.b16 %v490
          %v1053 = vunpack.c.h.b16 %v490
          %v1054 = vunpack.c.l.b16 %v491
          %v1055 = vunpack.c.h.b16 %v491
          %v1056 = vunpack.c.l.b16 %v492
          %v1057 = vunpack.c.h.b16 %v492
          %v1058 = vunpack.c.l.b16 %v493
          %v1059 = vunpack.c.h.b16 %v493
          %v1060 = vunpack.c.l.b16 %v494
          %v1061 = vunpack.c.h.b16 %v494
          %v1062 = vunpack.c.l.b16 %v495
          %v1063 = vunpack.c.h.b16 %v495
          %v1064 = vunpack.c.l.b16 %v496
          %v1065 = vunpack.c.h.b16 %v496
          %v1066 = vunpack.c.l.b16 %v497
          %v1067 = vunpack.c.h.b16 %v497
          %v1068 = vunpack.c.l.b16 %v498
          %v1069 = vunpack.c.h.b16 %v498
          %v1070 = vunpack.c.l.b16 %v499
          %v1071 = vunpack.c.h.b16 %v499
          %v1072 = vunpack.c.l.b16 %v500
          %v1073 = vunpack.c.h.b16 %v500
          %v1074 = vunpack.c.l.b16 %v501
          %v1075 = vunpack.c.h.b16 %v501
          %v1076 = vunpack.c.l.b16 %v502
          %v1077 = vunpack.c.h.b16 %v502
          %v1078 = vunpack.c.l.b16 %v503
          %v1079 = vunpack.c.h.b16 %v503
          %v1080 = vunpack.c.l.b16 %v504
          %v1081 = vunpack.c.h.b16 %v504
          %v1082 = vunpack.c.l.b16 %v505
          %v1083 = vunpack.c.h.b16 %v505
          %v1084 = vunpack.c.l.b16 %v506
          %v1085 = vunpack.c.h.b16 %v506
          %v1086 = vunpack.c.l.b16 %v507
          %v1087 = vunpack.c.h.b16 %v507
          %v1088 = vunpack.c.l.b16 %v508
          %v1089 = vunpack.c.h.b16 %v508
          %v1090 = vunpack.c.l.b16 %v509
          %v1091 = vunpack.c.h.b16 %v509
          %v1092 = vunpack.c.l.b16 %v510
          %v1093 = vunpack.c.h.b16 %v510
          %v1094 = vunpack.c.l.b16 %v511
          %v1095 = vunpack.c.h.b16 %v511
          %v1096 = vunpack.c.l.b16 %v512
          %v1097 = vunpack.c.h.b16 %v512
          %v1098 = vunpack.c.l.b16 %v513
          %v1099 = vunpack.c.h.b16 %v513
          %v1100 = vunpack.c.l.b16 %v514
          %v1101 = vunpack.c.h.b16 %v514
          %v1102 = vunpack.c.l.b16 %v515
          %v1103 = vunpack.c.h.b16 %v515
          %v1104 = vunpack.c.l.b16 %v516
          %v1105 = vunpack.c.h.b16 %v516
          %v1106 = vunpack.c.l.b16 %v517
          %v1107 = vunpack.c.h.b16 %v517
          %v1108 = vunpack.c.l.b16 %v518
          %v1109 = vunpack.c.h.b16 %v518
          %v1110 = vunpack.c.l.b16 %v519
          %v1111 = vunpack.c.h.b16 %v519
          %v1112 = vunpack.c.l.b16 %v520
          %v1113 = vunpack.c.h.b16 %v520
          %v1114 = vunpack.c.l.b16 %v521
          %v1115 = vunpack.c.h.b16 %v521
          %v1116 = vunpack.c.l.b16 %v522
          %v1117 = vunpack.c.h.b16 %v522
          %v1118 = vunpack.c.l.b16 %v523
          %v1119 = vunpack.c.h.b16 %v523
          %v1120 = vunpack.c.l.b16 %v524
          %v1121 = vunpack.c.h.b16 %v524
          %v1122 = vunpack.c.l.b16 %v525
          %v1123 = vunpack.c.h.b16 %v525
          %v1124 = vunpack.c.l.b16 %v526
          %v1125 = vunpack.c.h.b16 %v526
          %v1126 = vunpack.c.l.b16 %v527
          %v1127 = vunpack.c.h.b16 %v527
          %v1128 = vunpack.c.l.b16 %v528
          %v1129 = vunpack.c.h.b16 %v528
          %v1130 = vunpack.c.l.b16 %v529
          %v1131 = vunpack.c.h.b16 %v529
          %v1132 = vunpack.c.l.b16 %v530
          %v1133 = vunpack.c.h.b16 %v530
          %v1134 = vunpack.c.l.b16 %v531
          %v1135 = vunpack.c.h.b16 %v531
          %v1136 = vunpack.c.l.b16 %v532
          %v1137 = vunpack.c.h.b16 %v532
          %v1138 = vunpack.c.l.b16 %v533
          %v1139 = vunpack.c.h.b16 %v533
          %v1140 = vunpack.c.l.b16 %v534
          %v1141 = vunpack.c.h.b16 %v534
          %v1142 = vunpack.c.l.b16 %v535
          %v1143 = vunpack.c.h.b16 %v535
          %v1144 = vunpack.c.l.b16 %v536
          %v1145 = vunpack.c.h.b16 %v536
          %v1146 = vunpack.c.l.b16 %v537
          %v1147 = vunpack.c.h.b16 %v537
          %v1148 = vunpack.c.l.b16 %v538
          %v1149 = vunpack.c.h.b16 %v538
          %v1150 = vunpack.c.l.b16 %v539
          %v1151 = vunpack.c.h.b16 %v539
          %v1152 = vunpack.c.l.b16 %v540
          %v1153 = vunpack.c.h.b16 %v540
          %v1154 = vunpack.c.l.b16 %v541
          %v1155 = vunpack.c.h.b16 %v541
          %v1156 = vunpack.c.l.b16 %v542
          %v1157 = vunpack.c.h.b16 %v542
          %v1158 = vunpack.c.l.b16 %v543
          %v1159 = vunpack.c.h.b16 %v543
          %v1160 = vunpack.c.l.b16 %v544
          %v1161 = vunpack.c.h.b16 %v544
          %v1162 = vunpack.c.l.b16 %v545
          %v1163 = vunpack.c.h.b16 %v545
          %v1164 = vunpack.c.l.b16 %v546
          %v1165 = vunpack.c.h.b16 %v546
          %v1166 = vunpack.c.l.b16 %v547
          %v1167 = vunpack.c.h.b16 %v547
          %v1168 = vunpack.c.l.b16 %v548
          %v1169 = vunpack.c.h.b16 %v548
          %v1170 = vunpack.c.l.b16 %v549
          %v1171 = vunpack.c.h.b16 %v549
          %v1172 = vunpack.c.l.b16 %v550
          %v1173 = vunpack.c.h.b16 %v550
          %v1174 = vunpack.c.l.b16 %v551
          %v1175 = vunpack.c.h.b16 %v551
          %v1176 = vunpack.c.l.b16 %v552
          %v1177 = vunpack.c.h.b16 %v552
          %v1178 = vunpack.c.l.b16 %v553
          %v1179 = vunpack.c.h.b16 %v553
          %v1180 = vunpack.c.l.b16 %v554
          %v1181 = vunpack.c.h.b16 %v554
          %v1182 = vunpack.c.l.b16 %v555
          %v1183 = vunpack.c.h.b16 %v555
          %v1184 = vunpack.c.l.b16 %v556
          %v1185 = vunpack.c.h.b16 %v556
          %v1186 = vunpack.c.l.b16 %v557
          %v1187 = vunpack.c.h.b16 %v557
          %v1188 = vunpack.c.l.b16 %v558
          %v1189 = vunpack.c.h.b16 %v558
          %v1190 = vunpack.c.l.b16 %v559
          %v1191 = vunpack.c.h.b16 %v559
          %v1192 = vunpack.c.l.b16 %v560
          %v1193 = vunpack.c.h.b16 %v560
          %v1194 = vunpack.c.l.b16 %v561
          %v1195 = vunpack.c.h.b16 %v561
          %v1196 = vunpack.c.l.b16 %v562
          %v1197 = vunpack.c.h.b16 %v562
          %v1198 = vunpack.c.l.b16 %v563
          %v1199 = vunpack.c.h.b16 %v563
          %v1200 = vunpack.c.l.b16 %v564
          %v1201 = vunpack.c.h.b16 %v564
          %v1202 = vunpack.c.l.b16 %v565
          %v1203 = vunpack.c.h.b16 %v565
          %v1204 = vunpack.c.l.b16 %v566
          %v1205 = vunpack.c.h.b16 %v566
          %v1206 = vunpack.c.l.b16 %v567
          %v1207 = vunpack.c.h.b16 %v567
          %v1208 = vunpack.c.l.b16 %v568
          %v1209 = vunpack.c.h.b16 %v568
          %v1210 = vunpack.c.l.b16 %v569
          %v1211 = vunpack.c.h.b16 %v569
          %v1212 = vunpack.c.l.b16 %v570
          %v1213 = vunpack.c.h.b16 %v570
          %v1214 = vunpack.c.l.b16 %v571
          %v1215 = vunpack.c.h.b16 %v571
          %v1216 = vunpack.c.l.b16 %v572
          %v1217 = vunpack.c.h.b16 %v572
          %v1218 = vunpack.c.l.b16 %v573
          %v1219 = vunpack.c.h.b16 %v573
          %v1220 = vunpack.c.l.b16 %v574
          %v1221 = vunpack.c.h.b16 %v574
          %v1222 = vunpack.c.l.b16 %v575
          %v1223 = vunpack.c.h.b16 %v575
          %v1224 = vunpack.c.l.b16 %v576
          %v1225 = vunpack.c.h.b16 %v576
          %v1226 = vunpack.c.l.b16 %v577
          %v1227 = vunpack.c.h.b16 %v577
          %v1228 = vunpack.c.l.b16 %v578
          %v1229 = vunpack.c.h.b16 %v578
          %v1230 = vunpack.c.l.b16 %v579
          %v1231 = vunpack.c.h.b16 %v579
          %v1232 = vunpack.c.l.b16 %v580
          %v1233 = vunpack.c.h.b16 %v580
          %v1234 = vunpack.c.l.b16 %v581
          %v1235 = vunpack.c.h.b16 %v581
          %v1236 = vunpack.c.l.b16 %v582
          %v1237 = vunpack.c.h.b16 %v582
          %v1238 = vunpack.c.l.b16 %v583
          %v1239 = vunpack.c.h.b16 %v583
          %v1240 = vunpack.c.l.b16 %v584
          %v1241 = vunpack.c.h.b16 %v584
          %v1242 = vunpack.c.l.b16 %v585
          %v1243 = vunpack.c.h.b16 %v585
          %v1244 = vunpack.c.l.b16 %v586
          %v1245 = vunpack.c.h.b16 %v586
          %v1246 = vunpack.c.l.b16 %v587
          %v1247 = vunpack.c.h.b16 %v587
          %v1248 = vunpack.c.l.b16 %v588
          %v1249 = vunpack.c.h.b16 %v588
          %v1250 = vunpack.c.l.b16 %v589
          %v1251 = vunpack.c.h.b16 %v589
          %v1252 = vunpack.c.l.b16 %v590
          %v1253 = vunpack.c.h.b16 %v590
          %v1254 = vunpack.c.l.b16 %v591
          %v1255 = vunpack.c.h.b16 %v591
          %v1256 = vunpack.c.l.b16 %v592
          %v1257 = vunpack.c.h.b16 %v592
          %v1258 = vunpack.c.l.b16 %v593
          %v1259 = vunpack.c.h.b16 %v593
          %v1260 = vunpack.c.l.b16 %v594
          %v1261 = vunpack.c.h.b16 %v594
          %v1262 = vunpack.c.l.b16 %v595
          %v1263 = vunpack.c.h.b16 %v595
          %v1264 = vunpack.c.l.b16 %v596
          %v1265 = vunpack.c.h.b16 %v596
          %v1266 = vunpack.c.l.b16 %v597
          %v1267 = vunpack.c.h.b16 %v597
          %v1268 = vunpack.c.l.b16 %v598
          %v1269 = vunpack.c.h.b16 %v598
          %v1270 = vunpack.c.l.b16 %v599
          %v1271 = vunpack.c.h.b16 %v599
          %v1272 = vunpack.c.l.b16 %v600
          %v1273 = vunpack.c.h.b16 %v600
          %v1274 = vunpack.c.l.b16 %v601
          %v1275 = vunpack.c.h.b16 %v601
          %v1276 = vunpack.c.l.b16 %v602
          %v1277 = vunpack.c.h.b16 %v602
          %v1278 = vunpack.c.l.b16 %v603
          %v1279 = vunpack.c.h.b16 %v603
          %v1280 = vunpack.c.l.b16 %v604
          %v1281 = vunpack.c.h.b16 %v604
          %v1282 = vunpack.c.l.b16 %v605
          %v1283 = vunpack.c.h.b16 %v605
          %v1284 = vunpack.c.l.b16 %v606
          %v1285 = vunpack.c.h.b16 %v606
          %v1286 = vunpack.c.l.b16 %v607
          %v1287 = vunpack.c.h.b16 %v607
          %v1288 = vunpack.c.l.b16 %v608
          %v1289 = vunpack.c.h.b16 %v608
          %v1290 = vunpack.c.l.b16 %v609
          %v1291 = vunpack.c.h.b16 %v609
          %v1292 = vunpack.c.l.b16 %v610
          %v1293 = vunpack.c.h.b16 %v610
          %v1294 = vunpack.c.l.b16 %v611
          %v1295 = vunpack.c.h.b16 %v611
          %v1296 = vunpack.c.l.b16 %v612
          %v1297 = vunpack.c.h.b16 %v612
          %v1298 = vunpack.c.l.b16 %v613
          %v1299 = vunpack.c.h.b16 %v613
          %v1300 = vunpack.c.l.b16 %v614
          %v1301 = vunpack.c.h.b16 %v614
          %v1302 = vunpack.c.l.b16 %v615
          %v1303 = vunpack.c.h.b16 %v615
          %v1304 = vunpack.c.l.b16 %v616
          %v1305 = vunpack.c.h.b16 %v616
          %v1306 = vunpack.c.l.b16 %v617
          %v1307 = vunpack.c.h.b16 %v617
          %v1308 = vunpack.c.l.b16 %v618
          %v1309 = vunpack.c.h.b16 %v618
          %v1310 = vunpack.c.l.b16 %v619
          %v1311 = vunpack.c.h.b16 %v619
          %v1312 = vunpack.c.l.b16 %v620
          %v1313 = vunpack.c.h.b16 %v620
          %v1314 = vunpack.c.l.b16 %v621
          %v1315 = vunpack.c.h.b16 %v621
          %v1316 = vunpack.c.l.b16 %v622
          %v1317 = vunpack.c.h.b16 %v622
          %v1318 = vunpack.c.l.b16 %v623
          %v1319 = vunpack.c.h.b16 %v623
          %v1320 = vunpack.c.l.b16 %v624
          %v1321 = vunpack.c.h.b16 %v624
          %v1322 = vunpack.c.l.b16 %v625
          %v1323 = vunpack.c.h.b16 %v625
          %v1324 = vunpack.c.l.b16 %v626
          %v1325 = vunpack.c.h.b16 %v626
          %v1326 = vunpack.c.l.b16 %v627
          %v1327 = vunpack.c.h.b16 %v627
          %v1328 = vunpack.c.l.b16 %v628
          %v1329 = vunpack.c.h.b16 %v628
          %v1330 = vunpack.c.l.b16 %v629
          %v1331 = vunpack.c.h.b16 %v629
          %v1332 = vunpack.c.l.b16 %v630
          %v1333 = vunpack.c.h.b16 %v630
          %v1334 = vunpack.c.l.b16 %v631
          %v1335 = vunpack.c.h.b16 %v631
          %v1336 = vunpack.c.l.b16 %v632
          %v1337 = vunpack.c.h.b16 %v632
          %v1338 = vunpack.c.l.b16 %v633
          %v1339 = vunpack.c.h.b16 %v633
          %v1340 = vunpack.c.l.b16 %v634
          %v1341 = vunpack.c.h.b16 %v634
          %v1342 = vunpack.c.l.b16 %v635
          %v1343 = vunpack.c.h.b16 %v635
          %v1344 = vunpack.c.l.b16 %v636
          %v1345 = vunpack.c.h.b16 %v636
          %v1346 = vunpack.c.l.b16 %v637
          %v1347 = vunpack.c.h.b16 %v637
          %v1348 = vunpack.c.l.b16 %v638
          %v1349 = vunpack.c.h.b16 %v638
          %v1350 = vunpack.c.l.b16 %v639
          %v1351 = vunpack.c.h.b16 %v639
          %v1352 = vunpack.c.l.b16 %v640
          %v1353 = vunpack.c.h.b16 %v640
          %v1354 = vunpack.c.l.b16 %v641
          %v1355 = vunpack.c.h.b16 %v641
          %v1356 = vunpack.c.l.b16 %v642
          %v1357 = vunpack.c.h.b16 %v642
          %v1358 = vunpack.c.l.b16 %v643
          %v1359 = vunpack.c.h.b16 %v643
          %v1360 = vunpack.c.l.b16 %v644
          %v1361 = vunpack.c.h.b16 %v644
          %v1362 = vunpack.c.l.b16 %v645
          %v1363 = vunpack.c.h.b16 %v645
          %v1364 = vunpack.c.l.b16 %v646
          %v1365 = vunpack.c.h.b16 %v646
          %v1366 = vunpack.c.l.b16 %v647
          %v1367 = vunpack.c.h.b16 %v647
          %v1368 = vunpack.c.l.b16 %v648
          %v1369 = vunpack.c.h.b16 %v648
          %v1370 = vunpack.c.l.b16 %v649
          %v1371 = vunpack.c.h.b16 %v649
          %v1372 = vunpack.c.l.b16 %v650
          %v1373 = vunpack.c.h.b16 %v650
          %v1374 = vunpack.c.l.b16 %v651
          %v1375 = vunpack.c.h.b16 %v651
          %v1376 = vunpack.c.l.b16 %v652
          %v1377 = vunpack.c.h.b16 %v652
          %v1378 = vunpack.c.l.b16 %v653
          %v1379 = vunpack.c.h.b16 %v653
          %v1380 = vunpack.c.l.b16 %v654
          %v1381 = vunpack.c.h.b16 %v654
          %v1382 = vunpack.c.l.b16 %v655
          %v1383 = vunpack.c.h.b16 %v655
          %v1384 = vunpack.c.l.b16 %v656
          %v1385 = vunpack.c.h.b16 %v656
          %v1386 = vunpack.c.l.b16 %v657
          %v1387 = vunpack.c.h.b16 %v657
          %v1388 = vpack.c.b16 %v1012, %v1004
          %v1389 = vpack.c.b16 %v1013, %v1005
          %v1390 = vpack.c.b16 %v1014, %v1006
          %v1391 = vpack.c.b16 %v1015, %v1007
          %v1392 = vpack.c.b16 %v1016, %v1008
          %v1393 = vpack.c.b16 %v1017, %v1009
          %v1394 = vpack.c.b16 %v1018, %v1010
          %v1395 = vpack.c.b16 %v1019, %v1011
          %v1396 = vpack.c.b16 %v1028, %v1020
          %v1397 = vpack.c.b16 %v1029, %v1021
          %v1398 = vpack.c.b16 %v1030, %v1022
          %v1399 = vpack.c.b16 %v1031, %v1023
          %v1400 = vpack.c.b16 %v1032, %v1024
          %v1401 = vpack.c.b16 %v1033, %v1025
          %v1402 = vpack.c.b16 %v1034, %v1026
          %v1403 = vpack.c.b16 %v1035, %v1027
          %v1404 = vpack.c.b16 %v1044, %v1036
          %v1405 = vpack.c.b16 %v1045, %v1037
          %v1406 = vpack.c.b16 %v1046, %v1038
          %v1407 = vpack.c.b16 %v1047, %v1039
          %v1408 = vpack.c.b16 %v1048, %v1040
          %v1409 = vpack.c.b16 %v1049, %v1041
          %v1410 = vpack.c.b16 %v1050, %v1042
          %v1411 = vpack.c.b16 %v1051, %v1043
          %v1412 = vpack.c.b16 %v1060, %v1052
          %v1413 = vpack.c.b16 %v1061, %v1053
          %v1414 = vpack.c.b16 %v1062, %v1054
          %v1415 = vpack.c.b16 %v1063, %v1055
          %v1416 = vpack.c.b16 %v1064, %v1056
          %v1417 = vpack.c.b16 %v1065, %v1057
          %v1418 = vpack.c.b16 %v1066, %v1058
          %v1419 = vpack.c.b16 %v1067, %v1059
          %v1420 = vpack.c.b16 %v1076, %v1068
          %v1421 = vpack.c.b16 %v1077, %v1069
          %v1422 = vpack.c.b16 %v1078, %v1070
          %v1423 = vpack.c.b16 %v1079, %v1071
          %v1424 = vpack.c.b16 %v1080, %v1072
          %v1425 = vpack.c.b16 %v1081, %v1073
          %v1426 = vpack.c.b16 %v1082, %v1074
          %v1427 = vpack.c.b16 %v1083, %v1075
          %v1428 = vpack.c.b16 %v1092, %v1084
          %v1429 = vpack.c.b16 %v1093, %v1085
          %v1430 = vpack.c.b16 %v1094, %v1086
          %v1431 = vpack.c.b16 %v1095, %v1087
          %v1432 = vpack.c.b16 %v1096, %v1088
          %v1433 = vpack.c.b16 %v1097, %v1089
          %v1434 = vpack.c.b16 %v1098, %v1090
          %v1435 = vpack.c.b16 %v1099, %v1091
          %v1436 = vpack.c.b16 %v1108, %v1100
          %v1437 = vpack.c.b16 %v1109, %v1101
          %v1438 = vpack.c.b16 %v1110, %v1102
          %v1439 = vpack.c.b16 %v1111, %v1103
          %v1440 = vpack.c.b16 %v1112, %v1104
          %v1441 = vpack.c.b16 %v1113, %v1105
          %v1442 = vpack.c.b16 %v1114, %v1106
          %v1443 = vpack.c.b16 %v1115, %v1107
          %v1444 = vpack.c.b16 %v1124, %v1116
          %v1445 = vpack.c.b16 %v1125, %v1117
          %v1446 = vpack.c.b16 %v1126, %v1118
          %v1447 = vpack.c.b16 %v1127, %v1119
          %v1448 = vpack.c.b16 %v1128, %v1120
          %v1449 = vpack.c.b16 %v1129, %v1121
          %v1450 = vpack.c.b16 %v1130, %v1122
          %v1451 = vpack.c.b16 %v1131, %v1123
          %v1452 = vpack.c.b16 %v1140, %v1132
          %v1453 = vpack.c.b16 %v1141, %v1133
          %v1454 = vpack.c.b16 %v1142, %v1134
          %v1455 = vpack.c.b16 %v1143, %v1135
          %v1456 = vpack.c.b16 %v1144, %v1136
          %v1457 = vpack.c.b16 %v1145, %v1137
          %v1458 = vpack.c.b16 %v1146, %v1138
          %v1459 = vpack.c.b16 %v1147, %v1139
          %v1460 = vpack.c.b16 %v1156, %v1148
          %v1461 = vpack.c.b16 %v1157, %v1149
          %v1462 = vpack.c.b16 %v1158, %v1150
          %v1463 = vpack.c.b16 %v1159, %v1151
          %v1464 = vpack.c.b16 %v1160, %v1152
          %v1465 = vpack.c.b16 %v1161, %v1153
          %v1466 = vpack.c.b16 %v1162, %v1154
          %v1467 = vpack.c.b16 %v1163, %v1155
          %v1468 = vpack.c.b16 %v1172, %v1164
          %v1469 = vpack.c.b16 %v1173, %v1165
          %v1470 = vpack.c.b16 %v1174, %v1166
          %v1471 = vpack.c.b16 %v1175, %v1167
          %v1472 = vpack.c.b16 %v1176, %v1168
          %v1473 = vpack.c.b16 %v1177, %v1169
          %v1474 = vpack.c.b16 %v1178, %v1170
          %v1475 = vpack.c.b16 %v1179, %v1171
          %v1476 = vpack.c.b16 %v1188, %v1180
          %v1477 = vpack.c.b16 %v1189, %v1181
          %v1478 = vpack.c.b16 %v1190, %v1182
          %v1479 = vpack.c.b16 %v1191, %v1183
          %v1480 = vpack.c.b16 %v1192, %v1184
          %v1481 = vpack.c.b16 %v1193, %v1185
          %v1482 = vpack.c.b16 %v1194, %v1186
          %v1483 = vpack.c.b16 %v1195, %v1187
          %v1484 = vpack.c.b16 %v1204, %v1196
          %v1485 = vpack.c.b16 %v1205, %v1197
          %v1486 = vpack.c.b16 %v1206, %v1198
          %v1487 = vpack.c.b16 %v1207, %v1199
          %v1488 = vpack.c.b16 %v1208, %v1200
          %v1489 = vpack.c.b16 %v1209, %v1201
          %v1490 = vpack.c.b16 %v1210, %v1202
          %v1491 = vpack.c.b16 %v1211, %v1203
          %v1492 = vpack.c.b16 %v1220, %v1212
          %v1493 = vpack.c.b16 %v1221, %v1213
          %v1494 = vpack.c.b16 %v1222, %v1214
          %v1495 = vpack.c.b16 %v1223, %v1215
          %v1496 = vpack.c.b16 %v1224, %v1216
          %v1497 = vpack.c.b16 %v1225, %v1217
          %v1498 = vpack.c.b16 %v1226, %v1218
          %v1499 = vpack.c.b16 %v1227, %v1219
          %v1500 = vpack.c.b16 %v1236, %v1228
          %v1501 = vpack.c.b16 %v1237, %v1229
          %v1502 = vpack.c.b16 %v1238, %v1230
          %v1503 = vpack.c.b16 %v1239, %v1231
          %v1504 = vpack.c.b16 %v1240, %v1232
          %v1505 = vpack.c.b16 %v1241, %v1233
          %v1506 = vpack.c.b16 %v1242, %v1234
          %v1507 = vpack.c.b16 %v1243, %v1235
          %v1508 = vpack.c.b16 %v1252, %v1244
          %v1509 = vpack.c.b16 %v1253, %v1245
          %v1510 = vpack.c.b16 %v1254, %v1246
          %v1511 = vpack.c.b16 %v1255, %v1247
          %v1512 = vpack.c.b16 %v1256, %v1248
          %v1513 = vpack.c.b16 %v1257, %v1249
          %v1514 = vpack.c.b16 %v1258, %v1250
          %v1515 = vpack.c.b16 %v1259, %v1251
          %v1516 = vpack.c.b16 %v1268, %v1260
          %v1517 = vpack.c.b16 %v1269, %v1261
          %v1518 = vpack.c.b16 %v1270, %v1262
          %v1519 = vpack.c.b16 %v1271, %v1263
          %v1520 = vpack.c.b16 %v1272, %v1264
          %v1521 = vpack.c.b16 %v1273, %v1265
          %v1522 = vpack.c.b16 %v1274, %v1266
          %v1523 = vpack.c.b16 %v1275, %v1267
          %v1524 = vpack.c.b16 %v1284, %v1276
          %v1525 = vpack.c.b16 %v1285, %v1277
          %v1526 = vpack.c.b16 %v1286, %v1278
          %v1527 = vpack.c.b16 %v1287, %v1279
          %v1528 = vpack.c.b16 %v1288, %v1280
          %v1529 = vpack.c.b16 %v1289, %v1281
          %v1530 = vpack.c.b16 %v1290, %v1282
          %v1531 = vpack.c.b16 %v1291, %v1283
          %v1532 = vpack.c.b16 %v1300, %v1292
          %v1533 = vpack.c.b16 %v1301, %v1293
          %v1534 = vpack.c.b16 %v1302, %v1294
          %v1535 = vpack.c.b16 %v1303, %v1295
          %v1536 = vpack.c.b16 %v1304, %v1296
          %v1537 = vpack.c.b16 %v1305, %v1297
          %v1538 = vpack.c.b16 %v1306, %v1298
          %v1539 = vpack.c.b16 %v1307, %v1299
          %v1540 = vpack.c.b16 %v1316, %v1308
          %v1541 = vpack.c.b16 %v1317, %v1309
          %v1542 = vpack.c.b16 %v1318, %v1310
          %v1543 = vpack.c.b16 %v1319, %v1311
          %v1544 = vpack.c.b16 %v1320, %v1312
          %v1545 = vpack.c.b16 %v1321, %v1313
          %v1546 = vpack.c.b16 %v1322, %v1314
          %v1547 = vpack.c.b16 %v1323, %v1315
          %v1548 = vpack.c.b16 %v1332, %v1324
          %v1549 = vpack.c.b16 %v1333, %v1325
          %v1550 = vpack.c.b16 %v1334, %v1326
          %v1551 = vpack.c.b16 %v1335, %v1327
          %v1552 = vpack.c.b16 %v1336, %v1328
          %v1553 = vpack.c.b16 %v1337, %v1329
          %v1554 = vpack.c.b16 %v1338, %v1330
          %v1555 = vpack.c.b16 %v1339, %v1331
          %v1556 = vpack.c.b16 %v1348, %v1340
          %v1557 = vpack.c.b16 %v1349, %v1341
          %v1558 = vpack.c.b16 %v1350, %v1342
          %v1559 = vpack.c.b16 %v1351, %v1343
          %v1560 = vpack.c.b16 %v1352, %v1344
          %v1561 = vpack.c.b16 %v1353, %v1345
          %v1562 = vpack.c.b16 %v1354, %v1346
          %v1563 = vpack.c.b16 %v1355, %v1347
          %v1564 = vpack.c.b16 %v1364, %v1356
          %v1565 = vpack.c.b16 %v1365, %v1357
          %v1566 = vpack.c.b16 %v1366, %v1358
          %v1567 = vpack.c.b16 %v1367, %v1359
          %v1568 = vpack.c.b16 %v1368, %v1360
          %v1569 = vpack.c.b16 %v1369, %v1361
          %v1570 = vpack.c.b16 %v1370, %v1362
          %v1571 = vpack.c.b16 %v1371, %v1363
          %v1572 = vpack.c.b16 %v1380, %v1372
          %v1573 = vpack.c.b16 %v1381, %v1373
          %v1574 = vpack.c.b16 %v1382, %v1374
          %v1575 = vpack.c.b16 %v1383, %v1375
          %v1576 = vpack.c.b16 %v1384, %v1376
          %v1577 = vpack.c.b16 %v1385, %v1377
          %v1578 = vpack.c.b16 %v1386, %v1378
          %v1579 = vpack.c.b16 %v1387, %v1379
          %1772 = vmatprep.subr.bf16.mxu0 %v1389
          %1773 = vmatpush1.bf16.msra.mxu0 %v1388
          %1774 = vmatprep.subr.bf16.mxu0 %v1397
          %1775 = vmatpush1.bf16.msra.mxu0 %v1396
          %1776 = vmatprep.subr.bf16.mxu0 %v1405
          %1777 = vmatpush1.bf16.msra.mxu0 %v1404
          %1778 = vmatprep.subr.bf16.mxu0 %v1413
          %1779 = vmatpush1.bf16.msra.mxu0 %v1412
          %1780 = vmatprep.subr.bf16.mxu0 %v1421
          %1781 = vmatpush1.bf16.msra.mxu0 %v1420
          %1782 = vmatprep.subr.bf16.mxu0 %v1429
          %1783 = vmatpush1.bf16.msra.mxu0 %v1428
          %1784 = vmatprep.subr.bf16.mxu0 %v1437
          %1785 = vmatpush1.bf16.msra.mxu0 %v1436
          %1786 = vmatprep.subr.bf16.mxu0 %v1445
          %1787 = vmatpush1.bf16.msra.mxu0 %v1444
          %1788 = vmatprep.subr.bf16.mxu0 %v1453
          %1789 = vmatpush1.bf16.msra.mxu0 %v1452
          %1790 = vmatprep.subr.bf16.mxu0 %v1461
          %1791 = vmatpush1.bf16.msra.mxu0 %v1460
          %1792 = vmatprep.subr.bf16.mxu0 %v1469
          %1793 = vmatpush1.bf16.msra.mxu0 %v1468
          %1794 = vmatprep.subr.bf16.mxu0 %v1477
          %1795 = vmatpush1.bf16.msra.mxu0 %v1476
          %1796 = vmatprep.subr.bf16.mxu0 %v1485
          %1797 = vmatpush1.bf16.msra.mxu0 %v1484
          %1798 = vmatprep.subr.bf16.mxu0 %v1493
          %1799 = vmatpush1.bf16.msra.mxu0 %v1492
          %1800 = vmatprep.subr.bf16.mxu0 %v1501
          %1801 = vmatpush1.bf16.msra.mxu0 %v1500
          %1802 = vmatprep.subr.bf16.mxu0 %v1509
          %1803 = vmatpush1.bf16.msra.mxu0 %v1508
          %1804 = vmatprep.mubr.bf16.mxu0 %v771
          %1805 = vmatmul.mubr.bf16.gmra.mrb[0].mxu0 %v770
          %v1806 = vpop.f32.mrb[0].mxu0
          %v1807 = vadd.f32 %v663, %v1806
          %v1808 = vpop.f32.mrb[0].mxu0
          %v1809 = vadd.f32 %v667, %v1808
          %v1810 = vpop.f32.mrb[0].mxu0
          %v1811 = vadd.f32 %v663, %v1810
          %v1812 = vpop.f32.mrb[0].mxu0
          %v1813 = vadd.f32 %v667, %v1812
          %1814 = vmatprep.mubr.bf16.mxu0 %v774
          %1815 = vmatmul.mubr.bf16.gmra.mrb[0].mxu0 %v773
          %v1816 = vpop.f32.mrb[0].mxu0
          %v1817 = vadd.f32 %v663, %v1816
          %v1818 = vpop.f32.mrb[0].mxu0
          %v1819 = vadd.f32 %v667, %v1818
          %v1820 = vpop.f32.mrb[0].mxu0
          %v1821 = vadd.f32 %v663, %v1820
          %v1822 = vpop.f32.mrb[0].mxu0
          %v1823 = vadd.f32 %v667, %v1822
          %1824 = vmatprep.mubr.bf16.mxu0 %v777
          %1825 = vmatmul.mubr.bf16.gmra.mrb[0].mxu0 %v776
          %v1826 = vpop.f32.mrb[0].mxu0
          %v1827 = vadd.f32 %v663, %v1826
          %v1828 = vpop.f32.mrb[0].mxu0
          %v1829 = vadd.f32 %v667, %v1828
          %v1830 = vpop.f32.mrb[0].mxu0
          %v1831 = vadd.f32 %v663, %v1830
          %v1832 = vpop.f32.mrb[0].mxu0
          %v1833 = vadd.f32 %v667, %v1832
          %1834 = vmatprep.mubr.bf16.mxu0 %v780
          %1835 = vmatmul.mubr.bf16.gmra.mrb[0].mxu0 %v779
          %v1836 = vpop.f32.mrb[0].mxu0
          %v1837 = vadd.f32 %v663, %v1836
          %v1838 = vpop.f32.mrb[0].mxu0
          %v1839 = vadd.f32 %v667, %v1838
          %v1840 = vpop.f32.mrb[0].mxu0
          %v1841 = vadd.f32 %v663, %v1840
          %v1842 = vpop.f32.mrb[0].mxu0
          %v1843 = vadd.f32 %v667, %v1842
          %1844 = vmatprep.mubr.bf16.mxu0 %v783
          %1845 = vmatmul.mubr.bf16.gmra.mrb[0].mxu0 %v782
          %v1846 = vpop.f32.mrb[0].mxu0
          %v1847 = vadd.f32 %v663, %v1846
          %v1848 = vpop.f32.mrb[0].mxu0
          %v1849 = vadd.f32 %v667, %v1848
          %v1850 = vpop.f32.mrb[0].mxu0
          %v1851 = vadd.f32 %v663, %v1850
          %v1852 = vpop.f32.mrb[0].mxu0
          %v1853 = vadd.f32 %v667, %v1852
          %1854 = vmatprep.mubr.bf16.mxu0 %v786
          %1855 = vmatmul.mubr.bf16.gmra.mrb[0].mxu0 %v785
          %v1856 = vpop.f32.mrb[0].mxu0
          %v1857 = vadd.f32 %v663, %v1856
          %v1858 = vpop.f32.mrb[0].mxu0
          %v1859 = vadd.f32 %v667, %v1858
          %v1860 = vpop.f32.mrb[0].mxu0
          %v1861 = vadd.f32 %v663, %v1860
          %v1862 = vpop.f32.mrb[0].mxu0
          %v1863 = vadd.f32 %v667, %v1862
          %1864 = vmatprep.mubr.bf16.mxu0 %v789
          %1865 = vmatmul.mubr.bf16.gmra.mrb[0].mxu0 %v788
          %v1866 = vpop.f32.mrb[0].mxu0
          %v1867 = vadd.f32 %v663, %v1866
          %v1868 = vpop.f32.mrb[0].mxu0
          %v1869 = vadd.f32 %v667, %v1868
          %v1870 = vpop.f32.mrb[0].mxu0
          %v1871 = vadd.f32 %v663, %v1870
          %v1872 = vpop.f32.mrb[0].mxu0
          %v1873 = vadd.f32 %v667, %v1872
          %1874 = vdwg.mxu0
          %1875 = vmatprep.subr.bf16.mxu0 %v1517
          %1876 = vmatpush1.bf16.msra.mxu0 %v1516
          %1877 = vmatprep.subr.bf16.mxu0 %v1525
          %1878 = vmatpush1.bf16.msra.mxu0 %v1524
          %1879 = vmatprep.subr.bf16.mxu0 %v1533
          %1880 = vmatpush1.bf16.msra.mxu0 %v1532
          %1881 = vmatprep.subr.bf16.mxu0 %v1541
          %1882 = vmatpush1.bf16.msra.mxu0 %v1540
          %1883 = vmatprep.subr.bf16.mxu0 %v1549
          %1884 = vmatpush1.bf16.msra.mxu0 %v1548
          %1885 = vmatprep.subr.bf16.mxu0 %v1557
          %1886 = vmatpush1.bf16.msra.mxu0 %v1556
          %1887 = vmatprep.subr.bf16.mxu0 %v1565
          %1888 = vmatpush1.bf16.msra.mxu0 %v1564
          %1889 = vmatprep.subr.bf16.mxu0 %v1573
          %1890 = vmatpush1.bf16.msra.mxu0 %v1572
          %1891 = vmatprep.subr.bf16.mxu0 0
          %1892 = vmatpush1.bf16.msra.mxu0 0
          %1893 = vmatprep.subr.bf16.mxu0 0
          %1894 = vmatpush1.bf16.msra.mxu0 0
          %1895 = vmatprep.subr.bf16.mxu0 0
          %1896 = vmatpush1.bf16.msra.mxu0 0
          %1897 = vmatprep.subr.bf16.mxu0 0
          %1898 = vmatpush1.bf16.msra.mxu0 0
          %1899 = vmatprep.subr.bf16.mxu0 0
          %1900 = vmatpush1.bf16.msra.mxu0 0
          %1901 = vmatprep.subr.bf16.mxu0 0
          %1902 = vmatpush1.bf16.msra.mxu0 0
          %1903 = vmatprep.subr.bf16.mxu0 0
          %1904 = vmatpush1.bf16.msra.mxu0 0
          %1905 = vmatprep.subr.bf16.mxu0 0
          %1906 = vmatpush1.bf16.msra.mxu0 0
          %1907 = vmatprep.mubr.bf16.mxu0 0
          %1908 = vmatmul.mubr.bf16.gmra.mrb[0].mxu0 %v772
          %v1909 = vpop.f32.mrb[0].mxu0
          %v1910 = vadd.f32 %v1807, %v1909
          %v1911 = vpop.f32.mrb[0].mxu0
          %v1912 = vadd.f32 %v1809, %v1911
          %v1913 = vpop.f32.mrb[0].mxu0
          %v1914 = vadd.f32 %v1811, %v1913
          %v1915 = vpop.f32.mrb[0].mxu0
          %v1916 = vadd.f32 %v1813, %v1915
          %1917 = vmatprep.mubr.bf16.mxu0 0
          %1918 = vmatmul.mubr.bf16.gmra.mrb[0].mxu0 %v775
          %v1919 = vpop.f32.mrb[0].mxu0
          %v1920 = vadd.f32 %v1817, %v1919
          %v1921 = vpop.f32.mrb[0].mxu0
          %v1922 = vadd.f32 %v1819, %v1921
          %v1923 = vpop.f32.mrb[0].mxu0
          %v1924 = vadd.f32 %v1821, %v1923
          %v1925 = vpop.f32.mrb[0].mxu0
          %v1926 = vadd.f32 %v1823, %v1925
          %1927 = vmatprep.mubr.bf16.mxu0 0
          %1928 = vmatmul.mubr.bf16.gmra.mrb[0].mxu0 %v778
          %v1929 = vpop.f32.mrb[0].mxu0
          %v1930 = vadd.f32 %v1827, %v1929
          %v1931 = vpop.f32.mrb[0].mxu0
          %v1932 = vadd.f32 %v1829, %v1931
          %v1933 = vpop.f32.mrb[0].mxu0
          %v1934 = vadd.f32 %v1831, %v1933
          %v1935 = vpop.f32.mrb[0].mxu0
          %v1936 = vadd.f32 %v1833, %v1935
          %1937 = vmatprep.mubr.bf16.mxu0 0
          %1938 = vmatmul.mubr.bf16.gmra.mrb[0].mxu0 %v781
          %v1939 = vpop.f32.mrb[0].mxu0
          %v1940 = vadd.f32 %v1837, %v1939
          %v1941 = vpop.f32.mrb[0].mxu0
          %v1942 = vadd.f32 %v1839, %v1941
          %v1943 = vpop.f32.mrb[0].mxu0
          %v1944 = vadd.f32 %v1841, %v1943
          %v1945 = vpop.f32.mrb[0].mxu0
          %v1946 = vadd.f32 %v1843, %v1945
          %1947 = vmatprep.mubr.bf16.mxu0 0
          %1948 = vmatmul.mubr.bf16.gmra.mrb[0].mxu0 %v784
          %v1949 = vpop.f32.mrb[0].mxu0
          %v1950 = vadd.f32 %v1847, %v1949
          %v1951 = vpop.f32.mrb[0].mxu0
          %v1952 = vadd.f32 %v1849, %v1951
          %v1953 = vpop.f32.mrb[0].mxu0
          %v1954 = vadd.f32 %v1851, %v1953
          %v1955 = vpop.f32.mrb[0].mxu0
          %v1956 = vadd.f32 %v1853, %v1955
          %1957 = vmatprep.mubr.bf16.mxu0 0
          %1958 = vmatmul.mubr.bf16.gmra.mrb[0].mxu0 %v787
          %v1959 = vpop.f32.mrb[0].mxu0
          %v1960 = vadd.f32 %v1857, %v1959
          %v1961 = vpop.f32.mrb[0].mxu0
          %v1962 = vadd.f32 %v1859, %v1961
          %v1963 = vpop.f32.mrb[0].mxu0
          %v1964 = vadd.f32 %v1861, %v1963
          %v1965 = vpop.f32.mrb[0].mxu0
          %v1966 = vadd.f32 %v1863, %v1965
          %1967 = vmatprep.mubr.bf16.mxu0 0
          %1968 = vmatmul.mubr.bf16.gmra.mrb[0].mxu0 %v790
          %v1969 = vpop.f32.mrb[0].mxu0
          %v1970 = vadd.f32 %v1867, %v1969
          %v1971 = vpop.f32.mrb[0].mxu0
          %v1972 = vadd.f32 %v1869, %v1971
          %v1973 = vpop.f32.mrb[0].mxu0
          %v1974 = vadd.f32 %v1871, %v1973
          %v1975 = vpop.f32.mrb[0].mxu0
          %v1976 = vadd.f32 %v1873, %v1975
          %1977 = vdwg.mxu0
          %1978 = vmatprep.subr.bf16.mxu0 %v1391
          %1979 = vmatpush1.bf16.msra.mxu0 %v1390
          %1980 = vmatprep.subr.bf16.mxu0 %v1399
          %1981 = vmatpush1.bf16.msra.mxu0 %v1398
          %1982 = vmatprep.subr.bf16.mxu0 %v1407
          %1983 = vmatpush1.bf16.msra.mxu0 %v1406
          %1984 = vmatprep.subr.bf16.mxu0 %v1415
          %1985 = vmatpush1.bf16.msra.mxu0 %v1414
          %1986 = vmatprep.subr.bf16.mxu0 %v1423
          %1987 = vmatpush1.bf16.msra.mxu0 %v1422
          %1988 = vmatprep.subr.bf16.mxu0 %v1431
          %1989 = vmatpush1.bf16.msra.mxu0 %v1430
          %1990 = vmatprep.subr.bf16.mxu0 %v1439
          %1991 = vmatpush1.bf16.msra.mxu0 %v1438
          %1992 = vmatprep.subr.bf16.mxu0 %v1447
          %1993 = vmatpush1.bf16.msra.mxu0 %v1446
          %1994 = vmatprep.subr.bf16.mxu0 %v1455
          %1995 = vmatpush1.bf16.msra.mxu0 %v1454
          %1996 = vmatprep.subr.bf16.mxu0 %v1463
          %1997 = vmatpush1.bf16.msra.mxu0 %v1462
          %1998 = vmatprep.subr.bf16.mxu0 %v1471
          %1999 = vmatpush1.bf16.msra.mxu0 %v1470
          %2000 = vmatprep.subr.bf16.mxu0 %v1479
          %2001 = vmatpush1.bf16.msra.mxu0 %v1478
          %2002 = vmatprep.subr.bf16.mxu0 %v1487
          %2003 = vmatpush1.bf16.msra.mxu0 %v1486
          %2004 = vmatprep.subr.bf16.mxu0 %v1495
          %2005 = vmatpush1.bf16.msra.mxu0 %v1494
          %2006 = vmatprep.subr.bf16.mxu0 %v1503
          %2007 = vmatpush1.bf16.msra.mxu0 %v1502
          %2008 = vmatprep.subr.bf16.mxu0 %v1511
          %2009 = vmatpush1.bf16.msra.mxu0 %v1510
          %2010 = vmatprep.mubr.bf16.mxu0 %v771
          %2011 = vmatmul.mubr.bf16.gmra.mrb[0].mxu0 %v770
          %v2012 = vpop.f32.mrb[0].mxu0
          %v2013 = vadd.f32 %v671, %v2012
          %v2014 = vpop.f32.mrb[0].mxu0
          %v2015 = vadd.f32 %v675, %v2014
          %v2016 = vpop.f32.mrb[0].mxu0
          %v2017 = vadd.f32 %v671, %v2016
          %v2018 = vpop.f32.mrb[0].mxu0
          %v2019 = vadd.f32 %v675, %v2018
          %2020 = vmatprep.mubr.bf16.mxu0 %v774
          %2021 = vmatmul.mubr.bf16.gmra.mrb[0].mxu0 %v773
          %v2022 = vpop.f32.mrb[0].mxu0
          %v2023 = vadd.f32 %v671, %v2022
          %v2024 = vpop.f32.mrb[0].mxu0
          %v2025 = vadd.f32 %v675, %v2024
          %v2026 = vpop.f32.mrb[0].mxu0
          %v2027 = vadd.f32 %v671, %v2026
          %v2028 = vpop.f32.mrb[0].mxu0
          %v2029 = vadd.f32 %v675, %v2028
          %2030 = vmatprep.mubr.bf16.mxu0 %v777
          %2031 = vmatmul.mubr.bf16.gmra.mrb[0].mxu0 %v776
          %v2032 = vpop.f32.mrb[0].mxu0
          %v2033 = vadd.f32 %v671, %v2032
          %v2034 = vpop.f32.mrb[0].mxu0
          %v2035 = vadd.f32 %v675, %v2034
          %v2036 = vpop.f32.mrb[0].mxu0
          %v2037 = vadd.f32 %v671, %v2036
          %v2038 = vpop.f32.mrb[0].mxu0
          %v2039 = vadd.f32 %v675, %v2038
          %2040 = vmatprep.mubr.bf16.mxu0 %v780
          %2041 = vmatmul.mubr.bf16.gmra.mrb[0].mxu0 %v779
          %v2042 = vpop.f32.mrb[0].mxu0
          %v2043 = vadd.f32 %v671, %v2042
          %v2044 = vpop.f32.mrb[0].mxu0
          %v2045 = vadd.f32 %v675, %v2044
          %v2046 = vpop.f32.mrb[0].mxu0
          %v2047 = vadd.f32 %v671, %v2046
          %v2048 = vpop.f32.mrb[0].mxu0
          %v2049 = vadd.f32 %v675, %v2048
          %2050 = vmatprep.mubr.bf16.mxu0 %v783
          %2051 = vmatmul.mubr.bf16.gmra.mrb[0].mxu0 %v782
          %v2052 = vpop.f32.mrb[0].mxu0
          %v2053 = vadd.f32 %v671, %v2052
          %v2054 = vpop.f32.mrb[0].mxu0
          %v2055 = vadd.f32 %v675, %v2054
          %v2056 = vpop.f32.mrb[0].mxu0
          %v2057 = vadd.f32 %v671, %v2056
          %v2058 = vpop.f32.mrb[0].mxu0
          %v2059 = vadd.f32 %v675, %v2058
          %2060 = vmatprep.mubr.bf16.mxu0 %v786
          %2061 = vmatmul.mubr.bf16.gmra.mrb[0].mxu0 %v785
          %v2062 = vpop.f32.mrb[0].mxu0
          %v2063 = vadd.f32 %v671, %v2062
          %v2064 = vpop.f32.mrb[0].mxu0
          %v2065 = vadd.f32 %v675, %v2064
          %v2066 = vpop.f32.mrb[0].mxu0
          %v2067 = vadd.f32 %v671, %v2066
          %v2068 = vpop.f32.mrb[0].mxu0
          %v2069 = vadd.f32 %v675, %v2068
          %2070 = vmatprep.mubr.bf16.mxu0 %v789
          %2071 = vmatmul.mubr.bf16.gmra.mrb[0].mxu0 %v788
          %v2072 = vpop.f32.mrb[0].mxu0
          %v2073 = vadd.f32 %v671, %v2072
          %v2074 = vpop.f32.mrb[0].mxu0
          %v2075 = vadd.f32 %v675, %v2074
          %v2076 = vpop.f32.mrb[0].mxu0
          %v2077 = vadd.f32 %v671, %v2076
          %v2078 = vpop.f32.mrb[0].mxu0
          %v2079 = vadd.f32 %v675, %v2078
          %2080 = vdwg.mxu0
          %2081 = vmatprep.subr.bf16.mxu0 %v1519
          %2082 = vmatpush1.bf16.msra.mxu0 %v1518
          %2083 = vmatprep.subr.bf16.mxu0 %v1527
          %2084 = vmatpush1.bf16.msra.mxu0 %v1526
          %2085 = vmatprep.subr.bf16.mxu0 %v1535
          %2086 = vmatpush1.bf16.msra.mxu0 %v1534
          %2087 = vmatprep.subr.bf16.mxu0 %v1543
          %2088 = vmatpush1.bf16.msra.mxu0 %v1542
          %2089 = vmatprep.subr.bf16.mxu0 %v1551
          %2090 = vmatpush1.bf16.msra.mxu0 %v1550
          %2091 = vmatprep.subr.bf16.mxu0 %v1559
          %2092 = vmatpush1.bf16.msra.mxu0 %v1558
          %2093 = vmatprep.subr.bf16.mxu0 %v1567
          %2094 = vmatpush1.bf16.msra.mxu0 %v1566
          %2095 = vmatprep.subr.bf16.mxu0 %v1575
          %2096 = vmatpush1.bf16.msra.mxu0 %v1574
          %2097 = vmatprep.subr.bf16.mxu0 0
          %2098 = vmatpush1.bf16.msra.mxu0 0
          %2099 = vmatprep.subr.bf16.mxu0 0
          %2100 = vmatpush1.bf16.msra.mxu0 0
          %2101 = vmatprep.subr.bf16.mxu0 0
          %2102 = vmatpush1.bf16.msra.mxu0 0
          %2103 = vmatprep.subr.bf16.mxu0 0
          %2104 = vmatpush1.bf16.msra.mxu0 0
          %2105 = vmatprep.subr.bf16.mxu0 0
          %2106 = vmatpush1.bf16.msra.mxu0 0
          %2107 = vmatprep.subr.bf16.mxu0 0
          %2108 = vmatpush1.bf16.msra.mxu0 0
          %2109 = vmatprep.subr.bf16.mxu0 0
          %2110 = vmatpush1.bf16.msra.mxu0 0
          %2111 = vmatprep.subr.bf16.mxu0 0
          %2112 = vmatpush1.bf16.msra.mxu0 0
          %2113 = vmatprep.mubr.bf16.mxu0 0
          %2114 = vmatmul.mubr.bf16.gmra.mrb[0].mxu0 %v772
          %v2115 = vpop.f32.mrb[0].mxu0
          %v2116 = vadd.f32 %v2013, %v2115
          %v2117 = vpop.f32.mrb[0].mxu0
          %v2118 = vadd.f32 %v2015, %v2117
          %v2119 = vpop.f32.mrb[0].mxu0
          %v2120 = vadd.f32 %v2017, %v2119
          %v2121 = vpop.f32.mrb[0].mxu0
          %v2122 = vadd.f32 %v2019, %v2121
          %2123 = vmatprep.mubr.bf16.mxu0 0
          %2124 = vmatmul.mubr.bf16.gmra.mrb[0].mxu0 %v775
          %v2125 = vpop.f32.mrb[0].mxu0
          %v2126 = vadd.f32 %v2023, %v2125
          %v2127 = vpop.f32.mrb[0].mxu0
          %v2128 = vadd.f32 %v2025, %v2127
          %v2129 = vpop.f32.mrb[0].mxu0
          %v2130 = vadd.f32 %v2027, %v2129
          %v2131 = vpop.f32.mrb[0].mxu0
          %v2132 = vadd.f32 %v2029, %v2131
          %2133 = vmatprep.mubr.bf16.mxu0 0
          %2134 = vmatmul.mubr.bf16.gmra.mrb[0].mxu0 %v778
          %v2135 = vpop.f32.mrb[0].mxu0
          %v2136 = vadd.f32 %v2033, %v2135
          %v2137 = vpop.f32.mrb[0].mxu0
          %v2138 = vadd.f32 %v2035, %v2137
          %v2139 = vpop.f32.mrb[0].mxu0
          %v2140 = vadd.f32 %v2037, %v2139
          %v2141 = vpop.f32.mrb[0].mxu0
          %v2142 = vadd.f32 %v2039, %v2141
          %2143 = vmatprep.mubr.bf16.mxu0 0
          %2144 = vmatmul.mubr.bf16.gmra.mrb[0].mxu0 %v781
          %v2145 = vpop.f32.mrb[0].mxu0
          %v2146 = vadd.f32 %v2043, %v2145
          %v2147 = vpop.f32.mrb[0].mxu0
          %v2148 = vadd.f32 %v2045, %v2147
          %v2149 = vpop.f32.mrb[0].mxu0
          %v2150 = vadd.f32 %v2047, %v2149
          %v2151 = vpop.f32.mrb[0].mxu0
          %v2152 = vadd.f32 %v2049, %v2151
          %2153 = vmatprep.mubr.bf16.mxu0 0
          %2154 = vmatmul.mubr.bf16.gmra.mrb[0].mxu0 %v784
          %v2155 = vpop.f32.mrb[0].mxu0
          %v2156 = vadd.f32 %v2053, %v2155
          %v2157 = vpop.f32.mrb[0].mxu0
          %v2158 = vadd.f32 %v2055, %v2157
          %v2159 = vpop.f32.mrb[0].mxu0
          %v2160 = vadd.f32 %v2057, %v2159
          %v2161 = vpop.f32.mrb[0].mxu0
          %v2162 = vadd.f32 %v2059, %v2161
          %2163 = vmatprep.mubr.bf16.mxu0 0
          %2164 = vmatmul.mubr.bf16.gmra.mrb[0].mxu0 %v787
          %v2165 = vpop.f32.mrb[0].mxu0
          %v2166 = vadd.f32 %v2063, %v2165
          %v2167 = vpop.f32.mrb[0].mxu0
          %v2168 = vadd.f32 %v2065, %v2167
          %v2169 = vpop.f32.mrb[0].mxu0
          %v2170 = vadd.f32 %v2067, %v2169
          %v2171 = vpop.f32.mrb[0].mxu0
          %v2172 = vadd.f32 %v2069, %v2171
          %2173 = vmatprep.mubr.bf16.mxu0 0
          %2174 = vmatmul.mubr.bf16.gmra.mrb[0].mxu0 %v790
          %v2175 = vpop.f32.mrb[0].mxu0
          %v2176 = vadd.f32 %v2073, %v2175
          %v2177 = vpop.f32.mrb[0].mxu0
          %v2178 = vadd.f32 %v2075, %v2177
          %v2179 = vpop.f32.mrb[0].mxu0
          %v2180 = vadd.f32 %v2077, %v2179
          %v2181 = vpop.f32.mrb[0].mxu0
          %v2182 = vadd.f32 %v2079, %v2181
          %2183 = vdwg.mxu0
          %2184 = vmatprep.subr.bf16.mxu0 %v1393
          %2185 = vmatpush1.bf16.msra.mxu0 %v1392
          %2186 = vmatprep.subr.bf16.mxu0 %v1401
          %2187 = vmatpush1.bf16.msra.mxu0 %v1400
          %2188 = vmatprep.subr.bf16.mxu0 %v1409
          %2189 = vmatpush1.bf16.msra.mxu0 %v1408
          %2190 = vmatprep.subr.bf16.mxu0 %v1417
          %2191 = vmatpush1.bf16.msra.mxu0 %v1416
          %2192 = vmatprep.subr.bf16.mxu0 %v1425
          %2193 = vmatpush1.bf16.msra.mxu0 %v1424
          %2194 = vmatprep.subr.bf16.mxu0 %v1433
          %2195 = vmatpush1.bf16.msra.mxu0 %v1432
          %2196 = vmatprep.subr.bf16.mxu0 %v1441
          %2197 = vmatpush1.bf16.msra.mxu0 %v1440
          %2198 = vmatprep.subr.bf16.mxu0 %v1449
          %2199 = vmatpush1.bf16.msra.mxu0 %v1448
          %2200 = vmatprep.subr.bf16.mxu0 %v1457
          %2201 = vmatpush1.bf16.msra.mxu0 %v1456
          %2202 = vmatprep.subr.bf16.mxu0 %v1465
          %2203 = vmatpush1.bf16.msra.mxu0 %v1464
          %2204 = vmatprep.subr.bf16.mxu0 %v1473
          %2205 = vmatpush1.bf16.msra.mxu0 %v1472
          %2206 = vmatprep.subr.bf16.mxu0 %v1481
          %2207 = vmatpush1.bf16.msra.mxu0 %v1480
          %2208 = vmatprep.subr.bf16.mxu0 %v1489
          %2209 = vmatpush1.bf16.msra.mxu0 %v1488
          %2210 = vmatprep.subr.bf16.mxu0 %v1497
          %2211 = vmatpush1.bf16.msra.mxu0 %v1496
          %2212 = vmatprep.subr.bf16.mxu0 %v1505
          %2213 = vmatpush1.bf16.msra.mxu0 %v1504
          %2214 = vmatprep.subr.bf16.mxu0 %v1513
          %2215 = vmatpush1.bf16.msra.mxu0 %v1512
          %2216 = vmatprep.mubr.bf16.mxu0 %v771
          %2217 = vmatmul.mubr.bf16.gmra.mrb[0].mxu0 %v770
          %v2218 = vpop.f32.mrb[0].mxu0
          %v2219 = vadd.f32 %v679, %v2218
          %v2220 = vpop.f32.mrb[0].mxu0
          %v2221 = vadd.f32 %v683, %v2220
          %v2222 = vpop.f32.mrb[0].mxu0
          %v2223 = vadd.f32 %v679, %v2222
          %v2224 = vpop.f32.mrb[0].mxu0
          %v2225 = vadd.f32 %v683, %v2224
          %2226 = vmatprep.mubr.bf16.mxu0 %v774
          %2227 = vmatmul.mubr.bf16.gmra.mrb[0].mxu0 %v773
          %v2228 = vpop.f32.mrb[0].mxu0
          %v2229 = vadd.f32 %v679, %v2228
          %v2230 = vpop.f32.mrb[0].mxu0
          %v2231 = vadd.f32 %v683, %v2230
          %v2232 = vpop.f32.mrb[0].mxu0
          %v2233 = vadd.f32 %v679, %v2232
          %v2234 = vpop.f32.mrb[0].mxu0
          %v2235 = vadd.f32 %v683, %v2234
          %2236 = vmatprep.mubr.bf16.mxu0 %v777
          %2237 = vmatmul.mubr.bf16.gmra.mrb[0].mxu0 %v776
          %v2238 = vpop.f32.mrb[0].mxu0
          %v2239 = vadd.f32 %v679, %v2238
          %v2240 = vpop.f32.mrb[0].mxu0
          %v2241 = vadd.f32 %v683, %v2240
          %v2242 = vpop.f32.mrb[0].mxu0
          %v2243 = vadd.f32 %v679, %v2242
          %v2244 = vpop.f32.mrb[0].mxu0
          %v2245 = vadd.f32 %v683, %v2244
          %2246 = vmatprep.mubr.bf16.mxu0 %v780
          %2247 = vmatmul.mubr.bf16.gmra.mrb[0].mxu0 %v779
          %v2248 = vpop.f32.mrb[0].mxu0
          %v2249 = vadd.f32 %v679, %v2248
          %v2250 = vpop.f32.mrb[0].mxu0
          %v2251 = vadd.f32 %v683, %v2250
          %v2252 = vpop.f32.mrb[0].mxu0
          %v2253 = vadd.f32 %v679, %v2252
          %v2254 = vpop.f32.mrb[0].mxu0
          %v2255 = vadd.f32 %v683, %v2254
          %2256 = vmatprep.mubr.bf16.mxu0 %v783
          %2257 = vmatmul.mubr.bf16.gmra.mrb[0].mxu0 %v782
          %v2258 = vpop.f32.mrb[0].mxu0
          %v2259 = vadd.f32 %v679, %v2258
          %v2260 = vpop.f32.mrb[0].mxu0
          %v2261 = vadd.f32 %v683, %v2260
          %v2262 = vpop.f32.mrb[0].mxu0
          %v2263 = vadd.f32 %v679, %v2262
          %v2264 = vpop.f32.mrb[0].mxu0
          %v2265 = vadd.f32 %v683, %v2264
          %2266 = vmatprep.mubr.bf16.mxu0 %v786
          %2267 = vmatmul.mubr.bf16.gmra.mrb[0].mxu0 %v785
          %v2268 = vpop.f32.mrb[0].mxu0
          %v2269 = vadd.f32 %v679, %v2268
          %v2270 = vpop.f32.mrb[0].mxu0
          %v2271 = vadd.f32 %v683, %v2270
          %v2272 = vpop.f32.mrb[0].mxu0
          %v2273 = vadd.f32 %v679, %v2272
          %v2274 = vpop.f32.mrb[0].mxu0
          %v2275 = vadd.f32 %v683, %v2274
          %2276 = vmatprep.mubr.bf16.mxu0 %v789
          %2277 = vmatmul.mubr.bf16.gmra.mrb[0].mxu0 %v788
          %v2278 = vpop.f32.mrb[0].mxu0
          %v2279 = vadd.f32 %v679, %v2278
          %v2280 = vpop.f32.mrb[0].mxu0
          %v2281 = vadd.f32 %v683, %v2280
          %v2282 = vpop.f32.mrb[0].mxu0
          %v2283 = vadd.f32 %v679, %v2282
          %v2284 = vpop.f32.mrb[0].mxu0
          %v2285 = vadd.f32 %v683, %v2284
          %2286 = vdwg.mxu0
          %2287 = vmatprep.subr.bf16.mxu0 %v1521
          %2288 = vmatpush1.bf16.msra.mxu0 %v1520
          %2289 = vmatprep.subr.bf16.mxu0 %v1529
          %2290 = vmatpush1.bf16.msra.mxu0 %v1528
          %2291 = vmatprep.subr.bf16.mxu0 %v1537
          %2292 = vmatpush1.bf16.msra.mxu0 %v1536
          %2293 = vmatprep.subr.bf16.mxu0 %v1545
          %2294 = vmatpush1.bf16.msra.mxu0 %v1544
          %2295 = vmatprep.subr.bf16.mxu0 %v1553
          %2296 = vmatpush1.bf16.msra.mxu0 %v1552
          %2297 = vmatprep.subr.bf16.mxu0 %v1561
          %2298 = vmatpush1.bf16.msra.mxu0 %v1560
          %2299 = vmatprep.subr.bf16.mxu0 %v1569
          %2300 = vmatpush1.bf16.msra.mxu0 %v1568
          %2301 = vmatprep.subr.bf16.mxu0 %v1577
          %2302 = vmatpush1.bf16.msra.mxu0 %v1576
          %2303 = vmatprep.subr.bf16.mxu0 0
          %2304 = vmatpush1.bf16.msra.mxu0 0
          %2305 = vmatprep.subr.bf16.mxu0 0
          %2306 = vmatpush1.bf16.msra.mxu0 0
          %2307 = vmatprep.subr.bf16.mxu0 0
          %2308 = vmatpush1.bf16.msra.mxu0 0
          %2309 = vmatprep.subr.bf16.mxu0 0
          %2310 = vmatpush1.bf16.msra.mxu0 0
          %2311 = vmatprep.subr.bf16.mxu0 0
          %2312 = vmatpush1.bf16.msra.mxu0 0
          %2313 = vmatprep.subr.bf16.mxu0 0
          %2314 = vmatpush1.bf16.msra.mxu0 0
          %2315 = vmatprep.subr.bf16.mxu0 0
          %2316 = vmatpush1.bf16.msra.mxu0 0
          %2317 = vmatprep.subr.bf16.mxu0 0
          %2318 = vmatpush1.bf16.msra.mxu0 0
          %2319 = vmatprep.mubr.bf16.mxu0 0
          %2320 = vmatmul.mubr.bf16.gmra.mrb[0].mxu0 %v772
          %v2321 = vpop.f32.mrb[0].mxu0
          %v2322 = vadd.f32 %v2219, %v2321
          %v2323 = vpop.f32.mrb[0].mxu0
          %v2324 = vadd.f32 %v2221, %v2323
          %v2325 = vpop.f32.mrb[0].mxu0
          %v2326 = vadd.f32 %v2223, %v2325
          %v2327 = vpop.f32.mrb[0].mxu0
          %v2328 = vadd.f32 %v2225, %v2327
          %2329 = vmatprep.mubr.bf16.mxu0 0
          %2330 = vmatmul.mubr.bf16.gmra.mrb[0].mxu0 %v775
          %v2331 = vpop.f32.mrb[0].mxu0
          %v2332 = vadd.f32 %v2229, %v2331
          %v2333 = vpop.f32.mrb[0].mxu0
          %v2334 = vadd.f32 %v2231, %v2333
          %v2335 = vpop.f32.mrb[0].mxu0
          %v2336 = vadd.f32 %v2233, %v2335
          %v2337 = vpop.f32.mrb[0].mxu0
          %v2338 = vadd.f32 %v2235, %v2337
          %2339 = vmatprep.mubr.bf16.mxu0 0
          %2340 = vmatmul.mubr.bf16.gmra.mrb[0].mxu0 %v778
          %v2341 = vpop.f32.mrb[0].mxu0
          %v2342 = vadd.f32 %v2239, %v2341
          %v2343 = vpop.f32.mrb[0].mxu0
          %v2344 = vadd.f32 %v2241, %v2343
          %v2345 = vpop.f32.mrb[0].mxu0
          %v2346 = vadd.f32 %v2243, %v2345
          %v2347 = vpop.f32.mrb[0].mxu0
          %v2348 = vadd.f32 %v2245, %v2347
          %2349 = vmatprep.mubr.bf16.mxu0 0
          %2350 = vmatmul.mubr.bf16.gmra.mrb[0].mxu0 %v781
          %v2351 = vpop.f32.mrb[0].mxu0
          %v2352 = vadd.f32 %v2249, %v2351
          %v2353 = vpop.f32.mrb[0].mxu0
          %v2354 = vadd.f32 %v2251, %v2353
          %v2355 = vpop.f32.mrb[0].mxu0
          %v2356 = vadd.f32 %v2253, %v2355
          %v2357 = vpop.f32.mrb[0].mxu0
          %v2358 = vadd.f32 %v2255, %v2357
          %2359 = vmatprep.mubr.bf16.mxu0 0
          %2360 = vmatmul.mubr.bf16.gmra.mrb[0].mxu0 %v784
          %v2361 = vpop.f32.mrb[0].mxu0
          %v2362 = vadd.f32 %v2259, %v2361
          %v2363 = vpop.f32.mrb[0].mxu0
          %v2364 = vadd.f32 %v2261, %v2363
          %v2365 = vpop.f32.mrb[0].mxu0
          %v2366 = vadd.f32 %v2263, %v2365
          %v2367 = vpop.f32.mrb[0].mxu0
          %v2368 = vadd.f32 %v2265, %v2367
          %2369 = vmatprep.mubr.bf16.mxu0 0
          %2370 = vmatmul.mubr.bf16.gmra.mrb[0].mxu0 %v787
          %v2371 = vpop.f32.mrb[0].mxu0
          %v2372 = vadd.f32 %v2269, %v2371
          %v2373 = vpop.f32.mrb[0].mxu0
          %v2374 = vadd.f32 %v2271, %v2373
          %v2375 = vpop.f32.mrb[0].mxu0
          %v2376 = vadd.f32 %v2273, %v2375
          %v2377 = vpop.f32.mrb[0].mxu0
          %v2378 = vadd.f32 %v2275, %v2377
          %2379 = vmatprep.mubr.bf16.mxu0 0
          %2380 = vmatmul.mubr.bf16.gmra.mrb[0].mxu0 %v790
          %v2381 = vpop.f32.mrb[0].mxu0
          %v2382 = vadd.f32 %v2279, %v2381
          %v2383 = vpop.f32.mrb[0].mxu0
          %v2384 = vadd.f32 %v2281, %v2383
          %v2385 = vpop.f32.mrb[0].mxu0
          %v2386 = vadd.f32 %v2283, %v2385
          %v2387 = vpop.f32.mrb[0].mxu0
          %v2388 = vadd.f32 %v2285, %v2387
          %2389 = vdwg.mxu0
          %2390 = vmatprep.subr.bf16.mxu0 %v1395
          %2391 = vmatpush1.bf16.msra.mxu0 %v1394
          %2392 = vmatprep.subr.bf16.mxu0 %v1403
          %2393 = vmatpush1.bf16.msra.mxu0 %v1402
          %2394 = vmatprep.subr.bf16.mxu0 %v1411
          %2395 = vmatpush1.bf16.msra.mxu0 %v1410
          %2396 = vmatprep.subr.bf16.mxu0 %v1419
          %2397 = vmatpush1.bf16.msra.mxu0 %v1418
          %2398 = vmatprep.subr.bf16.mxu0 %v1427
          %2399 = vmatpush1.bf16.msra.mxu0 %v1426
          %2400 = vmatprep.subr.bf16.mxu0 %v1435
          %2401 = vmatpush1.bf16.msra.mxu0 %v1434
          %2402 = vmatprep.subr.bf16.mxu0 %v1443
          %2403 = vmatpush1.bf16.msra.mxu0 %v1442
          %2404 = vmatprep.subr.bf16.mxu0 %v1451
          %2405 = vmatpush1.bf16.msra.mxu0 %v1450
          %2406 = vmatprep.subr.bf16.mxu0 %v1459
          %2407 = vmatpush1.bf16.msra.mxu0 %v1458
          %2408 = vmatprep.subr.bf16.mxu0 %v1467
          %2409 = vmatpush1.bf16.msra.mxu0 %v1466
          %2410 = vmatprep.subr.bf16.mxu0 %v1475
          %2411 = vmatpush1.bf16.msra.mxu0 %v1474
          %2412 = vmatprep.subr.bf16.mxu0 %v1483
          %2413 = vmatpush1.bf16.msra.mxu0 %v1482
          %2414 = vmatprep.subr.bf16.mxu0 %v1491
          %2415 = vmatpush1.bf16.msra.mxu0 %v1490
          %2416 = vmatprep.subr.bf16.mxu0 %v1499
          %2417 = vmatpush1.bf16.msra.mxu0 %v1498
          %2418 = vmatprep.subr.bf16.mxu0 %v1507
          %2419 = vmatpush1.bf16.msra.mxu0 %v1506
          %2420 = vmatprep.subr.bf16.mxu0 %v1515
          %2421 = vmatpush1.bf16.msra.mxu0 %v1514
          %2422 = vmatprep.mubr.bf16.mxu0 %v771
          %2423 = vmatmul.mubr.bf16.gmra.mrb[0].mxu0 %v770
          %v2424 = vpop.f32.mrb[0].mxu0
          %v2425 = vadd.f32 %v687, %v2424
          %v2426 = vpop.f32.mrb[0].mxu0
          %v2427 = vadd.f32 %v691, %v2426
          %v2428 = vpop.f32.mrb[0].mxu0
          %v2429 = vadd.f32 %v687, %v2428
          %v2430 = vpop.f32.mrb[0].mxu0
          %v2431 = vadd.f32 %v691, %v2430
          %2432 = vmatprep.mubr.bf16.mxu0 %v774
          %2433 = vmatmul.mubr.bf16.gmra.mrb[0].mxu0 %v773
          %v2434 = vpop.f32.mrb[0].mxu0
          %v2435 = vadd.f32 %v687, %v2434
          %v2436 = vpop.f32.mrb[0].mxu0
          %v2437 = vadd.f32 %v691, %v2436
          %v2438 = vpop.f32.mrb[0].mxu0
          %v2439 = vadd.f32 %v687, %v2438
          %v2440 = vpop.f32.mrb[0].mxu0
          %v2441 = vadd.f32 %v691, %v2440
          %2442 = vmatprep.mubr.bf16.mxu0 %v777
          %2443 = vmatmul.mubr.bf16.gmra.mrb[0].mxu0 %v776
          %v2444 = vpop.f32.mrb[0].mxu0
          %v2445 = vadd.f32 %v687, %v2444
          %v2446 = vpop.f32.mrb[0].mxu0
          %v2447 = vadd.f32 %v691, %v2446
          %v2448 = vpop.f32.mrb[0].mxu0
          %v2449 = vadd.f32 %v687, %v2448
          %v2450 = vpop.f32.mrb[0].mxu0
          %v2451 = vadd.f32 %v691, %v2450
          %2452 = vmatprep.mubr.bf16.mxu0 %v780
          %2453 = vmatmul.mubr.bf16.gmra.mrb[0].mxu0 %v779
          %v2454 = vpop.f32.mrb[0].mxu0
          %v2455 = vadd.f32 %v687, %v2454
          %v2456 = vpop.f32.mrb[0].mxu0
          %v2457 = vadd.f32 %v691, %v2456
          %v2458 = vpop.f32.mrb[0].mxu0
          %v2459 = vadd.f32 %v687, %v2458
          %v2460 = vpop.f32.mrb[0].mxu0
          %v2461 = vadd.f32 %v691, %v2460
          %2462 = vmatprep.mubr.bf16.mxu0 %v783
          %2463 = vmatmul.mubr.bf16.gmra.mrb[0].mxu0 %v782
          %v2464 = vpop.f32.mrb[0].mxu0
          %v2465 = vadd.f32 %v687, %v2464
          %v2466 = vpop.f32.mrb[0].mxu0
          %v2467 = vadd.f32 %v691, %v2466
          %v2468 = vpop.f32.mrb[0].mxu0
          %v2469 = vadd.f32 %v687, %v2468
          %v2470 = vpop.f32.mrb[0].mxu0
          %v2471 = vadd.f32 %v691, %v2470
          %2472 = vmatprep.mubr.bf16.mxu0 %v786
          %2473 = vmatmul.mubr.bf16.gmra.mrb[0].mxu0 %v785
          %v2474 = vpop.f32.mrb[0].mxu0
          %v2475 = vadd.f32 %v687, %v2474
          %v2476 = vpop.f32.mrb[0].mxu0
          %v2477 = vadd.f32 %v691, %v2476
          %v2478 = vpop.f32.mrb[0].mxu0
          %v2479 = vadd.f32 %v687, %v2478
          %v2480 = vpop.f32.mrb[0].mxu0
          %v2481 = vadd.f32 %v691, %v2480
          %2482 = vmatprep.mubr.bf16.mxu0 %v789
          %2483 = vmatmul.mubr.bf16.gmra.mrb[0].mxu0 %v788
          %v2484 = vpop.f32.mrb[0].mxu0
          %v2485 = vadd.f32 %v687, %v2484
          %v2486 = vpop.f32.mrb[0].mxu0
          %v2487 = vadd.f32 %v691, %v2486
          %v2488 = vpop.f32.mrb[0].mxu0
          %v2489 = vadd.f32 %v687, %v2488
          %v2490 = vpop.f32.mrb[0].mxu0
          %v2491 = vadd.f32 %v691, %v2490
          %2492 = vdwg.mxu0
          %2493 = vmatprep.subr.bf16.mxu0 %v1523
          %2494 = vmatpush1.bf16.msra.mxu0 %v1522
          %2495 = vmatprep.subr.bf16.mxu0 %v1531
          %2496 = vmatpush1.bf16.msra.mxu0 %v1530
          %2497 = vmatprep.subr.bf16.mxu0 %v1539
          %2498 = vmatpush1.bf16.msra.mxu0 %v1538
          %2499 = vmatprep.subr.bf16.mxu0 %v1547
          %2500 = vmatpush1.bf16.msra.mxu0 %v1546
          %2501 = vmatprep.subr.bf16.mxu0 %v1555
          %2502 = vmatpush1.bf16.msra.mxu0 %v1554
          %2503 = vmatprep.subr.bf16.mxu0 %v1563
          %2504 = vmatpush1.bf16.msra.mxu0 %v1562
          %2505 = vmatprep.subr.bf16.mxu0 %v1571
          %2506 = vmatpush1.bf16.msra.mxu0 %v1570
          %2507 = vmatprep.subr.bf16.mxu0 %v1579
          %2508 = vmatpush1.bf16.msra.mxu0 %v1578
          %2509 = vmatprep.subr.bf16.mxu0 0
          %2510 = vmatpush1.bf16.msra.mxu0 0
          %2511 = vmatprep.subr.bf16.mxu0 0
          %2512 = vmatpush1.bf16.msra.mxu0 0
          %2513 = vmatprep.subr.bf16.mxu0 0
          %2514 = vmatpush1.bf16.msra.mxu0 0
          %2515 = vmatprep.subr.bf16.mxu0 0
          %2516 = vmatpush1.bf16.msra.mxu0 0
          %2517 = vmatprep.subr.bf16.mxu0 0
          %2518 = vmatpush1.bf16.msra.mxu0 0
          %2519 = vmatprep.subr.bf16.mxu0 0
          %2520 = vmatpush1.bf16.msra.mxu0 0
          %2521 = vmatprep.subr.bf16.mxu0 0
          %2522 = vmatpush1.bf16.msra.mxu0 0
          %2523 = vmatprep.subr.bf16.mxu0 0
          %2524 = vmatpush1.bf16.msra.mxu0 0
          %2525 = vmatprep.mubr.bf16.mxu0 0
          %2526 = vmatmul.mubr.bf16.gmra.mrb[0].mxu0 %v772
          %v2527 = vpop.f32.mrb[0].mxu0
          %v2528 = vadd.f32 %v2425, %v2527
          %v2529 = vpop.f32.mrb[0].mxu0
          %v2530 = vadd.f32 %v2427, %v2529
          %v2531 = vpop.f32.mrb[0].mxu0
          %v2532 = vadd.f32 %v2429, %v2531
          %v2533 = vpop.f32.mrb[0].mxu0
          %v2534 = vadd.f32 %v2431, %v2533
          %2535 = vmatprep.mubr.bf16.mxu0 0
          %2536 = vmatmul.mubr.bf16.gmra.mrb[0].mxu0 %v775
          %v2537 = vpop.f32.mrb[0].mxu0
          %v2538 = vadd.f32 %v2435, %v2537
          %v2539 = vpop.f32.mrb[0].mxu0
          %v2540 = vadd.f32 %v2437, %v2539
          %v2541 = vpop.f32.mrb[0].mxu0
          %v2542 = vadd.f32 %v2439, %v2541
          %v2543 = vpop.f32.mrb[0].mxu0
          %v2544 = vadd.f32 %v2441, %v2543
          %2545 = vmatprep.mubr.bf16.mxu0 0
          %2546 = vmatmul.mubr.bf16.gmra.mrb[0].mxu0 %v778
          %v2547 = vpop.f32.mrb[0].mxu0
          %v2548 = vadd.f32 %v2445, %v2547
          %v2549 = vpop.f32.mrb[0].mxu0
          %v2550 = vadd.f32 %v2447, %v2549
          %v2551 = vpop.f32.mrb[0].mxu0
          %v2552 = vadd.f32 %v2449, %v2551
          %v2553 = vpop.f32.mrb[0].mxu0
          %v2554 = vadd.f32 %v2451, %v2553
          %2555 = vmatprep.mubr.bf16.mxu0 0
          %2556 = vmatmul.mubr.bf16.gmra.mrb[0].mxu0 %v781
          %v2557 = vpop.f32.mrb[0].mxu0
          %v2558 = vadd.f32 %v2455, %v2557
          %v2559 = vpop.f32.mrb[0].mxu0
          %v2560 = vadd.f32 %v2457, %v2559
          %v2561 = vpop.f32.mrb[0].mxu0
          %v2562 = vadd.f32 %v2459, %v2561
          %v2563 = vpop.f32.mrb[0].mxu0
          %v2564 = vadd.f32 %v2461, %v2563
          %2565 = vmatprep.mubr.bf16.mxu0 0
          %2566 = vmatmul.mubr.bf16.gmra.mrb[0].mxu0 %v784
          %v2567 = vpop.f32.mrb[0].mxu0
          %v2568 = vadd.f32 %v2465, %v2567
          %v2569 = vpop.f32.mrb[0].mxu0
          %v2570 = vadd.f32 %v2467, %v2569
          %v2571 = vpop.f32.mrb[0].mxu0
          %v2572 = vadd.f32 %v2469, %v2571
          %v2573 = vpop.f32.mrb[0].mxu0
          %v2574 = vadd.f32 %v2471, %v2573
          %2575 = vmatprep.mubr.bf16.mxu0 0
          %2576 = vmatmul.mubr.bf16.gmra.mrb[0].mxu0 %v787
          %v2577 = vpop.f32.mrb[0].mxu0
          %v2578 = vadd.f32 %v2475, %v2577
          %v2579 = vpop.f32.mrb[0].mxu0
          %v2580 = vadd.f32 %v2477, %v2579
          %v2581 = vpop.f32.mrb[0].mxu0
          %v2582 = vadd.f32 %v2479, %v2581
          %v2583 = vpop.f32.mrb[0].mxu0
          %v2584 = vadd.f32 %v2481, %v2583
          %2585 = vmatprep.mubr.bf16.mxu0 0
          %2586 = vmatmul.mubr.bf16.gmra.mrb[0].mxu0 %v790
          %v2587 = vpop.f32.mrb[0].mxu0
          %v2588 = vadd.f32 %v2485, %v2587
          %v2589 = vpop.f32.mrb[0].mxu0
          %v2590 = vadd.f32 %v2487, %v2589
          %v2591 = vpop.f32.mrb[0].mxu0
          %v2592 = vadd.f32 %v2489, %v2591
          %v2593 = vpop.f32.mrb[0].mxu0
          %v2594 = vadd.f32 %v2491, %v2593
          %2595 = vdwg.mxu0
          %2596 = vst [vmem:[#allocation2] sm:$0xff] %v1910
          %2597 = vst [vmem:[#allocation2 + $0x8] sm:$0xff] %v1912
          %2598 = vst [vmem:[#allocation2 + $0x10] sm:$0xff] %v2116
          %2599 = vst [vmem:[#allocation2 + $0x18] sm:$0xff] %v2118
          %2600 = vst [vmem:[#allocation2 + $0x20] sm:$0xff] %v2322
          %2601 = vst [vmem:[#allocation2 + $0x28] sm:$0xff] %v2324
          %2602 = vst [vmem:[#allocation2 + $0x30] sm:$0xff] %v2528
          %2603 = vst [vmem:[#allocation2 + $0x38] sm:$0xff] %v2530
          %2604 = vst [vmem:[#allocation2 + $0x40] sm:$0xff] %v1914
          %2605 = vst [vmem:[#allocation2 + $0x48] sm:$0xff] %v1916
          %2606 = vst [vmem:[#allocation2 + $0x50] sm:$0xff] %v2120
          %2607 = vst [vmem:[#allocation2 + $0x58] sm:$0xff] %v2122
          %2608 = vst [vmem:[#allocation2 + $0x60] sm:$0xff] %v2326
          %2609 = vst [vmem:[#allocation2 + $0x68] sm:$0xff] %v2328
          %2610 = vst [vmem:[#allocation2 + $0x70] sm:$0xff] %v2532
          %2611 = vst [vmem:[#allocation2 + $0x78] sm:$0xff] %v2534
          %2612 = vst [vmem:[#allocation2 + $0x80] sm:$0xff] %v1920
          %2613 = vst [vmem:[#allocation2 + $0x88] sm:$0xff] %v1922
          %2614 = vst [vmem:[#allocation2 + $0x90] sm:$0xff] %v2126
          %2615 = vst [vmem:[#allocation2 + $0x98] sm:$0xff] %v2128
          %2616 = vst [vmem:[#allocation2 + $0xa0] sm:$0xff] %v2332
          %2617 = vst [vmem:[#allocation2 + $0xa8] sm:$0xff] %v2334
          %2618 = vst [vmem:[#allocation2 + $0xb0] sm:$0xff] %v2538
          %2619 = vst [vmem:[#allocation2 + $0xb8] sm:$0xff] %v2540
          %2620 = vst [vmem:[#allocation2 + $0xc0] sm:$0xff] %v1924
          %2621 = vst [vmem:[#allocation2 + $0xc8] sm:$0xff] %v1926
          %2622 = vst [vmem:[#allocation2 + $0xd0] sm:$0xff] %v2130
          %2623 = vst [vmem:[#allocation2 + $0xd8] sm:$0xff] %v2132
          %2624 = vst [vmem:[#allocation2 + $0xe0] sm:$0xff] %v2336
          %2625 = vst [vmem:[#allocation2 + $0xe8] sm:$0xff] %v2338
          %2626 = vst [vmem:[#allocation2 + $0xf0] sm:$0xff] %v2542
          %2627 = vst [vmem:[#allocation2 + $0xf8] sm:$0xff] %v2544
          %2628 = vst [vmem:[#allocation2 + $0x100] sm:$0xff] %v1930
          %2629 = vst [vmem:[#allocation2 + $0x108] sm:$0xff] %v1932
          %2630 = vst [vmem:[#allocation2 + $0x110] sm:$0xff] %v2136
          %2631 = vst [vmem:[#allocation2 + $0x118] sm:$0xff] %v2138
          %2632 = vst [vmem:[#allocation2 + $0x120] sm:$0xff] %v2342
          %2633 = vst [vmem:[#allocation2 + $0x128] sm:$0xff] %v2344
          %2634 = vst [vmem:[#allocation2 + $0x130] sm:$0xff] %v2548
          %2635 = vst [vmem:[#allocation2 + $0x138] sm:$0xff] %v2550
          %2636 = vst [vmem:[#allocation2 + $0x140] sm:$0xff] %v1934
          %2637 = vst [vmem:[#allocation2 + $0x148] sm:$0xff] %v1936
          %2638 = vst [vmem:[#allocation2 + $0x150] sm:$0xff] %v2140
          %2639 = vst [vmem:[#allocation2 + $0x158] sm:$0xff] %v2142
          %2640 = vst [vmem:[#allocation2 + $0x160] sm:$0xff] %v2346
          %2641 = vst [vmem:[#allocation2 + $0x168] sm:$0xff] %v2348
          %2642 = vst [vmem:[#allocation2 + $0x170] sm:$0xff] %v2552
          %2643 = vst [vmem:[#allocation2 + $0x178] sm:$0xff] %v2554
          %2644 = vst [vmem:[#allocation2 + $0x180] sm:$0xff] %v1940
          %2645 = vst [vmem:[#allocation2 + $0x188] sm:$0xff] %v1942
          %2646 = vst [vmem:[#allocation2 + $0x190] sm:$0xff] %v2146
          %2647 = vst [vmem:[#allocation2 + $0x198] sm:$0xff] %v2148
          %2648 = vst [vmem:[#allocation2 + $0x1a0] sm:$0xff] %v2352
          %2649 = vst [vmem:[#allocation2 + $0x1a8] sm:$0xff] %v2354
          %2650 = vst [vmem:[#allocation2 + $0x1b0] sm:$0xff] %v2558
          %2651 = vst [vmem:[#allocation2 + $0x1b8] sm:$0xff] %v2560
          %2652 = vst [vmem:[#allocation2 + $0x1c0] sm:$0xff] %v1944
          %2653 = vst [vmem:[#allocation2 + $0x1c8] sm:$0xff] %v1946
          %2654 = vst [vmem:[#allocation2 + $0x1d0] sm:$0xff] %v2150
          %2655 = vst [vmem:[#allocation2 + $0x1d8] sm:$0xff] %v2152
          %2656 = vst [vmem:[#allocation2 + $0x1e0] sm:$0xff] %v2356
          %2657 = vst [vmem:[#allocation2 + $0x1e8] sm:$0xff] %v2358
          %2658 = vst [vmem:[#allocation2 + $0x1f0] sm:$0xff] %v2562
          %2659 = vst [vmem:[#allocation2 + $0x1f8] sm:$0xff] %v2564
          %2660 = vst [vmem:[#allocation2 + $0x200] sm:$0xff] %v1950
          %2661 = vst [vmem:[#allocation2 + $0x208] sm:$0xff] %v1952
          %2662 = vst [vmem:[#allocation2 + $0x210] sm:$0xff] %v2156
          %2663 = vst [vmem:[#allocation2 + $0x218] sm:$0xff] %v2158
          %2664 = vst [vmem:[#allocation2 + $0x220] sm:$0xff] %v2362
          %2665 = vst [vmem:[#allocation2 + $0x228] sm:$0xff] %v2364
          %2666 = vst [vmem:[#allocation2 + $0x230] sm:$0xff] %v2568
          %2667 = vst [vmem:[#allocation2 + $0x238] sm:$0xff] %v2570
          %2668 = vst [vmem:[#allocation2 + $0x240] sm:$0xff] %v1954
          %2669 = vst [vmem:[#allocation2 + $0x248] sm:$0xff] %v1956
          %2670 = vst [vmem:[#allocation2 + $0x250] sm:$0xff] %v2160
          %2671 = vst [vmem:[#allocation2 + $0x258] sm:$0xff] %v2162
          %2672 = vst [vmem:[#allocation2 + $0x260] sm:$0xff] %v2366
          %2673 = vst [vmem:[#allocation2 + $0x268] sm:$0xff] %v2368
          %2674 = vst [vmem:[#allocation2 + $0x270] sm:$0xff] %v2572
          %2675 = vst [vmem:[#allocation2 + $0x278] sm:$0xff] %v2574
          %2676 = vst [vmem:[#allocation2 + $0x280] sm:$0xff] %v1960
          %2677 = vst [vmem:[#allocation2 + $0x288] sm:$0xff] %v1962
          %2678 = vst [vmem:[#allocation2 + $0x290] sm:$0xff] %v2166
          %2679 = vst [vmem:[#allocation2 + $0x298] sm:$0xff] %v2168
          %2680 = vst [vmem:[#allocation2 + $0x2a0] sm:$0xff] %v2372
          %2681 = vst [vmem:[#allocation2 + $0x2a8] sm:$0xff] %v2374
          %2682 = vst [vmem:[#allocation2 + $0x2b0] sm:$0xff] %v2578
          %2683 = vst [vmem:[#allocation2 + $0x2b8] sm:$0xff] %v2580
          %2684 = vst [vmem:[#allocation2 + $0x2c0] sm:$0xff] %v1964
          %2685 = vst [vmem:[#allocation2 + $0x2c8] sm:$0xff] %v1966
          %2686 = vst [vmem:[#allocation2 + $0x2d0] sm:$0xff] %v2170
          %2687 = vst [vmem:[#allocation2 + $0x2d8] sm:$0xff] %v2172
          %2688 = vst [vmem:[#allocation2 + $0x2e0] sm:$0xff] %v2376
          %2689 = vst [vmem:[#allocation2 + $0x2e8] sm:$0xff] %v2378
          %2690 = vst [vmem:[#allocation2 + $0x2f0] sm:$0xff] %v2582
          %2691 = vst [vmem:[#allocation2 + $0x2f8] sm:$0xff] %v2584
          %2692 = vst [vmem:[#allocation2 + $0x300] sm:$0xff] %v1970
          %2693 = vst [vmem:[#allocation2 + $0x308] sm:$0xff] %v1972
          %2694 = vst [vmem:[#allocation2 + $0x310] sm:$0xff] %v2176
          %2695 = vst [vmem:[#allocation2 + $0x318] sm:$0xff] %v2178
          %2696 = vst [vmem:[#allocation2 + $0x320] sm:$0xff] %v2382
          %2697 = vst [vmem:[#allocation2 + $0x328] sm:$0xff] %v2384
          %2698 = vst [vmem:[#allocation2 + $0x330] sm:$0xff] %v2588
          %2699 = vst [vmem:[#allocation2 + $0x338] sm:$0xff] %v2590
          %2700 = vst [vmem:[#allocation2 + $0x340] sm:$0xff] %v1974
          %2701 = vst [vmem:[#allocation2 + $0x348] sm:$0xff] %v1976
          %2702 = vst [vmem:[#allocation2 + $0x350] sm:$0xff] %v2180
          %2703 = vst [vmem:[#allocation2 + $0x358] sm:$0xff] %v2182
          %2704 = vst [vmem:[#allocation2 + $0x360] sm:$0xff] %v2386
          %2705 = vst [vmem:[#allocation2 + $0x368] sm:$0xff] %v2388
          %2706 = vst [vmem:[#allocation2 + $0x370] sm:$0xff] %v2592
          %2707 = vst [vmem:[#allocation2 + $0x378] sm:$0xff] %v2594
          %2708 = vst [vmem:[#allocation3] sm:$0xff] %v1910
          %2709 = vst [vmem:[#allocation3 + $0x8] sm:$0xff] %v1912
          %2710 = vst [vmem:[#allocation3 + $0x10] sm:$0xff] %v2116
          %2711 = vst [vmem:[#allocation3 + $0x18] sm:$0xff] %v2118
          %2712 = vst [vmem:[#allocation3 + $0x20] sm:$0xff] %v2322
          %2713 = vst [vmem:[#allocation3 + $0x28] sm:$0xff] %v2324
          %2714 = vst [vmem:[#allocation3 + $0x30] sm:$0xff] %v2528
          %2715 = vst [vmem:[#allocation3 + $0x38] sm:$0xff] %v2530
          %2716 = vst [vmem:[#allocation3 + $0x40] sm:$0xff] %v1914
          %2717 = vst [vmem:[#allocation3 + $0x48] sm:$0xff] %v1916
          %2718 = vst [vmem:[#allocation3 + $0x50] sm:$0xff] %v2120
          %2719 = vst [vmem:[#allocation3 + $0x58] sm:$0xff] %v2122
          %2720 = vst [vmem:[#allocation3 + $0x60] sm:$0xff] %v2326
          %2721 = vst [vmem:[#allocation3 + $0x68] sm:$0xff] %v2328
          %2722 = vst [vmem:[#allocation3 + $0x70] sm:$0xff] %v2532
          %2723 = vst [vmem:[#allocation3 + $0x78] sm:$0xff] %v2534
          %2724 = vst [vmem:[#allocation3 + $0x80] sm:$0xff] %v1920
          %2725 = vst [vmem:[#allocation3 + $0x88] sm:$0xff] %v1922
          %2726 = vst [vmem:[#allocation3 + $0x90] sm:$0xff] %v2126
          %2727 = vst [vmem:[#allocation3 + $0x98] sm:$0xff] %v2128
          %2728 = vst [vmem:[#allocation3 + $0xa0] sm:$0xff] %v2332
          %2729 = vst [vmem:[#allocation3 + $0xa8] sm:$0xff] %v2334
          %2730 = vst [vmem:[#allocation3 + $0xb0] sm:$0xff] %v2538
          %2731 = vst [vmem:[#allocation3 + $0xb8] sm:$0xff] %v2540
          %2732 = vst [vmem:[#allocation3 + $0xc0] sm:$0xff] %v1924
          %2733 = vst [vmem:[#allocation3 + $0xc8] sm:$0xff] %v1926
          %2734 = vst [vmem:[#allocation3 + $0xd0] sm:$0xff] %v2130
          %2735 = vst [vmem:[#allocation3 + $0xd8] sm:$0xff] %v2132
          %2736 = vst [vmem:[#allocation3 + $0xe0] sm:$0xff] %v2336
          %2737 = vst [vmem:[#allocation3 + $0xe8] sm:$0xff] %v2338
          %2738 = vst [vmem:[#allocation3 + $0xf0] sm:$0xff] %v2542
          %2739 = vst [vmem:[#allocation3 + $0xf8] sm:$0xff] %v2544
          %2740 = vst [vmem:[#allocation3 + $0x100] sm:$0xff] %v1930
          %2741 = vst [vmem:[#allocation3 + $0x108] sm:$0xff] %v1932
          %2742 = vst [vmem:[#allocation3 + $0x110] sm:$0xff] %v2136
          %2743 = vst [vmem:[#allocation3 + $0x118] sm:$0xff] %v2138
          %2744 = vst [vmem:[#allocation3 + $0x120] sm:$0xff] %v2342
          %2745 = vst [vmem:[#allocation3 + $0x128] sm:$0xff] %v2344
          %2746 = vst [vmem:[#allocation3 + $0x130] sm:$0xff] %v2548
          %2747 = vst [vmem:[#allocation3 + $0x138] sm:$0xff] %v2550
          %2748 = vst [vmem:[#allocation3 + $0x140] sm:$0xff] %v1934
          %2749 = vst [vmem:[#allocation3 + $0x148] sm:$0xff] %v1936
          %2750 = vst [vmem:[#allocation3 + $0x150] sm:$0xff] %v2140
          %2751 = vst [vmem:[#allocation3 + $0x158] sm:$0xff] %v2142
          %2752 = vst [vmem:[#allocation3 + $0x160] sm:$0xff] %v2346
          %2753 = vst [vmem:[#allocation3 + $0x168] sm:$0xff] %v2348
          %2754 = vst [vmem:[#allocation3 + $0x170] sm:$0xff] %v2552
          %2755 = vst [vmem:[#allocation3 + $0x178] sm:$0xff] %v2554
          %2756 = vst [vmem:[#allocation3 + $0x180] sm:$0xff] %v1940
          %2757 = vst [vmem:[#allocation3 + $0x188] sm:$0xff] %v1942
          %2758 = vst [vmem:[#allocation3 + $0x190] sm:$0xff] %v2146
          %2759 = vst [vmem:[#allocation3 + $0x198] sm:$0xff] %v2148
          %2760 = vst [vmem:[#allocation3 + $0x1a0] sm:$0xff] %v2352
          %2761 = vst [vmem:[#allocation3 + $0x1a8] sm:$0xff] %v2354
          %2762 = vst [vmem:[#allocation3 + $0x1b0] sm:$0xff] %v2558
          %2763 = vst [vmem:[#allocation3 + $0x1b8] sm:$0xff] %v2560
          %2764 = vst [vmem:[#allocation3 + $0x1c0] sm:$0xff] %v1944
          %2765 = vst [vmem:[#allocation3 + $0x1c8] sm:$0xff] %v1946
          %2766 = vst [vmem:[#allocation3 + $0x1d0] sm:$0xff] %v2150
          %2767 = vst [vmem:[#allocation3 + $0x1d8] sm:$0xff] %v2152
          %2768 = vst [vmem:[#allocation3 + $0x1e0] sm:$0xff] %v2356
          %2769 = vst [vmem:[#allocation3 + $0x1e8] sm:$0xff] %v2358
          %2770 = vst [vmem:[#allocation3 + $0x1f0] sm:$0xff] %v2562
          %2771 = vst [vmem:[#allocation3 + $0x1f8] sm:$0xff] %v2564
          %2772 = vst [vmem:[#allocation3 + $0x200] sm:$0xff] %v1950
          %2773 = vst [vmem:[#allocation3 + $0x208] sm:$0xff] %v1952
          %2774 = vst [vmem:[#allocation3 + $0x210] sm:$0xff] %v2156
          %2775 = vst [vmem:[#allocation3 + $0x218] sm:$0xff] %v2158
          %2776 = vst [vmem:[#allocation3 + $0x220] sm:$0xff] %v2362
          %2777 = vst [vmem:[#allocation3 + $0x228] sm:$0xff] %v2364
          %2778 = vst [vmem:[#allocation3 + $0x230] sm:$0xff] %v2568
          %2779 = vst [vmem:[#allocation3 + $0x238] sm:$0xff] %v2570
          %2780 = vst [vmem:[#allocation3 + $0x240] sm:$0xff] %v1954
          %2781 = vst [vmem:[#allocation3 + $0x248] sm:$0xff] %v1956
          %2782 = vst [vmem:[#allocation3 + $0x250] sm:$0xff] %v2160
          %2783 = vst [vmem:[#allocation3 + $0x258] sm:$0xff] %v2162
          %2784 = vst [vmem:[#allocation3 + $0x260] sm:$0xff] %v2366
          %2785 = vst [vmem:[#allocation3 + $0x268] sm:$0xff] %v2368
          %2786 = vst [vmem:[#allocation3 + $0x270] sm:$0xff] %v2572
          %2787 = vst [vmem:[#allocation3 + $0x278] sm:$0xff] %v2574
          %2788 = vst [vmem:[#allocation3 + $0x280] sm:$0xff] %v1960
          %2789 = vst [vmem:[#allocation3 + $0x288] sm:$0xff] %v1962
          %2790 = vst [vmem:[#allocation3 + $0x290] sm:$0xff] %v2166
          %2791 = vst [vmem:[#allocation3 + $0x298] sm:$0xff] %v2168
          %2792 = vst [vmem:[#allocation3 + $0x2a0] sm:$0xff] %v2372
          %2793 = vst [vmem:[#allocation3 + $0x2a8] sm:$0xff] %v2374
          %2794 = vst [vmem:[#allocation3 + $0x2b0] sm:$0xff] %v2578
          %2795 = vst [vmem:[#allocation3 + $0x2b8] sm:$0xff] %v2580
          %2796 = vst [vmem:[#allocation3 + $0x2c0] sm:$0xff] %v1964
          %2797 = vst [vmem:[#allocation3 + $0x2c8] sm:$0xff] %v1966
          %2798 = vst [vmem:[#allocation3 + $0x2d0] sm:$0xff] %v2170
          %2799 = vst [vmem:[#allocation3 + $0x2d8] sm:$0xff] %v2172
          %2800 = vst [vmem:[#allocation3 + $0x2e0] sm:$0xff] %v2376
          %2801 = vst [vmem:[#allocation3 + $0x2e8] sm:$0xff] %v2378
          %2802 = vst [vmem:[#allocation3 + $0x2f0] sm:$0xff] %v2582
          %2803 = vst [vmem:[#allocation3 + $0x2f8] sm:$0xff] %v2584
          %2804 = vst [vmem:[#allocation3 + $0x300] sm:$0xff] %v1970
          %2805 = vst [vmem:[#allocation3 + $0x308] sm:$0xff] %v1972
          %2806 = vst [vmem:[#allocation3 + $0x310] sm:$0xff] %v2176
          %2807 = vst [vmem:[#allocation3 + $0x318] sm:$0xff] %v2178
          %2808 = vst [vmem:[#allocation3 + $0x320] sm:$0xff] %v2382
          %2809 = vst [vmem:[#allocation3 + $0x328] sm:$0xff] %v2384
          %2810 = vst [vmem:[#allocation3 + $0x330] sm:$0xff] %v2588
          %2811 = vst [vmem:[#allocation3 + $0x338] sm:$0xff] %v2590
          %2812 = vst [vmem:[#allocation3 + $0x340] sm:$0xff] %v1974
          %2813 = vst [vmem:[#allocation3 + $0x348] sm:$0xff] %v1976
          %2814 = vst [vmem:[#allocation3 + $0x350] sm:$0xff] %v2180
          %2815 = vst [vmem:[#allocation3 + $0x358] sm:$0xff] %v2182
          %2816 = vst [vmem:[#allocation3 + $0x360] sm:$0xff] %v2386
          %2817 = vst [vmem:[#allocation3 + $0x368] sm:$0xff] %v2388
          %2818 = vst [vmem:[#allocation3 + $0x370] sm:$0xff] %v2592
          %2819 = vst [vmem:[#allocation3 + $0x378] sm:$0xff] %v2594
        $region84: #{generator_forward.3} parent=51 // pred_fallthru
          _
        %v2820 = vld [vmem:[#allocation2] sm:$0xff]
        %v2821 = vld [vmem:[#allocation2 + $0x8] sm:$0xff]
        %v2822 = vld [vmem:[#allocation2 + $0x10] sm:$0xff]
        %v2823 = vld [vmem:[#allocation2 + $0x18] sm:$0xff]
        %v2824 = vld [vmem:[#allocation2 + $0x20] sm:$0xff]
        %v2825 = vld [vmem:[#allocation2 + $0x28] sm:$0xff]
        %v2826 = vld [vmem:[#allocation2 + $0x30] sm:$0xff]
        %v2827 = vld [vmem:[#allocation2 + $0x38] sm:$0xff]
        %v2828 = vld [vmem:[#allocation2 + $0x40] sm:$0xff]
        %v2829 = vld [vmem:[#allocation2 + $0x48] sm:$0xff]
        %v2830 = vld [vmem:[#allocation2 + $0x50] sm:$0xff]
        %v2831 = vld [vmem:[#allocation2 + $0x58] sm:$0xff]
        %v2832 = vld [vmem:[#allocation2 + $0x60] sm:$0xff]
        %v2833 = vld [vmem:[#allocation2 + $0x68] sm:$0xff]
        %v2834 = vld [vmem:[#allocation2 + $0x70] sm:$0xff]
        %v2835 = vld [vmem:[#allocation2 + $0x78] sm:$0xff]
        %v2836 = vld [vmem:[#allocation2 + $0x80] sm:$0xff]
        %v2837 = vld [vmem:[#allocation2 + $0x88] sm:$0xff]
        %v2838 = vld [vmem:[#allocation2 + $0x90] sm:$0xff]
        %v2839 = vld [vmem:[#allocation2 + $0x98] sm:$0xff]
        %v2840 = vld [vmem:[#allocation2 + $0xa0] sm:$0xff]
        %v2841 = vld [vmem:[#allocation2 + $0xa8] sm:$0xff]
        %v2842 = vld [vmem:[#allocation2 + $0xb0] sm:$0xff]
        %v2843 = vld [vmem:[#allocation2 + $0xb8] sm:$0xff]
        %v2844 = vld [vmem:[#allocation2 + $0xc0] sm:$0xff]
        %v2845 = vld [vmem:[#allocation2 + $0xc8] sm:$0xff]
        %v2846 = vld [vmem:[#allocation2 + $0xd0] sm:$0xff]
        %v2847 = vld [vmem:[#allocation2 + $0xd8] sm:$0xff]
        %v2848 = vld [vmem:[#allocation2 + $0xe0] sm:$0xff]
        %v2849 = vld [vmem:[#allocation2 + $0xe8] sm:$0xff]
        %v2850 = vld [vmem:[#allocation2 + $0xf0] sm:$0xff]
        %v2851 = vld [vmem:[#allocation2 + $0xf8] sm:$0xff]
        %v2852 = vld [vmem:[#allocation2 + $0x100] sm:$0xff]
        %v2853 = vld [vmem:[#allocation2 + $0x108] sm:$0xff]
        %v2854 = vld [vmem:[#allocation2 + $0x110] sm:$0xff]
        %v2855 = vld [vmem:[#allocation2 + $0x118] sm:$0xff]
        %v2856 = vld [vmem:[#allocation2 + $0x120] sm:$0xff]
        %v2857 = vld [vmem:[#allocation2 + $0x128] sm:$0xff]
        %v2858 = vld [vmem:[#allocation2 + $0x130] sm:$0xff]
        %v2859 = vld [vmem:[#allocation2 + $0x138] sm:$0xff]
        %v2860 = vld [vmem:[#allocation2 + $0x140] sm:$0xff]
        %v2861 = vld [vmem:[#allocation2 + $0x148] sm:$0xff]
        %v2862 = vld [vmem:[#allocation2 + $0x150] sm:$0xff]
        %v2863 = vld [vmem:[#allocation2 + $0x158] sm:$0xff]
        %v2864 = vld [vmem:[#allocation2 + $0x160] sm:$0xff]
        %v2865 = vld [vmem:[#allocation2 + $0x168] sm:$0xff]
        %v2866 = vld [vmem:[#allocation2 + $0x170] sm:$0xff]
        %v2867 = vld [vmem:[#allocation2 + $0x178] sm:$0xff]
        %v2868 = vld [vmem:[#allocation2 + $0x180] sm:$0xff]
        %v2869 = vld [vmem:[#allocation2 + $0x188] sm:$0xff]
        %v2870 = vld [vmem:[#allocation2 + $0x190] sm:$0xff]
        %v2871 = vld [vmem:[#allocation2 + $0x198] sm:$0xff]
        %v2872 = vld [vmem:[#allocation2 + $0x1a0] sm:$0xff]
        %v2873 = vld [vmem:[#allocation2 + $0x1a8] sm:$0xff]
        %v2874 = vld [vmem:[#allocation2 + $0x1b0] sm:$0xff]
        %v2875 = vld [vmem:[#allocation2 + $0x1b8] sm:$0xff]
        %v2876 = vld [vmem:[#allocation2 + $0x1c0] sm:$0xff]
        %v2877 = vld [vmem:[#allocation2 + $0x1c8] sm:$0xff]
        %v2878 = vld [vmem:[#allocation2 + $0x1d0] sm:$0xff]
        %v2879 = vld [vmem:[#allocation2 + $0x1d8] sm:$0xff]
        %v2880 = vld [vmem:[#allocation2 + $0x1e0] sm:$0xff]
        %v2881 = vld [vmem:[#allocation2 + $0x1e8] sm:$0xff]
        %v2882 = vld [vmem:[#allocation2 + $0x1f0] sm:$0xff]
        %v2883 = vld [vmem:[#allocation2 + $0x1f8] sm:$0xff]
        %v2884 = vld [vmem:[#allocation2 + $0x200] sm:$0xff]
        %v2885 = vld [vmem:[#allocation2 + $0x208] sm:$0xff]
        %v2886 = vld [vmem:[#allocation2 + $0x210] sm:$0xff]
        %v2887 = vld [vmem:[#allocation2 + $0x218] sm:$0xff]
        %v2888 = vld [vmem:[#allocation2 + $0x220] sm:$0xff]
        %v2889 = vld [vmem:[#allocation2 + $0x228] sm:$0xff]
        %v2890 = vld [vmem:[#allocation2 + $0x230] sm:$0xff]
        %v2891 = vld [vmem:[#allocation2 + $0x238] sm:$0xff]
        %v2892 = vld [vmem:[#allocation2 + $0x240] sm:$0xff]
        %v2893 = vld [vmem:[#allocation2 + $0x248] sm:$0xff]
        %v2894 = vld [vmem:[#allocation2 + $0x250] sm:$0xff]
        %v2895 = vld [vmem:[#allocation2 + $0x258] sm:$0xff]
        %v2896 = vld [vmem:[#allocation2 + $0x260] sm:$0xff]
        %v2897 = vld [vmem:[#allocation2 + $0x268] sm:$0xff]
        %v2898 = vld [vmem:[#allocation2 + $0x270] sm:$0xff]
        %v2899 = vld [vmem:[#allocation2 + $0x278] sm:$0xff]
        %v2900 = vld [vmem:[#allocation2 + $0x280] sm:$0xff]
        %v2901 = vld [vmem:[#allocation2 + $0x288] sm:$0xff]
        %v2902 = vld [vmem:[#allocation2 + $0x290] sm:$0xff]
        %v2903 = vld [vmem:[#allocation2 + $0x298] sm:$0xff]
        %v2904 = vld [vmem:[#allocation2 + $0x2a0] sm:$0xff]
        %v2905 = vld [vmem:[#allocation2 + $0x2a8] sm:$0xff]
        %v2906 = vld [vmem:[#allocation2 + $0x2b0] sm:$0xff]
        %v2907 = vld [vmem:[#allocation2 + $0x2b8] sm:$0xff]
        %v2908 = vld [vmem:[#allocation2 + $0x2c0] sm:$0xff]
        %v2909 = vld [vmem:[#allocation2 + $0x2c8] sm:$0xff]
        %v2910 = vld [vmem:[#allocation2 + $0x2d0] sm:$0xff]
        %v2911 = vld [vmem:[#allocation2 + $0x2d8] sm:$0xff]
        %v2912 = vld [vmem:[#allocation2 + $0x2e0] sm:$0xff]
        %v2913 = vld [vmem:[#allocation2 + $0x2e8] sm:$0xff]
        %v2914 = vld [vmem:[#allocation2 + $0x2f0] sm:$0xff]
        %v2915 = vld [vmem:[#allocation2 + $0x2f8] sm:$0xff]
        %v2916 = vld [vmem:[#allocation2 + $0x300] sm:$0xff]
        %v2917 = vld [vmem:[#allocation2 + $0x308] sm:$0xff]
        %v2918 = vld [vmem:[#allocation2 + $0x310] sm:$0xff]
        %v2919 = vld [vmem:[#allocation2 + $0x318] sm:$0xff]
        %v2920 = vld [vmem:[#allocation2 + $0x320] sm:$0xff]
        %v2921 = vld [vmem:[#allocation2 + $0x328] sm:$0xff]
        %v2922 = vld [vmem:[#allocation2 + $0x330] sm:$0xff]
        %v2923 = vld [vmem:[#allocation2 + $0x338] sm:$0xff]
        %v2924 = vld [vmem:[#allocation2 + $0x340] sm:$0xff]
        %v2925 = vld [vmem:[#allocation2 + $0x348] sm:$0xff]
        %v2926 = vld [vmem:[#allocation2 + $0x350] sm:$0xff]
        %v2927 = vld [vmem:[#allocation2 + $0x358] sm:$0xff]
        %v2928 = vld [vmem:[#allocation2 + $0x360] sm:$0xff]
        %v2929 = vld [vmem:[#allocation2 + $0x368] sm:$0xff]
        %v2930 = vld [vmem:[#allocation2 + $0x370] sm:$0xff]
        %v2931 = vld [vmem:[#allocation2 + $0x378] sm:$0xff]
        %v2932 = vpack.c.bf16 %v2828, %v2820
        %v2933 = vpack.c.bf16 %v2829, %v2821
        %v2934 = vpack.c.bf16 %v2830, %v2822
        %v2935 = vpack.c.bf16 %v2831, %v2823
        %v2936 = vpack.c.bf16 %v2832, %v2824
        %v2937 = vpack.c.bf16 %v2833, %v2825
        %v2938 = vpack.c.bf16 %v2834, %v2826
        %v2939 = vpack.c.bf16 %v2835, %v2827
        %v2940 = vpack.c.bf16 %v2844, %v2836
        %v2941 = vpack.c.bf16 %v2845, %v2837
        %v2942 = vpack.c.bf16 %v2846, %v2838
        %v2943 = vpack.c.bf16 %v2847, %v2839
        %v2944 = vpack.c.bf16 %v2848, %v2840
        %v2945 = vpack.c.bf16 %v2849, %v2841
        %v2946 = vpack.c.bf16 %v2850, %v2842
        %v2947 = vpack.c.bf16 %v2851, %v2843
        %v2948 = vpack.c.bf16 %v2860, %v2852
        %v2949 = vpack.c.bf16 %v2861, %v2853
        %v2950 = vpack.c.bf16 %v2862, %v2854
        %v2951 = vpack.c.bf16 %v2863, %v2855
        %v2952 = vpack.c.bf16 %v2864, %v2856
        %v2953 = vpack.c.bf16 %v2865, %v2857
        %v2954 = vpack.c.bf16 %v2866, %v2858
        %v2955 = vpack.c.bf16 %v2867, %v2859
        %v2956 = vpack.c.bf16 %v2876, %v2868
        %v2957 = vpack.c.bf16 %v2877, %v2869
        %v2958 = vpack.c.bf16 %v2878, %v2870
        %v2959 = vpack.c.bf16 %v2879, %v2871
        %v2960 = vpack.c.bf16 %v2880, %v2872
        %v2961 = vpack.c.bf16 %v2881, %v2873
        %v2962 = vpack.c.bf16 %v2882, %v2874
        %v2963 = vpack.c.bf16 %v2883, %v2875
        %v2964 = vpack.c.bf16 %v2892, %v2884
        %v2965 = vpack.c.bf16 %v2893, %v2885
        %v2966 = vpack.c.bf16 %v2894, %v2886
        %v2967 = vpack.c.bf16 %v2895, %v2887
        %v2968 = vpack.c.bf16 %v2896, %v2888
        %v2969 = vpack.c.bf16 %v2897, %v2889
        %v2970 = vpack.c.bf16 %v2898, %v2890
        %v2971 = vpack.c.bf16 %v2899, %v2891
        %v2972 = vpack.c.bf16 %v2908, %v2900
        %v2973 = vpack.c.bf16 %v2909, %v2901
        %v2974 = vpack.c.bf16 %v2910, %v2902
        %v2975 = vpack.c.bf16 %v2911, %v2903
        %v2976 = vpack.c.bf16 %v2912, %v2904
        %v2977 = vpack.c.bf16 %v2913, %v2905
        %v2978 = vpack.c.bf16 %v2914, %v2906
        %v2979 = vpack.c.bf16 %v2915, %v2907
        %v2980 = vpack.c.bf16 %v2924, %v2916
        %v2981 = vpack.c.bf16 %v2925, %v2917
        %v2982 = vpack.c.bf16 %v2926, %v2918
        %v2983 = vpack.c.bf16 %v2927, %v2919
        %v2984 = vpack.c.bf16 %v2928, %v2920
        %v2985 = vpack.c.bf16 %v2929, %v2921
        %v2986 = vpack.c.bf16 %v2930, %v2922
        %v2987 = vpack.c.bf16 %v2931, %v2923
        %v2988 = vld [vmem:[%s369] sm:$0xff]
        %v2989 = vld [vmem:[%s369 + $0x8] sm:$0xff]
        %v2990 = vld [vmem:[%s369 + $0x10] sm:$0xff]
        %v2991 = vld [vmem:[%s369 + $0x18] sm:$0xff]
        %v2992 = vld [vmem:[%s369 + $0x20] sm:$0xff]
        %v2993 = vld [vmem:[%s369 + $0x28] sm:$0xff]
        %v2994 = vld [vmem:[%s369 + $0x30] sm:$0xff]
        %v2995 = vld [vmem:[%s369 + $0x38] sm:$0xff]
        %v2996 = vld [vmem:[%s369 + $0x40] sm:$0xff]
        %v2997 = vld [vmem:[%s369 + $0x48] sm:$0xff]
        %v2998 = vld [vmem:[%s369 + $0x50] sm:$0xff]
        %v2999 = vld [vmem:[%s369 + $0x58] sm:$0xff]
        %v3000 = vld [vmem:[%s369 + $0x60] sm:$0xff]
        %v3001 = vld [vmem:[%s369 + $0x68] sm:$0xff]
        %v3002 = vld [vmem:[%s369 + $0x70] sm:$0xff]
        %v3003 = vld [vmem:[%s369 + $0x78] sm:$0xff]
        %v3004 = vld [vmem:[%s369 + $0x80] sm:$0xff]
        %v3005 = vld [vmem:[%s369 + $0x88] sm:$0xff]
        %v3006 = vld [vmem:[%s369 + $0x90] sm:$0xff]
        %v3007 = vld [vmem:[%s369 + $0x98] sm:$0xff]
        %v3008 = vld [vmem:[%s369 + $0xa0] sm:$0xff]
        %v3009 = vld [vmem:[%s369 + $0xa8] sm:$0xff]
        %v3010 = vld [vmem:[%s369 + $0xb0] sm:$0xff]
        %v3011 = vld [vmem:[%s369 + $0xb8] sm:$0xff]
        %v3012 = vld [vmem:[%s369 + $0xc0] sm:$0xff]
        %v3013 = vld [vmem:[%s369 + $0xc8] sm:$0xff]
        %v3014 = vld [vmem:[%s369 + $0xd0] sm:$0xff]
        %v3015 = vld [vmem:[%s369 + $0xd8] sm:$0xff]
        %v3016 = vld [vmem:[%s369 + $0xe0] sm:$0xff]
        %v3017 = vld [vmem:[%s369 + $0xe8] sm:$0xff]
        %v3018 = vld [vmem:[%s369 + $0xf0] sm:$0xff]
        %v3019 = vld [vmem:[%s369 + $0xf8] sm:$0xff]
        %v3020 = vld [vmem:[%s369 + $0x100] sm:$0xff]
        %v3021 = vld [vmem:[%s369 + $0x108] sm:$0xff]
        %v3022 = vld [vmem:[%s369 + $0x110] sm:$0xff]
        %v3023 = vld [vmem:[%s369 + $0x118] sm:$0xff]
        %v3024 = vld [vmem:[%s369 + $0x120] sm:$0xff]
        %v3025 = vld [vmem:[%s369 + $0x128] sm:$0xff]
        %v3026 = vld [vmem:[%s369 + $0x130] sm:$0xff]
        %v3027 = vld [vmem:[%s369 + $0x138] sm:$0xff]
        %v3028 = vld [vmem:[%s369 + $0x140] sm:$0xff]
        %v3029 = vld [vmem:[%s369 + $0x148] sm:$0xff]
        %v3030 = vld [vmem:[%s369 + $0x150] sm:$0xff]
        %v3031 = vld [vmem:[%s369 + $0x158] sm:$0xff]
        %v3032 = vld [vmem:[%s369 + $0x160] sm:$0xff]
        %v3033 = vld [vmem:[%s369 + $0x168] sm:$0xff]
        %v3034 = vld [vmem:[%s369 + $0x170] sm:$0xff]
        %v3035 = vld [vmem:[%s369 + $0x178] sm:$0xff]
        %v3036 = vld [vmem:[%s369 + $0x180] sm:$0xff]
        %v3037 = vld [vmem:[%s369 + $0x188] sm:$0xff]
        %v3038 = vld [vmem:[%s369 + $0x190] sm:$0xff]
        %v3039 = vld [vmem:[%s369 + $0x198] sm:$0xff]
        %v3040 = vld [vmem:[%s369 + $0x1a0] sm:$0xff]
        %v3041 = vld [vmem:[%s369 + $0x1a8] sm:$0xff]
        %v3042 = vld [vmem:[%s369 + $0x1b0] sm:$0xff]
        %v3043 = vld [vmem:[%s369 + $0x1b8] sm:$0xff]
        %v3044 = vld [vmem:[%s369 + $0x1c0] sm:$0xff]
        %v3045 = vld [vmem:[%s369 + $0x1c8] sm:$0xff]
        %v3046 = vld [vmem:[%s369 + $0x1d0] sm:$0xff]
        %v3047 = vld [vmem:[%s369 + $0x1d8] sm:$0xff]
        %v3048 = vld [vmem:[%s369 + $0x1e0] sm:$0xff]
        %v3049 = vld [vmem:[%s369 + $0x1e8] sm:$0xff]
        %v3050 = vld [vmem:[%s369 + $0x1f0] sm:$0xff]
        %v3051 = vld [vmem:[%s369 + $0x1f8] sm:$0xff]
        %v3052 = vld [vmem:[%s369 + $0x200] sm:$0xff]
        %v3053 = vld [vmem:[%s369 + $0x208] sm:$0xff]
        %v3054 = vld [vmem:[%s369 + $0x210] sm:$0xff]
        %v3055 = vld [vmem:[%s369 + $0x218] sm:$0xff]
        %v3056 = vld [vmem:[%s369 + $0x220] sm:$0xff]
        %v3057 = vld [vmem:[%s369 + $0x228] sm:$0xff]
        %v3058 = vld [vmem:[%s369 + $0x230] sm:$0xff]
        %v3059 = vld [vmem:[%s369 + $0x238] sm:$0xff]
        %v3060 = vld [vmem:[%s369 + $0x240] sm:$0xff]
        %v3061 = vld [vmem:[%s369 + $0x248] sm:$0xff]
        %v3062 = vld [vmem:[%s369 + $0x250] sm:$0xff]
        %v3063 = vld [vmem:[%s369 + $0x258] sm:$0xff]
        %v3064 = vld [vmem:[%s369 + $0x260] sm:$0xff]
        %v3065 = vld [vmem:[%s369 + $0x268] sm:$0xff]
        %v3066 = vld [vmem:[%s369 + $0x270] sm:$0xff]
        %v3067 = vld [vmem:[%s369 + $0x278] sm:$0xff]
        %v3068 = vld [vmem:[%s369 + $0x280] sm:$0xff]
        %v3069 = vld [vmem:[%s369 + $0x288] sm:$0xff]
        %v3070 = vld [vmem:[%s369 + $0x290] sm:$0xff]
        %v3071 = vld [vmem:[%s369 + $0x298] sm:$0xff]
        %v3072 = vld [vmem:[%s369 + $0x2a0] sm:$0xff]
        %v3073 = vld [vmem:[%s369 + $0x2a8] sm:$0xff]
        %v3074 = vld [vmem:[%s369 + $0x2b0] sm:$0xff]
        %v3075 = vld [vmem:[%s369 + $0x2b8] sm:$0xff]
        %v3076 = vld [vmem:[%s369 + $0x2c0] sm:$0xff]
        %v3077 = vld [vmem:[%s369 + $0x2c8] sm:$0xff]
        %v3078 = vld [vmem:[%s369 + $0x2d0] sm:$0xff]
        %v3079 = vld [vmem:[%s369 + $0x2d8] sm:$0xff]
        %v3080 = vld [vmem:[%s369 + $0x2e0] sm:$0xff]
        %v3081 = vld [vmem:[%s369 + $0x2e8] sm:$0xff]
        %v3082 = vld [vmem:[%s369 + $0x2f0] sm:$0xff]
        %v3083 = vld [vmem:[%s369 + $0x2f8] sm:$0xff]
        %v3084 = vld [vmem:[%s369 + $0x300] sm:$0xff]
        %v3085 = vld [vmem:[%s369 + $0x308] sm:$0xff]
        %v3086 = vld [vmem:[%s369 + $0x310] sm:$0xff]
        %v3087 = vld [vmem:[%s369 + $0x318] sm:$0xff]
        %v3088 = vld [vmem:[%s369 + $0x320] sm:$0xff]
        %v3089 = vld [vmem:[%s369 + $0x328] sm:$0xff]
        %v3090 = vld [vmem:[%s369 + $0x330] sm:$0xff]
        %v3091 = vld [vmem:[%s369 + $0x338] sm:$0xff]
        %v3092 = vld [vmem:[%s369 + $0x340] sm:$0xff]
        %v3093 = vld [vmem:[%s369 + $0x348] sm:$0xff]
        %v3094 = vld [vmem:[%s369 + $0x350] sm:$0xff]
        %v3095 = vld [vmem:[%s369 + $0x358] sm:$0xff]
        %v3096 = vld [vmem:[%s369 + $0x360] sm:$0xff]
        %v3097 = vld [vmem:[%s369 + $0x368] sm:$0xff]
        %v3098 = vld [vmem:[%s369 + $0x370] sm:$0xff]
        %v3099 = vld [vmem:[%s369 + $0x378] sm:$0xff]
        %v3100 = vld [vmem:[%s369 + $0x380] sm:$0xff]
        %v3101 = vld [vmem:[%s369 + $0x388] sm:$0xff]
        %v3102 = vld [vmem:[%s369 + $0x390] sm:$0xff]
        %v3103 = vld [vmem:[%s369 + $0x398] sm:$0xff]
        %v3104 = vld [vmem:[%s369 + $0x3a0] sm:$0xff]
        %v3105 = vld [vmem:[%s369 + $0x3a8] sm:$0xff]
        %v3106 = vld [vmem:[%s369 + $0x3b0] sm:$0xff]
        %v3107 = vld [vmem:[%s369 + $0x3b8] sm:$0xff]
        %v3108 = vld [vmem:[%s369 + $0x3c0] sm:$0xff]
        %v3109 = vld [vmem:[%s369 + $0x3c8] sm:$0xff]
        %v3110 = vld [vmem:[%s369 + $0x3d0] sm:$0xff]
        %v3111 = vld [vmem:[%s369 + $0x3d8] sm:$0xff]
        %v3112 = vld [vmem:[%s369 + $0x3e0] sm:$0xff]
        %v3113 = vld [vmem:[%s369 + $0x3e8] sm:$0xff]
        %v3114 = vld [vmem:[%s369 + $0x3f0] sm:$0xff]
        %v3115 = vld [vmem:[%s369 + $0x3f8] sm:$0xff]
        %v3116 = vld [vmem:[%s369 + $0x400] sm:$0xff]
        %v3117 = vld [vmem:[%s369 + $0x408] sm:$0xff]
        %v3118 = vld [vmem:[%s369 + $0x410] sm:$0xff]
        %v3119 = vld [vmem:[%s369 + $0x418] sm:$0xff]
        %v3120 = vld [vmem:[%s369 + $0x420] sm:$0xff]
        %v3121 = vld [vmem:[%s369 + $0x428] sm:$0xff]
        %v3122 = vld [vmem:[%s369 + $0x430] sm:$0xff]
        %v3123 = vld [vmem:[%s369 + $0x438] sm:$0xff]
        %v3124 = vld [vmem:[%s369 + $0x440] sm:$0xff]
        %v3125 = vld [vmem:[%s369 + $0x448] sm:$0xff]
        %v3126 = vld [vmem:[%s369 + $0x450] sm:$0xff]
        %v3127 = vld [vmem:[%s369 + $0x458] sm:$0xff]
        %v3128 = vld [vmem:[%s369 + $0x460] sm:$0xff]
        %v3129 = vld [vmem:[%s369 + $0x468] sm:$0xff]
        %v3130 = vld [vmem:[%s369 + $0x470] sm:$0xff]
        %v3131 = vld [vmem:[%s369 + $0x478] sm:$0xff]
        %v3132 = vld [vmem:[%s369 + $0x480] sm:$0xff]
        %v3133 = vld [vmem:[%s369 + $0x488] sm:$0xff]
        %v3134 = vld [vmem:[%s369 + $0x490] sm:$0xff]
        %v3135 = vld [vmem:[%s369 + $0x498] sm:$0xff]
        %v3136 = vld [vmem:[%s369 + $0x4a0] sm:$0xff]
        %v3137 = vld [vmem:[%s369 + $0x4a8] sm:$0xff]
        %v3138 = vld [vmem:[%s369 + $0x4b0] sm:$0xff]
        %v3139 = vld [vmem:[%s369 + $0x4b8] sm:$0xff]
        %v3140 = vld [vmem:[%s369 + $0x4c0] sm:$0xff]
        %v3141 = vld [vmem:[%s369 + $0x4c8] sm:$0xff]
        %v3142 = vld [vmem:[%s369 + $0x4d0] sm:$0xff]
        %v3143 = vld [vmem:[%s369 + $0x4d8] sm:$0xff]
        %v3144 = vld [vmem:[%s369 + $0x4e0] sm:$0xff]
        %v3145 = vld [vmem:[%s369 + $0x4e8] sm:$0xff]
        %v3146 = vld [vmem:[%s369 + $0x4f0] sm:$0xff]
        %v3147 = vld [vmem:[%s369 + $0x4f8] sm:$0xff]
        %v3148 = vld [vmem:[%s369 + $0x500] sm:$0xff]
        %v3149 = vld [vmem:[%s369 + $0x508] sm:$0xff]
        %v3150 = vld [vmem:[%s369 + $0x510] sm:$0xff]
        %v3151 = vld [vmem:[%s369 + $0x518] sm:$0xff]
        %v3152 = vld [vmem:[%s369 + $0x520] sm:$0xff]
        %v3153 = vld [vmem:[%s369 + $0x528] sm:$0xff]
        %v3154 = vld [vmem:[%s369 + $0x530] sm:$0xff]
        %v3155 = vld [vmem:[%s369 + $0x538] sm:$0xff]
        %v3156 = vld [vmem:[%s369 + $0x540] sm:$0xff]
        %v3157 = vld [vmem:[%s369 + $0x548] sm:$0xff]
        %v3158 = vld [vmem:[%s369 + $0x550] sm:$0xff]
        %v3159 = vld [vmem:[%s369 + $0x558] sm:$0xff]
        %v3160 = vld [vmem:[%s369 + $0x560] sm:$0xff]
        %v3161 = vld [vmem:[%s369 + $0x568] sm:$0xff]
        %v3162 = vld [vmem:[%s369 + $0x570] sm:$0xff]
        %v3163 = vld [vmem:[%s369 + $0x578] sm:$0xff]
        %v3164 = vld [vmem:[%s369 + $0x580] sm:$0xff]
        %v3165 = vld [vmem:[%s369 + $0x588] sm:$0xff]
        %v3166 = vld [vmem:[%s369 + $0x590] sm:$0xff]
        %v3167 = vld [vmem:[%s369 + $0x598] sm:$0xff]
        %v3168 = vld [vmem:[%s369 + $0x5a0] sm:$0xff]
        %v3169 = vld [vmem:[%s369 + $0x5a8] sm:$0xff]
        %v3170 = vld [vmem:[%s369 + $0x5b0] sm:$0xff]
        %v3171 = vld [vmem:[%s369 + $0x5b8] sm:$0xff]
        %v3172 = vld [vmem:[%s369 + $0x5c0] sm:$0xff]
        %v3173 = vld [vmem:[%s369 + $0x5c8] sm:$0xff]
        %v3174 = vld [vmem:[%s369 + $0x5d0] sm:$0xff]
        %v3175 = vld [vmem:[%s369 + $0x5d8] sm:$0xff]
        %v3176 = vld [vmem:[%s369 + $0x5e0] sm:$0xff]
        %v3177 = vld [vmem:[%s369 + $0x5e8] sm:$0xff]
        %v3178 = vld [vmem:[%s369 + $0x5f0] sm:$0xff]
        %v3179 = vld [vmem:[%s369 + $0x5f8] sm:$0xff]
        %v3180 = vld [vmem:[%s369 + $0x600] sm:$0xff]
        %v3181 = vld [vmem:[%s369 + $0x608] sm:$0xff]
        %v3182 = vld [vmem:[%s369 + $0x610] sm:$0xff]
        %v3183 = vld [vmem:[%s369 + $0x618] sm:$0xff]
        %v3184 = vld [vmem:[%s369 + $0x620] sm:$0xff]
        %v3185 = vld [vmem:[%s369 + $0x628] sm:$0xff]
        %v3186 = vld [vmem:[%s369 + $0x630] sm:$0xff]
        %v3187 = vld [vmem:[%s369 + $0x638] sm:$0xff]
        %v3188 = vld [vmem:[%s369 + $0x640] sm:$0xff]
        %v3189 = vld [vmem:[%s369 + $0x648] sm:$0xff]
        %v3190 = vld [vmem:[%s369 + $0x650] sm:$0xff]
        %v3191 = vld [vmem:[%s369 + $0x658] sm:$0xff]
        %v3192 = vld [vmem:[%s369 + $0x660] sm:$0xff]
        %v3193 = vld [vmem:[%s369 + $0x668] sm:$0xff]
        %v3194 = vld [vmem:[%s369 + $0x670] sm:$0xff]
        %v3195 = vld [vmem:[%s369 + $0x678] sm:$0xff]
        %v3196 = vld [vmem:[%s369 + $0x680] sm:$0xff]
        %v3197 = vld [vmem:[%s369 + $0x688] sm:$0xff]
        %v3198 = vld [vmem:[%s369 + $0x690] sm:$0xff]
        %v3199 = vld [vmem:[%s369 + $0x698] sm:$0xff]
        %v3200 = vld [vmem:[%s369 + $0x6a0] sm:$0xff]
        %v3201 = vld [vmem:[%s369 + $0x6a8] sm:$0xff]
        %v3202 = vld [vmem:[%s369 + $0x6b0] sm:$0xff]
        %v3203 = vld [vmem:[%s369 + $0x6b8] sm:$0xff]
        %v3204 = vld [vmem:[%s369 + $0x6c0] sm:$0xff]
        %v3205 = vld [vmem:[%s369 + $0x6c8] sm:$0xff]
        %v3206 = vld [vmem:[%s369 + $0x6d0] sm:$0xff]
        %v3207 = vld [vmem:[%s369 + $0x6d8] sm:$0xff]
        %v3208 = vld [vmem:[%s369 + $0x6e0] sm:$0xff]
        %v3209 = vld [vmem:[%s369 + $0x6e8] sm:$0xff]
        %v3210 = vld [vmem:[%s369 + $0x6f0] sm:$0xff]
        %v3211 = vld [vmem:[%s369 + $0x6f8] sm:$0xff]
        %v3212 = vld [vmem:[%s369 + $0x700] sm:$0xff]
        %v3213 = vld [vmem:[%s369 + $0x708] sm:$0xff]
        %v3214 = vld [vmem:[%s369 + $0x710] sm:$0xff]
        %v3215 = vld [vmem:[%s369 + $0x718] sm:$0xff]
        %v3216 = vld [vmem:[%s369 + $0x720] sm:$0xff]
        %v3217 = vld [vmem:[%s369 + $0x728] sm:$0xff]
        %v3218 = vld [vmem:[%s369 + $0x730] sm:$0xff]
        %v3219 = vld [vmem:[%s369 + $0x738] sm:$0xff]
        %v3220 = vld [vmem:[%s369 + $0x740] sm:$0xff]
        %v3221 = vld [vmem:[%s369 + $0x748] sm:$0xff]
        %v3222 = vld [vmem:[%s369 + $0x750] sm:$0xff]
        %v3223 = vld [vmem:[%s369 + $0x758] sm:$0xff]
        %v3224 = vld [vmem:[%s369 + $0x760] sm:$0xff]
        %v3225 = vld [vmem:[%s369 + $0x768] sm:$0xff]
        %v3226 = vld [vmem:[%s369 + $0x770] sm:$0xff]
        %v3227 = vld [vmem:[%s369 + $0x778] sm:$0xff]
        %v3228 = vld [vmem:[%s369 + $0x780] sm:$0xff]
        %v3229 = vld [vmem:[%s369 + $0x788] sm:$0xff]
        %v3230 = vld [vmem:[%s369 + $0x790] sm:$0xff]
        %v3231 = vld [vmem:[%s369 + $0x798] sm:$0xff]
        %v3232 = vld [vmem:[%s369 + $0x7a0] sm:$0xff]
        %v3233 = vld [vmem:[%s369 + $0x7a8] sm:$0xff]
        %v3234 = vld [vmem:[%s369 + $0x7b0] sm:$0xff]
        %v3235 = vld [vmem:[%s369 + $0x7b8] sm:$0xff]
        %v3236 = vld [vmem:[%s369 + $0x7c0] sm:$0xff]
        %v3237 = vld [vmem:[%s369 + $0x7c8] sm:$0xff]
        %v3238 = vld [vmem:[%s369 + $0x7d0] sm:$0xff]
        %v3239 = vld [vmem:[%s369 + $0x7d8] sm:$0xff]
        %v3240 = vld [vmem:[%s369 + $0x7e0] sm:$0xff]
        %v3241 = vld [vmem:[%s369 + $0x7e8] sm:$0xff]
        %v3242 = vld [vmem:[%s369 + $0x7f0] sm:$0xff]
        %v3243 = vld [vmem:[%s369 + $0x7f8] sm:$0xff]
        %v3244 = vld [vmem:[%s369 + $0x800] sm:$0xff]
        %v3245 = vld [vmem:[%s369 + $0x808] sm:$0xff]
        %v3246 = vld [vmem:[%s369 + $0x810] sm:$0xff]
        %v3247 = vld [vmem:[%s369 + $0x818] sm:$0xff]
        %v3248 = vld [vmem:[%s369 + $0x820] sm:$0xff]
        %v3249 = vld [vmem:[%s369 + $0x828] sm:$0xff]
        %v3250 = vld [vmem:[%s369 + $0x830] sm:$0xff]
        %v3251 = vld [vmem:[%s369 + $0x838] sm:$0xff]
        %v3252 = vld [vmem:[%s369 + $0x840] sm:$0xff]
        %v3253 = vld [vmem:[%s369 + $0x848] sm:$0xff]
        %v3254 = vld [vmem:[%s369 + $0x850] sm:$0xff]
        %v3255 = vld [vmem:[%s369 + $0x858] sm:$0xff]
        %v3256 = vld [vmem:[%s369 + $0x860] sm:$0xff]
        %v3257 = vld [vmem:[%s369 + $0x868] sm:$0xff]
        %v3258 = vld [vmem:[%s369 + $0x870] sm:$0xff]
        %v3259 = vld [vmem:[%s369 + $0x878] sm:$0xff]
        %v3260 = vld [vmem:[%s369 + $0x880] sm:$0xff]
        %v3261 = vld [vmem:[%s369 + $0x888] sm:$0xff]
        %v3262 = vld [vmem:[%s369 + $0x890] sm:$0xff]
        %v3263 = vld [vmem:[%s369 + $0x898] sm:$0xff]
        %v3264 = vld [vmem:[%s369 + $0x8a0] sm:$0xff]
        %v3265 = vld [vmem:[%s369 + $0x8a8] sm:$0xff]
        %v3266 = vld [vmem:[%s369 + $0x8b0] sm:$0xff]
        %v3267 = vld [vmem:[%s369 + $0x8b8] sm:$0xff]
        %v3268 = vld [vmem:[%s369 + $0x8c0] sm:$0xff]
        %v3269 = vld [vmem:[%s369 + $0x8c8] sm:$0xff]
        %v3270 = vld [vmem:[%s369 + $0x8d0] sm:$0xff]
        %v3271 = vld [vmem:[%s369 + $0x8d8] sm:$0xff]
        %v3272 = vld [vmem:[%s369 + $0x8e0] sm:$0xff]
        %v3273 = vld [vmem:[%s369 + $0x8e8] sm:$0xff]
        %v3274 = vld [vmem:[%s369 + $0x8f0] sm:$0xff]
        %v3275 = vld [vmem:[%s369 + $0x8f8] sm:$0xff]
        %v3276 = vld [vmem:[%s369 + $0x900] sm:$0xff]
        %v3277 = vld [vmem:[%s369 + $0x908] sm:$0xff]
        %v3278 = vld [vmem:[%s369 + $0x910] sm:$0xff]
        %v3279 = vld [vmem:[%s369 + $0x918] sm:$0xff]
        %v3280 = vld [vmem:[%s369 + $0x920] sm:$0xff]
        %v3281 = vld [vmem:[%s369 + $0x928] sm:$0xff]
        %v3282 = vld [vmem:[%s369 + $0x930] sm:$0xff]
        %v3283 = vld [vmem:[%s369 + $0x938] sm:$0xff]
        %v3284 = vld [vmem:[%s369 + $0x940] sm:$0xff]
        %v3285 = vld [vmem:[%s369 + $0x948] sm:$0xff]
        %v3286 = vld [vmem:[%s369 + $0x950] sm:$0xff]
        %v3287 = vld [vmem:[%s369 + $0x958] sm:$0xff]
        %v3288 = vld [vmem:[%s369 + $0x960] sm:$0xff]
        %v3289 = vld [vmem:[%s369 + $0x968] sm:$0xff]
        %v3290 = vld [vmem:[%s369 + $0x970] sm:$0xff]
        %v3291 = vld [vmem:[%s369 + $0x978] sm:$0xff]
        %v3292 = vld [vmem:[%s369 + $0x980] sm:$0xff]
        %v3293 = vld [vmem:[%s369 + $0x988] sm:$0xff]
        %v3294 = vld [vmem:[%s369 + $0x990] sm:$0xff]
        %v3295 = vld [vmem:[%s369 + $0x998] sm:$0xff]
        %v3296 = vld [vmem:[%s369 + $0x9a0] sm:$0xff]
        %v3297 = vld [vmem:[%s369 + $0x9a8] sm:$0xff]
        %v3298 = vld [vmem:[%s369 + $0x9b0] sm:$0xff]
        %v3299 = vld [vmem:[%s369 + $0x9b8] sm:$0xff]
        %v3300 = vld [vmem:[%s369 + $0x9c0] sm:$0xff]
        %v3301 = vld [vmem:[%s369 + $0x9c8] sm:$0xff]
        %v3302 = vld [vmem:[%s369 + $0x9d0] sm:$0xff]
        %v3303 = vld [vmem:[%s369 + $0x9d8] sm:$0xff]
        %v3304 = vld [vmem:[%s369 + $0x9e0] sm:$0xff]
        %v3305 = vld [vmem:[%s369 + $0x9e8] sm:$0xff]
        %v3306 = vld [vmem:[%s369 + $0x9f0] sm:$0xff]
        %v3307 = vld [vmem:[%s369 + $0x9f8] sm:$0xff]
        %v3308 = vld [vmem:[%s369 + $0xa00] sm:$0xff]
        %v3309 = vld [vmem:[%s369 + $0xa08] sm:$0xff]
        %v3310 = vld [vmem:[%s369 + $0xa10] sm:$0xff]
        %v3311 = vld [vmem:[%s369 + $0xa18] sm:$0xff]
        %v3312 = vld [vmem:[%s369 + $0xa20] sm:$0xff]
        %v3313 = vld [vmem:[%s369 + $0xa28] sm:$0xff]
        %v3314 = vld [vmem:[%s369 + $0xa30] sm:$0xff]
        %v3315 = vld [vmem:[%s369 + $0xa38] sm:$0xff]
        %v3316 = vld [vmem:[%s369 + $0xa40] sm:$0xff]
        %v3317 = vld [vmem:[%s369 + $0xa48] sm:$0xff]
        %v3318 = vld [vmem:[%s369 + $0xa50] sm:$0xff]
        %v3319 = vld [vmem:[%s369 + $0xa58] sm:$0xff]
        %v3320 = vld [vmem:[%s369 + $0xa60] sm:$0xff]
        %v3321 = vld [vmem:[%s369 + $0xa68] sm:$0xff]
        %v3322 = vld [vmem:[%s369 + $0xa70] sm:$0xff]
        %v3323 = vld [vmem:[%s369 + $0xa78] sm:$0xff]
        %v3324 = vld [vmem:[%s369 + $0xa80] sm:$0xff]
        %v3325 = vld [vmem:[%s369 + $0xa88] sm:$0xff]
        %v3326 = vld [vmem:[%s369 + $0xa90] sm:$0xff]
        %v3327 = vld [vmem:[%s369 + $0xa98] sm:$0xff]
        %v3328 = vld [vmem:[%s369 + $0xaa0] sm:$0xff]
        %v3329 = vld [vmem:[%s369 + $0xaa8] sm:$0xff]
        %v3330 = vld [vmem:[%s369 + $0xab0] sm:$0xff]
        %v3331 = vld [vmem:[%s369 + $0xab8] sm:$0xff]
        %v3332 = vld [vmem:[%s369 + $0xac0] sm:$0xff]
        %v3333 = vld [vmem:[%s369 + $0xac8] sm:$0xff]
        %v3334 = vld [vmem:[%s369 + $0xad0] sm:$0xff]
        %v3335 = vld [vmem:[%s369 + $0xad8] sm:$0xff]
        %v3336 = vld [vmem:[%s369 + $0xae0] sm:$0xff]
        %v3337 = vld [vmem:[%s369 + $0xae8] sm:$0xff]
        %v3338 = vld [vmem:[%s369 + $0xaf0] sm:$0xff]
        %v3339 = vld [vmem:[%s369 + $0xaf8] sm:$0xff]
        %v3340 = vld [vmem:[%s369 + $0xb00] sm:$0xff]
        %v3341 = vld [vmem:[%s369 + $0xb08] sm:$0xff]
        %v3342 = vld [vmem:[%s369 + $0xb10] sm:$0xff]
        %v3343 = vld [vmem:[%s369 + $0xb18] sm:$0xff]
        %v3344 = vld [vmem:[%s369 + $0xb20] sm:$0xff]
        %v3345 = vld [vmem:[%s369 + $0xb28] sm:$0xff]
        %v3346 = vld [vmem:[%s369 + $0xb30] sm:$0xff]
        %v3347 = vld [vmem:[%s369 + $0xb38] sm:$0xff]
        %v3348 = vld [vmem:[%s369 + $0xb40] sm:$0xff]
        %v3349 = vld [vmem:[%s369 + $0xb48] sm:$0xff]
        %v3350 = vld [vmem:[%s369 + $0xb50] sm:$0xff]
        %v3351 = vld [vmem:[%s369 + $0xb58] sm:$0xff]
        %v3352 = vld [vmem:[%s369 + $0xb60] sm:$0xff]
        %v3353 = vld [vmem:[%s369 + $0xb68] sm:$0xff]
        %v3354 = vld [vmem:[%s369 + $0xb70] sm:$0xff]
        %v3355 = vld [vmem:[%s369 + $0xb78] sm:$0xff]
        %v3356 = vld [vmem:[%s369 + $0xb80] sm:$0xff]
        %v3357 = vld [vmem:[%s369 + $0xb88] sm:$0xff]
        %v3358 = vld [vmem:[%s369 + $0xb90] sm:$0xff]
        %v3359 = vld [vmem:[%s369 + $0xb98] sm:$0xff]
        %v3360 = vld [vmem:[%s369 + $0xba0] sm:$0xff]
        %v3361 = vld [vmem:[%s369 + $0xba8] sm:$0xff]
        %v3362 = vld [vmem:[%s369 + $0xbb0] sm:$0xff]
        %v3363 = vld [vmem:[%s369 + $0xbb8] sm:$0xff]
        %v3364 = vld [vmem:[%s369 + $0xbc0] sm:$0xff]
        %v3365 = vld [vmem:[%s369 + $0xbc8] sm:$0xff]
        %v3366 = vld [vmem:[%s369 + $0xbd0] sm:$0xff]
        %v3367 = vld [vmem:[%s369 + $0xbd8] sm:$0xff]
        %v3368 = vld [vmem:[%s369 + $0xbe0] sm:$0xff]
        %v3369 = vld [vmem:[%s369 + $0xbe8] sm:$0xff]
        %v3370 = vld [vmem:[%s369 + $0xbf0] sm:$0xff]
        %v3371 = vld [vmem:[%s369 + $0xbf8] sm:$0xff]
        %v3372 = vld [vmem:[%s369 + $0xc00] sm:$0xff]
        %v3373 = vld [vmem:[%s369 + $0xc08] sm:$0xff]
        %v3374 = vld [vmem:[%s369 + $0xc10] sm:$0xff]
        %v3375 = vld [vmem:[%s369 + $0xc18] sm:$0xff]
        %v3376 = vld [vmem:[%s369 + $0xc20] sm:$0xff]
        %v3377 = vld [vmem:[%s369 + $0xc28] sm:$0xff]
        %v3378 = vld [vmem:[%s369 + $0xc30] sm:$0xff]
        %v3379 = vld [vmem:[%s369 + $0xc38] sm:$0xff]
        %v3380 = vld [vmem:[%s369 + $0xc40] sm:$0xff]
        %v3381 = vld [vmem:[%s369 + $0xc48] sm:$0xff]
        %v3382 = vld [vmem:[%s369 + $0xc50] sm:$0xff]
        %v3383 = vld [vmem:[%s369 + $0xc58] sm:$0xff]
        %v3384 = vld [vmem:[%s369 + $0xc60] sm:$0xff]
        %v3385 = vld [vmem:[%s369 + $0xc68] sm:$0xff]
        %v3386 = vld [vmem:[%s369 + $0xc70] sm:$0xff]
        %v3387 = vld [vmem:[%s369 + $0xc78] sm:$0xff]
        %v3388 = vld [vmem:[%s369 + $0xc80] sm:$0xff]
        %v3389 = vld [vmem:[%s369 + $0xc88] sm:$0xff]
        %v3390 = vld [vmem:[%s369 + $0xc90] sm:$0xff]
        %v3391 = vld [vmem:[%s369 + $0xc98] sm:$0xff]
        %v3392 = vld [vmem:[%s369 + $0xca0] sm:$0xff]
        %v3393 = vld [vmem:[%s369 + $0xca8] sm:$0xff]
        %v3394 = vld [vmem:[%s369 + $0xcb0] sm:$0xff]
        %v3395 = vld [vmem:[%s369 + $0xcb8] sm:$0xff]
        %v3396 = vld [vmem:[%s369 + $0xcc0] sm:$0xff]
        %v3397 = vld [vmem:[%s369 + $0xcc8] sm:$0xff]
        %v3398 = vld [vmem:[%s369 + $0xcd0] sm:$0xff]
        %v3399 = vld [vmem:[%s369 + $0xcd8] sm:$0xff]
        %v3400 = vld [vmem:[%s369 + $0xce0] sm:$0xff]
        %v3401 = vld [vmem:[%s369 + $0xce8] sm:$0xff]
        %v3402 = vld [vmem:[%s369 + $0xcf0] sm:$0xff]
        %v3403 = vld [vmem:[%s369 + $0xcf8] sm:$0xff]
        %v3404 = vld [vmem:[%s369 + $0xd00] sm:$0xff]
        %v3405 = vld [vmem:[%s369 + $0xd08] sm:$0xff]
        %v3406 = vld [vmem:[%s369 + $0xd10] sm:$0xff]
        %v3407 = vld [vmem:[%s369 + $0xd18] sm:$0xff]
        %v3408 = vld [vmem:[%s369 + $0xd20] sm:$0xff]
        %v3409 = vld [vmem:[%s369 + $0xd28] sm:$0xff]
        %v3410 = vld [vmem:[%s369 + $0xd30] sm:$0xff]
        %v3411 = vld [vmem:[%s369 + $0xd38] sm:$0xff]
        %v3412 = vld [vmem:[%s369 + $0xd40] sm:$0xff]
        %v3413 = vld [vmem:[%s369 + $0xd48] sm:$0xff]
        %v3414 = vld [vmem:[%s369 + $0xd50] sm:$0xff]
        %v3415 = vld [vmem:[%s369 + $0xd58] sm:$0xff]
        %v3416 = vld [vmem:[%s369 + $0xd60] sm:$0xff]
        %v3417 = vld [vmem:[%s369 + $0xd68] sm:$0xff]
        %v3418 = vld [vmem:[%s369 + $0xd70] sm:$0xff]
        %v3419 = vld [vmem:[%s369 + $0xd78] sm:$0xff]
        %v3420 = vld [vmem:[%s369 + $0xd80] sm:$0xff]
        %v3421 = vld [vmem:[%s369 + $0xd88] sm:$0xff]
        %v3422 = vld [vmem:[%s369 + $0xd90] sm:$0xff]
        %v3423 = vld [vmem:[%s369 + $0xd98] sm:$0xff]
        %v3424 = vld [vmem:[%s369 + $0xda0] sm:$0xff]
        %v3425 = vld [vmem:[%s369 + $0xda8] sm:$0xff]
        %v3426 = vld [vmem:[%s369 + $0xdb0] sm:$0xff]
        %v3427 = vld [vmem:[%s369 + $0xdb8] sm:$0xff]
        %v3428 = vld [vmem:[%s369 + $0xdc0] sm:$0xff]
        %v3429 = vld [vmem:[%s369 + $0xdc8] sm:$0xff]
        %v3430 = vld [vmem:[%s369 + $0xdd0] sm:$0xff]
        %v3431 = vld [vmem:[%s369 + $0xdd8] sm:$0xff]
        %v3432 = vld [vmem:[%s369 + $0xde0] sm:$0xff]
        %v3433 = vld [vmem:[%s369 + $0xde8] sm:$0xff]
        %v3434 = vld [vmem:[%s369 + $0xdf0] sm:$0xff]
        %v3435 = vld [vmem:[%s369 + $0xdf8] sm:$0xff]
        %v3436 = vld [vmem:[%s369 + $0xe00] sm:$0xff]
        %v3437 = vld [vmem:[%s369 + $0xe08] sm:$0xff]
        %v3438 = vld [vmem:[%s369 + $0xe10] sm:$0xff]
        %v3439 = vld [vmem:[%s369 + $0xe18] sm:$0xff]
        %v3440 = vld [vmem:[%s369 + $0xe20] sm:$0xff]
        %v3441 = vld [vmem:[%s369 + $0xe28] sm:$0xff]
        %v3442 = vld [vmem:[%s369 + $0xe30] sm:$0xff]
        %v3443 = vld [vmem:[%s369 + $0xe38] sm:$0xff]
        %v3444 = vld [vmem:[%s369 + $0xe40] sm:$0xff]
        %v3445 = vld [vmem:[%s369 + $0xe48] sm:$0xff]
        %v3446 = vld [vmem:[%s369 + $0xe50] sm:$0xff]
        %v3447 = vld [vmem:[%s369 + $0xe58] sm:$0xff]
        %v3448 = vld [vmem:[%s369 + $0xe60] sm:$0xff]
        %v3449 = vld [vmem:[%s369 + $0xe68] sm:$0xff]
        %v3450 = vld [vmem:[%s369 + $0xe70] sm:$0xff]
        %v3451 = vld [vmem:[%s369 + $0xe78] sm:$0xff]
        %v3452 = vld [vmem:[%s369 + $0xe80] sm:$0xff]
        %v3453 = vld [vmem:[%s369 + $0xe88] sm:$0xff]
        %v3454 = vld [vmem:[%s369 + $0xe90] sm:$0xff]
        %v3455 = vld [vmem:[%s369 + $0xe98] sm:$0xff]
        %v3456 = vld [vmem:[%s369 + $0xea0] sm:$0xff]
        %v3457 = vld [vmem:[%s369 + $0xea8] sm:$0xff]
        %v3458 = vld [vmem:[%s369 + $0xeb0] sm:$0xff]
        %v3459 = vld [vmem:[%s369 + $0xeb8] sm:$0xff]
        %v3460 = vld [vmem:[%s369 + $0xec0] sm:$0xff]
        %v3461 = vld [vmem:[%s369 + $0xec8] sm:$0xff]
        %v3462 = vld [vmem:[%s369 + $0xed0] sm:$0xff]
        %v3463 = vld [vmem:[%s369 + $0xed8] sm:$0xff]
        %v3464 = vld [vmem:[%s369 + $0xee0] sm:$0xff]
        %v3465 = vld [vmem:[%s369 + $0xee8] sm:$0xff]
        %v3466 = vld [vmem:[%s369 + $0xef0] sm:$0xff]
        %v3467 = vld [vmem:[%s369 + $0xef8] sm:$0xff]
        %v3468 = vld [vmem:[%s369 + $0xf00] sm:$0xff]
        %v3469 = vld [vmem:[%s369 + $0xf08] sm:$0xff]
        %v3470 = vld [vmem:[%s369 + $0xf10] sm:$0xff]
        %v3471 = vld [vmem:[%s369 + $0xf18] sm:$0xff]
        %v3472 = vld [vmem:[%s369 + $0xf20] sm:$0xff]
        %v3473 = vld [vmem:[%s369 + $0xf28] sm:$0xff]
        %v3474 = vld [vmem:[%s369 + $0xf30] sm:$0xff]
        %v3475 = vld [vmem:[%s369 + $0xf38] sm:$0xff]
        %v3476 = vld [vmem:[%s369 + $0xf40] sm:$0xff]
        %v3477 = vld [vmem:[%s369 + $0xf48] sm:$0xff]
        %v3478 = vld [vmem:[%s369 + $0xf50] sm:$0xff]
        %v3479 = vld [vmem:[%s369 + $0xf58] sm:$0xff]
        %v3480 = vld [vmem:[%s369 + $0xf60] sm:$0xff]
        %v3481 = vld [vmem:[%s369 + $0xf68] sm:$0xff]
        %v3482 = vld [vmem:[%s369 + $0xf70] sm:$0xff]
        %v3483 = vld [vmem:[%s369 + $0xf78] sm:$0xff]
        %v3484 = vld [vmem:[%s369 + $0xf80] sm:$0xff]
        %v3485 = vld [vmem:[%s369 + $0xf88] sm:$0xff]
        %v3486 = vld [vmem:[%s369 + $0xf90] sm:$0xff]
        %v3487 = vld [vmem:[%s369 + $0xf98] sm:$0xff]
        %v3488 = vld [vmem:[%s369 + $0xfa0] sm:$0xff]
        %v3489 = vld [vmem:[%s369 + $0xfa8] sm:$0xff]
        %v3490 = vld [vmem:[%s369 + $0xfb0] sm:$0xff]
        %v3491 = vld [vmem:[%s369 + $0xfb8] sm:$0xff]
        %v3492 = vld [vmem:[%s369 + $0xfc0] sm:$0xff]
        %v3493 = vld [vmem:[%s369 + $0xfc8] sm:$0xff]
        %v3494 = vld [vmem:[%s369 + $0xfd0] sm:$0xff]
        %v3495 = vld [vmem:[%s369 + $0xfd8] sm:$0xff]
        %v3496 = vld [vmem:[%s369 + $0xfe0] sm:$0xff]
        %v3497 = vld [vmem:[%s369 + $0xfe8] sm:$0xff]
        %v3498 = vld [vmem:[%s369 + $0xff0] sm:$0xff]
        %v3499 = vld [vmem:[%s369 + $0xff8] sm:$0xff]
        %v4012 = vunpack.c.l.b16 %v2988
        %v4013 = vunpack.c.h.b16 %v2988
        %v4014 = vunpack.c.l.b16 %v2989
        %v4015 = vunpack.c.h.b16 %v2989
        %v4016 = vunpack.c.l.b16 %v2990
        %v4017 = vunpack.c.h.b16 %v2990
        %v4018 = vunpack.c.l.b16 %v2991
        %v4019 = vunpack.c.h.b16 %v2991
        %v4020 = vunpack.c.l.b16 %v2992
        %v4021 = vunpack.c.h.b16 %v2992
        %v4022 = vunpack.c.l.b16 %v2993
        %v4023 = vunpack.c.h.b16 %v2993
        %v4024 = vunpack.c.l.b16 %v2994
        %v4025 = vunpack.c.h.b16 %v2994
        %v4026 = vunpack.c.l.b16 %v2995
        %v4027 = vunpack.c.h.b16 %v2995
        %v4028 = vunpack.c.l.b16 %v2996
        %v4029 = vunpack.c.h.b16 %v2996
        %v4030 = vunpack.c.l.b16 %v2997
        %v4031 = vunpack.c.h.b16 %v2997
        %v4032 = vunpack.c.l.b16 %v2998
        %v4033 = vunpack.c.h.b16 %v2998
        %v4034 = vunpack.c.l.b16 %v2999
        %v4035 = vunpack.c.h.b16 %v2999
        %v4036 = vunpack.c.l.b16 %v3000
        %v4037 = vunpack.c.h.b16 %v3000
        %v4038 = vunpack.c.l.b16 %v3001
        %v4039 = vunpack.c.h.b16 %v3001
        %v4040 = vunpack.c.l.b16 %v3002
        %v4041 = vunpack.c.h.b16 %v3002
        %v4042 = vunpack.c.l.b16 %v3003
        %v4043 = vunpack.c.h.b16 %v3003
        %v4044 = vunpack.c.l.b16 %v3004
        %v4045 = vunpack.c.h.b16 %v3004
        %v4046 = vunpack.c.l.b16 %v3005
        %v4047 = vunpack.c.h.b16 %v3005
        %v4048 = vunpack.c.l.b16 %v3006
        %v4049 = vunpack.c.h.b16 %v3006
        %v4050 = vunpack.c.l.b16 %v3007
        %v4051 = vunpack.c.h.b16 %v3007
        %v4052 = vunpack.c.l.b16 %v3008
        %v4053 = vunpack.c.h.b16 %v3008
        %v4054 = vunpack.c.l.b16 %v3009
        %v4055 = vunpack.c.h.b16 %v3009
        %v4056 = vunpack.c.l.b16 %v3010
        %v4057 = vunpack.c.h.b16 %v3010
        %v4058 = vunpack.c.l.b16 %v3011
        %v4059 = vunpack.c.h.b16 %v3011
        %v4060 = vunpack.c.l.b16 %v3012
        %v4061 = vunpack.c.h.b16 %v3012
        %v4062 = vunpack.c.l.b16 %v3013
        %v4063 = vunpack.c.h.b16 %v3013
        %v4064 = vunpack.c.l.b16 %v3014
        %v4065 = vunpack.c.h.b16 %v3014
        %v4066 = vunpack.c.l.b16 %v3015
        %v4067 = vunpack.c.h.b16 %v3015
        %v4068 = vunpack.c.l.b16 %v3016
        %v4069 = vunpack.c.h.b16 %v3016
        %v4070 = vunpack.c.l.b16 %v3017
        %v4071 = vunpack.c.h.b16 %v3017
        %v4072 = vunpack.c.l.b16 %v3018
        %v4073 = vunpack.c.h.b16 %v3018
        %v4074 = vunpack.c.l.b16 %v3019
        %v4075 = vunpack.c.h.b16 %v3019
        %v4076 = vunpack.c.l.b16 %v3020
        %v4077 = vunpack.c.h.b16 %v3020
        %v4078 = vunpack.c.l.b16 %v3021
        %v4079 = vunpack.c.h.b16 %v3021
        %v4080 = vunpack.c.l.b16 %v3022
        %v4081 = vunpack.c.h.b16 %v3022
        %v4082 = vunpack.c.l.b16 %v3023
        %v4083 = vunpack.c.h.b16 %v3023
        %v4084 = vunpack.c.l.b16 %v3024
        %v4085 = vunpack.c.h.b16 %v3024
        %v4086 = vunpack.c.l.b16 %v3025
        %v4087 = vunpack.c.h.b16 %v3025
        %v4088 = vunpack.c.l.b16 %v3026
        %v4089 = vunpack.c.h.b16 %v3026
        %v4090 = vunpack.c.l.b16 %v3027
        %v4091 = vunpack.c.h.b16 %v3027
        %v4092 = vunpack.c.l.b16 %v3028
        %v4093 = vunpack.c.h.b16 %v3028
        %v4094 = vunpack.c.l.b16 %v3029
        %v4095 = vunpack.c.h.b16 %v3029
        %v4096 = vunpack.c.l.b16 %v3030
        %v4097 = vunpack.c.h.b16 %v3030
        %v4098 = vunpack.c.l.b16 %v3031
        %v4099 = vunpack.c.h.b16 %v3031
        %v4100 = vunpack.c.l.b16 %v3032
        %v4101 = vunpack.c.h.b16 %v3032
        %v4102 = vunpack.c.l.b16 %v3033
        %v4103 = vunpack.c.h.b16 %v3033
        %v4104 = vunpack.c.l.b16 %v3034
        %v4105 = vunpack.c.h.b16 %v3034
        %v4106 = vunpack.c.l.b16 %v3035
        %v4107 = vunpack.c.h.b16 %v3035
        %v4108 = vunpack.c.l.b16 %v3036
        %v4109 = vunpack.c.h.b16 %v3036
        %v4110 = vunpack.c.l.b16 %v3037
        %v4111 = vunpack.c.h.b16 %v3037
        %v4112 = vunpack.c.l.b16 %v3038
        %v4113 = vunpack.c.h.b16 %v3038
        %v4114 = vunpack.c.l.b16 %v3039
        %v4115 = vunpack.c.h.b16 %v3039
        %v4116 = vunpack.c.l.b16 %v3040
        %v4117 = vunpack.c.h.b16 %v3040
        %v4118 = vunpack.c.l.b16 %v3041
        %v4119 = vunpack.c.h.b16 %v3041
        %v4120 = vunpack.c.l.b16 %v3042
        %v4121 = vunpack.c.h.b16 %v3042
        %v4122 = vunpack.c.l.b16 %v3043
        %v4123 = vunpack.c.h.b16 %v3043
        %v4124 = vunpack.c.l.b16 %v3044
        %v4125 = vunpack.c.h.b16 %v3044
        %v4126 = vunpack.c.l.b16 %v3045
        %v4127 = vunpack.c.h.b16 %v3045
        %v4128 = vunpack.c.l.b16 %v3046
        %v4129 = vunpack.c.h.b16 %v3046
        %v4130 = vunpack.c.l.b16 %v3047
        %v4131 = vunpack.c.h.b16 %v3047
        %v4132 = vunpack.c.l.b16 %v3048
        %v4133 = vunpack.c.h.b16 %v3048
        %v4134 = vunpack.c.l.b16 %v3049
        %v4135 = vunpack.c.h.b16 %v3049
        %v4136 = vunpack.c.l.b16 %v3050
        %v4137 = vunpack.c.h.b16 %v3050
        %v4138 = vunpack.c.l.b16 %v3051
        %v4139 = vunpack.c.h.b16 %v3051
        %v4140 = vunpack.c.l.b16 %v3052
        %v4141 = vunpack.c.h.b16 %v3052
        %v4142 = vunpack.c.l.b16 %v3053
        %v4143 = vunpack.c.h.b16 %v3053
        %v4144 = vunpack.c.l.b16 %v3054
        %v4145 = vunpack.c.h.b16 %v3054
        %v4146 = vunpack.c.l.b16 %v3055
        %v4147 = vunpack.c.h.b16 %v3055
        %v4148 = vunpack.c.l.b16 %v3056
        %v4149 = vunpack.c.h.b16 %v3056
        %v4150 = vunpack.c.l.b16 %v3057
        %v4151 = vunpack.c.h.b16 %v3057
        %v4152 = vunpack.c.l.b16 %v3058
        %v4153 = vunpack.c.h.b16 %v3058
        %v4154 = vunpack.c.l.b16 %v3059
        %v4155 = vunpack.c.h.b16 %v3059
        %v4156 = vunpack.c.l.b16 %v3060
        %v4157 = vunpack.c.h.b16 %v3060
        %v4158 = vunpack.c.l.b16 %v3061
        %v4159 = vunpack.c.h.b16 %v3061
        %v4160 = vunpack.c.l.b16 %v3062
        %v4161 = vunpack.c.h.b16 %v3062
        %v4162 = vunpack.c.l.b16 %v3063
        %v4163 = vunpack.c.h.b16 %v3063
        %v4164 = vunpack.c.l.b16 %v3064
        %v4165 = vunpack.c.h.b16 %v3064
        %v4166 = vunpack.c.l.b16 %v3065
        %v4167 = vunpack.c.h.b16 %v3065
        %v4168 = vunpack.c.l.b16 %v3066
        %v4169 = vunpack.c.h.b16 %v3066
        %v4170 = vunpack.c.l.b16 %v3067
        %v4171 = vunpack.c.h.b16 %v3067
        %v4172 = vunpack.c.l.b16 %v3068
        %v4173 = vunpack.c.h.b16 %v3068
        %v4174 = vunpack.c.l.b16 %v3069
        %v4175 = vunpack.c.h.b16 %v3069
        %v4176 = vunpack.c.l.b16 %v3070
        %v4177 = vunpack.c.h.b16 %v3070
        %v4178 = vunpack.c.l.b16 %v3071
        %v4179 = vunpack.c.h.b16 %v3071
        %v4180 = vunpack.c.l.b16 %v3072
        %v4181 = vunpack.c.h.b16 %v3072
        %v4182 = vunpack.c.l.b16 %v3073
        %v4183 = vunpack.c.h.b16 %v3073
        %v4184 = vunpack.c.l.b16 %v3074
        %v4185 = vunpack.c.h.b16 %v3074
        %v4186 = vunpack.c.l.b16 %v3075
        %v4187 = vunpack.c.h.b16 %v3075
        %v4188 = vunpack.c.l.b16 %v3076
        %v4189 = vunpack.c.h.b16 %v3076
        %v4190 = vunpack.c.l.b16 %v3077
        %v4191 = vunpack.c.h.b16 %v3077
        %v4192 = vunpack.c.l.b16 %v3078
        %v4193 = vunpack.c.h.b16 %v3078
        %v4194 = vunpack.c.l.b16 %v3079
        %v4195 = vunpack.c.h.b16 %v3079
        %v4196 = vunpack.c.l.b16 %v3080
        %v4197 = vunpack.c.h.b16 %v3080
        %v4198 = vunpack.c.l.b16 %v3081
        %v4199 = vunpack.c.h.b16 %v3081
        %v4200 = vunpack.c.l.b16 %v3082
        %v4201 = vunpack.c.h.b16 %v3082
        %v4202 = vunpack.c.l.b16 %v3083
        %v4203 = vunpack.c.h.b16 %v3083
        %v4204 = vunpack.c.l.b16 %v3084
        %v4205 = vunpack.c.h.b16 %v3084
        %v4206 = vunpack.c.l.b16 %v3085
        %v4207 = vunpack.c.h.b16 %v3085
        %v4208 = vunpack.c.l.b16 %v3086
        %v4209 = vunpack.c.h.b16 %v3086
        %v4210 = vunpack.c.l.b16 %v3087
        %v4211 = vunpack.c.h.b16 %v3087
        %v4212 = vunpack.c.l.b16 %v3088
        %v4213 = vunpack.c.h.b16 %v3088
        %v4214 = vunpack.c.l.b16 %v3089
        %v4215 = vunpack.c.h.b16 %v3089
        %v4216 = vunpack.c.l.b16 %v3090
        %v4217 = vunpack.c.h.b16 %v3090
        %v4218 = vunpack.c.l.b16 %v3091
        %v4219 = vunpack.c.h.b16 %v3091
        %v4220 = vunpack.c.l.b16 %v3092
        %v4221 = vunpack.c.h.b16 %v3092
        %v4222 = vunpack.c.l.b16 %v3093
        %v4223 = vunpack.c.h.b16 %v3093
        %v4224 = vunpack.c.l.b16 %v3094
        %v4225 = vunpack.c.h.b16 %v3094
        %v4226 = vunpack.c.l.b16 %v3095
        %v4227 = vunpack.c.h.b16 %v3095
        %v4228 = vunpack.c.l.b16 %v3096
        %v4229 = vunpack.c.h.b16 %v3096
        %v4230 = vunpack.c.l.b16 %v3097
        %v4231 = vunpack.c.h.b16 %v3097
        %v4232 = vunpack.c.l.b16 %v3098
        %v4233 = vunpack.c.h.b16 %v3098
        %v4234 = vunpack.c.l.b16 %v3099
        %v4235 = vunpack.c.h.b16 %v3099
        %v4236 = vunpack.c.l.b16 %v3100
        %v4237 = vunpack.c.h.b16 %v3100
        %v4238 = vunpack.c.l.b16 %v3101
        %v4239 = vunpack.c.h.b16 %v3101
        %v4240 = vunpack.c.l.b16 %v3102
        %v4241 = vunpack.c.h.b16 %v3102
        %v4242 = vunpack.c.l.b16 %v3103
        %v4243 = vunpack.c.h.b16 %v3103
        %v4244 = vunpack.c.l.b16 %v3104
        %v4245 = vunpack.c.h.b16 %v3104
        %v4246 = vunpack.c.l.b16 %v3105
        %v4247 = vunpack.c.h.b16 %v3105
        %v4248 = vunpack.c.l.b16 %v3106
        %v4249 = vunpack.c.h.b16 %v3106
        %v4250 = vunpack.c.l.b16 %v3107
        %v4251 = vunpack.c.h.b16 %v3107
        %v4252 = vunpack.c.l.b16 %v3108
        %v4253 = vunpack.c.h.b16 %v3108
        %v4254 = vunpack.c.l.b16 %v3109
        %v4255 = vunpack.c.h.b16 %v3109
        %v4256 = vunpack.c.l.b16 %v3110
        %v4257 = vunpack.c.h.b16 %v3110
        %v4258 = vunpack.c.l.b16 %v3111
        %v4259 = vunpack.c.h.b16 %v3111
        %v4260 = vunpack.c.l.b16 %v3112
        %v4261 = vunpack.c.h.b16 %v3112
        %v4262 = vunpack.c.l.b16 %v3113
        %v4263 = vunpack.c.h.b16 %v3113
        %v4264 = vunpack.c.l.b16 %v3114
        %v4265 = vunpack.c.h.b16 %v3114
        %v4266 = vunpack.c.l.b16 %v3115
        %v4267 = vunpack.c.h.b16 %v3115
        %v4268 = vunpack.c.l.b16 %v3116
        %v4269 = vunpack.c.h.b16 %v3116
        %v4270 = vunpack.c.l.b16 %v3117
        %v4271 = vunpack.c.h.b16 %v3117
        %v4272 = vunpack.c.l.b16 %v3118
        %v4273 = vunpack.c.h.b16 %v3118
        %v4274 = vunpack.c.l.b16 %v3119
        %v4275 = vunpack.c.h.b16 %v3119
        %v4276 = vunpack.c.l.b16 %v3120
        %v4277 = vunpack.c.h.b16 %v3120
        %v4278 = vunpack.c.l.b16 %v3121
        %v4279 = vunpack.c.h.b16 %v3121
        %v4280 = vunpack.c.l.b16 %v3122
        %v4281 = vunpack.c.h.b16 %v3122
        %v4282 = vunpack.c.l.b16 %v3123
        %v4283 = vunpack.c.h.b16 %v3123
        %v4284 = vunpack.c.l.b16 %v3124
        %v4285 = vunpack.c.h.b16 %v3124
        %v4286 = vunpack.c.l.b16 %v3125
        %v4287 = vunpack.c.h.b16 %v3125
        %v4288 = vunpack.c.l.b16 %v3126
        %v4289 = vunpack.c.h.b16 %v3126
        %v4290 = vunpack.c.l.b16 %v3127
        %v4291 = vunpack.c.h.b16 %v3127
        %v4292 = vunpack.c.l.b16 %v3128
        %v4293 = vunpack.c.h.b16 %v3128
        %v4294 = vunpack.c.l.b16 %v3129
        %v4295 = vunpack.c.h.b16 %v3129
        %v4296 = vunpack.c.l.b16 %v3130
        %v4297 = vunpack.c.h.b16 %v3130
        %v4298 = vunpack.c.l.b16 %v3131
        %v4299 = vunpack.c.h.b16 %v3131
        %v4300 = vunpack.c.l.b16 %v3132
        %v4301 = vunpack.c.h.b16 %v3132
        %v4302 = vunpack.c.l.b16 %v3133
        %v4303 = vunpack.c.h.b16 %v3133
        %v4304 = vunpack.c.l.b16 %v3134
        %v4305 = vunpack.c.h.b16 %v3134
        %v4306 = vunpack.c.l.b16 %v3135
        %v4307 = vunpack.c.h.b16 %v3135
        %v4308 = vunpack.c.l.b16 %v3136
        %v4309 = vunpack.c.h.b16 %v3136
        %v4310 = vunpack.c.l.b16 %v3137
        %v4311 = vunpack.c.h.b16 %v3137
        %v4312 = vunpack.c.l.b16 %v3138
        %v4313 = vunpack.c.h.b16 %v3138
        %v4314 = vunpack.c.l.b16 %v3139
        %v4315 = vunpack.c.h.b16 %v3139
        %v4316 = vunpack.c.l.b16 %v3140
        %v4317 = vunpack.c.h.b16 %v3140
        %v4318 = vunpack.c.l.b16 %v3141
        %v4319 = vunpack.c.h.b16 %v3141
        %v4320 = vunpack.c.l.b16 %v3142
        %v4321 = vunpack.c.h.b16 %v3142
        %v4322 = vunpack.c.l.b16 %v3143
        %v4323 = vunpack.c.h.b16 %v3143
        %v4324 = vunpack.c.l.b16 %v3144
        %v4325 = vunpack.c.h.b16 %v3144
        %v4326 = vunpack.c.l.b16 %v3145
        %v4327 = vunpack.c.h.b16 %v3145
        %v4328 = vunpack.c.l.b16 %v3146
        %v4329 = vunpack.c.h.b16 %v3146
        %v4330 = vunpack.c.l.b16 %v3147
        %v4331 = vunpack.c.h.b16 %v3147
        %v4332 = vunpack.c.l.b16 %v3148
        %v4333 = vunpack.c.h.b16 %v3148
        %v4334 = vunpack.c.l.b16 %v3149
        %v4335 = vunpack.c.h.b16 %v3149
        %v4336 = vunpack.c.l.b16 %v3150
        %v4337 = vunpack.c.h.b16 %v3150
        %v4338 = vunpack.c.l.b16 %v3151
        %v4339 = vunpack.c.h.b16 %v3151
        %v4340 = vunpack.c.l.b16 %v3152
        %v4341 = vunpack.c.h.b16 %v3152
        %v4342 = vunpack.c.l.b16 %v3153
        %v4343 = vunpack.c.h.b16 %v3153
        %v4344 = vunpack.c.l.b16 %v3154
        %v4345 = vunpack.c.h.b16 %v3154
        %v4346 = vunpack.c.l.b16 %v3155
        %v4347 = vunpack.c.h.b16 %v3155
        %v4348 = vunpack.c.l.b16 %v3156
        %v4349 = vunpack.c.h.b16 %v3156
        %v4350 = vunpack.c.l.b16 %v3157
        %v4351 = vunpack.c.h.b16 %v3157
        %v4352 = vunpack.c.l.b16 %v3158
        %v4353 = vunpack.c.h.b16 %v3158
        %v4354 = vunpack.c.l.b16 %v3159
        %v4355 = vunpack.c.h.b16 %v3159
        %v4356 = vunpack.c.l.b16 %v3160
        %v4357 = vunpack.c.h.b16 %v3160
        %v4358 = vunpack.c.l.b16 %v3161
        %v4359 = vunpack.c.h.b16 %v3161
        %v4360 = vunpack.c.l.b16 %v3162
        %v4361 = vunpack.c.h.b16 %v3162
        %v4362 = vunpack.c.l.b16 %v3163
        %v4363 = vunpack.c.h.b16 %v3163
        %v4364 = vunpack.c.l.b16 %v3164
        %v4365 = vunpack.c.h.b16 %v3164
        %v4366 = vunpack.c.l.b16 %v3165
        %v4367 = vunpack.c.h.b16 %v3165
        %v4368 = vunpack.c.l.b16 %v3166
        %v4369 = vunpack.c.h.b16 %v3166
        %v4370 = vunpack.c.l.b16 %v3167
        %v4371 = vunpack.c.h.b16 %v3167
        %v4372 = vunpack.c.l.b16 %v3168
        %v4373 = vunpack.c.h.b16 %v3168
        %v4374 = vunpack.c.l.b16 %v3169
        %v4375 = vunpack.c.h.b16 %v3169
        %v4376 = vunpack.c.l.b16 %v3170
        %v4377 = vunpack.c.h.b16 %v3170
        %v4378 = vunpack.c.l.b16 %v3171
        %v4379 = vunpack.c.h.b16 %v3171
        %v4380 = vunpack.c.l.b16 %v3172
        %v4381 = vunpack.c.h.b16 %v3172
        %v4382 = vunpack.c.l.b16 %v3173
        %v4383 = vunpack.c.h.b16 %v3173
        %v4384 = vunpack.c.l.b16 %v3174
        %v4385 = vunpack.c.h.b16 %v3174
        %v4386 = vunpack.c.l.b16 %v3175
        %v4387 = vunpack.c.h.b16 %v3175
        %v4388 = vunpack.c.l.b16 %v3176
        %v4389 = vunpack.c.h.b16 %v3176
        %v4390 = vunpack.c.l.b16 %v3177
        %v4391 = vunpack.c.h.b16 %v3177
        %v4392 = vunpack.c.l.b16 %v3178
        %v4393 = vunpack.c.h.b16 %v3178
        %v4394 = vunpack.c.l.b16 %v3179
        %v4395 = vunpack.c.h.b16 %v3179
        %v4396 = vunpack.c.l.b16 %v3180
        %v4397 = vunpack.c.h.b16 %v3180
        %v4398 = vunpack.c.l.b16 %v3181
        %v4399 = vunpack.c.h.b16 %v3181
        %v4400 = vunpack.c.l.b16 %v3182
        %v4401 = vunpack.c.h.b16 %v3182
        %v4402 = vunpack.c.l.b16 %v3183
        %v4403 = vunpack.c.h.b16 %v3183
        %v4404 = vunpack.c.l.b16 %v3184
        %v4405 = vunpack.c.h.b16 %v3184
        %v4406 = vunpack.c.l.b16 %v3185
        %v4407 = vunpack.c.h.b16 %v3185
        %v4408 = vunpack.c.l.b16 %v3186
        %v4409 = vunpack.c.h.b16 %v3186
        %v4410 = vunpack.c.l.b16 %v3187
        %v4411 = vunpack.c.h.b16 %v3187
        %v4412 = vunpack.c.l.b16 %v3188
        %v4413 = vunpack.c.h.b16 %v3188
        %v4414 = vunpack.c.l.b16 %v3189
        %v4415 = vunpack.c.h.b16 %v3189
        %v4416 = vunpack.c.l.b16 %v3190
        %v4417 = vunpack.c.h.b16 %v3190
        %v4418 = vunpack.c.l.b16 %v3191
        %v4419 = vunpack.c.h.b16 %v3191
        %v4420 = vunpack.c.l.b16 %v3192
        %v4421 = vunpack.c.h.b16 %v3192
        %v4422 = vunpack.c.l.b16 %v3193
        %v4423 = vunpack.c.h.b16 %v3193
        %v4424 = vunpack.c.l.b16 %v3194
        %v4425 = vunpack.c.h.b16 %v3194
        %v4426 = vunpack.c.l.b16 %v3195
        %v4427 = vunpack.c.h.b16 %v3195
        %v4428 = vunpack.c.l.b16 %v3196
        %v4429 = vunpack.c.h.b16 %v3196
        %v4430 = vunpack.c.l.b16 %v3197
        %v4431 = vunpack.c.h.b16 %v3197
        %v4432 = vunpack.c.l.b16 %v3198
        %v4433 = vunpack.c.h.b16 %v3198
        %v4434 = vunpack.c.l.b16 %v3199
        %v4435 = vunpack.c.h.b16 %v3199
        %v4436 = vunpack.c.l.b16 %v3200
        %v4437 = vunpack.c.h.b16 %v3200
        %v4438 = vunpack.c.l.b16 %v3201
        %v4439 = vunpack.c.h.b16 %v3201
        %v4440 = vunpack.c.l.b16 %v3202
        %v4441 = vunpack.c.h.b16 %v3202
        %v4442 = vunpack.c.l.b16 %v3203
        %v4443 = vunpack.c.h.b16 %v3203
        %v4444 = vunpack.c.l.b16 %v3204
        %v4445 = vunpack.c.h.b16 %v3204
        %v4446 = vunpack.c.l.b16 %v3205
        %v4447 = vunpack.c.h.b16 %v3205
        %v4448 = vunpack.c.l.b16 %v3206
        %v4449 = vunpack.c.h.b16 %v3206
        %v4450 = vunpack.c.l.b16 %v3207
        %v4451 = vunpack.c.h.b16 %v3207
        %v4452 = vunpack.c.l.b16 %v3208
        %v4453 = vunpack.c.h.b16 %v3208
        %v4454 = vunpack.c.l.b16 %v3209
        %v4455 = vunpack.c.h.b16 %v3209
        %v4456 = vunpack.c.l.b16 %v3210
        %v4457 = vunpack.c.h.b16 %v3210
        %v4458 = vunpack.c.l.b16 %v3211
        %v4459 = vunpack.c.h.b16 %v3211
        %v4460 = vunpack.c.l.b16 %v3212
        %v4461 = vunpack.c.h.b16 %v3212
        %v4462 = vunpack.c.l.b16 %v3213
        %v4463 = vunpack.c.h.b16 %v3213
        %v4464 = vunpack.c.l.b16 %v3214
        %v4465 = vunpack.c.h.b16 %v3214
        %v4466 = vunpack.c.l.b16 %v3215
        %v4467 = vunpack.c.h.b16 %v3215
        %v4468 = vunpack.c.l.b16 %v3216
        %v4469 = vunpack.c.h.b16 %v3216
        %v4470 = vunpack.c.l.b16 %v3217
        %v4471 = vunpack.c.h.b16 %v3217
        %v4472 = vunpack.c.l.b16 %v3218
        %v4473 = vunpack.c.h.b16 %v3218
        %v4474 = vunpack.c.l.b16 %v3219
        %v4475 = vunpack.c.h.b16 %v3219
        %v4476 = vunpack.c.l.b16 %v3220
        %v4477 = vunpack.c.h.b16 %v3220
        %v4478 = vunpack.c.l.b16 %v3221
        %v4479 = vunpack.c.h.b16 %v3221
        %v4480 = vunpack.c.l.b16 %v3222
        %v4481 = vunpack.c.h.b16 %v3222
        %v4482 = vunpack.c.l.b16 %v3223
        %v4483 = vunpack.c.h.b16 %v3223
        %v4484 = vunpack.c.l.b16 %v3224
        %v4485 = vunpack.c.h.b16 %v3224
        %v4486 = vunpack.c.l.b16 %v3225
        %v4487 = vunpack.c.h.b16 %v3225
        %v4488 = vunpack.c.l.b16 %v3226
        %v4489 = vunpack.c.h.b16 %v3226
        %v4490 = vunpack.c.l.b16 %v3227
        %v4491 = vunpack.c.h.b16 %v3227
        %v4492 = vunpack.c.l.b16 %v3228
        %v4493 = vunpack.c.h.b16 %v3228
        %v4494 = vunpack.c.l.b16 %v3229
        %v4495 = vunpack.c.h.b16 %v3229
        %v4496 = vunpack.c.l.b16 %v3230
        %v4497 = vunpack.c.h.b16 %v3230
        %v4498 = vunpack.c.l.b16 %v3231
        %v4499 = vunpack.c.h.b16 %v3231
        %v4500 = vunpack.c.l.b16 %v3232
        %v4501 = vunpack.c.h.b16 %v3232
        %v4502 = vunpack.c.l.b16 %v3233
        %v4503 = vunpack.c.h.b16 %v3233
        %v4504 = vunpack.c.l.b16 %v3234
        %v4505 = vunpack.c.h.b16 %v3234
        %v4506 = vunpack.c.l.b16 %v3235
        %v4507 = vunpack.c.h.b16 %v3235
        %v4508 = vunpack.c.l.b16 %v3236
        %v4509 = vunpack.c.h.b16 %v3236
        %v4510 = vunpack.c.l.b16 %v3237
        %v4511 = vunpack.c.h.b16 %v3237
        %v4512 = vunpack.c.l.b16 %v3238
        %v4513 = vunpack.c.h.b16 %v3238
        %v4514 = vunpack.c.l.b16 %v3239
        %v4515 = vunpack.c.h.b16 %v3239
        %v4516 = vunpack.c.l.b16 %v3240
        %v4517 = vunpack.c.h.b16 %v3240
        %v4518 = vunpack.c.l.b16 %v3241
        %v4519 = vunpack.c.h.b16 %v3241
        %v4520 = vunpack.c.l.b16 %v3242
        %v4521 = vunpack.c.h.b16 %v3242
        %v4522 = vunpack.c.l.b16 %v3243
        %v4523 = vunpack.c.h.b16 %v3243
        %v4524 = vunpack.c.l.b16 %v3244
        %v4525 = vunpack.c.h.b16 %v3244
        %v4526 = vunpack.c.l.b16 %v3245
        %v4527 = vunpack.c.h.b16 %v3245
        %v4528 = vunpack.c.l.b16 %v3246
        %v4529 = vunpack.c.h.b16 %v3246
        %v4530 = vunpack.c.l.b16 %v3247
        %v4531 = vunpack.c.h.b16 %v3247
        %v4532 = vunpack.c.l.b16 %v3248
        %v4533 = vunpack.c.h.b16 %v3248
        %v4534 = vunpack.c.l.b16 %v3249
        %v4535 = vunpack.c.h.b16 %v3249
        %v4536 = vunpack.c.l.b16 %v3250
        %v4537 = vunpack.c.h.b16 %v3250
        %v4538 = vunpack.c.l.b16 %v3251
        %v4539 = vunpack.c.h.b16 %v3251
        %v4540 = vunpack.c.l.b16 %v3252
        %v4541 = vunpack.c.h.b16 %v3252
        %v4542 = vunpack.c.l.b16 %v3253
        %v4543 = vunpack.c.h.b16 %v3253
        %v4544 = vunpack.c.l.b16 %v3254
        %v4545 = vunpack.c.h.b16 %v3254
        %v4546 = vunpack.c.l.b16 %v3255
        %v4547 = vunpack.c.h.b16 %v3255
        %v4548 = vunpack.c.l.b16 %v3256
        %v4549 = vunpack.c.h.b16 %v3256
        %v4550 = vunpack.c.l.b16 %v3257
        %v4551 = vunpack.c.h.b16 %v3257
        %v4552 = vunpack.c.l.b16 %v3258
        %v4553 = vunpack.c.h.b16 %v3258
        %v4554 = vunpack.c.l.b16 %v3259
        %v4555 = vunpack.c.h.b16 %v3259
        %v4556 = vunpack.c.l.b16 %v3260
        %v4557 = vunpack.c.h.b16 %v3260
        %v4558 = vunpack.c.l.b16 %v3261
        %v4559 = vunpack.c.h.b16 %v3261
        %v4560 = vunpack.c.l.b16 %v3262
        %v4561 = vunpack.c.h.b16 %v3262
        %v4562 = vunpack.c.l.b16 %v3263
        %v4563 = vunpack.c.h.b16 %v3263
        %v4564 = vunpack.c.l.b16 %v3264
        %v4565 = vunpack.c.h.b16 %v3264
        %v4566 = vunpack.c.l.b16 %v3265
        %v4567 = vunpack.c.h.b16 %v3265
        %v4568 = vunpack.c.l.b16 %v3266
        %v4569 = vunpack.c.h.b16 %v3266
        %v4570 = vunpack.c.l.b16 %v3267
        %v4571 = vunpack.c.h.b16 %v3267
        %v4572 = vunpack.c.l.b16 %v3268
        %v4573 = vunpack.c.h.b16 %v3268
        %v4574 = vunpack.c.l.b16 %v3269
        %v4575 = vunpack.c.h.b16 %v3269
        %v4576 = vunpack.c.l.b16 %v3270
        %v4577 = vunpack.c.h.b16 %v3270
        %v4578 = vunpack.c.l.b16 %v3271
        %v4579 = vunpack.c.h.b16 %v3271
        %v4580 = vunpack.c.l.b16 %v3272
        %v4581 = vunpack.c.h.b16 %v3272
        %v4582 = vunpack.c.l.b16 %v3273
        %v4583 = vunpack.c.h.b16 %v3273
        %v4584 = vunpack.c.l.b16 %v3274
        %v4585 = vunpack.c.h.b16 %v3274
        %v4586 = vunpack.c.l.b16 %v3275
        %v4587 = vunpack.c.h.b16 %v3275
        %v4588 = vunpack.c.l.b16 %v3276
        %v4589 = vunpack.c.h.b16 %v3276
        %v4590 = vunpack.c.l.b16 %v3277
        %v4591 = vunpack.c.h.b16 %v3277
        %v4592 = vunpack.c.l.b16 %v3278
        %v4593 = vunpack.c.h.b16 %v3278
        %v4594 = vunpack.c.l.b16 %v3279
        %v4595 = vunpack.c.h.b16 %v3279
        %v4596 = vunpack.c.l.b16 %v3280
        %v4597 = vunpack.c.h.b16 %v3280
        %v4598 = vunpack.c.l.b16 %v3281
        %v4599 = vunpack.c.h.b16 %v3281
        %v4600 = vunpack.c.l.b16 %v3282
        %v4601 = vunpack.c.h.b16 %v3282
        %v4602 = vunpack.c.l.b16 %v3283
        %v4603 = vunpack.c.h.b16 %v3283
        %v4604 = vunpack.c.l.b16 %v3284
        %v4605 = vunpack.c.h.b16 %v3284
        %v4606 = vunpack.c.l.b16 %v3285
        %v4607 = vunpack.c.h.b16 %v3285
        %v4608 = vunpack.c.l.b16 %v3286
        %v4609 = vunpack.c.h.b16 %v3286
        %v4610 = vunpack.c.l.b16 %v3287
        %v4611 = vunpack.c.h.b16 %v3287
        %v4612 = vunpack.c.l.b16 %v3288
        %v4613 = vunpack.c.h.b16 %v3288
        %v4614 = vunpack.c.l.b16 %v3289
        %v4615 = vunpack.c.h.b16 %v3289
        %v4616 = vunpack.c.l.b16 %v3290
        %v4617 = vunpack.c.h.b16 %v3290
        %v4618 = vunpack.c.l.b16 %v3291
        %v4619 = vunpack.c.h.b16 %v3291
        %v4620 = vunpack.c.l.b16 %v3292
        %v4621 = vunpack.c.h.b16 %v3292
        %v4622 = vunpack.c.l.b16 %v3293
        %v4623 = vunpack.c.h.b16 %v3293
        %v4624 = vunpack.c.l.b16 %v3294
        %v4625 = vunpack.c.h.b16 %v3294
        %v4626 = vunpack.c.l.b16 %v3295
        %v4627 = vunpack.c.h.b16 %v3295
        %v4628 = vunpack.c.l.b16 %v3296
        %v4629 = vunpack.c.h.b16 %v3296
        %v4630 = vunpack.c.l.b16 %v3297
        %v4631 = vunpack.c.h.b16 %v3297
        %v4632 = vunpack.c.l.b16 %v3298
        %v4633 = vunpack.c.h.b16 %v3298
        %v4634 = vunpack.c.l.b16 %v3299
        %v4635 = vunpack.c.h.b16 %v3299
        %v4636 = vunpack.c.l.b16 %v3300
        %v4637 = vunpack.c.h.b16 %v3300
        %v4638 = vunpack.c.l.b16 %v3301
        %v4639 = vunpack.c.h.b16 %v3301
        %v4640 = vunpack.c.l.b16 %v3302
        %v4641 = vunpack.c.h.b16 %v3302
        %v4642 = vunpack.c.l.b16 %v3303
        %v4643 = vunpack.c.h.b16 %v3303
        %v4644 = vunpack.c.l.b16 %v3304
        %v4645 = vunpack.c.h.b16 %v3304
        %v4646 = vunpack.c.l.b16 %v3305
        %v4647 = vunpack.c.h.b16 %v3305
        %v4648 = vunpack.c.l.b16 %v3306
        %v4649 = vunpack.c.h.b16 %v3306
        %v4650 = vunpack.c.l.b16 %v3307
        %v4651 = vunpack.c.h.b16 %v3307
        %v4652 = vunpack.c.l.b16 %v3308
        %v4653 = vunpack.c.h.b16 %v3308
        %v4654 = vunpack.c.l.b16 %v3309
        %v4655 = vunpack.c.h.b16 %v3309
        %v4656 = vunpack.c.l.b16 %v3310
        %v4657 = vunpack.c.h.b16 %v3310
        %v4658 = vunpack.c.l.b16 %v3311
        %v4659 = vunpack.c.h.b16 %v3311
        %v4660 = vunpack.c.l.b16 %v3312
        %v4661 = vunpack.c.h.b16 %v3312
        %v4662 = vunpack.c.l.b16 %v3313
        %v4663 = vunpack.c.h.b16 %v3313
        %v4664 = vunpack.c.l.b16 %v3314
        %v4665 = vunpack.c.h.b16 %v3314
        %v4666 = vunpack.c.l.b16 %v3315
        %v4667 = vunpack.c.h.b16 %v3315
        %v4668 = vunpack.c.l.b16 %v3316
        %v4669 = vunpack.c.h.b16 %v3316
        %v4670 = vunpack.c.l.b16 %v3317
        %v4671 = vunpack.c.h.b16 %v3317
        %v4672 = vunpack.c.l.b16 %v3318
        %v4673 = vunpack.c.h.b16 %v3318
        %v4674 = vunpack.c.l.b16 %v3319
        %v4675 = vunpack.c.h.b16 %v3319
        %v4676 = vunpack.c.l.b16 %v3320
        %v4677 = vunpack.c.h.b16 %v3320
        %v4678 = vunpack.c.l.b16 %v3321
        %v4679 = vunpack.c.h.b16 %v3321
        %v4680 = vunpack.c.l.b16 %v3322
        %v4681 = vunpack.c.h.b16 %v3322
        %v4682 = vunpack.c.l.b16 %v3323
        %v4683 = vunpack.c.h.b16 %v3323
        %v4684 = vunpack.c.l.b16 %v3324
        %v4685 = vunpack.c.h.b16 %v3324
        %v4686 = vunpack.c.l.b16 %v3325
        %v4687 = vunpack.c.h.b16 %v3325
        %v4688 = vunpack.c.l.b16 %v3326
        %v4689 = vunpack.c.h.b16 %v3326
        %v4690 = vunpack.c.l.b16 %v3327
        %v4691 = vunpack.c.h.b16 %v3327
        %v4692 = vunpack.c.l.b16 %v3328
        %v4693 = vunpack.c.h.b16 %v3328
        %v4694 = vunpack.c.l.b16 %v3329
        %v4695 = vunpack.c.h.b16 %v3329
        %v4696 = vunpack.c.l.b16 %v3330
        %v4697 = vunpack.c.h.b16 %v3330
        %v4698 = vunpack.c.l.b16 %v3331
        %v4699 = vunpack.c.h.b16 %v3331
        %v4700 = vunpack.c.l.b16 %v3332
        %v4701 = vunpack.c.h.b16 %v3332
        %v4702 = vunpack.c.l.b16 %v3333
        %v4703 = vunpack.c.h.b16 %v3333
        %v4704 = vunpack.c.l.b16 %v3334
        %v4705 = vunpack.c.h.b16 %v3334
        %v4706 = vunpack.c.l.b16 %v3335
        %v4707 = vunpack.c.h.b16 %v3335
        %v4708 = vunpack.c.l.b16 %v3336
        %v4709 = vunpack.c.h.b16 %v3336
        %v4710 = vunpack.c.l.b16 %v3337
        %v4711 = vunpack.c.h.b16 %v3337
        %v4712 = vunpack.c.l.b16 %v3338
        %v4713 = vunpack.c.h.b16 %v3338
        %v4714 = vunpack.c.l.b16 %v3339
        %v4715 = vunpack.c.h.b16 %v3339
        %v4716 = vunpack.c.l.b16 %v3340
        %v4717 = vunpack.c.h.b16 %v3340
        %v4718 = vunpack.c.l.b16 %v3341
        %v4719 = vunpack.c.h.b16 %v3341
        %v4720 = vunpack.c.l.b16 %v3342
        %v4721 = vunpack.c.h.b16 %v3342
        %v4722 = vunpack.c.l.b16 %v3343
        %v4723 = vunpack.c.h.b16 %v3343
        %v4724 = vunpack.c.l.b16 %v3344
        %v4725 = vunpack.c.h.b16 %v3344
        %v4726 = vunpack.c.l.b16 %v3345
        %v4727 = vunpack.c.h.b16 %v3345
        %v4728 = vunpack.c.l.b16 %v3346
        %v4729 = vunpack.c.h.b16 %v3346
        %v4730 = vunpack.c.l.b16 %v3347
        %v4731 = vunpack.c.h.b16 %v3347
        %v4732 = vunpack.c.l.b16 %v3348
        %v4733 = vunpack.c.h.b16 %v3348
        %v4734 = vunpack.c.l.b16 %v3349
        %v4735 = vunpack.c.h.b16 %v3349
        %v4736 = vunpack.c.l.b16 %v3350
        %v4737 = vunpack.c.h.b16 %v3350
        %v4738 = vunpack.c.l.b16 %v3351
        %v4739 = vunpack.c.h.b16 %v3351
        %v4740 = vunpack.c.l.b16 %v3352
        %v4741 = vunpack.c.h.b16 %v3352
        %v4742 = vunpack.c.l.b16 %v3353
        %v4743 = vunpack.c.h.b16 %v3353
        %v4744 = vunpack.c.l.b16 %v3354
        %v4745 = vunpack.c.h.b16 %v3354
        %v4746 = vunpack.c.l.b16 %v3355
        %v4747 = vunpack.c.h.b16 %v3355
        %v4748 = vunpack.c.l.b16 %v3356
        %v4749 = vunpack.c.h.b16 %v3356
        %v4750 = vunpack.c.l.b16 %v3357
        %v4751 = vunpack.c.h.b16 %v3357
        %v4752 = vunpack.c.l.b16 %v3358
        %v4753 = vunpack.c.h.b16 %v3358
        %v4754 = vunpack.c.l.b16 %v3359
        %v4755 = vunpack.c.h.b16 %v3359
        %v4756 = vunpack.c.l.b16 %v3360
        %v4757 = vunpack.c.h.b16 %v3360
        %v4758 = vunpack.c.l.b16 %v3361
        %v4759 = vunpack.c.h.b16 %v3361
        %v4760 = vunpack.c.l.b16 %v3362
        %v4761 = vunpack.c.h.b16 %v3362
        %v4762 = vunpack.c.l.b16 %v3363
        %v4763 = vunpack.c.h.b16 %v3363
        %v4764 = vunpack.c.l.b16 %v3364
        %v4765 = vunpack.c.h.b16 %v3364
        %v4766 = vunpack.c.l.b16 %v3365
        %v4767 = vunpack.c.h.b16 %v3365
        %v4768 = vunpack.c.l.b16 %v3366
        %v4769 = vunpack.c.h.b16 %v3366
        %v4770 = vunpack.c.l.b16 %v3367
        %v4771 = vunpack.c.h.b16 %v3367
        %v4772 = vunpack.c.l.b16 %v3368
        %v4773 = vunpack.c.h.b16 %v3368
        %v4774 = vunpack.c.l.b16 %v3369
        %v4775 = vunpack.c.h.b16 %v3369
        %v4776 = vunpack.c.l.b16 %v3370
        %v4777 = vunpack.c.h.b16 %v3370
        %v4778 = vunpack.c.l.b16 %v3371
        %v4779 = vunpack.c.h.b16 %v3371
        %v4780 = vunpack.c.l.b16 %v3372
        %v4781 = vunpack.c.h.b16 %v3372
        %v4782 = vunpack.c.l.b16 %v3373
        %v4783 = vunpack.c.h.b16 %v3373
        %v4784 = vunpack.c.l.b16 %v3374
        %v4785 = vunpack.c.h.b16 %v3374
        %v4786 = vunpack.c.l.b16 %v3375
        %v4787 = vunpack.c.h.b16 %v3375
        %v4788 = vunpack.c.l.b16 %v3376
        %v4789 = vunpack.c.h.b16 %v3376
        %v4790 = vunpack.c.l.b16 %v3377
        %v4791 = vunpack.c.h.b16 %v3377
        %v4792 = vunpack.c.l.b16 %v3378
        %v4793 = vunpack.c.h.b16 %v3378
        %v4794 = vunpack.c.l.b16 %v3379
        %v4795 = vunpack.c.h.b16 %v3379
        %v4796 = vunpack.c.l.b16 %v3380
        %v4797 = vunpack.c.h.b16 %v3380
        %v4798 = vunpack.c.l.b16 %v3381
        %v4799 = vunpack.c.h.b16 %v3381
        %v4800 = vunpack.c.l.b16 %v3382
        %v4801 = vunpack.c.h.b16 %v3382
        %v4802 = vunpack.c.l.b16 %v3383
        %v4803 = vunpack.c.h.b16 %v3383
        %v4804 = vunpack.c.l.b16 %v3384
        %v4805 = vunpack.c.h.b16 %v3384
        %v4806 = vunpack.c.l.b16 %v3385
        %v4807 = vunpack.c.h.b16 %v3385
        %v4808 = vunpack.c.l.b16 %v3386
        %v4809 = vunpack.c.h.b16 %v3386
        %v4810 = vunpack.c.l.b16 %v3387
        %v4811 = vunpack.c.h.b16 %v3387
        %v4812 = vunpack.c.l.b16 %v3388
        %v4813 = vunpack.c.h.b16 %v3388
        %v4814 = vunpack.c.l.b16 %v3389
        %v4815 = vunpack.c.h.b16 %v3389
        %v4816 = vunpack.c.l.b16 %v3390
        %v4817 = vunpack.c.h.b16 %v3390
        %v4818 = vunpack.c.l.b16 %v3391
        %v4819 = vunpack.c.h.b16 %v3391
        %v4820 = vunpack.c.l.b16 %v3392
        %v4821 = vunpack.c.h.b16 %v3392
        %v4822 = vunpack.c.l.b16 %v3393
        %v4823 = vunpack.c.h.b16 %v3393
        %v4824 = vunpack.c.l.b16 %v3394
        %v4825 = vunpack.c.h.b16 %v3394
        %v4826 = vunpack.c.l.b16 %v3395
        %v4827 = vunpack.c.h.b16 %v3395
        %v4828 = vunpack.c.l.b16 %v3396
        %v4829 = vunpack.c.h.b16 %v3396
        %v4830 = vunpack.c.l.b16 %v3397
        %v4831 = vunpack.c.h.b16 %v3397
        %v4832 = vunpack.c.l.b16 %v3398
        %v4833 = vunpack.c.h.b16 %v3398
        %v4834 = vunpack.c.l.b16 %v3399
        %v4835 = vunpack.c.h.b16 %v3399
        %v4836 = vunpack.c.l.b16 %v3400
        %v4837 = vunpack.c.h.b16 %v3400
        %v4838 = vunpack.c.l.b16 %v3401
        %v4839 = vunpack.c.h.b16 %v3401
        %v4840 = vunpack.c.l.b16 %v3402
        %v4841 = vunpack.c.h.b16 %v3402
        %v4842 = vunpack.c.l.b16 %v3403
        %v4843 = vunpack.c.h.b16 %v3403
        %v4844 = vunpack.c.l.b16 %v3404
        %v4845 = vunpack.c.h.b16 %v3404
        %v4846 = vunpack.c.l.b16 %v3405
        %v4847 = vunpack.c.h.b16 %v3405
        %v4848 = vunpack.c.l.b16 %v3406
        %v4849 = vunpack.c.h.b16 %v3406
        %v4850 = vunpack.c.l.b16 %v3407
        %v4851 = vunpack.c.h.b16 %v3407
        %v4852 = vunpack.c.l.b16 %v3408
        %v4853 = vunpack.c.h.b16 %v3408
        %v4854 = vunpack.c.l.b16 %v3409
        %v4855 = vunpack.c.h.b16 %v3409
        %v4856 = vunpack.c.l.b16 %v3410
        %v4857 = vunpack.c.h.b16 %v3410
        %v4858 = vunpack.c.l.b16 %v3411
        %v4859 = vunpack.c.h.b16 %v3411
        %v4860 = vunpack.c.l.b16 %v3412
        %v4861 = vunpack.c.h.b16 %v3412
        %v4862 = vunpack.c.l.b16 %v3413
        %v4863 = vunpack.c.h.b16 %v3413
        %v4864 = vunpack.c.l.b16 %v3414
        %v4865 = vunpack.c.h.b16 %v3414
        %v4866 = vunpack.c.l.b16 %v3415
        %v4867 = vunpack.c.h.b16 %v3415
        %v4868 = vunpack.c.l.b16 %v3416
        %v4869 = vunpack.c.h.b16 %v3416
        %v4870 = vunpack.c.l.b16 %v3417
        %v4871 = vunpack.c.h.b16 %v3417
        %v4872 = vunpack.c.l.b16 %v3418
        %v4873 = vunpack.c.h.b16 %v3418
        %v4874 = vunpack.c.l.b16 %v3419
        %v4875 = vunpack.c.h.b16 %v3419
        %v4876 = vunpack.c.l.b16 %v3420
        %v4877 = vunpack.c.h.b16 %v3420
        %v4878 = vunpack.c.l.b16 %v3421
        %v4879 = vunpack.c.h.b16 %v3421
        %v4880 = vunpack.c.l.b16 %v3422
        %v4881 = vunpack.c.h.b16 %v3422
        %v4882 = vunpack.c.l.b16 %v3423
        %v4883 = vunpack.c.h.b16 %v3423
        %v4884 = vunpack.c.l.b16 %v3424
        %v4885 = vunpack.c.h.b16 %v3424
        %v4886 = vunpack.c.l.b16 %v3425
        %v4887 = vunpack.c.h.b16 %v3425
        %v4888 = vunpack.c.l.b16 %v3426
        %v4889 = vunpack.c.h.b16 %v3426
        %v4890 = vunpack.c.l.b16 %v3427
        %v4891 = vunpack.c.h.b16 %v3427
        %v4892 = vunpack.c.l.b16 %v3428
        %v4893 = vunpack.c.h.b16 %v3428
        %v4894 = vunpack.c.l.b16 %v3429
        %v4895 = vunpack.c.h.b16 %v3429
        %v4896 = vunpack.c.l.b16 %v3430
        %v4897 = vunpack.c.h.b16 %v3430
        %v4898 = vunpack.c.l.b16 %v3431
        %v4899 = vunpack.c.h.b16 %v3431
        %v4900 = vunpack.c.l.b16 %v3432
        %v4901 = vunpack.c.h.b16 %v3432
        %v4902 = vunpack.c.l.b16 %v3433
        %v4903 = vunpack.c.h.b16 %v3433
        %v4904 = vunpack.c.l.b16 %v3434
        %v4905 = vunpack.c.h.b16 %v3434
        %v4906 = vunpack.c.l.b16 %v3435
        %v4907 = vunpack.c.h.b16 %v3435
        %v4908 = vunpack.c.l.b16 %v3436
        %v4909 = vunpack.c.h.b16 %v3436
        %v4910 = vunpack.c.l.b16 %v3437
        %v4911 = vunpack.c.h.b16 %v3437
        %v4912 = vunpack.c.l.b16 %v3438
        %v4913 = vunpack.c.h.b16 %v3438
        %v4914 = vunpack.c.l.b16 %v3439
        %v4915 = vunpack.c.h.b16 %v3439
        %v4916 = vunpack.c.l.b16 %v3440
        %v4917 = vunpack.c.h.b16 %v3440
        %v4918 = vunpack.c.l.b16 %v3441
        %v4919 = vunpack.c.h.b16 %v3441
        %v4920 = vunpack.c.l.b16 %v3442
        %v4921 = vunpack.c.h.b16 %v3442
        %v4922 = vunpack.c.l.b16 %v3443
        %v4923 = vunpack.c.h.b16 %v3443
        %v4924 = vunpack.c.l.b16 %v3444
        %v4925 = vunpack.c.h.b16 %v3444
        %v4926 = vunpack.c.l.b16 %v3445
        %v4927 = vunpack.c.h.b16 %v3445
        %v4928 = vunpack.c.l.b16 %v3446
        %v4929 = vunpack.c.h.b16 %v3446
        %v4930 = vunpack.c.l.b16 %v3447
        %v4931 = vunpack.c.h.b16 %v3447
        %v4932 = vunpack.c.l.b16 %v3448
        %v4933 = vunpack.c.h.b16 %v3448
        %v4934 = vunpack.c.l.b16 %v3449
        %v4935 = vunpack.c.h.b16 %v3449
        %v4936 = vunpack.c.l.b16 %v3450
        %v4937 = vunpack.c.h.b16 %v3450
        %v4938 = vunpack.c.l.b16 %v3451
        %v4939 = vunpack.c.h.b16 %v3451
        %v4940 = vunpack.c.l.b16 %v3452
        %v4941 = vunpack.c.h.b16 %v3452
        %v4942 = vunpack.c.l.b16 %v3453
        %v4943 = vunpack.c.h.b16 %v3453
        %v4944 = vunpack.c.l.b16 %v3454
        %v4945 = vunpack.c.h.b16 %v3454
        %v4946 = vunpack.c.l.b16 %v3455
        %v4947 = vunpack.c.h.b16 %v3455
        %v4948 = vunpack.c.l.b16 %v3456
        %v4949 = vunpack.c.h.b16 %v3456
        %v4950 = vunpack.c.l.b16 %v3457
        %v4951 = vunpack.c.h.b16 %v3457
        %v4952 = vunpack.c.l.b16 %v3458
        %v4953 = vunpack.c.h.b16 %v3458
        %v4954 = vunpack.c.l.b16 %v3459
        %v4955 = vunpack.c.h.b16 %v3459
        %v4956 = vunpack.c.l.b16 %v3460
        %v4957 = vunpack.c.h.b16 %v3460
        %v4958 = vunpack.c.l.b16 %v3461
        %v4959 = vunpack.c.h.b16 %v3461
        %v4960 = vunpack.c.l.b16 %v3462
        %v4961 = vunpack.c.h.b16 %v3462
        %v4962 = vunpack.c.l.b16 %v3463
        %v4963 = vunpack.c.h.b16 %v3463
        %v4964 = vunpack.c.l.b16 %v3464
        %v4965 = vunpack.c.h.b16 %v3464
        %v4966 = vunpack.c.l.b16 %v3465
        %v4967 = vunpack.c.h.b16 %v3465
        %v4968 = vunpack.c.l.b16 %v3466
        %v4969 = vunpack.c.h.b16 %v3466
        %v4970 = vunpack.c.l.b16 %v3467
        %v4971 = vunpack.c.h.b16 %v3467
        %v4972 = vunpack.c.l.b16 %v3468
        %v4973 = vunpack.c.h.b16 %v3468
        %v4974 = vunpack.c.l.b16 %v3469
        %v4975 = vunpack.c.h.b16 %v3469
        %v4976 = vunpack.c.l.b16 %v3470
        %v4977 = vunpack.c.h.b16 %v3470
        %v4978 = vunpack.c.l.b16 %v3471
        %v4979 = vunpack.c.h.b16 %v3471
        %v4980 = vunpack.c.l.b16 %v3472
        %v4981 = vunpack.c.h.b16 %v3472
        %v4982 = vunpack.c.l.b16 %v3473
        %v4983 = vunpack.c.h.b16 %v3473
        %v4984 = vunpack.c.l.b16 %v3474
        %v4985 = vunpack.c.h.b16 %v3474
        %v4986 = vunpack.c.l.b16 %v3475
        %v4987 = vunpack.c.h.b16 %v3475
        %v4988 = vunpack.c.l.b16 %v3476
        %v4989 = vunpack.c.h.b16 %v3476
        %v4990 = vunpack.c.l.b16 %v3477
        %v4991 = vunpack.c.h.b16 %v3477
        %v4992 = vunpack.c.l.b16 %v3478
        %v4993 = vunpack.c.h.b16 %v3478
        %v4994 = vunpack.c.l.b16 %v3479
        %v4995 = vunpack.c.h.b16 %v3479
        %v4996 = vunpack.c.l.b16 %v3480
        %v4997 = vunpack.c.h.b16 %v3480
        %v4998 = vunpack.c.l.b16 %v3481
        %v4999 = vunpack.c.h.b16 %v3481
        %v5000 = vunpack.c.l.b16 %v3482
        %v5001 = vunpack.c.h.b16 %v3482
        %v5002 = vunpack.c.l.b16 %v3483
        %v5003 = vunpack.c.h.b16 %v3483
        %v5004 = vunpack.c.l.b16 %v3484
        %v5005 = vunpack.c.h.b16 %v3484
        %v5006 = vunpack.c.l.b16 %v3485
        %v5007 = vunpack.c.h.b16 %v3485
        %v5008 = vunpack.c.l.b16 %v3486
        %v5009 = vunpack.c.h.b16 %v3486
        %v5010 = vunpack.c.l.b16 %v3487
        %v5011 = vunpack.c.h.b16 %v3487
        %v5012 = vunpack.c.l.b16 %v3488
        %v5013 = vunpack.c.h.b16 %v3488
        %v5014 = vunpack.c.l.b16 %v3489
        %v5015 = vunpack.c.h.b16 %v3489
        %v5016 = vunpack.c.l.b16 %v3490
        %v5017 = vunpack.c.h.b16 %v3490
        %v5018 = vunpack.c.l.b16 %v3491
        %v5019 = vunpack.c.h.b16 %v3491
        %v5020 = vunpack.c.l.b16 %v3492
        %v5021 = vunpack.c.h.b16 %v3492
        %v5022 = vunpack.c.l.b16 %v3493
        %v5023 = vunpack.c.h.b16 %v3493
        %v5024 = vunpack.c.l.b16 %v3494
        %v5025 = vunpack.c.h.b16 %v3494
        %v5026 = vunpack.c.l.b16 %v3495
        %v5027 = vunpack.c.h.b16 %v3495
        %v5028 = vunpack.c.l.b16 %v3496
        %v5029 = vunpack.c.h.b16 %v3496
        %v5030 = vunpack.c.l.b16 %v3497
        %v5031 = vunpack.c.h.b16 %v3497
        %v5032 = vunpack.c.l.b16 %v3498
        %v5033 = vunpack.c.h.b16 %v3498
        %v5034 = vunpack.c.l.b16 %v3499
        %v5035 = vunpack.c.h.b16 %v3499
        %v5036 = vpack.c.b16 %v4020, %v4012
        %v5037 = vpack.c.b16 %v4021, %v4013
        %v5038 = vpack.c.b16 %v4022, %v4014
        %v5039 = vpack.c.b16 %v4023, %v4015
        %v5040 = vpack.c.b16 %v4024, %v4016
        %v5041 = vpack.c.b16 %v4025, %v4017
        %v5042 = vpack.c.b16 %v4026, %v4018
        %v5043 = vpack.c.b16 %v4027, %v4019
        %v5044 = vpack.c.b16 %v4036, %v4028
        %v5045 = vpack.c.b16 %v4037, %v4029
        %v5046 = vpack.c.b16 %v4038, %v4030
        %v5047 = vpack.c.b16 %v4039, %v4031
        %v5048 = vpack.c.b16 %v4040, %v4032
        %v5049 = vpack.c.b16 %v4041, %v4033
        %v5050 = vpack.c.b16 %v4042, %v4034
        %v5051 = vpack.c.b16 %v4043, %v4035
        %v5052 = vpack.c.b16 %v4052, %v4044
        %v5053 = vpack.c.b16 %v4053, %v4045
        %v5054 = vpack.c.b16 %v4054, %v4046
        %v5055 = vpack.c.b16 %v4055, %v4047
        %v5056 = vpack.c.b16 %v4056, %v4048
        %v5057 = vpack.c.b16 %v4057, %v4049
        %v5058 = vpack.c.b16 %v4058, %v4050
        %v5059 = vpack.c.b16 %v4059, %v4051
        %v5060 = vpack.c.b16 %v4068, %v4060
        %v5061 = vpack.c.b16 %v4069, %v4061
        %v5062 = vpack.c.b16 %v4070, %v4062
        %v5063 = vpack.c.b16 %v4071, %v4063
        %v5064 = vpack.c.b16 %v4072, %v4064
        %v5065 = vpack.c.b16 %v4073, %v4065
        %v5066 = vpack.c.b16 %v4074, %v4066
        %v5067 = vpack.c.b16 %v4075, %v4067
        %v5068 = vpack.c.b16 %v4084, %v4076
        %v5069 = vpack.c.b16 %v4085, %v4077
        %v5070 = vpack.c.b16 %v4086, %v4078
        %v5071 = vpack.c.b16 %v4087, %v4079
        %v5072 = vpack.c.b16 %v4088, %v4080
        %v5073 = vpack.c.b16 %v4089, %v4081
        %v5074 = vpack.c.b16 %v4090, %v4082
        %v5075 = vpack.c.b16 %v4091, %v4083
        %v5076 = vpack.c.b16 %v4100, %v4092
        %v5077 = vpack.c.b16 %v4101, %v4093
        %v5078 = vpack.c.b16 %v4102, %v4094
        %v5079 = vpack.c.b16 %v4103, %v4095
        %v5080 = vpack.c.b16 %v4104, %v4096
        %v5081 = vpack.c.b16 %v4105, %v4097
        %v5082 = vpack.c.b16 %v4106, %v4098
        %v5083 = vpack.c.b16 %v4107, %v4099
        %v5084 = vpack.c.b16 %v4116, %v4108
        %v5085 = vpack.c.b16 %v4117, %v4109
        %v5086 = vpack.c.b16 %v4118, %v4110
        %v5087 = vpack.c.b16 %v4119, %v4111
        %v5088 = vpack.c.b16 %v4120, %v4112
        %v5089 = vpack.c.b16 %v4121, %v4113
        %v5090 = vpack.c.b16 %v4122, %v4114
        %v5091 = vpack.c.b16 %v4123, %v4115
        %v5092 = vpack.c.b16 %v4132, %v4124
        %v5093 = vpack.c.b16 %v4133, %v4125
        %v5094 = vpack.c.b16 %v4134, %v4126
        %v5095 = vpack.c.b16 %v4135, %v4127
        %v5096 = vpack.c.b16 %v4136, %v4128
        %v5097 = vpack.c.b16 %v4137, %v4129
        %v5098 = vpack.c.b16 %v4138, %v4130
        %v5099 = vpack.c.b16 %v4139, %v4131
        %v5100 = vpack.c.b16 %v4148, %v4140
        %v5101 = vpack.c.b16 %v4149, %v4141
        %v5102 = vpack.c.b16 %v4150, %v4142
        %v5103 = vpack.c.b16 %v4151, %v4143
        %v5104 = vpack.c.b16 %v4152, %v4144
        %v5105 = vpack.c.b16 %v4153, %v4145
        %v5106 = vpack.c.b16 %v4154, %v4146
        %v5107 = vpack.c.b16 %v4155, %v4147
        %v5108 = vpack.c.b16 %v4164, %v4156
        %v5109 = vpack.c.b16 %v4165, %v4157
        %v5110 = vpack.c.b16 %v4166, %v4158
        %v5111 = vpack.c.b16 %v4167, %v4159
        %v5112 = vpack.c.b16 %v4168, %v4160
        %v5113 = vpack.c.b16 %v4169, %v4161
        %v5114 = vpack.c.b16 %v4170, %v4162
        %v5115 = vpack.c.b16 %v4171, %v4163
        %v5116 = vpack.c.b16 %v4180, %v4172
        %v5117 = vpack.c.b16 %v4181, %v4173
        %v5118 = vpack.c.b16 %v4182, %v4174
        %v5119 = vpack.c.b16 %v4183, %v4175
        %v5120 = vpack.c.b16 %v4184, %v4176
        %v5121 = vpack.c.b16 %v4185, %v4177
        %v5122 = vpack.c.b16 %v4186, %v4178
        %v5123 = vpack.c.b16 %v4187, %v4179
        %v5124 = vpack.c.b16 %v4196, %v4188
        %v5125 = vpack.c.b16 %v4197, %v4189
        %v5126 = vpack.c.b16 %v4198, %v4190
        %v5127 = vpack.c.b16 %v4199, %v4191
        %v5128 = vpack.c.b16 %v4200, %v4192
        %v5129 = vpack.c.b16 %v4201, %v4193
        %v5130 = vpack.c.b16 %v4202, %v4194
        %v5131 = vpack.c.b16 %v4203, %v4195
        %v5132 = vpack.c.b16 %v4212, %v4204
        %v5133 = vpack.c.b16 %v4213, %v4205
        %v5134 = vpack.c.b16 %v4214, %v4206
        %v5135 = vpack.c.b16 %v4215, %v4207
        %v5136 = vpack.c.b16 %v4216, %v4208
        %v5137 = vpack.c.b16 %v4217, %v4209
        %v5138 = vpack.c.b16 %v4218, %v4210
        %v5139 = vpack.c.b16 %v4219, %v4211
        %v5140 = vpack.c.b16 %v4228, %v4220
        %v5141 = vpack.c.b16 %v4229, %v4221
        %v5142 = vpack.c.b16 %v4230, %v4222
        %v5143 = vpack.c.b16 %v4231, %v4223
        %v5144 = vpack.c.b16 %v4232, %v4224
        %v5145 = vpack.c.b16 %v4233, %v4225
        %v5146 = vpack.c.b16 %v4234, %v4226
        %v5147 = vpack.c.b16 %v4235, %v4227
        %v5148 = vpack.c.b16 %v4244, %v4236
        %v5149 = vpack.c.b16 %v4245, %v4237
        %v5150 = vpack.c.b16 %v4246, %v4238
        %v5151 = vpack.c.b16 %v4247, %v4239
        %v5152 = vpack.c.b16 %v4248, %v4240
        %v5153 = vpack.c.b16 %v4249, %v4241
        %v5154 = vpack.c.b16 %v4250, %v4242
        %v5155 = vpack.c.b16 %v4251, %v4243
        %v5156 = vpack.c.b16 %v4260, %v4252
        %v5157 = vpack.c.b16 %v4261, %v4253
        %v5158 = vpack.c.b16 %v4262, %v4254
        %v5159 = vpack.c.b16 %v4263, %v4255
        %v5160 = vpack.c.b16 %v4264, %v4256
        %v5161 = vpack.c.b16 %v4265, %v4257
        %v5162 = vpack.c.b16 %v4266, %v4258
        %v5163 = vpack.c.b16 %v4267, %v4259
        %v5164 = vpack.c.b16 %v4276, %v4268
        %v5165 = vpack.c.b16 %v4277, %v4269
        %v5166 = vpack.c.b16 %v4278, %v4270
        %v5167 = vpack.c.b16 %v4279, %v4271
        %v5168 = vpack.c.b16 %v4280, %v4272
        %v5169 = vpack.c.b16 %v4281, %v4273
        %v5170 = vpack.c.b16 %v4282, %v4274
        %v5171 = vpack.c.b16 %v4283, %v4275
        %v5172 = vpack.c.b16 %v4292, %v4284
        %v5173 = vpack.c.b16 %v4293, %v4285
        %v5174 = vpack.c.b16 %v4294, %v4286
        %v5175 = vpack.c.b16 %v4295, %v4287
        %v5176 = vpack.c.b16 %v4296, %v4288
        %v5177 = vpack.c.b16 %v4297, %v4289
        %v5178 = vpack.c.b16 %v4298, %v4290
        %v5179 = vpack.c.b16 %v4299, %v4291
        %v5180 = vpack.c.b16 %v4308, %v4300
        %v5181 = vpack.c.b16 %v4309, %v4301
        %v5182 = vpack.c.b16 %v4310, %v4302
        %v5183 = vpack.c.b16 %v4311, %v4303
        %v5184 = vpack.c.b16 %v4312, %v4304
        %v5185 = vpack.c.b16 %v4313, %v4305
        %v5186 = vpack.c.b16 %v4314, %v4306
        %v5187 = vpack.c.b16 %v4315, %v4307
        %v5188 = vpack.c.b16 %v4324, %v4316
        %v5189 = vpack.c.b16 %v4325, %v4317
        %v5190 = vpack.c.b16 %v4326, %v4318
        %v5191 = vpack.c.b16 %v4327, %v4319
        %v5192 = vpack.c.b16 %v4328, %v4320
        %v5193 = vpack.c.b16 %v4329, %v4321
        %v5194 = vpack.c.b16 %v4330, %v4322
        %v5195 = vpack.c.b16 %v4331, %v4323
        %v5196 = vpack.c.b16 %v4340, %v4332
        %v5197 = vpack.c.b16 %v4341, %v4333
        %v5198 = vpack.c.b16 %v4342, %v4334
        %v5199 = vpack.c.b16 %v4343, %v4335
        %v5200 = vpack.c.b16 %v4344, %v4336
        %v5201 = vpack.c.b16 %v4345, %v4337
        %v5202 = vpack.c.b16 %v4346, %v4338
        %v5203 = vpack.c.b16 %v4347, %v4339
        %v5204 = vpack.c.b16 %v4356, %v4348
        %v5205 = vpack.c.b16 %v4357, %v4349
        %v5206 = vpack.c.b16 %v4358, %v4350
        %v5207 = vpack.c.b16 %v4359, %v4351
        %v5208 = vpack.c.b16 %v4360, %v4352
        %v5209 = vpack.c.b16 %v4361, %v4353
        %v5210 = vpack.c.b16 %v4362, %v4354
        %v5211 = vpack.c.b16 %v4363, %v4355
        %v5212 = vpack.c.b16 %v4372, %v4364
        %v5213 = vpack.c.b16 %v4373, %v4365
        %v5214 = vpack.c.b16 %v4374, %v4366
        %v5215 = vpack.c.b16 %v4375, %v4367
        %v5216 = vpack.c.b16 %v4376, %v4368
        %v5217 = vpack.c.b16 %v4377, %v4369
        %v5218 = vpack.c.b16 %v4378, %v4370
        %v5219 = vpack.c.b16 %v4379, %v4371
        %v5220 = vpack.c.b16 %v4388, %v4380
        %v5221 = vpack.c.b16 %v4389, %v4381
        %v5222 = vpack.c.b16 %v4390, %v4382
        %v5223 = vpack.c.b16 %v4391, %v4383
        %v5224 = vpack.c.b16 %v4392, %v4384
        %v5225 = vpack.c.b16 %v4393, %v4385
        %v5226 = vpack.c.b16 %v4394, %v4386
        %v5227 = vpack.c.b16 %v4395, %v4387
        %v5228 = vpack.c.b16 %v4404, %v4396
        %v5229 = vpack.c.b16 %v4405, %v4397
        %v5230 = vpack.c.b16 %v4406, %v4398
        %v5231 = vpack.c.b16 %v4407, %v4399
        %v5232 = vpack.c.b16 %v4408, %v4400
        %v5233 = vpack.c.b16 %v4409, %v4401
        %v5234 = vpack.c.b16 %v4410, %v4402
        %v5235 = vpack.c.b16 %v4411, %v4403
        %v5236 = vpack.c.b16 %v4420, %v4412
        %v5237 = vpack.c.b16 %v4421, %v4413
        %v5238 = vpack.c.b16 %v4422, %v4414
        %v5239 = vpack.c.b16 %v4423, %v4415
        %v5240 = vpack.c.b16 %v4424, %v4416
        %v5241 = vpack.c.b16 %v4425, %v4417
        %v5242 = vpack.c.b16 %v4426, %v4418
        %v5243 = vpack.c.b16 %v4427, %v4419
        %v5244 = vpack.c.b16 %v4436, %v4428
        %v5245 = vpack.c.b16 %v4437, %v4429
        %v5246 = vpack.c.b16 %v4438, %v4430
        %v5247 = vpack.c.b16 %v4439, %v4431
        %v5248 = vpack.c.b16 %v4440, %v4432
        %v5249 = vpack.c.b16 %v4441, %v4433
        %v5250 = vpack.c.b16 %v4442, %v4434
        %v5251 = vpack.c.b16 %v4443, %v4435
        %v5252 = vpack.c.b16 %v4452, %v4444
        %v5253 = vpack.c.b16 %v4453, %v4445
        %v5254 = vpack.c.b16 %v4454, %v4446
        %v5255 = vpack.c.b16 %v4455, %v4447
        %v5256 = vpack.c.b16 %v4456, %v4448
        %v5257 = vpack.c.b16 %v4457, %v4449
        %v5258 = vpack.c.b16 %v4458, %v4450
        %v5259 = vpack.c.b16 %v4459, %v4451
        %v5260 = vpack.c.b16 %v4468, %v4460
        %v5261 = vpack.c.b16 %v4469, %v4461
        %v5262 = vpack.c.b16 %v4470, %v4462
        %v5263 = vpack.c.b16 %v4471, %v4463
        %v5264 = vpack.c.b16 %v4472, %v4464
        %v5265 = vpack.c.b16 %v4473, %v4465
        %v5266 = vpack.c.b16 %v4474, %v4466
        %v5267 = vpack.c.b16 %v4475, %v4467
        %v5268 = vpack.c.b16 %v4484, %v4476
        %v5269 = vpack.c.b16 %v4485, %v4477
        %v5270 = vpack.c.b16 %v4486, %v4478
        %v5271 = vpack.c.b16 %v4487, %v4479
        %v5272 = vpack.c.b16 %v4488, %v4480
        %v5273 = vpack.c.b16 %v4489, %v4481
        %v5274 = vpack.c.b16 %v4490, %v4482
        %v5275 = vpack.c.b16 %v4491, %v4483
        %v5276 = vpack.c.b16 %v4500, %v4492
        %v5277 = vpack.c.b16 %v4501, %v4493
        %v5278 = vpack.c.b16 %v4502, %v4494
        %v5279 = vpack.c.b16 %v4503, %v4495
        %v5280 = vpack.c.b16 %v4504, %v4496
        %v5281 = vpack.c.b16 %v4505, %v4497
        %v5282 = vpack.c.b16 %v4506, %v4498
        %v5283 = vpack.c.b16 %v4507, %v4499
        %v5284 = vpack.c.b16 %v4516, %v4508
        %v5285 = vpack.c.b16 %v4517, %v4509
        %v5286 = vpack.c.b16 %v4518, %v4510
        %v5287 = vpack.c.b16 %v4519, %v4511
        %v5288 = vpack.c.b16 %v4520, %v4512
        %v5289 = vpack.c.b16 %v4521, %v4513
        %v5290 = vpack.c.b16 %v4522, %v4514
        %v5291 = vpack.c.b16 %v4523, %v4515
        %v5292 = vpack.c.b16 %v4532, %v4524
        %v5293 = vpack.c.b16 %v4533, %v4525
        %v5294 = vpack.c.b16 %v4534, %v4526
        %v5295 = vpack.c.b16 %v4535, %v4527
        %v5296 = vpack.c.b16 %v4536, %v4528
        %v5297 = vpack.c.b16 %v4537, %v4529
        %v5298 = vpack.c.b16 %v4538, %v4530
        %v5299 = vpack.c.b16 %v4539, %v4531
        %v5300 = vpack.c.b16 %v4548, %v4540
        %v5301 = vpack.c.b16 %v4549, %v4541
        %v5302 = vpack.c.b16 %v4550, %v4542
        %v5303 = vpack.c.b16 %v4551, %v4543
        %v5304 = vpack.c.b16 %v4552, %v4544
        %v5305 = vpack.c.b16 %v4553, %v4545
        %v5306 = vpack.c.b16 %v4554, %v4546
        %v5307 = vpack.c.b16 %v4555, %v4547
        %v5308 = vpack.c.b16 %v4564, %v4556
        %v5309 = vpack.c.b16 %v4565, %v4557
        %v5310 = vpack.c.b16 %v4566, %v4558
        %v5311 = vpack.c.b16 %v4567, %v4559
        %v5312 = vpack.c.b16 %v4568, %v4560
        %v5313 = vpack.c.b16 %v4569, %v4561
        %v5314 = vpack.c.b16 %v4570, %v4562
        %v5315 = vpack.c.b16 %v4571, %v4563
        %v5316 = vpack.c.b16 %v4580, %v4572
        %v5317 = vpack.c.b16 %v4581, %v4573
        %v5318 = vpack.c.b16 %v4582, %v4574
        %v5319 = vpack.c.b16 %v4583, %v4575
        %v5320 = vpack.c.b16 %v4584, %v4576
        %v5321 = vpack.c.b16 %v4585, %v4577
        %v5322 = vpack.c.b16 %v4586, %v4578
        %v5323 = vpack.c.b16 %v4587, %v4579
        %v5324 = vpack.c.b16 %v4596, %v4588
        %v5325 = vpack.c.b16 %v4597, %v4589
        %v5326 = vpack.c.b16 %v4598, %v4590
        %v5327 = vpack.c.b16 %v4599, %v4591
        %v5328 = vpack.c.b16 %v4600, %v4592
        %v5329 = vpack.c.b16 %v4601, %v4593
        %v5330 = vpack.c.b16 %v4602, %v4594
        %v5331 = vpack.c.b16 %v4603, %v4595
        %v5332 = vpack.c.b16 %v4612, %v4604
        %v5333 = vpack.c.b16 %v4613, %v4605
        %v5334 = vpack.c.b16 %v4614, %v4606
        %v5335 = vpack.c.b16 %v4615, %v4607
        %v5336 = vpack.c.b16 %v4616, %v4608
        %v5337 = vpack.c.b16 %v4617, %v4609
        %v5338 = vpack.c.b16 %v4618, %v4610
        %v5339 = vpack.c.b16 %v4619, %v4611
        %v5340 = vpack.c.b16 %v4628, %v4620
        %v5341 = vpack.c.b16 %v4629, %v4621
        %v5342 = vpack.c.b16 %v4630, %v4622
        %v5343 = vpack.c.b16 %v4631, %v4623
        %v5344 = vpack.c.b16 %v4632, %v4624
        %v5345 = vpack.c.b16 %v4633, %v4625
        %v5346 = vpack.c.b16 %v4634, %v4626
        %v5347 = vpack.c.b16 %v4635, %v4627
        %v5348 = vpack.c.b16 %v4644, %v4636
        %v5349 = vpack.c.b16 %v4645, %v4637
        %v5350 = vpack.c.b16 %v4646, %v4638
        %v5351 = vpack.c.b16 %v4647, %v4639
        %v5352 = vpack.c.b16 %v4648, %v4640
        %v5353 = vpack.c.b16 %v4649, %v4641
        %v5354 = vpack.c.b16 %v4650, %v4642
        %v5355 = vpack.c.b16 %v4651, %v4643
        %v5356 = vpack.c.b16 %v4660, %v4652
        %v5357 = vpack.c.b16 %v4661, %v4653
        %v5358 = vpack.c.b16 %v4662, %v4654
        %v5359 = vpack.c.b16 %v4663, %v4655
        %v5360 = vpack.c.b16 %v4664, %v4656
        %v5361 = vpack.c.b16 %v4665, %v4657
        %v5362 = vpack.c.b16 %v4666, %v4658
        %v5363 = vpack.c.b16 %v4667, %v4659
        %v5364 = vpack.c.b16 %v4676, %v4668
        %v5365 = vpack.c.b16 %v4677, %v4669
        %v5366 = vpack.c.b16 %v4678, %v4670
        %v5367 = vpack.c.b16 %v4679, %v4671
        %v5368 = vpack.c.b16 %v4680, %v4672
        %v5369 = vpack.c.b16 %v4681, %v4673
        %v5370 = vpack.c.b16 %v4682, %v4674
        %v5371 = vpack.c.b16 %v4683, %v4675
        %v5372 = vpack.c.b16 %v4692, %v4684
        %v5373 = vpack.c.b16 %v4693, %v4685
        %v5374 = vpack.c.b16 %v4694, %v4686
        %v5375 = vpack.c.b16 %v4695, %v4687
        %v5376 = vpack.c.b16 %v4696, %v4688
        %v5377 = vpack.c.b16 %v4697, %v4689
        %v5378 = vpack.c.b16 %v4698, %v4690
        %v5379 = vpack.c.b16 %v4699, %v4691
        %v5380 = vpack.c.b16 %v4708, %v4700
        %v5381 = vpack.c.b16 %v4709, %v4701
        %v5382 = vpack.c.b16 %v4710, %v4702
        %v5383 = vpack.c.b16 %v4711, %v4703
        %v5384 = vpack.c.b16 %v4712, %v4704
        %v5385 = vpack.c.b16 %v4713, %v4705
        %v5386 = vpack.c.b16 %v4714, %v4706
        %v5387 = vpack.c.b16 %v4715, %v4707
        %v5388 = vpack.c.b16 %v4724, %v4716
        %v5389 = vpack.c.b16 %v4725, %v4717
        %v5390 = vpack.c.b16 %v4726, %v4718
        %v5391 = vpack.c.b16 %v4727, %v4719
        %v5392 = vpack.c.b16 %v4728, %v4720
        %v5393 = vpack.c.b16 %v4729, %v4721
        %v5394 = vpack.c.b16 %v4730, %v4722
        %v5395 = vpack.c.b16 %v4731, %v4723
        %v5396 = vpack.c.b16 %v4740, %v4732
        %v5397 = vpack.c.b16 %v4741, %v4733
        %v5398 = vpack.c.b16 %v4742, %v4734
        %v5399 = vpack.c.b16 %v4743, %v4735
        %v5400 = vpack.c.b16 %v4744, %v4736
        %v5401 = vpack.c.b16 %v4745, %v4737
        %v5402 = vpack.c.b16 %v4746, %v4738
        %v5403 = vpack.c.b16 %v4747, %v4739
        %v5404 = vpack.c.b16 %v4756, %v4748
        %v5405 = vpack.c.b16 %v4757, %v4749
        %v5406 = vpack.c.b16 %v4758, %v4750
        %v5407 = vpack.c.b16 %v4759, %v4751
        %v5408 = vpack.c.b16 %v4760, %v4752
        %v5409 = vpack.c.b16 %v4761, %v4753
        %v5410 = vpack.c.b16 %v4762, %v4754
        %v5411 = vpack.c.b16 %v4763, %v4755
        %v5412 = vpack.c.b16 %v4772, %v4764
        %v5413 = vpack.c.b16 %v4773, %v4765
        %v5414 = vpack.c.b16 %v4774, %v4766
        %v5415 = vpack.c.b16 %v4775, %v4767
        %v5416 = vpack.c.b16 %v4776, %v4768
        %v5417 = vpack.c.b16 %v4777, %v4769
        %v5418 = vpack.c.b16 %v4778, %v4770
        %v5419 = vpack.c.b16 %v4779, %v4771
        %v5420 = vpack.c.b16 %v4788, %v4780
        %v5421 = vpack.c.b16 %v4789, %v4781
        %v5422 = vpack.c.b16 %v4790, %v4782
        %v5423 = vpack.c.b16 %v4791, %v4783
        %v5424 = vpack.c.b16 %v4792, %v4784
        %v5425 = vpack.c.b16 %v4793, %v4785
        %v5426 = vpack.c.b16 %v4794, %v4786
        %v5427 = vpack.c.b16 %v4795, %v4787
        %v5428 = vpack.c.b16 %v4804, %v4796
        %v5429 = vpack.c.b16 %v4805, %v4797
        %v5430 = vpack.c.b16 %v4806, %v4798
        %v5431 = vpack.c.b16 %v4807, %v4799
        %v5432 = vpack.c.b16 %v4808, %v4800
        %v5433 = vpack.c.b16 %v4809, %v4801
        %v5434 = vpack.c.b16 %v4810, %v4802
        %v5435 = vpack.c.b16 %v4811, %v4803
        %v5436 = vpack.c.b16 %v4820, %v4812
        %v5437 = vpack.c.b16 %v4821, %v4813
        %v5438 = vpack.c.b16 %v4822, %v4814
        %v5439 = vpack.c.b16 %v4823, %v4815
        %v5440 = vpack.c.b16 %v4824, %v4816
        %v5441 = vpack.c.b16 %v4825, %v4817
        %v5442 = vpack.c.b16 %v4826, %v4818
        %v5443 = vpack.c.b16 %v4827, %v4819
        %v5444 = vpack.c.b16 %v4836, %v4828
        %v5445 = vpack.c.b16 %v4837, %v4829
        %v5446 = vpack.c.b16 %v4838, %v4830
        %v5447 = vpack.c.b16 %v4839, %v4831
        %v5448 = vpack.c.b16 %v4840, %v4832
        %v5449 = vpack.c.b16 %v4841, %v4833
        %v5450 = vpack.c.b16 %v4842, %v4834
        %v5451 = vpack.c.b16 %v4843, %v4835
        %v5452 = vpack.c.b16 %v4852, %v4844
        %v5453 = vpack.c.b16 %v4853, %v4845
        %v5454 = vpack.c.b16 %v4854, %v4846
        %v5455 = vpack.c.b16 %v4855, %v4847
        %v5456 = vpack.c.b16 %v4856, %v4848
        %v5457 = vpack.c.b16 %v4857, %v4849
        %v5458 = vpack.c.b16 %v4858, %v4850
        %v5459 = vpack.c.b16 %v4859, %v4851
        %v5460 = vpack.c.b16 %v4868, %v4860
        %v5461 = vpack.c.b16 %v4869, %v4861
        %v5462 = vpack.c.b16 %v4870, %v4862
        %v5463 = vpack.c.b16 %v4871, %v4863
        %v5464 = vpack.c.b16 %v4872, %v4864
        %v5465 = vpack.c.b16 %v4873, %v4865
        %v5466 = vpack.c.b16 %v4874, %v4866
        %v5467 = vpack.c.b16 %v4875, %v4867
        %v5468 = vpack.c.b16 %v4884, %v4876
        %v5469 = vpack.c.b16 %v4885, %v4877
        %v5470 = vpack.c.b16 %v4886, %v4878
        %v5471 = vpack.c.b16 %v4887, %v4879
        %v5472 = vpack.c.b16 %v4888, %v4880
        %v5473 = vpack.c.b16 %v4889, %v4881
        %v5474 = vpack.c.b16 %v4890, %v4882
        %v5475 = vpack.c.b16 %v4891, %v4883
        %v5476 = vpack.c.b16 %v4900, %v4892
        %v5477 = vpack.c.b16 %v4901, %v4893
        %v5478 = vpack.c.b16 %v4902, %v4894
        %v5479 = vpack.c.b16 %v4903, %v4895
        %v5480 = vpack.c.b16 %v4904, %v4896
        %v5481 = vpack.c.b16 %v4905, %v4897
        %v5482 = vpack.c.b16 %v4906, %v4898
        %v5483 = vpack.c.b16 %v4907, %v4899
        %v5484 = vpack.c.b16 %v4916, %v4908
        %v5485 = vpack.c.b16 %v4917, %v4909
        %v5486 = vpack.c.b16 %v4918, %v4910
        %v5487 = vpack.c.b16 %v4919, %v4911
        %v5488 = vpack.c.b16 %v4920, %v4912
        %v5489 = vpack.c.b16 %v4921, %v4913
        %v5490 = vpack.c.b16 %v4922, %v4914
        %v5491 = vpack.c.b16 %v4923, %v4915
        %v5492 = vpack.c.b16 %v4932, %v4924
        %v5493 = vpack.c.b16 %v4933, %v4925
        %v5494 = vpack.c.b16 %v4934, %v4926
        %v5495 = vpack.c.b16 %v4935, %v4927
        %v5496 = vpack.c.b16 %v4936, %v4928
        %v5497 = vpack.c.b16 %v4937, %v4929
        %v5498 = vpack.c.b16 %v4938, %v4930
        %v5499 = vpack.c.b16 %v4939, %v4931
        %v5500 = vpack.c.b16 %v4948, %v4940
        %v5501 = vpack.c.b16 %v4949, %v4941
        %v5502 = vpack.c.b16 %v4950, %v4942
        %v5503 = vpack.c.b16 %v4951, %v4943
        %v5504 = vpack.c.b16 %v4952, %v4944
        %v5505 = vpack.c.b16 %v4953, %v4945
        %v5506 = vpack.c.b16 %v4954, %v4946
        %v5507 = vpack.c.b16 %v4955, %v4947
        %v5508 = vpack.c.b16 %v4964, %v4956
        %v5509 = vpack.c.b16 %v4965, %v4957
        %v5510 = vpack.c.b16 %v4966, %v4958
        %v5511 = vpack.c.b16 %v4967, %v4959
        %v5512 = vpack.c.b16 %v4968, %v4960
        %v5513 = vpack.c.b16 %v4969, %v4961
        %v5514 = vpack.c.b16 %v4970, %v4962
        %v5515 = vpack.c.b16 %v4971, %v4963
        %v5516 = vpack.c.b16 %v4980, %v4972
        %v5517 = vpack.c.b16 %v4981, %v4973
        %v5518 = vpack.c.b16 %v4982, %v4974
        %v5519 = vpack.c.b16 %v4983, %v4975
        %v5520 = vpack.c.b16 %v4984, %v4976
        %v5521 = vpack.c.b16 %v4985, %v4977
        %v5522 = vpack.c.b16 %v4986, %v4978
        %v5523 = vpack.c.b16 %v4987, %v4979
        %v5524 = vpack.c.b16 %v4996, %v4988
        %v5525 = vpack.c.b16 %v4997, %v4989
        %v5526 = vpack.c.b16 %v4998, %v4990
        %v5527 = vpack.c.b16 %v4999, %v4991
        %v5528 = vpack.c.b16 %v5000, %v4992
        %v5529 = vpack.c.b16 %v5001, %v4993
        %v5530 = vpack.c.b16 %v5002, %v4994
        %v5531 = vpack.c.b16 %v5003, %v4995
        %v5532 = vpack.c.b16 %v5012, %v5004
        %v5533 = vpack.c.b16 %v5013, %v5005
        %v5534 = vpack.c.b16 %v5014, %v5006
        %v5535 = vpack.c.b16 %v5015, %v5007
        %v5536 = vpack.c.b16 %v5016, %v5008
        %v5537 = vpack.c.b16 %v5017, %v5009
        %v5538 = vpack.c.b16 %v5018, %v5010
        %v5539 = vpack.c.b16 %v5019, %v5011
        %v5540 = vpack.c.b16 %v5028, %v5020
        %v5541 = vpack.c.b16 %v5029, %v5021
        %v5542 = vpack.c.b16 %v5030, %v5022
        %v5543 = vpack.c.b16 %v5031, %v5023
        %v5544 = vpack.c.b16 %v5032, %v5024
        %v5545 = vpack.c.b16 %v5033, %v5025
        %v5546 = vpack.c.b16 %v5034, %v5026
        %v5547 = vpack.c.b16 %v5035, %v5027
        %6060 = vmatprep.subr.bf16.mxu0 %v5037
        %6061 = vmatpush1.bf16.msra.mxu0 %v5036
        %6062 = vmatprep.subr.bf16.mxu0 %v5045
        %6063 = vmatpush1.bf16.msra.mxu0 %v5044
        %6064 = vmatprep.subr.bf16.mxu0 %v5053
        %6065 = vmatpush1.bf16.msra.mxu0 %v5052
        %6066 = vmatprep.subr.bf16.mxu0 %v5061
        %6067 = vmatpush1.bf16.msra.mxu0 %v5060
        %6068 = vmatprep.subr.bf16.mxu0 %v5069
        %6069 = vmatpush1.bf16.msra.mxu0 %v5068
        %6070 = vmatprep.subr.bf16.mxu0 %v5077
        %6071 = vmatpush1.bf16.msra.mxu0 %v5076
        %6072 = vmatprep.subr.bf16.mxu0 %v5085
        %6073 = vmatpush1.bf16.msra.mxu0 %v5084
        %6074 = vmatprep.subr.bf16.mxu0 %v5093
        %6075 = vmatpush1.bf16.msra.mxu0 %v5092
        %6076 = vmatprep.subr.bf16.mxu0 %v5101
        %6077 = vmatpush1.bf16.msra.mxu0 %v5100
        %6078 = vmatprep.subr.bf16.mxu0 %v5109
        %6079 = vmatpush1.bf16.msra.mxu0 %v5108
        %6080 = vmatprep.subr.bf16.mxu0 %v5117
        %6081 = vmatpush1.bf16.msra.mxu0 %v5116
        %6082 = vmatprep.subr.bf16.mxu0 %v5125
        %6083 = vmatpush1.bf16.msra.mxu0 %v5124
        %6084 = vmatprep.subr.bf16.mxu0 %v5133
        %6085 = vmatpush1.bf16.msra.mxu0 %v5132
        %6086 = vmatprep.subr.bf16.mxu0 %v5141
        %6087 = vmatpush1.bf16.msra.mxu0 %v5140
        %6088 = vmatprep.subr.bf16.mxu0 %v5149
        %6089 = vmatpush1.bf16.msra.mxu0 %v5148
        %6090 = vmatprep.subr.bf16.mxu0 %v5157
        %6091 = vmatpush1.bf16.msra.mxu0 %v5156
        %6092 = vmatprep.mubr.bf16.mxu0 %v2933
        %6093 = vmatmul.mubr.bf16.gmra.mrb[0].mxu0 %v2932
        %v6094 = vpop.f32.mrb[0].mxu0
        %v6095 = vadd.f32 0.0, %v6094
        %v6096 = vpop.f32.mrb[0].mxu0
        %v6097 = vadd.f32 0.0, %v6096
        %v6098 = vpop.f32.mrb[0].mxu0
        %v6099 = vadd.f32 0.0, %v6098
        %v6100 = vpop.f32.mrb[0].mxu0
        %v6101 = vadd.f32 0.0, %v6100
        %6102 = vmatprep.mubr.bf16.mxu0 %v2941
        %6103 = vmatmul.mubr.bf16.gmra.mrb[0].mxu0 %v2940
        %v6104 = vpop.f32.mrb[0].mxu0
        %v6105 = vadd.f32 0.0, %v6104
        %v6106 = vpop.f32.mrb[0].mxu0
        %v6107 = vadd.f32 0.0, %v6106
        %v6108 = vpop.f32.mrb[0].mxu0
        %v6109 = vadd.f32 0.0, %v6108
        %v6110 = vpop.f32.mrb[0].mxu0
        %v6111 = vadd.f32 0.0, %v6110
        %6112 = vmatprep.mubr.bf16.mxu0 %v2949
        %6113 = vmatmul.mubr.bf16.gmra.mrb[0].mxu0 %v2948
        %v6114 = vpop.f32.mrb[0].mxu0
        %v6115 = vadd.f32 0.0, %v6114
        %v6116 = vpop.f32.mrb[0].mxu0
        %v6117 = vadd.f32 0.0, %v6116
        %v6118 = vpop.f32.mrb[0].mxu0
        %v6119 = vadd.f32 0.0, %v6118
        %v6120 = vpop.f32.mrb[0].mxu0
        %v6121 = vadd.f32 0.0, %v6120
        %6122 = vmatprep.mubr.bf16.mxu0 %v2957
        %6123 = vmatmul.mubr.bf16.gmra.mrb[0].mxu0 %v2956
        %v6124 = vpop.f32.mrb[0].mxu0
        %v6125 = vadd.f32 0.0, %v6124
        %v6126 = vpop.f32.mrb[0].mxu0
        %v6127 = vadd.f32 0.0, %v6126
        %v6128 = vpop.f32.mrb[0].mxu0
        %v6129 = vadd.f32 0.0, %v6128
        %v6130 = vpop.f32.mrb[0].mxu0
        %v6131 = vadd.f32 0.0, %v6130
        %6132 = vmatprep.mubr.bf16.mxu0 %v2965
        %6133 = vmatmul.mubr.bf16.gmra.mrb[0].mxu0 %v2964
        %v6134 = vpop.f32.mrb[0].mxu0
        %v6135 = vadd.f32 0.0, %v6134
        %v6136 = vpop.f32.mrb[0].mxu0
        %v6137 = vadd.f32 0.0, %v6136
        %v6138 = vpop.f32.mrb[0].mxu0
        %v6139 = vadd.f32 0.0, %v6138
        %v6140 = vpop.f32.mrb[0].mxu0
        %v6141 = vadd.f32 0.0, %v6140
        %6142 = vmatprep.mubr.bf16.mxu0 %v2973
        %6143 = vmatmul.mubr.bf16.gmra.mrb[0].mxu0 %v2972
        %v6144 = vpop.f32.mrb[0].mxu0
        %v6145 = vadd.f32 0.0, %v6144
        %v6146 = vpop.f32.mrb[0].mxu0
        %v6147 = vadd.f32 0.0, %v6146
        %v6148 = vpop.f32.mrb[0].mxu0
        %v6149 = vadd.f32 0.0, %v6148
        %v6150 = vpop.f32.mrb[0].mxu0
        %v6151 = vadd.f32 0.0, %v6150
        %6152 = vmatprep.mubr.bf16.mxu0 %v2981
        %6153 = vmatmul.mubr.bf16.gmra.mrb[0].mxu0 %v2980
        %v6154 = vpop.f32.mrb[0].mxu0
        %v6155 = vadd.f32 0.0, %v6154
        %v6156 = vpop.f32.mrb[0].mxu0
        %v6157 = vadd.f32 0.0, %v6156
        %v6158 = vpop.f32.mrb[0].mxu0
        %v6159 = vadd.f32 0.0, %v6158
        %v6160 = vpop.f32.mrb[0].mxu0
        %v6161 = vadd.f32 0.0, %v6160
        %6162 = vdwg.mxu0
        %6163 = vmatprep.subr.bf16.mxu0 %v5165
        %6164 = vmatpush1.bf16.msra.mxu0 %v5164
        %6165 = vmatprep.subr.bf16.mxu0 %v5173
        %6166 = vmatpush1.bf16.msra.mxu0 %v5172
        %6167 = vmatprep.subr.bf16.mxu0 %v5181
        %6168 = vmatpush1.bf16.msra.mxu0 %v5180
        %6169 = vmatprep.subr.bf16.mxu0 %v5189
        %6170 = vmatpush1.bf16.msra.mxu0 %v5188
        %6171 = vmatprep.subr.bf16.mxu0 %v5197
        %6172 = vmatpush1.bf16.msra.mxu0 %v5196
        %6173 = vmatprep.subr.bf16.mxu0 %v5205
        %6174 = vmatpush1.bf16.msra.mxu0 %v5204
        %6175 = vmatprep.subr.bf16.mxu0 %v5213
        %6176 = vmatpush1.bf16.msra.mxu0 %v5212
        %6177 = vmatprep.subr.bf16.mxu0 %v5221
        %6178 = vmatpush1.bf16.msra.mxu0 %v5220
        %6179 = vmatprep.subr.bf16.mxu0 %v5229
        %6180 = vmatpush1.bf16.msra.mxu0 %v5228
        %6181 = vmatprep.subr.bf16.mxu0 %v5237
        %6182 = vmatpush1.bf16.msra.mxu0 %v5236
        %6183 = vmatprep.subr.bf16.mxu0 %v5245
        %6184 = vmatpush1.bf16.msra.mxu0 %v5244
        %6185 = vmatprep.subr.bf16.mxu0 %v5253
        %6186 = vmatpush1.bf16.msra.mxu0 %v5252
        %6187 = vmatprep.subr.bf16.mxu0 %v5261
        %6188 = vmatpush1.bf16.msra.mxu0 %v5260
        %6189 = vmatprep.subr.bf16.mxu0 %v5269
        %6190 = vmatpush1.bf16.msra.mxu0 %v5268
        %6191 = vmatprep.subr.bf16.mxu0 %v5277
        %6192 = vmatpush1.bf16.msra.mxu0 %v5276
        %6193 = vmatprep.subr.bf16.mxu0 %v5285
        %6194 = vmatpush1.bf16.msra.mxu0 %v5284
        %6195 = vmatprep.mubr.bf16.mxu0 %v2935
        %6196 = vmatmul.mubr.bf16.gmra.mrb[0].mxu0 %v2934
        %v6197 = vpop.f32.mrb[0].mxu0
        %v6198 = vadd.f32 %v6095, %v6197
        %v6199 = vpop.f32.mrb[0].mxu0
        %v6200 = vadd.f32 %v6097, %v6199
        %v6201 = vpop.f32.mrb[0].mxu0
        %v6202 = vadd.f32 %v6099, %v6201
        %v6203 = vpop.f32.mrb[0].mxu0
        %v6204 = vadd.f32 %v6101, %v6203
        %6205 = vmatprep.mubr.bf16.mxu0 %v2943
        %6206 = vmatmul.mubr.bf16.gmra.mrb[0].mxu0 %v2942
        %v6207 = vpop.f32.mrb[0].mxu0
        %v6208 = vadd.f32 %v6105, %v6207
        %v6209 = vpop.f32.mrb[0].mxu0
        %v6210 = vadd.f32 %v6107, %v6209
        %v6211 = vpop.f32.mrb[0].mxu0
        %v6212 = vadd.f32 %v6109, %v6211
        %v6213 = vpop.f32.mrb[0].mxu0
        %v6214 = vadd.f32 %v6111, %v6213
        %6215 = vmatprep.mubr.bf16.mxu0 %v2951
        %6216 = vmatmul.mubr.bf16.gmra.mrb[0].mxu0 %v2950
        %v6217 = vpop.f32.mrb[0].mxu0
        %v6218 = vadd.f32 %v6115, %v6217
        %v6219 = vpop.f32.mrb[0].mxu0
        %v6220 = vadd.f32 %v6117, %v6219
        %v6221 = vpop.f32.mrb[0].mxu0
        %v6222 = vadd.f32 %v6119, %v6221
        %v6223 = vpop.f32.mrb[0].mxu0
        %v6224 = vadd.f32 %v6121, %v6223
        %6225 = vmatprep.mubr.bf16.mxu0 %v2959
        %6226 = vmatmul.mubr.bf16.gmra.mrb[0].mxu0 %v2958
        %v6227 = vpop.f32.mrb[0].mxu0
        %v6228 = vadd.f32 %v6125, %v6227
        %v6229 = vpop.f32.mrb[0].mxu0
        %v6230 = vadd.f32 %v6127, %v6229
        %v6231 = vpop.f32.mrb[0].mxu0
        %v6232 = vadd.f32 %v6129, %v6231
        %v6233 = vpop.f32.mrb[0].mxu0
        %v6234 = vadd.f32 %v6131, %v6233
        %6235 = vmatprep.mubr.bf16.mxu0 %v2967
        %6236 = vmatmul.mubr.bf16.gmra.mrb[0].mxu0 %v2966
        %v6237 = vpop.f32.mrb[0].mxu0
        %v6238 = vadd.f32 %v6135, %v6237
        %v6239 = vpop.f32.mrb[0].mxu0
        %v6240 = vadd.f32 %v6137, %v6239
        %v6241 = vpop.f32.mrb[0].mxu0
        %v6242 = vadd.f32 %v6139, %v6241
        %v6243 = vpop.f32.mrb[0].mxu0
        %v6244 = vadd.f32 %v6141, %v6243
        %6245 = vmatprep.mubr.bf16.mxu0 %v2975
        %6246 = vmatmul.mubr.bf16.gmra.mrb[0].mxu0 %v2974
        %v6247 = vpop.f32.mrb[0].mxu0
        %v6248 = vadd.f32 %v6145, %v6247
        %v6249 = vpop.f32.mrb[0].mxu0
        %v6250 = vadd.f32 %v6147, %v6249
        %v6251 = vpop.f32.mrb[0].mxu0
        %v6252 = vadd.f32 %v6149, %v6251
        %v6253 = vpop.f32.mrb[0].mxu0
        %v6254 = vadd.f32 %v6151, %v6253
        %6255 = vmatprep.mubr.bf16.mxu0 %v2983
        %6256 = vmatmul.mubr.bf16.gmra.mrb[0].mxu0 %v2982
        %v6257 = vpop.f32.mrb[0].mxu0
        %v6258 = vadd.f32 %v6155, %v6257
        %v6259 = vpop.f32.mrb[0].mxu0
        %v6260 = vadd.f32 %v6157, %v6259
        %v6261 = vpop.f32.mrb[0].mxu0
        %v6262 = vadd.f32 %v6159, %v6261
        %v6263 = vpop.f32.mrb[0].mxu0
        %v6264 = vadd.f32 %v6161, %v6263
        %6265 = vdwg.mxu0
        %6266 = vmatprep.subr.bf16.mxu0 %v5293
        %6267 = vmatpush1.bf16.msra.mxu0 %v5292
        %6268 = vmatprep.subr.bf16.mxu0 %v5301
        %6269 = vmatpush1.bf16.msra.mxu0 %v5300
        %6270 = vmatprep.subr.bf16.mxu0 %v5309
        %6271 = vmatpush1.bf16.msra.mxu0 %v5308
        %6272 = vmatprep.subr.bf16.mxu0 %v5317
        %6273 = vmatpush1.bf16.msra.mxu0 %v5316
        %6274 = vmatprep.subr.bf16.mxu0 %v5325
        %6275 = vmatpush1.bf16.msra.mxu0 %v5324
        %6276 = vmatprep.subr.bf16.mxu0 %v5333
        %6277 = vmatpush1.bf16.msra.mxu0 %v5332
        %6278 = vmatprep.subr.bf16.mxu0 %v5341
        %6279 = vmatpush1.bf16.msra.mxu0 %v5340
        %6280 = vmatprep.subr.bf16.mxu0 %v5349
        %6281 = vmatpush1.bf16.msra.mxu0 %v5348
        %6282 = vmatprep.subr.bf16.mxu0 %v5357
        %6283 = vmatpush1.bf16.msra.mxu0 %v5356
        %6284 = vmatprep.subr.bf16.mxu0 %v5365
        %6285 = vmatpush1.bf16.msra.mxu0 %v5364
        %6286 = vmatprep.subr.bf16.mxu0 %v5373
        %6287 = vmatpush1.bf16.msra.mxu0 %v5372
        %6288 = vmatprep.subr.bf16.mxu0 %v5381
        %6289 = vmatpush1.bf16.msra.mxu0 %v5380
        %6290 = vmatprep.subr.bf16.mxu0 %v5389
        %6291 = vmatpush1.bf16.msra.mxu0 %v5388
        %6292 = vmatprep.subr.bf16.mxu0 %v5397
        %6293 = vmatpush1.bf16.msra.mxu0 %v5396
        %6294 = vmatprep.subr.bf16.mxu0 %v5405
        %6295 = vmatpush1.bf16.msra.mxu0 %v5404
        %6296 = vmatprep.subr.bf16.mxu0 %v5413
        %6297 = vmatpush1.bf16.msra.mxu0 %v5412
        %6298 = vmatprep.mubr.bf16.mxu0 %v2937
        %6299 = vmatmul.mubr.bf16.gmra.mrb[0].mxu0 %v2936
        %v6300 = vpop.f32.mrb[0].mxu0
        %v6301 = vadd.f32 %v6198, %v6300
        %v6302 = vpop.f32.mrb[0].mxu0
        %v6303 = vadd.f32 %v6200, %v6302
        %v6304 = vpop.f32.mrb[0].mxu0
        %v6305 = vadd.f32 %v6202, %v6304
        %v6306 = vpop.f32.mrb[0].mxu0
        %v6307 = vadd.f32 %v6204, %v6306
        %6308 = vmatprep.mubr.bf16.mxu0 %v2945
        %6309 = vmatmul.mubr.bf16.gmra.mrb[0].mxu0 %v2944
        %v6310 = vpop.f32.mrb[0].mxu0
        %v6311 = vadd.f32 %v6208, %v6310
        %v6312 = vpop.f32.mrb[0].mxu0
        %v6313 = vadd.f32 %v6210, %v6312
        %v6314 = vpop.f32.mrb[0].mxu0
        %v6315 = vadd.f32 %v6212, %v6314
        %v6316 = vpop.f32.mrb[0].mxu0
        %v6317 = vadd.f32 %v6214, %v6316
        %6318 = vmatprep.mubr.bf16.mxu0 %v2953
        %6319 = vmatmul.mubr.bf16.gmra.mrb[0].mxu0 %v2952
        %v6320 = vpop.f32.mrb[0].mxu0
        %v6321 = vadd.f32 %v6218, %v6320
        %v6322 = vpop.f32.mrb[0].mxu0
        %v6323 = vadd.f32 %v6220, %v6322
        %v6324 = vpop.f32.mrb[0].mxu0
        %v6325 = vadd.f32 %v6222, %v6324
        %v6326 = vpop.f32.mrb[0].mxu0
        %v6327 = vadd.f32 %v6224, %v6326
        %6328 = vmatprep.mubr.bf16.mxu0 %v2961
        %6329 = vmatmul.mubr.bf16.gmra.mrb[0].mxu0 %v2960
        %v6330 = vpop.f32.mrb[0].mxu0
        %v6331 = vadd.f32 %v6228, %v6330
        %v6332 = vpop.f32.mrb[0].mxu0
        %v6333 = vadd.f32 %v6230, %v6332
        %v6334 = vpop.f32.mrb[0].mxu0
        %v6335 = vadd.f32 %v6232, %v6334
        %v6336 = vpop.f32.mrb[0].mxu0
        %v6337 = vadd.f32 %v6234, %v6336
        %6338 = vmatprep.mubr.bf16.mxu0 %v2969
        %6339 = vmatmul.mubr.bf16.gmra.mrb[0].mxu0 %v2968
        %v6340 = vpop.f32.mrb[0].mxu0
        %v6341 = vadd.f32 %v6238, %v6340
        %v6342 = vpop.f32.mrb[0].mxu0
        %v6343 = vadd.f32 %v6240, %v6342
        %v6344 = vpop.f32.mrb[0].mxu0
        %v6345 = vadd.f32 %v6242, %v6344
        %v6346 = vpop.f32.mrb[0].mxu0
        %v6347 = vadd.f32 %v6244, %v6346
        %6348 = vmatprep.mubr.bf16.mxu0 %v2977
        %6349 = vmatmul.mubr.bf16.gmra.mrb[0].mxu0 %v2976
        %v6350 = vpop.f32.mrb[0].mxu0
        %v6351 = vadd.f32 %v6248, %v6350
        %v6352 = vpop.f32.mrb[0].mxu0
        %v6353 = vadd.f32 %v6250, %v6352
        %v6354 = vpop.f32.mrb[0].mxu0
        %v6355 = vadd.f32 %v6252, %v6354
        %v6356 = vpop.f32.mrb[0].mxu0
        %v6357 = vadd.f32 %v6254, %v6356
        %6358 = vmatprep.mubr.bf16.mxu0 %v2985
        %6359 = vmatmul.mubr.bf16.gmra.mrb[0].mxu0 %v2984
        %v6360 = vpop.f32.mrb[0].mxu0
        %v6361 = vadd.f32 %v6258, %v6360
        %v6362 = vpop.f32.mrb[0].mxu0
        %v6363 = vadd.f32 %v6260, %v6362
        %v6364 = vpop.f32.mrb[0].mxu0
        %v6365 = vadd.f32 %v6262, %v6364
        %v6366 = vpop.f32.mrb[0].mxu0
        %v6367 = vadd.f32 %v6264, %v6366
        %6368 = vdwg.mxu0
        %6369 = vmatprep.subr.bf16.mxu0 %v5421
        %6370 = vmatpush1.bf16.msra.mxu0 %v5420
        %6371 = vmatprep.subr.bf16.mxu0 %v5429
        %6372 = vmatpush1.bf16.msra.mxu0 %v5428
        %6373 = vmatprep.subr.bf16.mxu0 %v5437
        %6374 = vmatpush1.bf16.msra.mxu0 %v5436
        %6375 = vmatprep.subr.bf16.mxu0 %v5445
        %6376 = vmatpush1.bf16.msra.mxu0 %v5444
        %6377 = vmatprep.subr.bf16.mxu0 %v5453
        %6378 = vmatpush1.bf16.msra.mxu0 %v5452
        %6379 = vmatprep.subr.bf16.mxu0 %v5461
        %6380 = vmatpush1.bf16.msra.mxu0 %v5460
        %6381 = vmatprep.subr.bf16.mxu0 %v5469
        %6382 = vmatpush1.bf16.msra.mxu0 %v5468
        %6383 = vmatprep.subr.bf16.mxu0 %v5477
        %6384 = vmatpush1.bf16.msra.mxu0 %v5476
        %6385 = vmatprep.subr.bf16.mxu0 %v5485
        %6386 = vmatpush1.bf16.msra.mxu0 %v5484
        %6387 = vmatprep.subr.bf16.mxu0 %v5493
        %6388 = vmatpush1.bf16.msra.mxu0 %v5492
        %6389 = vmatprep.subr.bf16.mxu0 %v5501
        %6390 = vmatpush1.bf16.msra.mxu0 %v5500
        %6391 = vmatprep.subr.bf16.mxu0 %v5509
        %6392 = vmatpush1.bf16.msra.mxu0 %v5508
        %6393 = vmatprep.subr.bf16.mxu0 %v5517
        %6394 = vmatpush1.bf16.msra.mxu0 %v5516
        %6395 = vmatprep.subr.bf16.mxu0 %v5525
        %6396 = vmatpush1.bf16.msra.mxu0 %v5524
        %6397 = vmatprep.subr.bf16.mxu0 %v5533
        %6398 = vmatpush1.bf16.msra.mxu0 %v5532
        %6399 = vmatprep.subr.bf16.mxu0 %v5541
        %6400 = vmatpush1.bf16.msra.mxu0 %v5540
        %6401 = vmatprep.mubr.bf16.mxu0 %v2939
        %6402 = vmatmul.mubr.bf16.gmra.mrb[0].mxu0 %v2938
        %v6403 = vpop.f32.mrb[0].mxu0
        %v6404 = vadd.f32 %v6301, %v6403
        %v6405 = vpop.f32.mrb[0].mxu0
        %v6406 = vadd.f32 %v6303, %v6405
        %v6407 = vpop.f32.mrb[0].mxu0
        %v6408 = vadd.f32 %v6305, %v6407
        %v6409 = vpop.f32.mrb[0].mxu0
        %v6410 = vadd.f32 %v6307, %v6409
        %6411 = vmatprep.mubr.bf16.mxu0 %v2947
        %6412 = vmatmul.mubr.bf16.gmra.mrb[0].mxu0 %v2946
        %v6413 = vpop.f32.mrb[0].mxu0
        %v6414 = vadd.f32 %v6311, %v6413
        %v6415 = vpop.f32.mrb[0].mxu0
        %v6416 = vadd.f32 %v6313, %v6415
        %v6417 = vpop.f32.mrb[0].mxu0
        %v6418 = vadd.f32 %v6315, %v6417
        %v6419 = vpop.f32.mrb[0].mxu0
        %v6420 = vadd.f32 %v6317, %v6419
        %6421 = vmatprep.mubr.bf16.mxu0 %v2955
        %6422 = vmatmul.mubr.bf16.gmra.mrb[0].mxu0 %v2954
        %v6423 = vpop.f32.mrb[0].mxu0
        %v6424 = vadd.f32 %v6321, %v6423
        %v6425 = vpop.f32.mrb[0].mxu0
        %v6426 = vadd.f32 %v6323, %v6425
        %v6427 = vpop.f32.mrb[0].mxu0
        %v6428 = vadd.f32 %v6325, %v6427
        %v6429 = vpop.f32.mrb[0].mxu0
        %v6430 = vadd.f32 %v6327, %v6429
        %6431 = vmatprep.mubr.bf16.mxu0 %v2963
        %6432 = vmatmul.mubr.bf16.gmra.mrb[0].mxu0 %v2962
        %v6433 = vpop.f32.mrb[0].mxu0
        %v6434 = vadd.f32 %v6331, %v6433
        %v6435 = vpop.f32.mrb[0].mxu0
        %v6436 = vadd.f32 %v6333, %v6435
        %v6437 = vpop.f32.mrb[0].mxu0
        %v6438 = vadd.f32 %v6335, %v6437
        %v6439 = vpop.f32.mrb[0].mxu0
        %v6440 = vadd.f32 %v6337, %v6439
        %6441 = vmatprep.mubr.bf16.mxu0 %v2971
        %6442 = vmatmul.mubr.bf16.gmra.mrb[0].mxu0 %v2970
        %v6443 = vpop.f32.mrb[0].mxu0
        %v6444 = vadd.f32 %v6341, %v6443
        %v6445 = vpop.f32.mrb[0].mxu0
        %v6446 = vadd.f32 %v6343, %v6445
        %v6447 = vpop.f32.mrb[0].mxu0
        %v6448 = vadd.f32 %v6345, %v6447
        %v6449 = vpop.f32.mrb[0].mxu0
        %v6450 = vadd.f32 %v6347, %v6449
        %6451 = vmatprep.mubr.bf16.mxu0 %v2979
        %6452 = vmatmul.mubr.bf16.gmra.mrb[0].mxu0 %v2978
        %v6453 = vpop.f32.mrb[0].mxu0
        %v6454 = vadd.f32 %v6351, %v6453
        %v6455 = vpop.f32.mrb[0].mxu0
        %v6456 = vadd.f32 %v6353, %v6455
        %v6457 = vpop.f32.mrb[0].mxu0
        %v6458 = vadd.f32 %v6355, %v6457
        %v6459 = vpop.f32.mrb[0].mxu0
        %v6460 = vadd.f32 %v6357, %v6459
        %6461 = vmatprep.mubr.bf16.mxu0 %v2987
        %6462 = vmatmul.mubr.bf16.gmra.mrb[0].mxu0 %v2986
        %v6463 = vpop.f32.mrb[0].mxu0
        %v6464 = vadd.f32 %v6361, %v6463
        %v6465 = vpop.f32.mrb[0].mxu0
        %v6466 = vadd.f32 %v6363, %v6465
        %v6467 = vpop.f32.mrb[0].mxu0
        %v6468 = vadd.f32 %v6365, %v6467
        %v6469 = vpop.f32.mrb[0].mxu0
        %v6470 = vadd.f32 %v6367, %v6469
        %6471 = vdwg.mxu0
        %6472 = vmatprep.subr.bf16.mxu0 %v5039
        %6473 = vmatpush1.bf16.msra.mxu0 %v5038
        %6474 = vmatprep.subr.bf16.mxu0 %v5047
        %6475 = vmatpush1.bf16.msra.mxu0 %v5046
        %6476 = vmatprep.subr.bf16.mxu0 %v5055
        %6477 = vmatpush1.bf16.msra.mxu0 %v5054
        %6478 = vmatprep.subr.bf16.mxu0 %v5063
        %6479 = vmatpush1.bf16.msra.mxu0 %v5062
        %6480 = vmatprep.subr.bf16.mxu0 %v5071
        %6481 = vmatpush1.bf16.msra.mxu0 %v5070
        %6482 = vmatprep.subr.bf16.mxu0 %v5079
        %6483 = vmatpush1.bf16.msra.mxu0 %v5078
        %6484 = vmatprep.subr.bf16.mxu0 %v5087
        %6485 = vmatpush1.bf16.msra.mxu0 %v5086
        %6486 = vmatprep.subr.bf16.mxu0 %v5095
        %6487 = vmatpush1.bf16.msra.mxu0 %v5094
        %6488 = vmatprep.subr.bf16.mxu0 %v5103
        %6489 = vmatpush1.bf16.msra.mxu0 %v5102
        %6490 = vmatprep.subr.bf16.mxu0 %v5111
        %6491 = vmatpush1.bf16.msra.mxu0 %v5110
        %6492 = vmatprep.subr.bf16.mxu0 %v5119
        %6493 = vmatpush1.bf16.msra.mxu0 %v5118
        %6494 = vmatprep.subr.bf16.mxu0 %v5127
        %6495 = vmatpush1.bf16.msra.mxu0 %v5126
        %6496 = vmatprep.subr.bf16.mxu0 %v5135
        %6497 = vmatpush1.bf16.msra.mxu0 %v5134
        %6498 = vmatprep.subr.bf16.mxu0 %v5143
        %6499 = vmatpush1.bf16.msra.mxu0 %v5142
        %6500 = vmatprep.subr.bf16.mxu0 %v5151
        %6501 = vmatpush1.bf16.msra.mxu0 %v5150
        %6502 = vmatprep.subr.bf16.mxu0 %v5159
        %6503 = vmatpush1.bf16.msra.mxu0 %v5158
        %6504 = vmatprep.mubr.bf16.mxu0 %v2933
        %6505 = vmatmul.mubr.bf16.gmra.mrb[0].mxu0 %v2932
        %v6506 = vpop.f32.mrb[0].mxu0
        %v6507 = vadd.f32 0.0, %v6506
        %v6508 = vpop.f32.mrb[0].mxu0
        %v6509 = vadd.f32 0.0, %v6508
        %v6510 = vpop.f32.mrb[0].mxu0
        %v6511 = vadd.f32 0.0, %v6510
        %v6512 = vpop.f32.mrb[0].mxu0
        %v6513 = vadd.f32 0.0, %v6512
        %6514 = vmatprep.mubr.bf16.mxu0 %v2941
        %6515 = vmatmul.mubr.bf16.gmra.mrb[0].mxu0 %v2940
        %v6516 = vpop.f32.mrb[0].mxu0
        %v6517 = vadd.f32 0.0, %v6516
        %v6518 = vpop.f32.mrb[0].mxu0
        %v6519 = vadd.f32 0.0, %v6518
        %v6520 = vpop.f32.mrb[0].mxu0
        %v6521 = vadd.f32 0.0, %v6520
        %v6522 = vpop.f32.mrb[0].mxu0
        %v6523 = vadd.f32 0.0, %v6522
        %6524 = vmatprep.mubr.bf16.mxu0 %v2949
        %6525 = vmatmul.mubr.bf16.gmra.mrb[0].mxu0 %v2948
        %v6526 = vpop.f32.mrb[0].mxu0
        %v6527 = vadd.f32 0.0, %v6526
        %v6528 = vpop.f32.mrb[0].mxu0
        %v6529 = vadd.f32 0.0, %v6528
        %v6530 = vpop.f32.mrb[0].mxu0
        %v6531 = vadd.f32 0.0, %v6530
        %v6532 = vpop.f32.mrb[0].mxu0
        %v6533 = vadd.f32 0.0, %v6532
        %6534 = vmatprep.mubr.bf16.mxu0 %v2957
        %6535 = vmatmul.mubr.bf16.gmra.mrb[0].mxu0 %v2956
        %v6536 = vpop.f32.mrb[0].mxu0
        %v6537 = vadd.f32 0.0, %v6536
        %v6538 = vpop.f32.mrb[0].mxu0
        %v6539 = vadd.f32 0.0, %v6538
        %v6540 = vpop.f32.mrb[0].mxu0
        %v6541 = vadd.f32 0.0, %v6540
        %v6542 = vpop.f32.mrb[0].mxu0
        %v6543 = vadd.f32 0.0, %v6542
        %6544 = vmatprep.mubr.bf16.mxu0 %v2965
        %6545 = vmatmul.mubr.bf16.gmra.mrb[0].mxu0 %v2964
        %v6546 = vpop.f32.mrb[0].mxu0
        %v6547 = vadd.f32 0.0, %v6546
        %v6548 = vpop.f32.mrb[0].mxu0
        %v6549 = vadd.f32 0.0, %v6548
        %v6550 = vpop.f32.mrb[0].mxu0
        %v6551 = vadd.f32 0.0, %v6550
        %v6552 = vpop.f32.mrb[0].mxu0
        %v6553 = vadd.f32 0.0, %v6552
        %6554 = vmatprep.mubr.bf16.mxu0 %v2973
        %6555 = vmatmul.mubr.bf16.gmra.mrb[0].mxu0 %v2972
        %v6556 = vpop.f32.mrb[0].mxu0
        %v6557 = vadd.f32 0.0, %v6556
        %v6558 = vpop.f32.mrb[0].mxu0
        %v6559 = vadd.f32 0.0, %v6558
        %v6560 = vpop.f32.mrb[0].mxu0
        %v6561 = vadd.f32 0.0, %v6560
        %v6562 = vpop.f32.mrb[0].mxu0
        %v6563 = vadd.f32 0.0, %v6562
        %6564 = vmatprep.mubr.bf16.mxu0 %v2981
        %6565 = vmatmul.mubr.bf16.gmra.mrb[0].mxu0 %v2980
        %v6566 = vpop.f32.mrb[0].mxu0
        %v6567 = vadd.f32 0.0, %v6566
        %v6568 = vpop.f32.mrb[0].mxu0
        %v6569 = vadd.f32 0.0, %v6568
        %v6570 = vpop.f32.mrb[0].mxu0
        %v6571 = vadd.f32 0.0, %v6570
        %v6572 = vpop.f32.mrb[0].mxu0
        %v6573 = vadd.f32 0.0, %v6572
        %6574 = vdwg.mxu0
        %6575 = vmatprep.subr.bf16.mxu0 %v5167
        %6576 = vmatpush1.bf16.msra.mxu0 %v5166
        %6577 = vmatprep.subr.bf16.mxu0 %v5175
        %6578 = vmatpush1.bf16.msra.mxu0 %v5174
        %6579 = vmatprep.subr.bf16.mxu0 %v5183
        %6580 = vmatpush1.bf16.msra.mxu0 %v5182
        %6581 = vmatprep.subr.bf16.mxu0 %v5191
        %6582 = vmatpush1.bf16.msra.mxu0 %v5190
        %6583 = vmatprep.subr.bf16.mxu0 %v5199
        %6584 = vmatpush1.bf16.msra.mxu0 %v5198
        %6585 = vmatprep.subr.bf16.mxu0 %v5207
        %6586 = vmatpush1.bf16.msra.mxu0 %v5206
        %6587 = vmatprep.subr.bf16.mxu0 %v5215
        %6588 = vmatpush1.bf16.msra.mxu0 %v5214
        %6589 = vmatprep.subr.bf16.mxu0 %v5223
        %6590 = vmatpush1.bf16.msra.mxu0 %v5222
        %6591 = vmatprep.subr.bf16.mxu0 %v5231
        %6592 = vmatpush1.bf16.msra.mxu0 %v5230
        %6593 = vmatprep.subr.bf16.mxu0 %v5239
        %6594 = vmatpush1.bf16.msra.mxu0 %v5238
        %6595 = vmatprep.subr.bf16.mxu0 %v5247
        %6596 = vmatpush1.bf16.msra.mxu0 %v5246
        %6597 = vmatprep.subr.bf16.mxu0 %v5255
        %6598 = vmatpush1.bf16.msra.mxu0 %v5254
        %6599 = vmatprep.subr.bf16.mxu0 %v5263
        %6600 = vmatpush1.bf16.msra.mxu0 %v5262
        %6601 = vmatprep.subr.bf16.mxu0 %v5271
        %6602 = vmatpush1.bf16.msra.mxu0 %v5270
        %6603 = vmatprep.subr.bf16.mxu0 %v5279
        %6604 = vmatpush1.bf16.msra.mxu0 %v5278
        %6605 = vmatprep.subr.bf16.mxu0 %v5287
        %6606 = vmatpush1.bf16.msra.mxu0 %v5286
        %6607 = vmatprep.mubr.bf16.mxu0 %v2935
        %6608 = vmatmul.mubr.bf16.gmra.mrb[0].mxu0 %v2934
        %v6609 = vpop.f32.mrb[0].mxu0
        %v6610 = vadd.f32 %v6507, %v6609
        %v6611 = vpop.f32.mrb[0].mxu0
        %v6612 = vadd.f32 %v6509, %v6611
        %v6613 = vpop.f32.mrb[0].mxu0
        %v6614 = vadd.f32 %v6511, %v6613
        %v6615 = vpop.f32.mrb[0].mxu0
        %v6616 = vadd.f32 %v6513, %v6615
        %6617 = vmatprep.mubr.bf16.mxu0 %v2943
        %6618 = vmatmul.mubr.bf16.gmra.mrb[0].mxu0 %v2942
        %v6619 = vpop.f32.mrb[0].mxu0
        %v6620 = vadd.f32 %v6517, %v6619
        %v6621 = vpop.f32.mrb[0].mxu0
        %v6622 = vadd.f32 %v6519, %v6621
        %v6623 = vpop.f32.mrb[0].mxu0
        %v6624 = vadd.f32 %v6521, %v6623
        %v6625 = vpop.f32.mrb[0].mxu0
        %v6626 = vadd.f32 %v6523, %v6625
        %6627 = vmatprep.mubr.bf16.mxu0 %v2951
        %6628 = vmatmul.mubr.bf16.gmra.mrb[0].mxu0 %v2950
        %v6629 = vpop.f32.mrb[0].mxu0
        %v6630 = vadd.f32 %v6527, %v6629
        %v6631 = vpop.f32.mrb[0].mxu0
        %v6632 = vadd.f32 %v6529, %v6631
        %v6633 = vpop.f32.mrb[0].mxu0
        %v6634 = vadd.f32 %v6531, %v6633
        %v6635 = vpop.f32.mrb[0].mxu0
        %v6636 = vadd.f32 %v6533, %v6635
        %6637 = vmatprep.mubr.bf16.mxu0 %v2959
        %6638 = vmatmul.mubr.bf16.gmra.mrb[0].mxu0 %v2958
        %v6639 = vpop.f32.mrb[0].mxu0
        %v6640 = vadd.f32 %v6537, %v6639
        %v6641 = vpop.f32.mrb[0].mxu0
        %v6642 = vadd.f32 %v6539, %v6641
        %v6643 = vpop.f32.mrb[0].mxu0
        %v6644 = vadd.f32 %v6541, %v6643
        %v6645 = vpop.f32.mrb[0].mxu0
        %v6646 = vadd.f32 %v6543, %v6645
        %6647 = vmatprep.mubr.bf16.mxu0 %v2967
        %6648 = vmatmul.mubr.bf16.gmra.mrb[0].mxu0 %v2966
        %v6649 = vpop.f32.mrb[0].mxu0
        %v6650 = vadd.f32 %v6547, %v6649
        %v6651 = vpop.f32.mrb[0].mxu0
        %v6652 = vadd.f32 %v6549, %v6651
        %v6653 = vpop.f32.mrb[0].mxu0
        %v6654 = vadd.f32 %v6551, %v6653
        %v6655 = vpop.f32.mrb[0].mxu0
        %v6656 = vadd.f32 %v6553, %v6655
        %6657 = vmatprep.mubr.bf16.mxu0 %v2975
        %6658 = vmatmul.mubr.bf16.gmra.mrb[0].mxu0 %v2974
        %v6659 = vpop.f32.mrb[0].mxu0
        %v6660 = vadd.f32 %v6557, %v6659
        %v6661 = vpop.f32.mrb[0].mxu0
        %v6662 = vadd.f32 %v6559, %v6661
        %v6663 = vpop.f32.mrb[0].mxu0
        %v6664 = vadd.f32 %v6561, %v6663
        %v6665 = vpop.f32.mrb[0].mxu0
        %v6666 = vadd.f32 %v6563, %v6665
        %6667 = vmatprep.mubr.bf16.mxu0 %v2983
        %6668 = vmatmul.mubr.bf16.gmra.mrb[0].mxu0 %v2982
        %v6669 = vpop.f32.mrb[0].mxu0
        %v6670 = vadd.f32 %v6567, %v6669
        %v6671 = vpop.f32.mrb[0].mxu0
        %v6672 = vadd.f32 %v6569, %v6671
        %v6673 = vpop.f32.mrb[0].mxu0
        %v6674 = vadd.f32 %v6571, %v6673
        %v6675 = vpop.f32.mrb[0].mxu0
        %v6676 = vadd.f32 %v6573, %v6675
        %6677 = vdwg.mxu0
        %6678 = vmatprep.subr.bf16.mxu0 %v5295
        %6679 = vmatpush1.bf16.msra.mxu0 %v5294
        %6680 = vmatprep.subr.bf16.mxu0 %v5303
        %6681 = vmatpush1.bf16.msra.mxu0 %v5302
        %6682 = vmatprep.subr.bf16.mxu0 %v5311
        %6683 = vmatpush1.bf16.msra.mxu0 %v5310
        %6684 = vmatprep.subr.bf16.mxu0 %v5319
        %6685 = vmatpush1.bf16.msra.mxu0 %v5318
        %6686 = vmatprep.subr.bf16.mxu0 %v5327
        %6687 = vmatpush1.bf16.msra.mxu0 %v5326
        %6688 = vmatprep.subr.bf16.mxu0 %v5335
        %6689 = vmatpush1.bf16.msra.mxu0 %v5334
        %6690 = vmatprep.subr.bf16.mxu0 %v5343
        %6691 = vmatpush1.bf16.msra.mxu0 %v5342
        %6692 = vmatprep.subr.bf16.mxu0 %v5351
        %6693 = vmatpush1.bf16.msra.mxu0 %v5350
        %6694 = vmatprep.subr.bf16.mxu0 %v5359
        %6695 = vmatpush1.bf16.msra.mxu0 %v5358
        %6696 = vmatprep.subr.bf16.mxu0 %v5367
        %6697 = vmatpush1.bf16.msra.mxu0 %v5366
        %6698 = vmatprep.subr.bf16.mxu0 %v5375
        %6699 = vmatpush1.bf16.msra.mxu0 %v5374
        %6700 = vmatprep.subr.bf16.mxu0 %v5383
        %6701 = vmatpush1.bf16.msra.mxu0 %v5382
        %6702 = vmatprep.subr.bf16.mxu0 %v5391
        %6703 = vmatpush1.bf16.msra.mxu0 %v5390
        %6704 = vmatprep.subr.bf16.mxu0 %v5399
        %6705 = vmatpush1.bf16.msra.mxu0 %v5398
        %6706 = vmatprep.subr.bf16.mxu0 %v5407
        %6707 = vmatpush1.bf16.msra.mxu0 %v5406
        %6708 = vmatprep.subr.bf16.mxu0 %v5415
        %6709 = vmatpush1.bf16.msra.mxu0 %v5414
        %6710 = vmatprep.mubr.bf16.mxu0 %v2937
        %6711 = vmatmul.mubr.bf16.gmra.mrb[0].mxu0 %v2936
        %v6712 = vpop.f32.mrb[0].mxu0
        %v6713 = vadd.f32 %v6610, %v6712
        %v6714 = vpop.f32.mrb[0].mxu0
        %v6715 = vadd.f32 %v6612, %v6714
        %v6716 = vpop.f32.mrb[0].mxu0
        %v6717 = vadd.f32 %v6614, %v6716
        %v6718 = vpop.f32.mrb[0].mxu0
        %v6719 = vadd.f32 %v6616, %v6718
        %6720 = vmatprep.mubr.bf16.mxu0 %v2945
        %6721 = vmatmul.mubr.bf16.gmra.mrb[0].mxu0 %v2944
        %v6722 = vpop.f32.mrb[0].mxu0
        %v6723 = vadd.f32 %v6620, %v6722
        %v6724 = vpop.f32.mrb[0].mxu0
        %v6725 = vadd.f32 %v6622, %v6724
        %v6726 = vpop.f32.mrb[0].mxu0
        %v6727 = vadd.f32 %v6624, %v6726
        %v6728 = vpop.f32.mrb[0].mxu0
        %v6729 = vadd.f32 %v6626, %v6728
        %6730 = vmatprep.mubr.bf16.mxu0 %v2953
        %6731 = vmatmul.mubr.bf16.gmra.mrb[0].mxu0 %v2952
        %v6732 = vpop.f32.mrb[0].mxu0
        %v6733 = vadd.f32 %v6630, %v6732
        %v6734 = vpop.f32.mrb[0].mxu0
        %v6735 = vadd.f32 %v6632, %v6734
        %v6736 = vpop.f32.mrb[0].mxu0
        %v6737 = vadd.f32 %v6634, %v6736
        %v6738 = vpop.f32.mrb[0].mxu0
        %v6739 = vadd.f32 %v6636, %v6738
        %6740 = vmatprep.mubr.bf16.mxu0 %v2961
        %6741 = vmatmul.mubr.bf16.gmra.mrb[0].mxu0 %v2960
        %v6742 = vpop.f32.mrb[0].mxu0
        %v6743 = vadd.f32 %v6640, %v6742
        %v6744 = vpop.f32.mrb[0].mxu0
        %v6745 = vadd.f32 %v6642, %v6744
        %v6746 = vpop.f32.mrb[0].mxu0
        %v6747 = vadd.f32 %v6644, %v6746
        %v6748 = vpop.f32.mrb[0].mxu0
        %v6749 = vadd.f32 %v6646, %v6748
        %6750 = vmatprep.mubr.bf16.mxu0 %v2969
        %6751 = vmatmul.mubr.bf16.gmra.mrb[0].mxu0 %v2968
        %v6752 = vpop.f32.mrb[0].mxu0
        %v6753 = vadd.f32 %v6650, %v6752
        %v6754 = vpop.f32.mrb[0].mxu0
        %v6755 = vadd.f32 %v6652, %v6754
        %v6756 = vpop.f32.mrb[0].mxu0
        %v6757 = vadd.f32 %v6654, %v6756
        %v6758 = vpop.f32.mrb[0].mxu0
        %v6759 = vadd.f32 %v6656, %v6758
        %6760 = vmatprep.mubr.bf16.mxu0 %v2977
        %6761 = vmatmul.mubr.bf16.gmra.mrb[0].mxu0 %v2976
        %v6762 = vpop.f32.mrb[0].mxu0
        %v6763 = vadd.f32 %v6660, %v6762
        %v6764 = vpop.f32.mrb[0].mxu0
        %v6765 = vadd.f32 %v6662, %v6764
        %v6766 = vpop.f32.mrb[0].mxu0
        %v6767 = vadd.f32 %v6664, %v6766
        %v6768 = vpop.f32.mrb[0].mxu0
        %v6769 = vadd.f32 %v6666, %v6768
        %6770 = vmatprep.mubr.bf16.mxu0 %v2985
        %6771 = vmatmul.mubr.bf16.gmra.mrb[0].mxu0 %v2984
        %v6772 = vpop.f32.mrb[0].mxu0
        %v6773 = vadd.f32 %v6670, %v6772
        %v6774 = vpop.f32.mrb[0].mxu0
        %v6775 = vadd.f32 %v6672, %v6774
        %v6776 = vpop.f32.mrb[0].mxu0
        %v6777 = vadd.f32 %v6674, %v6776
        %v6778 = vpop.f32.mrb[0].mxu0
        %v6779 = vadd.f32 %v6676, %v6778
        %6780 = vdwg.mxu0
        %6781 = vmatprep.subr.bf16.mxu0 %v5423
        %6782 = vmatpush1.bf16.msra.mxu0 %v5422
        %6783 = vmatprep.subr.bf16.mxu0 %v5431
        %6784 = vmatpush1.bf16.msra.mxu0 %v5430
        %6785 = vmatprep.subr.bf16.mxu0 %v5439
        %6786 = vmatpush1.bf16.msra.mxu0 %v5438
        %6787 = vmatprep.subr.bf16.mxu0 %v5447
        %6788 = vmatpush1.bf16.msra.mxu0 %v5446
        %6789 = vmatprep.subr.bf16.mxu0 %v5455
        %6790 = vmatpush1.bf16.msra.mxu0 %v5454
        %6791 = vmatprep.subr.bf16.mxu0 %v5463
        %6792 = vmatpush1.bf16.msra.mxu0 %v5462
        %6793 = vmatprep.subr.bf16.mxu0 %v5471
        %6794 = vmatpush1.bf16.msra.mxu0 %v5470
        %6795 = vmatprep.subr.bf16.mxu0 %v5479
        %6796 = vmatpush1.bf16.msra.mxu0 %v5478
        %6797 = vmatprep.subr.bf16.mxu0 %v5487
        %6798 = vmatpush1.bf16.msra.mxu0 %v5486
        %6799 = vmatprep.subr.bf16.mxu0 %v5495
        %6800 = vmatpush1.bf16.msra.mxu0 %v5494
        %6801 = vmatprep.subr.bf16.mxu0 %v5503
        %6802 = vmatpush1.bf16.msra.mxu0 %v5502
        %6803 = vmatprep.subr.bf16.mxu0 %v5511
        %6804 = vmatpush1.bf16.msra.mxu0 %v5510
        %6805 = vmatprep.subr.bf16.mxu0 %v5519
        %6806 = vmatpush1.bf16.msra.mxu0 %v5518
        %6807 = vmatprep.subr.bf16.mxu0 %v5527
        %6808 = vmatpush1.bf16.msra.mxu0 %v5526
        %6809 = vmatprep.subr.bf16.mxu0 %v5535
        %6810 = vmatpush1.bf16.msra.mxu0 %v5534
        %6811 = vmatprep.subr.bf16.mxu0 %v5543
        %6812 = vmatpush1.bf16.msra.mxu0 %v5542
        %6813 = vmatprep.mubr.bf16.mxu0 %v2939
        %6814 = vmatmul.mubr.bf16.gmra.mrb[0].mxu0 %v2938
        %v6815 = vpop.f32.mrb[0].mxu0
        %v6816 = vadd.f32 %v6713, %v6815
        %v6817 = vpop.f32.mrb[0].mxu0
        %v6818 = vadd.f32 %v6715, %v6817
        %v6819 = vpop.f32.mrb[0].mxu0
        %v6820 = vadd.f32 %v6717, %v6819
        %v6821 = vpop.f32.mrb[0].mxu0
        %v6822 = vadd.f32 %v6719, %v6821
        %6823 = vmatprep.mubr.bf16.mxu0 %v2947
        %6824 = vmatmul.mubr.bf16.gmra.mrb[0].mxu0 %v2946
        %v6825 = vpop.f32.mrb[0].mxu0
        %v6826 = vadd.f32 %v6723, %v6825
        %v6827 = vpop.f32.mrb[0].mxu0
        %v6828 = vadd.f32 %v6725, %v6827
        %v6829 = vpop.f32.mrb[0].mxu0
        %v6830 = vadd.f32 %v6727, %v6829
        %v6831 = vpop.f32.mrb[0].mxu0
        %v6832 = vadd.f32 %v6729, %v6831
        %6833 = vmatprep.mubr.bf16.mxu0 %v2955
        %6834 = vmatmul.mubr.bf16.gmra.mrb[0].mxu0 %v2954
        %v6835 = vpop.f32.mrb[0].mxu0
        %v6836 = vadd.f32 %v6733, %v6835
        %v6837 = vpop.f32.mrb[0].mxu0
        %v6838 = vadd.f32 %v6735, %v6837
        %v6839 = vpop.f32.mrb[0].mxu0
        %v6840 = vadd.f32 %v6737, %v6839
        %v6841 = vpop.f32.mrb[0].mxu0
        %v6842 = vadd.f32 %v6739, %v6841
        %6843 = vmatprep.mubr.bf16.mxu0 %v2963
        %6844 = vmatmul.mubr.bf16.gmra.mrb[0].mxu0 %v2962
        %v6845 = vpop.f32.mrb[0].mxu0
        %v6846 = vadd.f32 %v6743, %v6845
        %v6847 = vpop.f32.mrb[0].mxu0
        %v6848 = vadd.f32 %v6745, %v6847
        %v6849 = vpop.f32.mrb[0].mxu0
        %v6850 = vadd.f32 %v6747, %v6849
        %v6851 = vpop.f32.mrb[0].mxu0
        %v6852 = vadd.f32 %v6749, %v6851
        %6853 = vmatprep.mubr.bf16.mxu0 %v2971
        %6854 = vmatmul.mubr.bf16.gmra.mrb[0].mxu0 %v2970
        %v6855 = vpop.f32.mrb[0].mxu0
        %v6856 = vadd.f32 %v6753, %v6855
        %v6857 = vpop.f32.mrb[0].mxu0
        %v6858 = vadd.f32 %v6755, %v6857
        %v6859 = vpop.f32.mrb[0].mxu0
        %v6860 = vadd.f32 %v6757, %v6859
        %v6861 = vpop.f32.mrb[0].mxu0
        %v6862 = vadd.f32 %v6759, %v6861
        %6863 = vmatprep.mubr.bf16.mxu0 %v2979
        %6864 = vmatmul.mubr.bf16.gmra.mrb[0].mxu0 %v2978
        %v6865 = vpop.f32.mrb[0].mxu0
        %v6866 = vadd.f32 %v6763, %v6865
        %v6867 = vpop.f32.mrb[0].mxu0
        %v6868 = vadd.f32 %v6765, %v6867
        %v6869 = vpop.f32.mrb[0].mxu0
        %v6870 = vadd.f32 %v6767, %v6869
        %v6871 = vpop.f32.mrb[0].mxu0
        %v6872 = vadd.f32 %v6769, %v6871
        %6873 = vmatprep.mubr.bf16.mxu0 %v2987
        %6874 = vmatmul.mubr.bf16.gmra.mrb[0].mxu0 %v2986
        %v6875 = vpop.f32.mrb[0].mxu0
        %v6876 = vadd.f32 %v6773, %v6875
        %v6877 = vpop.f32.mrb[0].mxu0
        %v6878 = vadd.f32 %v6775, %v6877
        %v6879 = vpop.f32.mrb[0].mxu0
        %v6880 = vadd.f32 %v6777, %v6879
        %v6881 = vpop.f32.mrb[0].mxu0
        %v6882 = vadd.f32 %v6779, %v6881
        %6883 = vdwg.mxu0
        %6884 = vmatprep.subr.bf16.mxu0 %v5041
        %6885 = vmatpush1.bf16.msra.mxu0 %v5040
        %6886 = vmatprep.subr.bf16.mxu0 %v5049
        %6887 = vmatpush1.bf16.msra.mxu0 %v5048
        %6888 = vmatprep.subr.bf16.mxu0 %v5057
        %6889 = vmatpush1.bf16.msra.mxu0 %v5056
        %6890 = vmatprep.subr.bf16.mxu0 %v5065
        %6891 = vmatpush1.bf16.msra.mxu0 %v5064
        %6892 = vmatprep.subr.bf16.mxu0 %v5073
        %6893 = vmatpush1.bf16.msra.mxu0 %v5072
        %6894 = vmatprep.subr.bf16.mxu0 %v5081
        %6895 = vmatpush1.bf16.msra.mxu0 %v5080
        %6896 = vmatprep.subr.bf16.mxu0 %v5089
        %6897 = vmatpush1.bf16.msra.mxu0 %v5088
        %6898 = vmatprep.subr.bf16.mxu0 %v5097
        %6899 = vmatpush1.bf16.msra.mxu0 %v5096
        %6900 = vmatprep.subr.bf16.mxu0 %v5105
        %6901 = vmatpush1.bf16.msra.mxu0 %v5104
        %6902 = vmatprep.subr.bf16.mxu0 %v5113
        %6903 = vmatpush1.bf16.msra.mxu0 %v5112
        %6904 = vmatprep.subr.bf16.mxu0 %v5121
        %6905 = vmatpush1.bf16.msra.mxu0 %v5120
        %6906 = vmatprep.subr.bf16.mxu0 %v5129
        %6907 = vmatpush1.bf16.msra.mxu0 %v5128
        %6908 = vmatprep.subr.bf16.mxu0 %v5137
        %6909 = vmatpush1.bf16.msra.mxu0 %v5136
        %6910 = vmatprep.subr.bf16.mxu0 %v5145
        %6911 = vmatpush1.bf16.msra.mxu0 %v5144
        %6912 = vmatprep.subr.bf16.mxu0 %v5153
        %6913 = vmatpush1.bf16.msra.mxu0 %v5152
        %6914 = vmatprep.subr.bf16.mxu0 %v5161
        %6915 = vmatpush1.bf16.msra.mxu0 %v5160
        %6916 = vmatprep.mubr.bf16.mxu0 %v2933
        %6917 = vmatmul.mubr.bf16.gmra.mrb[0].mxu0 %v2932
        %v6918 = vpop.f32.mrb[0].mxu0
        %v6919 = vadd.f32 0.0, %v6918
        %v6920 = vpop.f32.mrb[0].mxu0
        %v6921 = vadd.f32 0.0, %v6920
        %v6922 = vpop.f32.mrb[0].mxu0
        %v6923 = vadd.f32 0.0, %v6922
        %v6924 = vpop.f32.mrb[0].mxu0
        %v6925 = vadd.f32 0.0, %v6924
        %6926 = vmatprep.mubr.bf16.mxu0 %v2941
        %6927 = vmatmul.mubr.bf16.gmra.mrb[0].mxu0 %v2940
        %v6928 = vpop.f32.mrb[0].mxu0
        %v6929 = vadd.f32 0.0, %v6928
        %v6930 = vpop.f32.mrb[0].mxu0
        %v6931 = vadd.f32 0.0, %v6930
        %v6932 = vpop.f32.mrb[0].mxu0
        %v6933 = vadd.f32 0.0, %v6932
        %v6934 = vpop.f32.mrb[0].mxu0
        %v6935 = vadd.f32 0.0, %v6934
        %6936 = vmatprep.mubr.bf16.mxu0 %v2949
        %6937 = vmatmul.mubr.bf16.gmra.mrb[0].mxu0 %v2948
        %v6938 = vpop.f32.mrb[0].mxu0
        %v6939 = vadd.f32 0.0, %v6938
        %v6940 = vpop.f32.mrb[0].mxu0
        %v6941 = vadd.f32 0.0, %v6940
        %v6942 = vpop.f32.mrb[0].mxu0
        %v6943 = vadd.f32 0.0, %v6942
        %v6944 = vpop.f32.mrb[0].mxu0
        %v6945 = vadd.f32 0.0, %v6944
        %6946 = vmatprep.mubr.bf16.mxu0 %v2957
        %6947 = vmatmul.mubr.bf16.gmra.mrb[0].mxu0 %v2956
        %v6948 = vpop.f32.mrb[0].mxu0
        %v6949 = vadd.f32 0.0, %v6948
        %v6950 = vpop.f32.mrb[0].mxu0
        %v6951 = vadd.f32 0.0, %v6950
        %v6952 = vpop.f32.mrb[0].mxu0
        %v6953 = vadd.f32 0.0, %v6952
        %v6954 = vpop.f32.mrb[0].mxu0
        %v6955 = vadd.f32 0.0, %v6954
        %6956 = vmatprep.mubr.bf16.mxu0 %v2965
        %6957 = vmatmul.mubr.bf16.gmra.mrb[0].mxu0 %v2964
        %v6958 = vpop.f32.mrb[0].mxu0
        %v6959 = vadd.f32 0.0, %v6958
        %v6960 = vpop.f32.mrb[0].mxu0
        %v6961 = vadd.f32 0.0, %v6960
        %v6962 = vpop.f32.mrb[0].mxu0
        %v6963 = vadd.f32 0.0, %v6962
        %v6964 = vpop.f32.mrb[0].mxu0
        %v6965 = vadd.f32 0.0, %v6964
        %6966 = vmatprep.mubr.bf16.mxu0 %v2973
        %6967 = vmatmul.mubr.bf16.gmra.mrb[0].mxu0 %v2972
        %v6968 = vpop.f32.mrb[0].mxu0
        %v6969 = vadd.f32 0.0, %v6968
        %v6970 = vpop.f32.mrb[0].mxu0
        %v6971 = vadd.f32 0.0, %v6970
        %v6972 = vpop.f32.mrb[0].mxu0
        %v6973 = vadd.f32 0.0, %v6972
        %v6974 = vpop.f32.mrb[0].mxu0
        %v6975 = vadd.f32 0.0, %v6974
        %6976 = vmatprep.mubr.bf16.mxu0 %v2981
        %6977 = vmatmul.mubr.bf16.gmra.mrb[0].mxu0 %v2980
        %v6978 = vpop.f32.mrb[0].mxu0
        %v6979 = vadd.f32 0.0, %v6978
        %v6980 = vpop.f32.mrb[0].mxu0
        %v6981 = vadd.f32 0.0, %v6980
        %v6982 = vpop.f32.mrb[0].mxu0
        %v6983 = vadd.f32 0.0, %v6982
        %v6984 = vpop.f32.mrb[0].mxu0
        %v6985 = vadd.f32 0.0, %v6984
        %6986 = vdwg.mxu0
        %6987 = vmatprep.subr.bf16.mxu0 %v5169
        %6988 = vmatpush1.bf16.msra.mxu0 %v5168
        %6989 = vmatprep.subr.bf16.mxu0 %v5177
        %6990 = vmatpush1.bf16.msra.mxu0 %v5176
        %6991 = vmatprep.subr.bf16.mxu0 %v5185
        %6992 = vmatpush1.bf16.msra.mxu0 %v5184
        %6993 = vmatprep.subr.bf16.mxu0 %v5193
        %6994 = vmatpush1.bf16.msra.mxu0 %v5192
        %6995 = vmatprep.subr.bf16.mxu0 %v5201
        %6996 = vmatpush1.bf16.msra.mxu0 %v5200
        %6997 = vmatprep.subr.bf16.mxu0 %v5209
        %6998 = vmatpush1.bf16.msra.mxu0 %v5208
        %6999 = vmatprep.subr.bf16.mxu0 %v5217
        %7000 = vmatpush1.bf16.msra.mxu0 %v5216
        %7001 = vmatprep.subr.bf16.mxu0 %v5225
        %7002 = vmatpush1.bf16.msra.mxu0 %v5224
        %7003 = vmatprep.subr.bf16.mxu0 %v5233
        %7004 = vmatpush1.bf16.msra.mxu0 %v5232
        %7005 = vmatprep.subr.bf16.mxu0 %v5241
        %7006 = vmatpush1.bf16.msra.mxu0 %v5240
        %7007 = vmatprep.subr.bf16.mxu0 %v5249
        %7008 = vmatpush1.bf16.msra.mxu0 %v5248
        %7009 = vmatprep.subr.bf16.mxu0 %v5257
        %7010 = vmatpush1.bf16.msra.mxu0 %v5256
        %7011 = vmatprep.subr.bf16.mxu0 %v5265
        %7012 = vmatpush1.bf16.msra.mxu0 %v5264
        %7013 = vmatprep.subr.bf16.mxu0 %v5273
        %7014 = vmatpush1.bf16.msra.mxu0 %v5272
        %7015 = vmatprep.subr.bf16.mxu0 %v5281
        %7016 = vmatpush1.bf16.msra.mxu0 %v5280
        %7017 = vmatprep.subr.bf16.mxu0 %v5289
        %7018 = vmatpush1.bf16.msra.mxu0 %v5288
        %7019 = vmatprep.mubr.bf16.mxu0 %v2935
        %7020 = vmatmul.mubr.bf16.gmra.mrb[0].mxu0 %v2934
        %v7021 = vpop.f32.mrb[0].mxu0
        %v7022 = vadd.f32 %v6919, %v7021
        %v7023 = vpop.f32.mrb[0].mxu0
        %v7024 = vadd.f32 %v6921, %v7023
        %v7025 = vpop.f32.mrb[0].mxu0
        %v7026 = vadd.f32 %v6923, %v7025
        %v7027 = vpop.f32.mrb[0].mxu0
        %v7028 = vadd.f32 %v6925, %v7027
        %7029 = vmatprep.mubr.bf16.mxu0 %v2943
        %7030 = vmatmul.mubr.bf16.gmra.mrb[0].mxu0 %v2942
        %v7031 = vpop.f32.mrb[0].mxu0
        %v7032 = vadd.f32 %v6929, %v7031
        %v7033 = vpop.f32.mrb[0].mxu0
        %v7034 = vadd.f32 %v6931, %v7033
        %v7035 = vpop.f32.mrb[0].mxu0
        %v7036 = vadd.f32 %v6933, %v7035
        %v7037 = vpop.f32.mrb[0].mxu0
        %v7038 = vadd.f32 %v6935, %v7037
        %7039 = vmatprep.mubr.bf16.mxu0 %v2951
        %7040 = vmatmul.mubr.bf16.gmra.mrb[0].mxu0 %v2950
        %v7041 = vpop.f32.mrb[0].mxu0
        %v7042 = vadd.f32 %v6939, %v7041
        %v7043 = vpop.f32.mrb[0].mxu0
        %v7044 = vadd.f32 %v6941, %v7043
        %v7045 = vpop.f32.mrb[0].mxu0
        %v7046 = vadd.f32 %v6943, %v7045
        %v7047 = vpop.f32.mrb[0].mxu0
        %v7048 = vadd.f32 %v6945, %v7047
        %7049 = vmatprep.mubr.bf16.mxu0 %v2959
        %7050 = vmatmul.mubr.bf16.gmra.mrb[0].mxu0 %v2958
        %v7051 = vpop.f32.mrb[0].mxu0
        %v7052 = vadd.f32 %v6949, %v7051
        %v7053 = vpop.f32.mrb[0].mxu0
        %v7054 = vadd.f32 %v6951, %v7053
        %v7055 = vpop.f32.mrb[0].mxu0
        %v7056 = vadd.f32 %v6953, %v7055
        %v7057 = vpop.f32.mrb[0].mxu0
        %v7058 = vadd.f32 %v6955, %v7057
        %7059 = vmatprep.mubr.bf16.mxu0 %v2967
        %7060 = vmatmul.mubr.bf16.gmra.mrb[0].mxu0 %v2966
        %v7061 = vpop.f32.mrb[0].mxu0
        %v7062 = vadd.f32 %v6959, %v7061
        %v7063 = vpop.f32.mrb[0].mxu0
        %v7064 = vadd.f32 %v6961, %v7063
        %v7065 = vpop.f32.mrb[0].mxu0
        %v7066 = vadd.f32 %v6963, %v7065
        %v7067 = vpop.f32.mrb[0].mxu0
        %v7068 = vadd.f32 %v6965, %v7067
        %7069 = vmatprep.mubr.bf16.mxu0 %v2975
        %7070 = vmatmul.mubr.bf16.gmra.mrb[0].mxu0 %v2974
        %v7071 = vpop.f32.mrb[0].mxu0
        %v7072 = vadd.f32 %v6969, %v7071
        %v7073 = vpop.f32.mrb[0].mxu0
        %v7074 = vadd.f32 %v6971, %v7073
        %v7075 = vpop.f32.mrb[0].mxu0
        %v7076 = vadd.f32 %v6973, %v7075
        %v7077 = vpop.f32.mrb[0].mxu0
        %v7078 = vadd.f32 %v6975, %v7077
        %7079 = vmatprep.mubr.bf16.mxu0 %v2983
        %7080 = vmatmul.mubr.bf16.gmra.mrb[0].mxu0 %v2982
        %v7081 = vpop.f32.mrb[0].mxu0
        %v7082 = vadd.f32 %v6979, %v7081
        %v7083 = vpop.f32.mrb[0].mxu0
        %v7084 = vadd.f32 %v6981, %v7083
        %v7085 = vpop.f32.mrb[0].mxu0
        %v7086 = vadd.f32 %v6983, %v7085
        %v7087 = vpop.f32.mrb[0].mxu0
        %v7088 = vadd.f32 %v6985, %v7087
        %7089 = vdwg.mxu0
        %7090 = vmatprep.subr.bf16.mxu0 %v5297
        %7091 = vmatpush1.bf16.msra.mxu0 %v5296
        %7092 = vmatprep.subr.bf16.mxu0 %v5305
        %7093 = vmatpush1.bf16.msra.mxu0 %v5304
        %7094 = vmatprep.subr.bf16.mxu0 %v5313
        %7095 = vmatpush1.bf16.msra.mxu0 %v5312
        %7096 = vmatprep.subr.bf16.mxu0 %v5321
        %7097 = vmatpush1.bf16.msra.mxu0 %v5320
        %7098 = vmatprep.subr.bf16.mxu0 %v5329
        %7099 = vmatpush1.bf16.msra.mxu0 %v5328
        %7100 = vmatprep.subr.bf16.mxu0 %v5337
        %7101 = vmatpush1.bf16.msra.mxu0 %v5336
        %7102 = vmatprep.subr.bf16.mxu0 %v5345
        %7103 = vmatpush1.bf16.msra.mxu0 %v5344
        %7104 = vmatprep.subr.bf16.mxu0 %v5353
        %7105 = vmatpush1.bf16.msra.mxu0 %v5352
        %7106 = vmatprep.subr.bf16.mxu0 %v5361
        %7107 = vmatpush1.bf16.msra.mxu0 %v5360
        %7108 = vmatprep.subr.bf16.mxu0 %v5369
        %7109 = vmatpush1.bf16.msra.mxu0 %v5368
        %7110 = vmatprep.subr.bf16.mxu0 %v5377
        %7111 = vmatpush1.bf16.msra.mxu0 %v5376
        %7112 = vmatprep.subr.bf16.mxu0 %v5385
        %7113 = vmatpush1.bf16.msra.mxu0 %v5384
        %7114 = vmatprep.subr.bf16.mxu0 %v5393
        %7115 = vmatpush1.bf16.msra.mxu0 %v5392
        %7116 = vmatprep.subr.bf16.mxu0 %v5401
        %7117 = vmatpush1.bf16.msra.mxu0 %v5400
        %7118 = vmatprep.subr.bf16.mxu0 %v5409
        %7119 = vmatpush1.bf16.msra.mxu0 %v5408
        %7120 = vmatprep.subr.bf16.mxu0 %v5417
        %7121 = vmatpush1.bf16.msra.mxu0 %v5416
        %7122 = vmatprep.mubr.bf16.mxu0 %v2937
        %7123 = vmatmul.mubr.bf16.gmra.mrb[0].mxu0 %v2936
        %v7124 = vpop.f32.mrb[0].mxu0
        %v7125 = vadd.f32 %v7022, %v7124
        %v7126 = vpop.f32.mrb[0].mxu0
        %v7127 = vadd.f32 %v7024, %v7126
        %v7128 = vpop.f32.mrb[0].mxu0
        %v7129 = vadd.f32 %v7026, %v7128
        %v7130 = vpop.f32.mrb[0].mxu0
        %v7131 = vadd.f32 %v7028, %v7130
        %7132 = vmatprep.mubr.bf16.mxu0 %v2945
        %7133 = vmatmul.mubr.bf16.gmra.mrb[0].mxu0 %v2944
        %v7134 = vpop.f32.mrb[0].mxu0
        %v7135 = vadd.f32 %v7032, %v7134
        %v7136 = vpop.f32.mrb[0].mxu0
        %v7137 = vadd.f32 %v7034, %v7136
        %v7138 = vpop.f32.mrb[0].mxu0
        %v7139 = vadd.f32 %v7036, %v7138
        %v7140 = vpop.f32.mrb[0].mxu0
        %v7141 = vadd.f32 %v7038, %v7140
        %7142 = vmatprep.mubr.bf16.mxu0 %v2953
        %7143 = vmatmul.mubr.bf16.gmra.mrb[0].mxu0 %v2952
        %v7144 = vpop.f32.mrb[0].mxu0
        %v7145 = vadd.f32 %v7042, %v7144
        %v7146 = vpop.f32.mrb[0].mxu0
        %v7147 = vadd.f32 %v7044, %v7146
        %v7148 = vpop.f32.mrb[0].mxu0
        %v7149 = vadd.f32 %v7046, %v7148
        %v7150 = vpop.f32.mrb[0].mxu0
        %v7151 = vadd.f32 %v7048, %v7150
        %7152 = vmatprep.mubr.bf16.mxu0 %v2961
        %7153 = vmatmul.mubr.bf16.gmra.mrb[0].mxu0 %v2960
        %v7154 = vpop.f32.mrb[0].mxu0
        %v7155 = vadd.f32 %v7052, %v7154
        %v7156 = vpop.f32.mrb[0].mxu0
        %v7157 = vadd.f32 %v7054, %v7156
        %v7158 = vpop.f32.mrb[0].mxu0
        %v7159 = vadd.f32 %v7056, %v7158
        %v7160 = vpop.f32.mrb[0].mxu0
        %v7161 = vadd.f32 %v7058, %v7160
        %7162 = vmatprep.mubr.bf16.mxu0 %v2969
        %7163 = vmatmul.mubr.bf16.gmra.mrb[0].mxu0 %v2968
        %v7164 = vpop.f32.mrb[0].mxu0
        %v7165 = vadd.f32 %v7062, %v7164
        %v7166 = vpop.f32.mrb[0].mxu0
        %v7167 = vadd.f32 %v7064, %v7166
        %v7168 = vpop.f32.mrb[0].mxu0
        %v7169 = vadd.f32 %v7066, %v7168
        %v7170 = vpop.f32.mrb[0].mxu0
        %v7171 = vadd.f32 %v7068, %v7170
        %7172 = vmatprep.mubr.bf16.mxu0 %v2977
        %7173 = vmatmul.mubr.bf16.gmra.mrb[0].mxu0 %v2976
        %v7174 = vpop.f32.mrb[0].mxu0
        %v7175 = vadd.f32 %v7072, %v7174
        %v7176 = vpop.f32.mrb[0].mxu0
        %v7177 = vadd.f32 %v7074, %v7176
        %v7178 = vpop.f32.mrb[0].mxu0
        %v7179 = vadd.f32 %v7076, %v7178
        %v7180 = vpop.f32.mrb[0].mxu0
        %v7181 = vadd.f32 %v7078, %v7180
        %7182 = vmatprep.mubr.bf16.mxu0 %v2985
        %7183 = vmatmul.mubr.bf16.gmra.mrb[0].mxu0 %v2984
        %v7184 = vpop.f32.mrb[0].mxu0
        %v7185 = vadd.f32 %v7082, %v7184
        %v7186 = vpop.f32.mrb[0].mxu0
        %v7187 = vadd.f32 %v7084, %v7186
        %v7188 = vpop.f32.mrb[0].mxu0
        %v7189 = vadd.f32 %v7086, %v7188
        %v7190 = vpop.f32.mrb[0].mxu0
        %v7191 = vadd.f32 %v7088, %v7190
        %7192 = vdwg.mxu0
        %7193 = vmatprep.subr.bf16.mxu0 %v5425
        %7194 = vmatpush1.bf16.msra.mxu0 %v5424
        %7195 = vmatprep.subr.bf16.mxu0 %v5433
        %7196 = vmatpush1.bf16.msra.mxu0 %v5432
        %7197 = vmatprep.subr.bf16.mxu0 %v5441
        %7198 = vmatpush1.bf16.msra.mxu0 %v5440
        %7199 = vmatprep.subr.bf16.mxu0 %v5449
        %7200 = vmatpush1.bf16.msra.mxu0 %v5448
        %7201 = vmatprep.subr.bf16.mxu0 %v5457
        %7202 = vmatpush1.bf16.msra.mxu0 %v5456
        %7203 = vmatprep.subr.bf16.mxu0 %v5465
        %7204 = vmatpush1.bf16.msra.mxu0 %v5464
        %7205 = vmatprep.subr.bf16.mxu0 %v5473
        %7206 = vmatpush1.bf16.msra.mxu0 %v5472
        %7207 = vmatprep.subr.bf16.mxu0 %v5481
        %7208 = vmatpush1.bf16.msra.mxu0 %v5480
        %7209 = vmatprep.subr.bf16.mxu0 %v5489
        %7210 = vmatpush1.bf16.msra.mxu0 %v5488
        %7211 = vmatprep.subr.bf16.mxu0 %v5497
        %7212 = vmatpush1.bf16.msra.mxu0 %v5496
        %7213 = vmatprep.subr.bf16.mxu0 %v5505
        %7214 = vmatpush1.bf16.msra.mxu0 %v5504
        %7215 = vmatprep.subr.bf16.mxu0 %v5513
        %7216 = vmatpush1.bf16.msra.mxu0 %v5512
        %7217 = vmatprep.subr.bf16.mxu0 %v5521
        %7218 = vmatpush1.bf16.msra.mxu0 %v5520
        %7219 = vmatprep.subr.bf16.mxu0 %v5529
        %7220 = vmatpush1.bf16.msra.mxu0 %v5528
        %7221 = vmatprep.subr.bf16.mxu0 %v5537
        %7222 = vmatpush1.bf16.msra.mxu0 %v5536
        %7223 = vmatprep.subr.bf16.mxu0 %v5545
        %7224 = vmatpush1.bf16.msra.mxu0 %v5544
        %7225 = vmatprep.mubr.bf16.mxu0 %v2939
        %7226 = vmatmul.mubr.bf16.gmra.mrb[0].mxu0 %v2938
        %v7227 = vpop.f32.mrb[0].mxu0
        %v7228 = vadd.f32 %v7125, %v7227
        %v7229 = vpop.f32.mrb[0].mxu0
        %v7230 = vadd.f32 %v7127, %v7229
        %v7231 = vpop.f32.mrb[0].mxu0
        %v7232 = vadd.f32 %v7129, %v7231
        %v7233 = vpop.f32.mrb[0].mxu0
        %v7234 = vadd.f32 %v7131, %v7233
        %7235 = vmatprep.mubr.bf16.mxu0 %v2947
        %7236 = vmatmul.mubr.bf16.gmra.mrb[0].mxu0 %v2946
        %v7237 = vpop.f32.mrb[0].mxu0
        %v7238 = vadd.f32 %v7135, %v7237
        %v7239 = vpop.f32.mrb[0].mxu0
        %v7240 = vadd.f32 %v7137, %v7239
        %v7241 = vpop.f32.mrb[0].mxu0
        %v7242 = vadd.f32 %v7139, %v7241
        %v7243 = vpop.f32.mrb[0].mxu0
        %v7244 = vadd.f32 %v7141, %v7243
        %7245 = vmatprep.mubr.bf16.mxu0 %v2955
        %7246 = vmatmul.mubr.bf16.gmra.mrb[0].mxu0 %v2954
        %v7247 = vpop.f32.mrb[0].mxu0
        %v7248 = vadd.f32 %v7145, %v7247
        %v7249 = vpop.f32.mrb[0].mxu0
        %v7250 = vadd.f32 %v7147, %v7249
        %v7251 = vpop.f32.mrb[0].mxu0
        %v7252 = vadd.f32 %v7149, %v7251
        %v7253 = vpop.f32.mrb[0].mxu0
        %v7254 = vadd.f32 %v7151, %v7253
        %7255 = vmatprep.mubr.bf16.mxu0 %v2963
        %7256 = vmatmul.mubr.bf16.gmra.mrb[0].mxu0 %v2962
        %v7257 = vpop.f32.mrb[0].mxu0
        %v7258 = vadd.f32 %v7155, %v7257
        %v7259 = vpop.f32.mrb[0].mxu0
        %v7260 = vadd.f32 %v7157, %v7259
        %v7261 = vpop.f32.mrb[0].mxu0
        %v7262 = vadd.f32 %v7159, %v7261
        %v7263 = vpop.f32.mrb[0].mxu0
        %v7264 = vadd.f32 %v7161, %v7263
        %7265 = vmatprep.mubr.bf16.mxu0 %v2971
        %7266 = vmatmul.mubr.bf16.gmra.mrb[0].mxu0 %v2970
        %v7267 = vpop.f32.mrb[0].mxu0
        %v7268 = vadd.f32 %v7165, %v7267
        %v7269 = vpop.f32.mrb[0].mxu0
        %v7270 = vadd.f32 %v7167, %v7269
        %v7271 = vpop.f32.mrb[0].mxu0
        %v7272 = vadd.f32 %v7169, %v7271
        %v7273 = vpop.f32.mrb[0].mxu0
        %v7274 = vadd.f32 %v7171, %v7273
        %7275 = vmatprep.mubr.bf16.mxu0 %v2979
        %7276 = vmatmul.mubr.bf16.gmra.mrb[0].mxu0 %v2978
        %v7277 = vpop.f32.mrb[0].mxu0
        %v7278 = vadd.f32 %v7175, %v7277
        %v7279 = vpop.f32.mrb[0].mxu0
        %v7280 = vadd.f32 %v7177, %v7279
        %v7281 = vpop.f32.mrb[0].mxu0
        %v7282 = vadd.f32 %v7179, %v7281
        %v7283 = vpop.f32.mrb[0].mxu0
        %v7284 = vadd.f32 %v7181, %v7283
        %7285 = vmatprep.mubr.bf16.mxu0 %v2987
        %7286 = vmatmul.mubr.bf16.gmra.mrb[0].mxu0 %v2986
        %v7287 = vpop.f32.mrb[0].mxu0
        %v7288 = vadd.f32 %v7185, %v7287
        %v7289 = vpop.f32.mrb[0].mxu0
        %v7290 = vadd.f32 %v7187, %v7289
        %v7291 = vpop.f32.mrb[0].mxu0
        %v7292 = vadd.f32 %v7189, %v7291
        %v7293 = vpop.f32.mrb[0].mxu0
        %v7294 = vadd.f32 %v7191, %v7293
        %7295 = vdwg.mxu0
        %7296 = vmatprep.subr.bf16.mxu0 %v5043
        %7297 = vmatpush1.bf16.msra.mxu0 %v5042
        %7298 = vmatprep.subr.bf16.mxu0 %v5051
        %7299 = vmatpush1.bf16.msra.mxu0 %v5050
        %7300 = vmatprep.subr.bf16.mxu0 %v5059
        %7301 = vmatpush1.bf16.msra.mxu0 %v5058
        %7302 = vmatprep.subr.bf16.mxu0 %v5067
        %7303 = vmatpush1.bf16.msra.mxu0 %v5066
        %7304 = vmatprep.subr.bf16.mxu0 %v5075
        %7305 = vmatpush1.bf16.msra.mxu0 %v5074
        %7306 = vmatprep.subr.bf16.mxu0 %v5083
        %7307 = vmatpush1.bf16.msra.mxu0 %v5082
        %7308 = vmatprep.subr.bf16.mxu0 %v5091
        %7309 = vmatpush1.bf16.msra.mxu0 %v5090
        %7310 = vmatprep.subr.bf16.mxu0 %v5099
        %7311 = vmatpush1.bf16.msra.mxu0 %v5098
        %7312 = vmatprep.subr.bf16.mxu0 %v5107
        %7313 = vmatpush1.bf16.msra.mxu0 %v5106
        %7314 = vmatprep.subr.bf16.mxu0 %v5115
        %7315 = vmatpush1.bf16.msra.mxu0 %v5114
        %7316 = vmatprep.subr.bf16.mxu0 %v5123
        %7317 = vmatpush1.bf16.msra.mxu0 %v5122
        %7318 = vmatprep.subr.bf16.mxu0 %v5131
        %7319 = vmatpush1.bf16.msra.mxu0 %v5130
        %7320 = vmatprep.subr.bf16.mxu0 %v5139
        %7321 = vmatpush1.bf16.msra.mxu0 %v5138
        %7322 = vmatprep.subr.bf16.mxu0 %v5147
        %7323 = vmatpush1.bf16.msra.mxu0 %v5146
        %7324 = vmatprep.subr.bf16.mxu0 %v5155
        %7325 = vmatpush1.bf16.msra.mxu0 %v5154
        %7326 = vmatprep.subr.bf16.mxu0 %v5163
        %7327 = vmatpush1.bf16.msra.mxu0 %v5162
        %7328 = vmatprep.mubr.bf16.mxu0 %v2933
        %7329 = vmatmul.mubr.bf16.gmra.mrb[0].mxu0 %v2932
        %v7330 = vpop.f32.mrb[0].mxu0
        %v7331 = vadd.f32 0.0, %v7330
        %v7332 = vpop.f32.mrb[0].mxu0
        %v7333 = vadd.f32 0.0, %v7332
        %v7334 = vpop.f32.mrb[0].mxu0
        %v7335 = vadd.f32 0.0, %v7334
        %v7336 = vpop.f32.mrb[0].mxu0
        %v7337 = vadd.f32 0.0, %v7336
        %7338 = vmatprep.mubr.bf16.mxu0 %v2941
        %7339 = vmatmul.mubr.bf16.gmra.mrb[0].mxu0 %v2940
        %v7340 = vpop.f32.mrb[0].mxu0
        %v7341 = vadd.f32 0.0, %v7340
        %v7342 = vpop.f32.mrb[0].mxu0
        %v7343 = vadd.f32 0.0, %v7342
        %v7344 = vpop.f32.mrb[0].mxu0
        %v7345 = vadd.f32 0.0, %v7344
        %v7346 = vpop.f32.mrb[0].mxu0
        %v7347 = vadd.f32 0.0, %v7346
        %7348 = vmatprep.mubr.bf16.mxu0 %v2949
        %7349 = vmatmul.mubr.bf16.gmra.mrb[0].mxu0 %v2948
        %v7350 = vpop.f32.mrb[0].mxu0
        %v7351 = vadd.f32 0.0, %v7350
        %v7352 = vpop.f32.mrb[0].mxu0
        %v7353 = vadd.f32 0.0, %v7352
        %v7354 = vpop.f32.mrb[0].mxu0
        %v7355 = vadd.f32 0.0, %v7354
        %v7356 = vpop.f32.mrb[0].mxu0
        %v7357 = vadd.f32 0.0, %v7356
        %7358 = vmatprep.mubr.bf16.mxu0 %v2957
        %7359 = vmatmul.mubr.bf16.gmra.mrb[0].mxu0 %v2956
        %v7360 = vpop.f32.mrb[0].mxu0
        %v7361 = vadd.f32 0.0, %v7360
        %v7362 = vpop.f32.mrb[0].mxu0
        %v7363 = vadd.f32 0.0, %v7362
        %v7364 = vpop.f32.mrb[0].mxu0
        %v7365 = vadd.f32 0.0, %v7364
        %v7366 = vpop.f32.mrb[0].mxu0
        %v7367 = vadd.f32 0.0, %v7366
        %7368 = vmatprep.mubr.bf16.mxu0 %v2965
        %7369 = vmatmul.mubr.bf16.gmra.mrb[0].mxu0 %v2964
        %v7370 = vpop.f32.mrb[0].mxu0
        %v7371 = vadd.f32 0.0, %v7370
        %v7372 = vpop.f32.mrb[0].mxu0
        %v7373 = vadd.f32 0.0, %v7372
        %v7374 = vpop.f32.mrb[0].mxu0
        %v7375 = vadd.f32 0.0, %v7374
        %v7376 = vpop.f32.mrb[0].mxu0
        %v7377 = vadd.f32 0.0, %v7376
        %7378 = vmatprep.mubr.bf16.mxu0 %v2973
        %7379 = vmatmul.mubr.bf16.gmra.mrb[0].mxu0 %v2972
        %v7380 = vpop.f32.mrb[0].mxu0
        %v7381 = vadd.f32 0.0, %v7380
        %v7382 = vpop.f32.mrb[0].mxu0
        %v7383 = vadd.f32 0.0, %v7382
        %v7384 = vpop.f32.mrb[0].mxu0
        %v7385 = vadd.f32 0.0, %v7384
        %v7386 = vpop.f32.mrb[0].mxu0
        %v7387 = vadd.f32 0.0, %v7386
        %7388 = vmatprep.mubr.bf16.mxu0 %v2981
        %7389 = vmatmul.mubr.bf16.gmra.mrb[0].mxu0 %v2980
        %v7390 = vpop.f32.mrb[0].mxu0
        %v7391 = vadd.f32 0.0, %v7390
        %v7392 = vpop.f32.mrb[0].mxu0
        %v7393 = vadd.f32 0.0, %v7392
        %v7394 = vpop.f32.mrb[0].mxu0
        %v7395 = vadd.f32 0.0, %v7394
        %v7396 = vpop.f32.mrb[0].mxu0
        %v7397 = vadd.f32 0.0, %v7396
        %7398 = vdwg.mxu0
        %7399 = vmatprep.subr.bf16.mxu0 %v5171
        %7400 = vmatpush1.bf16.msra.mxu0 %v5170
        %7401 = vmatprep.subr.bf16.mxu0 %v5179
        %7402 = vmatpush1.bf16.msra.mxu0 %v5178
        %7403 = vmatprep.subr.bf16.mxu0 %v5187
        %7404 = vmatpush1.bf16.msra.mxu0 %v5186
        %7405 = vmatprep.subr.bf16.mxu0 %v5195
        %7406 = vmatpush1.bf16.msra.mxu0 %v5194
        %7407 = vmatprep.subr.bf16.mxu0 %v5203
        %7408 = vmatpush1.bf16.msra.mxu0 %v5202
        %7409 = vmatprep.subr.bf16.mxu0 %v5211
        %7410 = vmatpush1.bf16.msra.mxu0 %v5210
        %7411 = vmatprep.subr.bf16.mxu0 %v5219
        %7412 = vmatpush1.bf16.msra.mxu0 %v5218
        %7413 = vmatprep.subr.bf16.mxu0 %v5227
        %7414 = vmatpush1.bf16.msra.mxu0 %v5226
        %7415 = vmatprep.subr.bf16.mxu0 %v5235
        %7416 = vmatpush1.bf16.msra.mxu0 %v5234
        %7417 = vmatprep.subr.bf16.mxu0 %v5243
        %7418 = vmatpush1.bf16.msra.mxu0 %v5242
        %7419 = vmatprep.subr.bf16.mxu0 %v5251
        %7420 = vmatpush1.bf16.msra.mxu0 %v5250
        %7421 = vmatprep.subr.bf16.mxu0 %v5259
        %7422 = vmatpush1.bf16.msra.mxu0 %v5258
        %7423 = vmatprep.subr.bf16.mxu0 %v5267
        %7424 = vmatpush1.bf16.msra.mxu0 %v5266
        %7425 = vmatprep.subr.bf16.mxu0 %v5275
        %7426 = vmatpush1.bf16.msra.mxu0 %v5274
        %7427 = vmatprep.subr.bf16.mxu0 %v5283
        %7428 = vmatpush1.bf16.msra.mxu0 %v5282
        %7429 = vmatprep.subr.bf16.mxu0 %v5291
        %7430 = vmatpush1.bf16.msra.mxu0 %v5290
        %7431 = vmatprep.mubr.bf16.mxu0 %v2935
        %7432 = vmatmul.mubr.bf16.gmra.mrb[0].mxu0 %v2934
        %v7433 = vpop.f32.mrb[0].mxu0
        %v7434 = vadd.f32 %v7331, %v7433
        %v7435 = vpop.f32.mrb[0].mxu0
        %v7436 = vadd.f32 %v7333, %v7435
        %v7437 = vpop.f32.mrb[0].mxu0
        %v7438 = vadd.f32 %v7335, %v7437
        %v7439 = vpop.f32.mrb[0].mxu0
        %v7440 = vadd.f32 %v7337, %v7439
        %7441 = vmatprep.mubr.bf16.mxu0 %v2943
        %7442 = vmatmul.mubr.bf16.gmra.mrb[0].mxu0 %v2942
        %v7443 = vpop.f32.mrb[0].mxu0
        %v7444 = vadd.f32 %v7341, %v7443
        %v7445 = vpop.f32.mrb[0].mxu0
        %v7446 = vadd.f32 %v7343, %v7445
        %v7447 = vpop.f32.mrb[0].mxu0
        %v7448 = vadd.f32 %v7345, %v7447
        %v7449 = vpop.f32.mrb[0].mxu0
        %v7450 = vadd.f32 %v7347, %v7449
        %7451 = vmatprep.mubr.bf16.mxu0 %v2951
        %7452 = vmatmul.mubr.bf16.gmra.mrb[0].mxu0 %v2950
        %v7453 = vpop.f32.mrb[0].mxu0
        %v7454 = vadd.f32 %v7351, %v7453
        %v7455 = vpop.f32.mrb[0].mxu0
        %v7456 = vadd.f32 %v7353, %v7455
        %v7457 = vpop.f32.mrb[0].mxu0
        %v7458 = vadd.f32 %v7355, %v7457
        %v7459 = vpop.f32.mrb[0].mxu0
        %v7460 = vadd.f32 %v7357, %v7459
        %7461 = vmatprep.mubr.bf16.mxu0 %v2959
        %7462 = vmatmul.mubr.bf16.gmra.mrb[0].mxu0 %v2958
        %v7463 = vpop.f32.mrb[0].mxu0
        %v7464 = vadd.f32 %v7361, %v7463
        %v7465 = vpop.f32.mrb[0].mxu0
        %v7466 = vadd.f32 %v7363, %v7465
        %v7467 = vpop.f32.mrb[0].mxu0
        %v7468 = vadd.f32 %v7365, %v7467
        %v7469 = vpop.f32.mrb[0].mxu0
        %v7470 = vadd.f32 %v7367, %v7469
        %7471 = vmatprep.mubr.bf16.mxu0 %v2967
        %7472 = vmatmul.mubr.bf16.gmra.mrb[0].mxu0 %v2966
        %v7473 = vpop.f32.mrb[0].mxu0
        %v7474 = vadd.f32 %v7371, %v7473
        %v7475 = vpop.f32.mrb[0].mxu0
        %v7476 = vadd.f32 %v7373, %v7475
        %v7477 = vpop.f32.mrb[0].mxu0
        %v7478 = vadd.f32 %v7375, %v7477
        %v7479 = vpop.f32.mrb[0].mxu0
        %v7480 = vadd.f32 %v7377, %v7479
        %7481 = vmatprep.mubr.bf16.mxu0 %v2975
        %7482 = vmatmul.mubr.bf16.gmra.mrb[0].mxu0 %v2974
        %v7483 = vpop.f32.mrb[0].mxu0
        %v7484 = vadd.f32 %v7381, %v7483
        %v7485 = vpop.f32.mrb[0].mxu0
        %v7486 = vadd.f32 %v7383, %v7485
        %v7487 = vpop.f32.mrb[0].mxu0
        %v7488 = vadd.f32 %v7385, %v7487
        %v7489 = vpop.f32.mrb[0].mxu0
        %v7490 = vadd.f32 %v7387, %v7489
        %7491 = vmatprep.mubr.bf16.mxu0 %v2983
        %7492 = vmatmul.mubr.bf16.gmra.mrb[0].mxu0 %v2982
        %v7493 = vpop.f32.mrb[0].mxu0
        %v7494 = vadd.f32 %v7391, %v7493
        %v7495 = vpop.f32.mrb[0].mxu0
        %v7496 = vadd.f32 %v7393, %v7495
        %v7497 = vpop.f32.mrb[0].mxu0
        %v7498 = vadd.f32 %v7395, %v7497
        %v7499 = vpop.f32.mrb[0].mxu0
        %v7500 = vadd.f32 %v7397, %v7499
        %7501 = vdwg.mxu0
        %7502 = vmatprep.subr.bf16.mxu0 %v5299
        %7503 = vmatpush1.bf16.msra.mxu0 %v5298
        %7504 = vmatprep.subr.bf16.mxu0 %v5307
        %7505 = vmatpush1.bf16.msra.mxu0 %v5306
        %7506 = vmatprep.subr.bf16.mxu0 %v5315
        %7507 = vmatpush1.bf16.msra.mxu0 %v5314
        %7508 = vmatprep.subr.bf16.mxu0 %v5323
        %7509 = vmatpush1.bf16.msra.mxu0 %v5322
        %7510 = vmatprep.subr.bf16.mxu0 %v5331
        %7511 = vmatpush1.bf16.msra.mxu0 %v5330
        %7512 = vmatprep.subr.bf16.mxu0 %v5339
        %7513 = vmatpush1.bf16.msra.mxu0 %v5338
        %7514 = vmatprep.subr.bf16.mxu0 %v5347
        %7515 = vmatpush1.bf16.msra.mxu0 %v5346
        %7516 = vmatprep.subr.bf16.mxu0 %v5355
        %7517 = vmatpush1.bf16.msra.mxu0 %v5354
        %7518 = vmatprep.subr.bf16.mxu0 %v5363
        %7519 = vmatpush1.bf16.msra.mxu0 %v5362
        %7520 = vmatprep.subr.bf16.mxu0 %v5371
        %7521 = vmatpush1.bf16.msra.mxu0 %v5370
        %7522 = vmatprep.subr.bf16.mxu0 %v5379
        %7523 = vmatpush1.bf16.msra.mxu0 %v5378
        %7524 = vmatprep.subr.bf16.mxu0 %v5387
        %7525 = vmatpush1.bf16.msra.mxu0 %v5386
        %7526 = vmatprep.subr.bf16.mxu0 %v5395
        %7527 = vmatpush1.bf16.msra.mxu0 %v5394
        %7528 = vmatprep.subr.bf16.mxu0 %v5403
        %7529 = vmatpush1.bf16.msra.mxu0 %v5402
        %7530 = vmatprep.subr.bf16.mxu0 %v5411
        %7531 = vmatpush1.bf16.msra.mxu0 %v5410
        %7532 = vmatprep.subr.bf16.mxu0 %v5419
        %7533 = vmatpush1.bf16.msra.mxu0 %v5418
        %7534 = vmatprep.mubr.bf16.mxu0 %v2937
        %7535 = vmatmul.mubr.bf16.gmra.mrb[0].mxu0 %v2936
        %v7536 = vpop.f32.mrb[0].mxu0
        %v7537 = vadd.f32 %v7434, %v7536
        %v7538 = vpop.f32.mrb[0].mxu0
        %v7539 = vadd.f32 %v7436, %v7538
        %v7540 = vpop.f32.mrb[0].mxu0
        %v7541 = vadd.f32 %v7438, %v7540
        %v7542 = vpop.f32.mrb[0].mxu0
        %v7543 = vadd.f32 %v7440, %v7542
        %7544 = vmatprep.mubr.bf16.mxu0 %v2945
        %7545 = vmatmul.mubr.bf16.gmra.mrb[0].mxu0 %v2944
        %v7546 = vpop.f32.mrb[0].mxu0
        %v7547 = vadd.f32 %v7444, %v7546
        %v7548 = vpop.f32.mrb[0].mxu0
        %v7549 = vadd.f32 %v7446, %v7548
        %v7550 = vpop.f32.mrb[0].mxu0
        %v7551 = vadd.f32 %v7448, %v7550
        %v7552 = vpop.f32.mrb[0].mxu0
        %v7553 = vadd.f32 %v7450, %v7552
        %7554 = vmatprep.mubr.bf16.mxu0 %v2953
        %7555 = vmatmul.mubr.bf16.gmra.mrb[0].mxu0 %v2952
        %v7556 = vpop.f32.mrb[0].mxu0
        %v7557 = vadd.f32 %v7454, %v7556
        %v7558 = vpop.f32.mrb[0].mxu0
        %v7559 = vadd.f32 %v7456, %v7558
        %v7560 = vpop.f32.mrb[0].mxu0
        %v7561 = vadd.f32 %v7458, %v7560
        %v7562 = vpop.f32.mrb[0].mxu0
        %v7563 = vadd.f32 %v7460, %v7562
        %7564 = vmatprep.mubr.bf16.mxu0 %v2961
        %7565 = vmatmul.mubr.bf16.gmra.mrb[0].mxu0 %v2960
        %v7566 = vpop.f32.mrb[0].mxu0
        %v7567 = vadd.f32 %v7464, %v7566
        %v7568 = vpop.f32.mrb[0].mxu0
        %v7569 = vadd.f32 %v7466, %v7568
        %v7570 = vpop.f32.mrb[0].mxu0
        %v7571 = vadd.f32 %v7468, %v7570
        %v7572 = vpop.f32.mrb[0].mxu0
        %v7573 = vadd.f32 %v7470, %v7572
        %7574 = vmatprep.mubr.bf16.mxu0 %v2969
        %7575 = vmatmul.mubr.bf16.gmra.mrb[0].mxu0 %v2968
        %v7576 = vpop.f32.mrb[0].mxu0
        %v7577 = vadd.f32 %v7474, %v7576
        %v7578 = vpop.f32.mrb[0].mxu0
        %v7579 = vadd.f32 %v7476, %v7578
        %v7580 = vpop.f32.mrb[0].mxu0
        %v7581 = vadd.f32 %v7478, %v7580
        %v7582 = vpop.f32.mrb[0].mxu0
        %v7583 = vadd.f32 %v7480, %v7582
        %7584 = vmatprep.mubr.bf16.mxu0 %v2977
        %7585 = vmatmul.mubr.bf16.gmra.mrb[0].mxu0 %v2976
        %v7586 = vpop.f32.mrb[0].mxu0
        %v7587 = vadd.f32 %v7484, %v7586
        %v7588 = vpop.f32.mrb[0].mxu0
        %v7589 = vadd.f32 %v7486, %v7588
        %v7590 = vpop.f32.mrb[0].mxu0
        %v7591 = vadd.f32 %v7488, %v7590
        %v7592 = vpop.f32.mrb[0].mxu0
        %v7593 = vadd.f32 %v7490, %v7592
        %7594 = vmatprep.mubr.bf16.mxu0 %v2985
        %7595 = vmatmul.mubr.bf16.gmra.mrb[0].mxu0 %v2984
        %v7596 = vpop.f32.mrb[0].mxu0
        %v7597 = vadd.f32 %v7494, %v7596
        %v7598 = vpop.f32.mrb[0].mxu0
        %v7599 = vadd.f32 %v7496, %v7598
        %v7600 = vpop.f32.mrb[0].mxu0
        %v7601 = vadd.f32 %v7498, %v7600
        %v7602 = vpop.f32.mrb[0].mxu0
        %v7603 = vadd.f32 %v7500, %v7602
        %7604 = vdwg.mxu0
        %7605 = vmatprep.subr.bf16.mxu0 %v5427
        %7606 = vmatpush1.bf16.msra.mxu0 %v5426
        %7607 = vmatprep.subr.bf16.mxu0 %v5435
        %7608 = vmatpush1.bf16.msra.mxu0 %v5434
        %7609 = vmatprep.subr.bf16.mxu0 %v5443
        %7610 = vmatpush1.bf16.msra.mxu0 %v5442
        %7611 = vmatprep.subr.bf16.mxu0 %v5451
        %7612 = vmatpush1.bf16.msra.mxu0 %v5450
        %7613 = vmatprep.subr.bf16.mxu0 %v5459
        %7614 = vmatpush1.bf16.msra.mxu0 %v5458
        %7615 = vmatprep.subr.bf16.mxu0 %v5467
        %7616 = vmatpush1.bf16.msra.mxu0 %v5466
        %7617 = vmatprep.subr.bf16.mxu0 %v5475
        %7618 = vmatpush1.bf16.msra.mxu0 %v5474
        %7619 = vmatprep.subr.bf16.mxu0 %v5483
        %7620 = vmatpush1.bf16.msra.mxu0 %v5482
        %7621 = vmatprep.subr.bf16.mxu0 %v5491
        %7622 = vmatpush1.bf16.msra.mxu0 %v5490
        %7623 = vmatprep.subr.bf16.mxu0 %v5499
        %7624 = vmatpush1.bf16.msra.mxu0 %v5498
        %7625 = vmatprep.subr.bf16.mxu0 %v5507
        %7626 = vmatpush1.bf16.msra.mxu0 %v5506
        %7627 = vmatprep.subr.bf16.mxu0 %v5515
        %7628 = vmatpush1.bf16.msra.mxu0 %v5514
        %7629 = vmatprep.subr.bf16.mxu0 %v5523
        %7630 = vmatpush1.bf16.msra.mxu0 %v5522
        %7631 = vmatprep.subr.bf16.mxu0 %v5531
        %7632 = vmatpush1.bf16.msra.mxu0 %v5530
        %7633 = vmatprep.subr.bf16.mxu0 %v5539
        %7634 = vmatpush1.bf16.msra.mxu0 %v5538
        %7635 = vmatprep.subr.bf16.mxu0 %v5547
        %7636 = vmatpush1.bf16.msra.mxu0 %v5546
        %7637 = vmatprep.mubr.bf16.mxu0 %v2939
        %7638 = vmatmul.mubr.bf16.gmra.mrb[0].mxu0 %v2938
        %v7639 = vpop.f32.mrb[0].mxu0
        %v7640 = vadd.f32 %v7537, %v7639
        %v7641 = vpop.f32.mrb[0].mxu0
        %v7642 = vadd.f32 %v7539, %v7641
        %v7643 = vpop.f32.mrb[0].mxu0
        %v7644 = vadd.f32 %v7541, %v7643
        %v7645 = vpop.f32.mrb[0].mxu0
        %v7646 = vadd.f32 %v7543, %v7645
        %7647 = vmatprep.mubr.bf16.mxu0 %v2947
        %7648 = vmatmul.mubr.bf16.gmra.mrb[0].mxu0 %v2946
        %v7649 = vpop.f32.mrb[0].mxu0
        %v7650 = vadd.f32 %v7547, %v7649
        %v7651 = vpop.f32.mrb[0].mxu0
        %v7652 = vadd.f32 %v7549, %v7651
        %v7653 = vpop.f32.mrb[0].mxu0
        %v7654 = vadd.f32 %v7551, %v7653
        %v7655 = vpop.f32.mrb[0].mxu0
        %v7656 = vadd.f32 %v7553, %v7655
        %7657 = vmatprep.mubr.bf16.mxu0 %v2955
        %7658 = vmatmul.mubr.bf16.gmra.mrb[0].mxu0 %v2954
        %v7659 = vpop.f32.mrb[0].mxu0
        %v7660 = vadd.f32 %v7557, %v7659
        %v7661 = vpop.f32.mrb[0].mxu0
        %v7662 = vadd.f32 %v7559, %v7661
        %v7663 = vpop.f32.mrb[0].mxu0
        %v7664 = vadd.f32 %v7561, %v7663
        %v7665 = vpop.f32.mrb[0].mxu0
        %v7666 = vadd.f32 %v7563, %v7665
        %7667 = vmatprep.mubr.bf16.mxu0 %v2963
        %7668 = vmatmul.mubr.bf16.gmra.mrb[0].mxu0 %v2962
        %v7669 = vpop.f32.mrb[0].mxu0
        %v7670 = vadd.f32 %v7567, %v7669
        %v7671 = vpop.f32.mrb[0].mxu0
        %v7672 = vadd.f32 %v7569, %v7671
        %v7673 = vpop.f32.mrb[0].mxu0
        %v7674 = vadd.f32 %v7571, %v7673
        %v7675 = vpop.f32.mrb[0].mxu0
        %v7676 = vadd.f32 %v7573, %v7675
        %7677 = vmatprep.mubr.bf16.mxu0 %v2971
        %7678 = vmatmul.mubr.bf16.gmra.mrb[0].mxu0 %v2970
        %v7679 = vpop.f32.mrb[0].mxu0
        %v7680 = vadd.f32 %v7577, %v7679
        %v7681 = vpop.f32.mrb[0].mxu0
        %v7682 = vadd.f32 %v7579, %v7681
        %v7683 = vpop.f32.mrb[0].mxu0
        %v7684 = vadd.f32 %v7581, %v7683
        %v7685 = vpop.f32.mrb[0].mxu0
        %v7686 = vadd.f32 %v7583, %v7685
        %7687 = vmatprep.mubr.bf16.mxu0 %v2979
        %7688 = vmatmul.mubr.bf16.gmra.mrb[0].mxu0 %v2978
        %v7689 = vpop.f32.mrb[0].mxu0
        %v7690 = vadd.f32 %v7587, %v7689
        %v7691 = vpop.f32.mrb[0].mxu0
        %v7692 = vadd.f32 %v7589, %v7691
        %v7693 = vpop.f32.mrb[0].mxu0
        %v7694 = vadd.f32 %v7591, %v7693
        %v7695 = vpop.f32.mrb[0].mxu0
        %v7696 = vadd.f32 %v7593, %v7695
        %7697 = vmatprep.mubr.bf16.mxu0 %v2987
        %7698 = vmatmul.mubr.bf16.gmra.mrb[0].mxu0 %v2986
        %v7699 = vpop.f32.mrb[0].mxu0
        %v7700 = vadd.f32 %v7597, %v7699
        %v7701 = vpop.f32.mrb[0].mxu0
        %v7702 = vadd.f32 %v7599, %v7701
        %v7703 = vpop.f32.mrb[0].mxu0
        %v7704 = vadd.f32 %v7601, %v7703
        %v7705 = vpop.f32.mrb[0].mxu0
        %v7706 = vadd.f32 %v7603, %v7705
        %7707 = vdwg.mxu0
        %v7708 = vld [vmem:[%s378] sm:$0xff]
        %v7710 = vlaneseq
        %v7711 = vshrl.u32 %v7710, 7
        %v7712 = vsub.s32 0, %v7711
        %v7713 = vrot.slane %v7708, %v7712
        %v7714 = vlaneseq
        %v7715 = vshrl.u32 %v7714, 7
        %v7716 = vsub.s32 1, %v7715
        %v7717 = vrot.slane %v7708, %v7716
        %v7718 = vlaneseq
        %v7719 = vshrl.u32 %v7718, 7
        %v7720 = vsub.s32 2, %v7719
        %v7721 = vrot.slane %v7708, %v7720
        %v7722 = vlaneseq
        %v7723 = vshrl.u32 %v7722, 7
        %v7724 = vsub.s32 3, %v7723
        %v7725 = vrot.slane %v7708, %v7724
        %v7726 = vlaneseq
        %v7727 = vshrl.u32 %v7726, 7
        %v7728 = vsub.s32 4, %v7727
        %v7729 = vrot.slane %v7708, %v7728
        %v7730 = vlaneseq
        %v7731 = vshrl.u32 %v7730, 7
        %v7732 = vsub.s32 5, %v7731
        %v7733 = vrot.slane %v7708, %v7732
        %v7734 = vlaneseq
        %v7735 = vshrl.u32 %v7734, 7
        %v7736 = vsub.s32 6, %v7735
        %v7737 = vrot.slane %v7708, %v7736
        %v7738 = vlaneseq
        %v7739 = vshrl.u32 %v7738, 7
        %v7740 = vsub.s32 7, %v7739
        %v7741 = vrot.slane %v7708, %v7740
        %v7750 = vmul.f32 %v6404, %v7713
        %v7751 = vmul.f32 %v6406, %v7717
        %v7752 = vmul.f32 %v6816, %v7721
        %v7753 = vmul.f32 %v6818, %v7725
        %v7754 = vmul.f32 %v7228, %v7729
        %v7755 = vmul.f32 %v7230, %v7733
        %v7756 = vmul.f32 %v7640, %v7737
        %v7757 = vmul.f32 %v7642, %v7741
        %v7758 = vmul.f32 %v6408, %v7713
        %v7759 = vmul.f32 %v6410, %v7717
        %v7760 = vmul.f32 %v6820, %v7721
        %v7761 = vmul.f32 %v6822, %v7725
        %v7762 = vmul.f32 %v7232, %v7729
        %v7763 = vmul.f32 %v7234, %v7733
        %v7764 = vmul.f32 %v7644, %v7737
        %v7765 = vmul.f32 %v7646, %v7741
        %v7766 = vmul.f32 %v6414, %v7713
        %v7767 = vmul.f32 %v6416, %v7717
        %v7768 = vmul.f32 %v6826, %v7721
        %v7769 = vmul.f32 %v6828, %v7725
        %v7770 = vmul.f32 %v7238, %v7729
        %v7771 = vmul.f32 %v7240, %v7733
        %v7772 = vmul.f32 %v7650, %v7737
        %v7773 = vmul.f32 %v7652, %v7741
        %v7774 = vmul.f32 %v6418, %v7713
        %v7775 = vmul.f32 %v6420, %v7717
        %v7776 = vmul.f32 %v6830, %v7721
        %v7777 = vmul.f32 %v6832, %v7725
        %v7778 = vmul.f32 %v7242, %v7729
        %v7779 = vmul.f32 %v7244, %v7733
        %v7780 = vmul.f32 %v7654, %v7737
        %v7781 = vmul.f32 %v7656, %v7741
        %v7782 = vmul.f32 %v6424, %v7713
        %v7783 = vmul.f32 %v6426, %v7717
        %v7784 = vmul.f32 %v6836, %v7721
        %v7785 = vmul.f32 %v6838, %v7725
        %v7786 = vmul.f32 %v7248, %v7729
        %v7787 = vmul.f32 %v7250, %v7733
        %v7788 = vmul.f32 %v7660, %v7737
        %v7789 = vmul.f32 %v7662, %v7741
        %v7790 = vmul.f32 %v6428, %v7713
        %v7791 = vmul.f32 %v6430, %v7717
        %v7792 = vmul.f32 %v6840, %v7721
        %v7793 = vmul.f32 %v6842, %v7725
        %v7794 = vmul.f32 %v7252, %v7729
        %v7795 = vmul.f32 %v7254, %v7733
        %v7796 = vmul.f32 %v7664, %v7737
        %v7797 = vmul.f32 %v7666, %v7741
        %v7798 = vmul.f32 %v6434, %v7713
        %v7799 = vmul.f32 %v6436, %v7717
        %v7800 = vmul.f32 %v6846, %v7721
        %v7801 = vmul.f32 %v6848, %v7725
        %v7802 = vmul.f32 %v7258, %v7729
        %v7803 = vmul.f32 %v7260, %v7733
        %v7804 = vmul.f32 %v7670, %v7737
        %v7805 = vmul.f32 %v7672, %v7741
        %v7806 = vmul.f32 %v6438, %v7713
        %v7807 = vmul.f32 %v6440, %v7717
        %v7808 = vmul.f32 %v6850, %v7721
        %v7809 = vmul.f32 %v6852, %v7725
        %v7810 = vmul.f32 %v7262, %v7729
        %v7811 = vmul.f32 %v7264, %v7733
        %v7812 = vmul.f32 %v7674, %v7737
        %v7813 = vmul.f32 %v7676, %v7741
        %v7814 = vmul.f32 %v6444, %v7713
        %v7815 = vmul.f32 %v6446, %v7717
        %v7816 = vmul.f32 %v6856, %v7721
        %v7817 = vmul.f32 %v6858, %v7725
        %v7818 = vmul.f32 %v7268, %v7729
        %v7819 = vmul.f32 %v7270, %v7733
        %v7820 = vmul.f32 %v7680, %v7737
        %v7821 = vmul.f32 %v7682, %v7741
        %v7822 = vmul.f32 %v6448, %v7713
        %v7823 = vmul.f32 %v6450, %v7717
        %v7824 = vmul.f32 %v6860, %v7721
        %v7825 = vmul.f32 %v6862, %v7725
        %v7826 = vmul.f32 %v7272, %v7729
        %v7827 = vmul.f32 %v7274, %v7733
        %v7828 = vmul.f32 %v7684, %v7737
        %v7829 = vmul.f32 %v7686, %v7741
        %v7830 = vmul.f32 %v6454, %v7713
        %v7831 = vmul.f32 %v6456, %v7717
        %v7832 = vmul.f32 %v6866, %v7721
        %v7833 = vmul.f32 %v6868, %v7725
        %v7834 = vmul.f32 %v7278, %v7729
        %v7835 = vmul.f32 %v7280, %v7733
        %v7836 = vmul.f32 %v7690, %v7737
        %v7837 = vmul.f32 %v7692, %v7741
        %v7838 = vmul.f32 %v6458, %v7713
        %v7839 = vmul.f32 %v6460, %v7717
        %v7840 = vmul.f32 %v6870, %v7721
        %v7841 = vmul.f32 %v6872, %v7725
        %v7842 = vmul.f32 %v7282, %v7729
        %v7843 = vmul.f32 %v7284, %v7733
        %v7844 = vmul.f32 %v7694, %v7737
        %v7845 = vmul.f32 %v7696, %v7741
        %v7846 = vmul.f32 %v6464, %v7713
        %v7847 = vmul.f32 %v6466, %v7717
        %v7848 = vmul.f32 %v6876, %v7721
        %v7849 = vmul.f32 %v6878, %v7725
        %v7850 = vmul.f32 %v7288, %v7729
        %v7851 = vmul.f32 %v7290, %v7733
        %v7852 = vmul.f32 %v7700, %v7737
        %v7853 = vmul.f32 %v7702, %v7741
        %v7854 = vmul.f32 %v6468, %v7713
        %v7855 = vmul.f32 %v6470, %v7717
        %v7856 = vmul.f32 %v6880, %v7721
        %v7857 = vmul.f32 %v6882, %v7725
        %v7858 = vmul.f32 %v7292, %v7729
        %v7859 = vmul.f32 %v7294, %v7733
        %v7860 = vmul.f32 %v7704, %v7737
        %v7861 = vmul.f32 %v7706, %v7741
        %v7862 = vld [vmem:[%s387] sm:$0xff]
        %v7864 = vlaneseq
        %v7865 = vshrl.u32 %v7864, 7
        %v7866 = vsub.s32 0, %v7865
        %v7867 = vrot.slane %v7862, %v7866
        %v7868 = vlaneseq
        %v7869 = vshrl.u32 %v7868, 7
        %v7870 = vsub.s32 1, %v7869
        %v7871 = vrot.slane %v7862, %v7870
        %v7872 = vlaneseq
        %v7873 = vshrl.u32 %v7872, 7
        %v7874 = vsub.s32 2, %v7873
        %v7875 = vrot.slane %v7862, %v7874
        %v7876 = vlaneseq
        %v7877 = vshrl.u32 %v7876, 7
        %v7878 = vsub.s32 3, %v7877
        %v7879 = vrot.slane %v7862, %v7878
        %v7880 = vlaneseq
        %v7881 = vshrl.u32 %v7880, 7
        %v7882 = vsub.s32 4, %v7881
        %v7883 = vrot.slane %v7862, %v7882
        %v7884 = vlaneseq
        %v7885 = vshrl.u32 %v7884, 7
        %v7886 = vsub.s32 5, %v7885
        %v7887 = vrot.slane %v7862, %v7886
        %v7888 = vlaneseq
        %v7889 = vshrl.u32 %v7888, 7
        %v7890 = vsub.s32 6, %v7889
        %v7891 = vrot.slane %v7862, %v7890
        %v7892 = vlaneseq
        %v7893 = vshrl.u32 %v7892, 7
        %v7894 = vsub.s32 7, %v7893
        %v7895 = vrot.slane %v7862, %v7894
        %v7904 = vadd.f32 %v7750, %v7867
        %v7905 = vadd.f32 %v7751, %v7871
        %v7906 = vadd.f32 %v7752, %v7875
        %v7907 = vadd.f32 %v7753, %v7879
        %v7908 = vadd.f32 %v7754, %v7883
        %v7909 = vadd.f32 %v7755, %v7887
        %v7910 = vadd.f32 %v7756, %v7891
        %v7911 = vadd.f32 %v7757, %v7895
        %v7912 = vadd.f32 %v7758, %v7867
        %v7913 = vadd.f32 %v7759, %v7871
        %v7914 = vadd.f32 %v7760, %v7875
        %v7915 = vadd.f32 %v7761, %v7879
        %v7916 = vadd.f32 %v7762, %v7883
        %v7917 = vadd.f32 %v7763, %v7887
        %v7918 = vadd.f32 %v7764, %v7891
        %v7919 = vadd.f32 %v7765, %v7895
        %v7920 = vadd.f32 %v7766, %v7867
        %v7921 = vadd.f32 %v7767, %v7871
        %v7922 = vadd.f32 %v7768, %v7875
        %v7923 = vadd.f32 %v7769, %v7879
        %v7924 = vadd.f32 %v7770, %v7883
        %v7925 = vadd.f32 %v7771, %v7887
        %v7926 = vadd.f32 %v7772, %v7891
        %v7927 = vadd.f32 %v7773, %v7895
        %v7928 = vadd.f32 %v7774, %v7867
        %v7929 = vadd.f32 %v7775, %v7871
        %v7930 = vadd.f32 %v7776, %v7875
        %v7931 = vadd.f32 %v7777, %v7879
        %v7932 = vadd.f32 %v7778, %v7883
        %v7933 = vadd.f32 %v7779, %v7887
        %v7934 = vadd.f32 %v7780, %v7891
        %v7935 = vadd.f32 %v7781, %v7895
        %v7936 = vadd.f32 %v7782, %v7867
        %v7937 = vadd.f32 %v7783, %v7871
        %v7938 = vadd.f32 %v7784, %v7875
        %v7939 = vadd.f32 %v7785, %v7879
        %v7940 = vadd.f32 %v7786, %v7883
        %v7941 = vadd.f32 %v7787, %v7887
        %v7942 = vadd.f32 %v7788, %v7891
        %v7943 = vadd.f32 %v7789, %v7895
        %v7944 = vadd.f32 %v7790, %v7867
        %v7945 = vadd.f32 %v7791, %v7871
        %v7946 = vadd.f32 %v7792, %v7875
        %v7947 = vadd.f32 %v7793, %v7879
        %v7948 = vadd.f32 %v7794, %v7883
        %v7949 = vadd.f32 %v7795, %v7887
        %v7950 = vadd.f32 %v7796, %v7891
        %v7951 = vadd.f32 %v7797, %v7895
        %v7952 = vadd.f32 %v7798, %v7867
        %v7953 = vadd.f32 %v7799, %v7871
        %v7954 = vadd.f32 %v7800, %v7875
        %v7955 = vadd.f32 %v7801, %v7879
        %v7956 = vadd.f32 %v7802, %v7883
        %v7957 = vadd.f32 %v7803, %v7887
        %v7958 = vadd.f32 %v7804, %v7891
        %v7959 = vadd.f32 %v7805, %v7895
        %v7960 = vadd.f32 %v7806, %v7867
        %v7961 = vadd.f32 %v7807, %v7871
        %v7962 = vadd.f32 %v7808, %v7875
        %v7963 = vadd.f32 %v7809, %v7879
        %v7964 = vadd.f32 %v7810, %v7883
        %v7965 = vadd.f32 %v7811, %v7887
        %v7966 = vadd.f32 %v7812, %v7891
        %v7967 = vadd.f32 %v7813, %v7895
        %v7968 = vadd.f32 %v7814, %v7867
        %v7969 = vadd.f32 %v7815, %v7871
        %v7970 = vadd.f32 %v7816, %v7875
        %v7971 = vadd.f32 %v7817, %v7879
        %v7972 = vadd.f32 %v7818, %v7883
        %v7973 = vadd.f32 %v7819, %v7887
        %v7974 = vadd.f32 %v7820, %v7891
        %v7975 = vadd.f32 %v7821, %v7895
        %v7976 = vadd.f32 %v7822, %v7867
        %v7977 = vadd.f32 %v7823, %v7871
        %v7978 = vadd.f32 %v7824, %v7875
        %v7979 = vadd.f32 %v7825, %v7879
        %v7980 = vadd.f32 %v7826, %v7883
        %v7981 = vadd.f32 %v7827, %v7887
        %v7982 = vadd.f32 %v7828, %v7891
        %v7983 = vadd.f32 %v7829, %v7895
        %v7984 = vadd.f32 %v7830, %v7867
        %v7985 = vadd.f32 %v7831, %v7871
        %v7986 = vadd.f32 %v7832, %v7875
        %v7987 = vadd.f32 %v7833, %v7879
        %v7988 = vadd.f32 %v7834, %v7883
        %v7989 = vadd.f32 %v7835, %v7887
        %v7990 = vadd.f32 %v7836, %v7891
        %v7991 = vadd.f32 %v7837, %v7895
        %v7992 = vadd.f32 %v7838, %v7867
        %v7993 = vadd.f32 %v7839, %v7871
        %v7994 = vadd.f32 %v7840, %v7875
        %v7995 = vadd.f32 %v7841, %v7879
        %v7996 = vadd.f32 %v7842, %v7883
        %v7997 = vadd.f32 %v7843, %v7887
        %v7998 = vadd.f32 %v7844, %v7891
        %v7999 = vadd.f32 %v7845, %v7895
        %v8000 = vadd.f32 %v7846, %v7867
        %v8001 = vadd.f32 %v7847, %v7871
        %v8002 = vadd.f32 %v7848, %v7875
        %v8003 = vadd.f32 %v7849, %v7879
        %v8004 = vadd.f32 %v7850, %v7883
        %v8005 = vadd.f32 %v7851, %v7887
        %v8006 = vadd.f32 %v7852, %v7891
        %v8007 = vadd.f32 %v7853, %v7895
        %v8008 = vadd.f32 %v7854, %v7867
        %v8009 = vadd.f32 %v7855, %v7871
        %v8010 = vadd.f32 %v7856, %v7875
        %v8011 = vadd.f32 %v7857, %v7879
        %v8012 = vadd.f32 %v7858, %v7883
        %v8013 = vadd.f32 %v7859, %v7887
        %v8014 = vadd.f32 %v7860, %v7891
        %v8015 = vadd.f32 %v7861, %v7895
        %v8016 = vmax.f32 %v7904, 0.0
        %v8017 = vmax.f32 %v7905, 0.0
        %v8018 = vmax.f32 %v7906, 0.0
        %v8019 = vmax.f32 %v7907, 0.0
        %v8020 = vmax.f32 %v7908, 0.0
        %v8021 = vmax.f32 %v7909, 0.0
        %v8022 = vmax.f32 %v7910, 0.0
        %v8023 = vmax.f32 %v7911, 0.0
        %v8024 = vmax.f32 %v7912, 0.0
        %v8025 = vmax.f32 %v7913, 0.0
        %v8026 = vmax.f32 %v7914, 0.0
        %v8027 = vmax.f32 %v7915, 0.0
        %v8028 = vmax.f32 %v7916, 0.0
        %v8029 = vmax.f32 %v7917, 0.0
        %v8030 = vmax.f32 %v7918, 0.0
        %v8031 = vmax.f32 %v7919, 0.0
        %v8032 = vmax.f32 %v7920, 0.0
        %v8033 = vmax.f32 %v7921, 0.0
        %v8034 = vmax.f32 %v7922, 0.0
        %v8035 = vmax.f32 %v7923, 0.0
        %v8036 = vmax.f32 %v7924, 0.0
        %v8037 = vmax.f32 %v7925, 0.0
        %v8038 = vmax.f32 %v7926, 0.0
        %v8039 = vmax.f32 %v7927, 0.0
        %v8040 = vmax.f32 %v7928, 0.0
        %v8041 = vmax.f32 %v7929, 0.0
        %v8042 = vmax.f32 %v7930, 0.0
        %v8043 = vmax.f32 %v7931, 0.0
        %v8044 = vmax.f32 %v7932, 0.0
        %v8045 = vmax.f32 %v7933, 0.0
        %v8046 = vmax.f32 %v7934, 0.0
        %v8047 = vmax.f32 %v7935, 0.0
        %v8048 = vmax.f32 %v7936, 0.0
        %v8049 = vmax.f32 %v7937, 0.0
        %v8050 = vmax.f32 %v7938, 0.0
        %v8051 = vmax.f32 %v7939, 0.0
        %v8052 = vmax.f32 %v7940, 0.0
        %v8053 = vmax.f32 %v7941, 0.0
        %v8054 = vmax.f32 %v7942, 0.0
        %v8055 = vmax.f32 %v7943, 0.0
        %v8056 = vmax.f32 %v7944, 0.0
        %v8057 = vmax.f32 %v7945, 0.0
        %v8058 = vmax.f32 %v7946, 0.0
        %v8059 = vmax.f32 %v7947, 0.0
        %v8060 = vmax.f32 %v7948, 0.0
        %v8061 = vmax.f32 %v7949, 0.0
        %v8062 = vmax.f32 %v7950, 0.0
        %v8063 = vmax.f32 %v7951, 0.0
        %v8064 = vmax.f32 %v7952, 0.0
        %v8065 = vmax.f32 %v7953, 0.0
        %v8066 = vmax.f32 %v7954, 0.0
        %v8067 = vmax.f32 %v7955, 0.0
        %v8068 = vmax.f32 %v7956, 0.0
        %v8069 = vmax.f32 %v7957, 0.0
        %v8070 = vmax.f32 %v7958, 0.0
        %v8071 = vmax.f32 %v7959, 0.0
        %v8072 = vmax.f32 %v7960, 0.0
        %v8073 = vmax.f32 %v7961, 0.0
        %v8074 = vmax.f32 %v7962, 0.0
        %v8075 = vmax.f32 %v7963, 0.0
        %v8076 = vmax.f32 %v7964, 0.0
        %v8077 = vmax.f32 %v7965, 0.0
        %v8078 = vmax.f32 %v7966, 0.0
        %v8079 = vmax.f32 %v7967, 0.0
        %v8080 = vmax.f32 %v7968, 0.0
        %v8081 = vmax.f32 %v7969, 0.0
        %v8082 = vmax.f32 %v7970, 0.0
        %v8083 = vmax.f32 %v7971, 0.0
        %v8084 = vmax.f32 %v7972, 0.0
        %v8085 = vmax.f32 %v7973, 0.0
        %v8086 = vmax.f32 %v7974, 0.0
        %v8087 = vmax.f32 %v7975, 0.0
        %v8088 = vmax.f32 %v7976, 0.0
        %v8089 = vmax.f32 %v7977, 0.0
        %v8090 = vmax.f32 %v7978, 0.0
        %v8091 = vmax.f32 %v7979, 0.0
        %v8092 = vmax.f32 %v7980, 0.0
        %v8093 = vmax.f32 %v7981, 0.0
        %v8094 = vmax.f32 %v7982, 0.0
        %v8095 = vmax.f32 %v7983, 0.0
        %v8096 = vmax.f32 %v7984, 0.0
        %v8097 = vmax.f32 %v7985, 0.0
        %v8098 = vmax.f32 %v7986, 0.0
        %v8099 = vmax.f32 %v7987, 0.0
        %v8100 = vmax.f32 %v7988, 0.0
        %v8101 = vmax.f32 %v7989, 0.0
        %v8102 = vmax.f32 %v7990, 0.0
        %v8103 = vmax.f32 %v7991, 0.0
        %v8104 = vmax.f32 %v7992, 0.0
        %v8105 = vmax.f32 %v7993, 0.0
        %v8106 = vmax.f32 %v7994, 0.0
        %v8107 = vmax.f32 %v7995, 0.0
        %v8108 = vmax.f32 %v7996, 0.0
        %v8109 = vmax.f32 %v7997, 0.0
        %v8110 = vmax.f32 %v7998, 0.0
        %v8111 = vmax.f32 %v7999, 0.0
        %v8112 = vmax.f32 %v8000, 0.0
        %v8113 = vmax.f32 %v8001, 0.0
        %v8114 = vmax.f32 %v8002, 0.0
        %v8115 = vmax.f32 %v8003, 0.0
        %v8116 = vmax.f32 %v8004, 0.0
        %v8117 = vmax.f32 %v8005, 0.0
        %v8118 = vmax.f32 %v8006, 0.0
        %v8119 = vmax.f32 %v8007, 0.0
        %v8120 = vmax.f32 %v8008, 0.0
        %v8121 = vmax.f32 %v8009, 0.0
        %v8122 = vmax.f32 %v8010, 0.0
        %v8123 = vmax.f32 %v8011, 0.0
        %v8124 = vmax.f32 %v8012, 0.0
        %v8125 = vmax.f32 %v8013, 0.0
        %v8126 = vmax.f32 %v8014, 0.0
        %v8127 = vmax.f32 %v8015, 0.0
        %p8128 = scmp.lt.s32.totalorder %s22, 0
        %s8129 = ssub.s32 0, %s22
        %s8130 = scalar_select %p8128, %s8129, %s22
        %s8131 = sand.u32 %s8130, 1
        %s8132 = ssub.s32 0, %s8131
        %s8133 = scalar_select %p8128, %s8132, %s8131
        %p8134 = scmp.ne.s32.totalorder %s8133, 0
        %p8135 = scmp.lt.s32.totalorder %s8133, 0
        %p8136 = pnand %p8135, %p8134
        %p8137 = pneg %p8136
        %s8138 = sadd.s32 %s8133, 2
        %s8139 = scalar_select %p8137, %s8138, %s8133
        %p8140 = scmp.eq.s32.totalorder %s8139, 0
        // Predicated region
        $region85: #{generator_forward.3} parent=51 // pred_check
          %p8141 = pneg %p8140
        $region86: #{generator_forward.3} parent=51 // pred_check_branch
          %8143 = sbr.rel (%p8141) target = $region88
        $region87: #{generator_forward.3} parent=51 // pred_region
          %8144 = vst [vmem:[#allocation2] sm:$0xff] %v8016
          %8145 = vst [vmem:[#allocation2 + $0x8] sm:$0xff] %v8017
          %8146 = vst [vmem:[#allocation2 + $0x10] sm:$0xff] %v8018
          %8147 = vst [vmem:[#allocation2 + $0x18] sm:$0xff] %v8019
          %8148 = vst [vmem:[#allocation2 + $0x20] sm:$0xff] %v8020
          %8149 = vst [vmem:[#allocation2 + $0x28] sm:$0xff] %v8021
          %8150 = vst [vmem:[#allocation2 + $0x30] sm:$0xff] %v8022
          %8151 = vst [vmem:[#allocation2 + $0x38] sm:$0xff] %v8023
          %8152 = vst [vmem:[#allocation2 + $0x40] sm:$0xff] %v8024
          %8153 = vst [vmem:[#allocation2 + $0x48] sm:$0xff] %v8025
          %8154 = vst [vmem:[#allocation2 + $0x50] sm:$0xff] %v8026
          %8155 = vst [vmem:[#allocation2 + $0x58] sm:$0xff] %v8027
          %8156 = vst [vmem:[#allocation2 + $0x60] sm:$0xff] %v8028
          %8157 = vst [vmem:[#allocation2 + $0x68] sm:$0xff] %v8029
          %8158 = vst [vmem:[#allocation2 + $0x70] sm:$0xff] %v8030
          %8159 = vst [vmem:[#allocation2 + $0x78] sm:$0xff] %v8031
          %8160 = vst [vmem:[#allocation2 + $0x80] sm:$0xff] %v8032
          %8161 = vst [vmem:[#allocation2 + $0x88] sm:$0xff] %v8033
          %8162 = vst [vmem:[#allocation2 + $0x90] sm:$0xff] %v8034
          %8163 = vst [vmem:[#allocation2 + $0x98] sm:$0xff] %v8035
          %8164 = vst [vmem:[#allocation2 + $0xa0] sm:$0xff] %v8036
          %8165 = vst [vmem:[#allocation2 + $0xa8] sm:$0xff] %v8037
          %8166 = vst [vmem:[#allocation2 + $0xb0] sm:$0xff] %v8038
          %8167 = vst [vmem:[#allocation2 + $0xb8] sm:$0xff] %v8039
          %8168 = vst [vmem:[#allocation2 + $0xc0] sm:$0xff] %v8040
          %8169 = vst [vmem:[#allocation2 + $0xc8] sm:$0xff] %v8041
          %8170 = vst [vmem:[#allocation2 + $0xd0] sm:$0xff] %v8042
          %8171 = vst [vmem:[#allocation2 + $0xd8] sm:$0xff] %v8043
          %8172 = vst [vmem:[#allocation2 + $0xe0] sm:$0xff] %v8044
          %8173 = vst [vmem:[#allocation2 + $0xe8] sm:$0xff] %v8045
          %8174 = vst [vmem:[#allocation2 + $0xf0] sm:$0xff] %v8046
          %8175 = vst [vmem:[#allocation2 + $0xf8] sm:$0xff] %v8047
          %8176 = vst [vmem:[#allocation2 + $0x100] sm:$0xff] %v8048
          %8177 = vst [vmem:[#allocation2 + $0x108] sm:$0xff] %v8049
          %8178 = vst [vmem:[#allocation2 + $0x110] sm:$0xff] %v8050
          %8179 = vst [vmem:[#allocation2 + $0x118] sm:$0xff] %v8051
          %8180 = vst [vmem:[#allocation2 + $0x120] sm:$0xff] %v8052
          %8181 = vst [vmem:[#allocation2 + $0x128] sm:$0xff] %v8053
          %8182 = vst [vmem:[#allocation2 + $0x130] sm:$0xff] %v8054
          %8183 = vst [vmem:[#allocation2 + $0x138] sm:$0xff] %v8055
          %8184 = vst [vmem:[#allocation2 + $0x140] sm:$0xff] %v8056
          %8185 = vst [vmem:[#allocation2 + $0x148] sm:$0xff] %v8057
          %8186 = vst [vmem:[#allocation2 + $0x150] sm:$0xff] %v8058
          %8187 = vst [vmem:[#allocation2 + $0x158] sm:$0xff] %v8059
          %8188 = vst [vmem:[#allocation2 + $0x160] sm:$0xff] %v8060
          %8189 = vst [vmem:[#allocation2 + $0x168] sm:$0xff] %v8061
          %8190 = vst [vmem:[#allocation2 + $0x170] sm:$0xff] %v8062
          %8191 = vst [vmem:[#allocation2 + $0x178] sm:$0xff] %v8063
          %8192 = vst [vmem:[#allocation2 + $0x180] sm:$0xff] %v8064
          %8193 = vst [vmem:[#allocation2 + $0x188] sm:$0xff] %v8065
          %8194 = vst [vmem:[#allocation2 + $0x190] sm:$0xff] %v8066
          %8195 = vst [vmem:[#allocation2 + $0x198] sm:$0xff] %v8067
          %8196 = vst [vmem:[#allocation2 + $0x1a0] sm:$0xff] %v8068
          %8197 = vst [vmem:[#allocation2 + $0x1a8] sm:$0xff] %v8069
          %8198 = vst [vmem:[#allocation2 + $0x1b0] sm:$0xff] %v8070
          %8199 = vst [vmem:[#allocation2 + $0x1b8] sm:$0xff] %v8071
          %8200 = vst [vmem:[#allocation2 + $0x1c0] sm:$0xff] %v8072
          %8201 = vst [vmem:[#allocation2 + $0x1c8] sm:$0xff] %v8073
          %8202 = vst [vmem:[#allocation2 + $0x1d0] sm:$0xff] %v8074
          %8203 = vst [vmem:[#allocation2 + $0x1d8] sm:$0xff] %v8075
          %8204 = vst [vmem:[#allocation2 + $0x1e0] sm:$0xff] %v8076
          %8205 = vst [vmem:[#allocation2 + $0x1e8] sm:$0xff] %v8077
          %8206 = vst [vmem:[#allocation2 + $0x1f0] sm:$0xff] %v8078
          %8207 = vst [vmem:[#allocation2 + $0x1f8] sm:$0xff] %v8079
          %8208 = vst [vmem:[#allocation2 + $0x200] sm:$0xff] %v8080
          %8209 = vst [vmem:[#allocation2 + $0x208] sm:$0xff] %v8081
          %8210 = vst [vmem:[#allocation2 + $0x210] sm:$0xff] %v8082
          %8211 = vst [vmem:[#allocation2 + $0x218] sm:$0xff] %v8083
          %8212 = vst [vmem:[#allocation2 + $0x220] sm:$0xff] %v8084
          %8213 = vst [vmem:[#allocation2 + $0x228] sm:$0xff] %v8085
          %8214 = vst [vmem:[#allocation2 + $0x230] sm:$0xff] %v8086
          %8215 = vst [vmem:[#allocation2 + $0x238] sm:$0xff] %v8087
          %8216 = vst [vmem:[#allocation2 + $0x240] sm:$0xff] %v8088
          %8217 = vst [vmem:[#allocation2 + $0x248] sm:$0xff] %v8089
          %8218 = vst [vmem:[#allocation2 + $0x250] sm:$0xff] %v8090
          %8219 = vst [vmem:[#allocation2 + $0x258] sm:$0xff] %v8091
          %8220 = vst [vmem:[#allocation2 + $0x260] sm:$0xff] %v8092
          %8221 = vst [vmem:[#allocation2 + $0x268] sm:$0xff] %v8093
          %8222 = vst [vmem:[#allocation2 + $0x270] sm:$0xff] %v8094
          %8223 = vst [vmem:[#allocation2 + $0x278] sm:$0xff] %v8095
          %8224 = vst [vmem:[#allocation2 + $0x280] sm:$0xff] %v8096
          %8225 = vst [vmem:[#allocation2 + $0x288] sm:$0xff] %v8097
          %8226 = vst [vmem:[#allocation2 + $0x290] sm:$0xff] %v8098
          %8227 = vst [vmem:[#allocation2 + $0x298] sm:$0xff] %v8099
          %8228 = vst [vmem:[#allocation2 + $0x2a0] sm:$0xff] %v8100
          %8229 = vst [vmem:[#allocation2 + $0x2a8] sm:$0xff] %v8101
          %8230 = vst [vmem:[#allocation2 + $0x2b0] sm:$0xff] %v8102
          %8231 = vst [vmem:[#allocation2 + $0x2b8] sm:$0xff] %v8103
          %8232 = vst [vmem:[#allocation2 + $0x2c0] sm:$0xff] %v8104
          %8233 = vst [vmem:[#allocation2 + $0x2c8] sm:$0xff] %v8105
          %8234 = vst [vmem:[#allocation2 + $0x2d0] sm:$0xff] %v8106
          %8235 = vst [vmem:[#allocation2 + $0x2d8] sm:$0xff] %v8107
          %8236 = vst [vmem:[#allocation2 + $0x2e0] sm:$0xff] %v8108
          %8237 = vst [vmem:[#allocation2 + $0x2e8] sm:$0xff] %v8109
          %8238 = vst [vmem:[#allocation2 + $0x2f0] sm:$0xff] %v8110
          %8239 = vst [vmem:[#allocation2 + $0x2f8] sm:$0xff] %v8111
          %8240 = vst [vmem:[#allocation2 + $0x300] sm:$0xff] %v8112
          %8241 = vst [vmem:[#allocation2 + $0x308] sm:$0xff] %v8113
          %8242 = vst [vmem:[#allocation2 + $0x310] sm:$0xff] %v8114
          %8243 = vst [vmem:[#allocation2 + $0x318] sm:$0xff] %v8115
          %8244 = vst [vmem:[#allocation2 + $0x320] sm:$0xff] %v8116
          %8245 = vst [vmem:[#allocation2 + $0x328] sm:$0xff] %v8117
          %8246 = vst [vmem:[#allocation2 + $0x330] sm:$0xff] %v8118
          %8247 = vst [vmem:[#allocation2 + $0x338] sm:$0xff] %v8119
          %8248 = vst [vmem:[#allocation2 + $0x340] sm:$0xff] %v8120
          %8249 = vst [vmem:[#allocation2 + $0x348] sm:$0xff] %v8121
          %8250 = vst [vmem:[#allocation2 + $0x350] sm:$0xff] %v8122
          %8251 = vst [vmem:[#allocation2 + $0x358] sm:$0xff] %v8123
          %8252 = vst [vmem:[#allocation2 + $0x360] sm:$0xff] %v8124
          %8253 = vst [vmem:[#allocation2 + $0x368] sm:$0xff] %v8125
          %8254 = vst [vmem:[#allocation2 + $0x370] sm:$0xff] %v8126
          %8255 = vst [vmem:[#allocation2 + $0x378] sm:$0xff] %v8127
        $region88: #{generator_forward.3} parent=51 // pred_fallthru
          _
        %p8256 = scmp.eq.s32.totalorder %s8139, 1
        // Predicated region
        $region89: #{generator_forward.3} parent=51 // pred_check
          %p8257 = pneg %p8256
        $region90: #{generator_forward.3} parent=51 // pred_check_branch
          %8259 = sbr.rel (%p8257) target = $region92
        $region91: #{generator_forward.3} parent=51 // pred_region
          %v8260 = vld [vmem:[#allocation3] sm:$0xff]
          %v8261 = vld [vmem:[#allocation3 + $0x8] sm:$0xff]
          %v8262 = vld [vmem:[#allocation3 + $0x10] sm:$0xff]
          %v8263 = vld [vmem:[#allocation3 + $0x18] sm:$0xff]
          %v8264 = vld [vmem:[#allocation3 + $0x20] sm:$0xff]
          %v8265 = vld [vmem:[#allocation3 + $0x28] sm:$0xff]
          %v8266 = vld [vmem:[#allocation3 + $0x30] sm:$0xff]
          %v8267 = vld [vmem:[#allocation3 + $0x38] sm:$0xff]
          %v8268 = vld [vmem:[#allocation3 + $0x40] sm:$0xff]
          %v8269 = vld [vmem:[#allocation3 + $0x48] sm:$0xff]
          %v8270 = vld [vmem:[#allocation3 + $0x50] sm:$0xff]
          %v8271 = vld [vmem:[#allocation3 + $0x58] sm:$0xff]
          %v8272 = vld [vmem:[#allocation3 + $0x60] sm:$0xff]
          %v8273 = vld [vmem:[#allocation3 + $0x68] sm:$0xff]
          %v8274 = vld [vmem:[#allocation3 + $0x70] sm:$0xff]
          %v8275 = vld [vmem:[#allocation3 + $0x78] sm:$0xff]
          %v8276 = vld [vmem:[#allocation3 + $0x80] sm:$0xff]
          %v8277 = vld [vmem:[#allocation3 + $0x88] sm:$0xff]
          %v8278 = vld [vmem:[#allocation3 + $0x90] sm:$0xff]
          %v8279 = vld [vmem:[#allocation3 + $0x98] sm:$0xff]
          %v8280 = vld [vmem:[#allocation3 + $0xa0] sm:$0xff]
          %v8281 = vld [vmem:[#allocation3 + $0xa8] sm:$0xff]
          %v8282 = vld [vmem:[#allocation3 + $0xb0] sm:$0xff]
          %v8283 = vld [vmem:[#allocation3 + $0xb8] sm:$0xff]
          %v8284 = vld [vmem:[#allocation3 + $0xc0] sm:$0xff]
          %v8285 = vld [vmem:[#allocation3 + $0xc8] sm:$0xff]
          %v8286 = vld [vmem:[#allocation3 + $0xd0] sm:$0xff]
          %v8287 = vld [vmem:[#allocation3 + $0xd8] sm:$0xff]
          %v8288 = vld [vmem:[#allocation3 + $0xe0] sm:$0xff]
          %v8289 = vld [vmem:[#allocation3 + $0xe8] sm:$0xff]
          %v8290 = vld [vmem:[#allocation3 + $0xf0] sm:$0xff]
          %v8291 = vld [vmem:[#allocation3 + $0xf8] sm:$0xff]
          %v8292 = vld [vmem:[#allocation3 + $0x100] sm:$0xff]
          %v8293 = vld [vmem:[#allocation3 + $0x108] sm:$0xff]
          %v8294 = vld [vmem:[#allocation3 + $0x110] sm:$0xff]
          %v8295 = vld [vmem:[#allocation3 + $0x118] sm:$0xff]
          %v8296 = vld [vmem:[#allocation3 + $0x120] sm:$0xff]
          %v8297 = vld [vmem:[#allocation3 + $0x128] sm:$0xff]
          %v8298 = vld [vmem:[#allocation3 + $0x130] sm:$0xff]
          %v8299 = vld [vmem:[#allocation3 + $0x138] sm:$0xff]
          %v8300 = vld [vmem:[#allocation3 + $0x140] sm:$0xff]
          %v8301 = vld [vmem:[#allocation3 + $0x148] sm:$0xff]
          %v8302 = vld [vmem:[#allocation3 + $0x150] sm:$0xff]
          %v8303 = vld [vmem:[#allocation3 + $0x158] sm:$0xff]
          %v8304 = vld [vmem:[#allocation3 + $0x160] sm:$0xff]
          %v8305 = vld [vmem:[#allocation3 + $0x168] sm:$0xff]
          %v8306 = vld [vmem:[#allocation3 + $0x170] sm:$0xff]
          %v8307 = vld [vmem:[#allocation3 + $0x178] sm:$0xff]
          %v8308 = vld [vmem:[#allocation3 + $0x180] sm:$0xff]
          %v8309 = vld [vmem:[#allocation3 + $0x188] sm:$0xff]
          %v8310 = vld [vmem:[#allocation3 + $0x190] sm:$0xff]
          %v8311 = vld [vmem:[#allocation3 + $0x198] sm:$0xff]
          %v8312 = vld [vmem:[#allocation3 + $0x1a0] sm:$0xff]
          %v8313 = vld [vmem:[#allocation3 + $0x1a8] sm:$0xff]
          %v8314 = vld [vmem:[#allocation3 + $0x1b0] sm:$0xff]
          %v8315 = vld [vmem:[#allocation3 + $0x1b8] sm:$0xff]
          %v8316 = vld [vmem:[#allocation3 + $0x1c0] sm:$0xff]
          %v8317 = vld [vmem:[#allocation3 + $0x1c8] sm:$0xff]
          %v8318 = vld [vmem:[#allocation3 + $0x1d0] sm:$0xff]
          %v8319 = vld [vmem:[#allocation3 + $0x1d8] sm:$0xff]
          %v8320 = vld [vmem:[#allocation3 + $0x1e0] sm:$0xff]
          %v8321 = vld [vmem:[#allocation3 + $0x1e8] sm:$0xff]
          %v8322 = vld [vmem:[#allocation3 + $0x1f0] sm:$0xff]
          %v8323 = vld [vmem:[#allocation3 + $0x1f8] sm:$0xff]
          %v8324 = vld [vmem:[#allocation3 + $0x200] sm:$0xff]
          %v8325 = vld [vmem:[#allocation3 + $0x208] sm:$0xff]
          %v8326 = vld [vmem:[#allocation3 + $0x210] sm:$0xff]
          %v8327 = vld [vmem:[#allocation3 + $0x218] sm:$0xff]
          %v8328 = vld [vmem:[#allocation3 + $0x220] sm:$0xff]
          %v8329 = vld [vmem:[#allocation3 + $0x228] sm:$0xff]
          %v8330 = vld [vmem:[#allocation3 + $0x230] sm:$0xff]
          %v8331 = vld [vmem:[#allocation3 + $0x238] sm:$0xff]
          %v8332 = vld [vmem:[#allocation3 + $0x240] sm:$0xff]
          %v8333 = vld [vmem:[#allocation3 + $0x248] sm:$0xff]
          %v8334 = vld [vmem:[#allocation3 + $0x250] sm:$0xff]
          %v8335 = vld [vmem:[#allocation3 + $0x258] sm:$0xff]
          %v8336 = vld [vmem:[#allocation3 + $0x260] sm:$0xff]
          %v8337 = vld [vmem:[#allocation3 + $0x268] sm:$0xff]
          %v8338 = vld [vmem:[#allocation3 + $0x270] sm:$0xff]
          %v8339 = vld [vmem:[#allocation3 + $0x278] sm:$0xff]
          %v8340 = vld [vmem:[#allocation3 + $0x280] sm:$0xff]
          %v8341 = vld [vmem:[#allocation3 + $0x288] sm:$0xff]
          %v8342 = vld [vmem:[#allocation3 + $0x290] sm:$0xff]
          %v8343 = vld [vmem:[#allocation3 + $0x298] sm:$0xff]
          %v8344 = vld [vmem:[#allocation3 + $0x2a0] sm:$0xff]
          %v8345 = vld [vmem:[#allocation3 + $0x2a8] sm:$0xff]
          %v8346 = vld [vmem:[#allocation3 + $0x2b0] sm:$0xff]
          %v8347 = vld [vmem:[#allocation3 + $0x2b8] sm:$0xff]
          %v8348 = vld [vmem:[#allocation3 + $0x2c0] sm:$0xff]
          %v8349 = vld [vmem:[#allocation3 + $0x2c8] sm:$0xff]
          %v8350 = vld [vmem:[#allocation3 + $0x2d0] sm:$0xff]
          %v8351 = vld [vmem:[#allocation3 + $0x2d8] sm:$0xff]
          %v8352 = vld [vmem:[#allocation3 + $0x2e0] sm:$0xff]
          %v8353 = vld [vmem:[#allocation3 + $0x2e8] sm:$0xff]
          %v8354 = vld [vmem:[#allocation3 + $0x2f0] sm:$0xff]
          %v8355 = vld [vmem:[#allocation3 + $0x2f8] sm:$0xff]
          %v8356 = vld [vmem:[#allocation3 + $0x300] sm:$0xff]
          %v8357 = vld [vmem:[#allocation3 + $0x308] sm:$0xff]
          %v8358 = vld [vmem:[#allocation3 + $0x310] sm:$0xff]
          %v8359 = vld [vmem:[#allocation3 + $0x318] sm:$0xff]
          %v8360 = vld [vmem:[#allocation3 + $0x320] sm:$0xff]
          %v8361 = vld [vmem:[#allocation3 + $0x328] sm:$0xff]
          %v8362 = vld [vmem:[#allocation3 + $0x330] sm:$0xff]
          %v8363 = vld [vmem:[#allocation3 + $0x338] sm:$0xff]
          %v8364 = vld [vmem:[#allocation3 + $0x340] sm:$0xff]
          %v8365 = vld [vmem:[#allocation3 + $0x348] sm:$0xff]
          %v8366 = vld [vmem:[#allocation3 + $0x350] sm:$0xff]
          %v8367 = vld [vmem:[#allocation3 + $0x358] sm:$0xff]
          %v8368 = vld [vmem:[#allocation3 + $0x360] sm:$0xff]
          %v8369 = vld [vmem:[#allocation3 + $0x368] sm:$0xff]
          %v8370 = vld [vmem:[#allocation3 + $0x370] sm:$0xff]
          %v8371 = vld [vmem:[#allocation3 + $0x378] sm:$0xff]
          %v8372 = vadd.f32 %v8016, %v8260
          %v8373 = vadd.f32 %v8017, %v8261
          %v8374 = vadd.f32 %v8018, %v8262
          %v8375 = vadd.f32 %v8019, %v8263
          %v8376 = vadd.f32 %v8020, %v8264
          %v8377 = vadd.f32 %v8021, %v8265
          %v8378 = vadd.f32 %v8022, %v8266
          %v8379 = vadd.f32 %v8023, %v8267
          %v8380 = vadd.f32 %v8024, %v8268
          %v8381 = vadd.f32 %v8025, %v8269
          %v8382 = vadd.f32 %v8026, %v8270
          %v8383 = vadd.f32 %v8027, %v8271
          %v8384 = vadd.f32 %v8028, %v8272
          %v8385 = vadd.f32 %v8029, %v8273
          %v8386 = vadd.f32 %v8030, %v8274
          %v8387 = vadd.f32 %v8031, %v8275
          %v8388 = vadd.f32 %v8032, %v8276
          %v8389 = vadd.f32 %v8033, %v8277
          %v8390 = vadd.f32 %v8034, %v8278
          %v8391 = vadd.f32 %v8035, %v8279
          %v8392 = vadd.f32 %v8036, %v8280
          %v8393 = vadd.f32 %v8037, %v8281
          %v8394 = vadd.f32 %v8038, %v8282
          %v8395 = vadd.f32 %v8039, %v8283
          %v8396 = vadd.f32 %v8040, %v8284
          %v8397 = vadd.f32 %v8041, %v8285
          %v8398 = vadd.f32 %v8042, %v8286
          %v8399 = vadd.f32 %v8043, %v8287
          %v8400 = vadd.f32 %v8044, %v8288
          %v8401 = vadd.f32 %v8045, %v8289
          %v8402 = vadd.f32 %v8046, %v8290
          %v8403 = vadd.f32 %v8047, %v8291
          %v8404 = vadd.f32 %v8048, %v8292
          %v8405 = vadd.f32 %v8049, %v8293
          %v8406 = vadd.f32 %v8050, %v8294
          %v8407 = vadd.f32 %v8051, %v8295
          %v8408 = vadd.f32 %v8052, %v8296
          %v8409 = vadd.f32 %v8053, %v8297
          %v8410 = vadd.f32 %v8054, %v8298
          %v8411 = vadd.f32 %v8055, %v8299
          %v8412 = vadd.f32 %v8056, %v8300
          %v8413 = vadd.f32 %v8057, %v8301
          %v8414 = vadd.f32 %v8058, %v8302
          %v8415 = vadd.f32 %v8059, %v8303
          %v8416 = vadd.f32 %v8060, %v8304
          %v8417 = vadd.f32 %v8061, %v8305
          %v8418 = vadd.f32 %v8062, %v8306
          %v8419 = vadd.f32 %v8063, %v8307
          %v8420 = vadd.f32 %v8064, %v8308
          %v8421 = vadd.f32 %v8065, %v8309
          %v8422 = vadd.f32 %v8066, %v8310
          %v8423 = vadd.f32 %v8067, %v8311
          %v8424 = vadd.f32 %v8068, %v8312
          %v8425 = vadd.f32 %v8069, %v8313
          %v8426 = vadd.f32 %v8070, %v8314
          %v8427 = vadd.f32 %v8071, %v8315
          %v8428 = vadd.f32 %v8072, %v8316
          %v8429 = vadd.f32 %v8073, %v8317
          %v8430 = vadd.f32 %v8074, %v8318
          %v8431 = vadd.f32 %v8075, %v8319
          %v8432 = vadd.f32 %v8076, %v8320
          %v8433 = vadd.f32 %v8077, %v8321
          %v8434 = vadd.f32 %v8078, %v8322
          %v8435 = vadd.f32 %v8079, %v8323
          %v8436 = vadd.f32 %v8080, %v8324
          %v8437 = vadd.f32 %v8081, %v8325
          %v8438 = vadd.f32 %v8082, %v8326
          %v8439 = vadd.f32 %v8083, %v8327
          %v8440 = vadd.f32 %v8084, %v8328
          %v8441 = vadd.f32 %v8085, %v8329
          %v8442 = vadd.f32 %v8086, %v8330
          %v8443 = vadd.f32 %v8087, %v8331
          %v8444 = vadd.f32 %v8088, %v8332
          %v8445 = vadd.f32 %v8089, %v8333
          %v8446 = vadd.f32 %v8090, %v8334
          %v8447 = vadd.f32 %v8091, %v8335
          %v8448 = vadd.f32 %v8092, %v8336
          %v8449 = vadd.f32 %v8093, %v8337
          %v8450 = vadd.f32 %v8094, %v8338
          %v8451 = vadd.f32 %v8095, %v8339
          %v8452 = vadd.f32 %v8096, %v8340
          %v8453 = vadd.f32 %v8097, %v8341
          %v8454 = vadd.f32 %v8098, %v8342
          %v8455 = vadd.f32 %v8099, %v8343
          %v8456 = vadd.f32 %v8100, %v8344
          %v8457 = vadd.f32 %v8101, %v8345
          %v8458 = vadd.f32 %v8102, %v8346
          %v8459 = vadd.f32 %v8103, %v8347
          %v8460 = vadd.f32 %v8104, %v8348
          %v8461 = vadd.f32 %v8105, %v8349
          %v8462 = vadd.f32 %v8106, %v8350
          %v8463 = vadd.f32 %v8107, %v8351
          %v8464 = vadd.f32 %v8108, %v8352
          %v8465 = vadd.f32 %v8109, %v8353
          %v8466 = vadd.f32 %v8110, %v8354
          %v8467 = vadd.f32 %v8111, %v8355
          %v8468 = vadd.f32 %v8112, %v8356
          %v8469 = vadd.f32 %v8113, %v8357
          %v8470 = vadd.f32 %v8114, %v8358
          %v8471 = vadd.f32 %v8115, %v8359
          %v8472 = vadd.f32 %v8116, %v8360
          %v8473 = vadd.f32 %v8117, %v8361
          %v8474 = vadd.f32 %v8118, %v8362
          %v8475 = vadd.f32 %v8119, %v8363
          %v8476 = vadd.f32 %v8120, %v8364
          %v8477 = vadd.f32 %v8121, %v8365
          %v8478 = vadd.f32 %v8122, %v8366
          %v8479 = vadd.f32 %v8123, %v8367
          %v8480 = vadd.f32 %v8124, %v8368
          %v8481 = vadd.f32 %v8125, %v8369
          %v8482 = vadd.f32 %v8126, %v8370
          %v8483 = vadd.f32 %v8127, %v8371
          %8484 = vst [vmem:[#allocation2] sm:$0xff] %v8372
          %8485 = vst [vmem:[#allocation2 + $0x8] sm:$0xff] %v8373
          %8486 = vst [vmem:[#allocation2 + $0x10] sm:$0xff] %v8374
          %8487 = vst [vmem:[#allocation2 + $0x18] sm:$0xff] %v8375
          %8488 = vst [vmem:[#allocation2 + $0x20] sm:$0xff] %v8376
          %8489 = vst [vmem:[#allocation2 + $0x28] sm:$0xff] %v8377
          %8490 = vst [vmem:[#allocation2 + $0x30] sm:$0xff] %v8378
          %8491 = vst [vmem:[#allocation2 + $0x38] sm:$0xff] %v8379
          %8492 = vst [vmem:[#allocation2 + $0x40] sm:$0xff] %v8380
          %8493 = vst [vmem:[#allocation2 + $0x48] sm:$0xff] %v8381
          %8494 = vst [vmem:[#allocation2 + $0x50] sm:$0xff] %v8382
          %8495 = vst [vmem:[#allocation2 + $0x58] sm:$0xff] %v8383
          %8496 = vst [vmem:[#allocation2 + $0x60] sm:$0xff] %v8384
          %8497 = vst [vmem:[#allocation2 + $0x68] sm:$0xff] %v8385
          %8498 = vst [vmem:[#allocation2 + $0x70] sm:$0xff] %v8386
          %8499 = vst [vmem:[#allocation2 + $0x78] sm:$0xff] %v8387
          %8500 = vst [vmem:[#allocation2 + $0x80] sm:$0xff] %v8388
          %8501 = vst [vmem:[#allocation2 + $0x88] sm:$0xff] %v8389
          %8502 = vst [vmem:[#allocation2 + $0x90] sm:$0xff] %v8390
          %8503 = vst [vmem:[#allocation2 + $0x98] sm:$0xff] %v8391
          %8504 = vst [vmem:[#allocation2 + $0xa0] sm:$0xff] %v8392
          %8505 = vst [vmem:[#allocation2 + $0xa8] sm:$0xff] %v8393
          %8506 = vst [vmem:[#allocation2 + $0xb0] sm:$0xff] %v8394
          %8507 = vst [vmem:[#allocation2 + $0xb8] sm:$0xff] %v8395
          %8508 = vst [vmem:[#allocation2 + $0xc0] sm:$0xff] %v8396
          %8509 = vst [vmem:[#allocation2 + $0xc8] sm:$0xff] %v8397
          %8510 = vst [vmem:[#allocation2 + $0xd0] sm:$0xff] %v8398
          %8511 = vst [vmem:[#allocation2 + $0xd8] sm:$0xff] %v8399
          %8512 = vst [vmem:[#allocation2 + $0xe0] sm:$0xff] %v8400
          %8513 = vst [vmem:[#allocation2 + $0xe8] sm:$0xff] %v8401
          %8514 = vst [vmem:[#allocation2 + $0xf0] sm:$0xff] %v8402
          %8515 = vst [vmem:[#allocation2 + $0xf8] sm:$0xff] %v8403
          %8516 = vst [vmem:[#allocation2 + $0x100] sm:$0xff] %v8404
          %8517 = vst [vmem:[#allocation2 + $0x108] sm:$0xff] %v8405
          %8518 = vst [vmem:[#allocation2 + $0x110] sm:$0xff] %v8406
          %8519 = vst [vmem:[#allocation2 + $0x118] sm:$0xff] %v8407
          %8520 = vst [vmem:[#allocation2 + $0x120] sm:$0xff] %v8408
          %8521 = vst [vmem:[#allocation2 + $0x128] sm:$0xff] %v8409
          %8522 = vst [vmem:[#allocation2 + $0x130] sm:$0xff] %v8410
          %8523 = vst [vmem:[#allocation2 + $0x138] sm:$0xff] %v8411
          %8524 = vst [vmem:[#allocation2 + $0x140] sm:$0xff] %v8412
          %8525 = vst [vmem:[#allocation2 + $0x148] sm:$0xff] %v8413
          %8526 = vst [vmem:[#allocation2 + $0x150] sm:$0xff] %v8414
          %8527 = vst [vmem:[#allocation2 + $0x158] sm:$0xff] %v8415
          %8528 = vst [vmem:[#allocation2 + $0x160] sm:$0xff] %v8416
          %8529 = vst [vmem:[#allocation2 + $0x168] sm:$0xff] %v8417
          %8530 = vst [vmem:[#allocation2 + $0x170] sm:$0xff] %v8418
          %8531 = vst [vmem:[#allocation2 + $0x178] sm:$0xff] %v8419
          %8532 = vst [vmem:[#allocation2 + $0x180] sm:$0xff] %v8420
          %8533 = vst [vmem:[#allocation2 + $0x188] sm:$0xff] %v8421
          %8534 = vst [vmem:[#allocation2 + $0x190] sm:$0xff] %v8422
          %8535 = vst [vmem:[#allocation2 + $0x198] sm:$0xff] %v8423
          %8536 = vst [vmem:[#allocation2 + $0x1a0] sm:$0xff] %v8424
          %8537 = vst [vmem:[#allocation2 + $0x1a8] sm:$0xff] %v8425
          %8538 = vst [vmem:[#allocation2 + $0x1b0] sm:$0xff] %v8426
          %8539 = vst [vmem:[#allocation2 + $0x1b8] sm:$0xff] %v8427
          %8540 = vst [vmem:[#allocation2 + $0x1c0] sm:$0xff] %v8428
          %8541 = vst [vmem:[#allocation2 + $0x1c8] sm:$0xff] %v8429
          %8542 = vst [vmem:[#allocation2 + $0x1d0] sm:$0xff] %v8430
          %8543 = vst [vmem:[#allocation2 + $0x1d8] sm:$0xff] %v8431
          %8544 = vst [vmem:[#allocation2 + $0x1e0] sm:$0xff] %v8432
          %8545 = vst [vmem:[#allocation2 + $0x1e8] sm:$0xff] %v8433
          %8546 = vst [vmem:[#allocation2 + $0x1f0] sm:$0xff] %v8434
          %8547 = vst [vmem:[#allocation2 + $0x1f8] sm:$0xff] %v8435
          %8548 = vst [vmem:[#allocation2 + $0x200] sm:$0xff] %v8436
          %8549 = vst [vmem:[#allocation2 + $0x208] sm:$0xff] %v8437
          %8550 = vst [vmem:[#allocation2 + $0x210] sm:$0xff] %v8438
          %8551 = vst [vmem:[#allocation2 + $0x218] sm:$0xff] %v8439
          %8552 = vst [vmem:[#allocation2 + $0x220] sm:$0xff] %v8440
          %8553 = vst [vmem:[#allocation2 + $0x228] sm:$0xff] %v8441
          %8554 = vst [vmem:[#allocation2 + $0x230] sm:$0xff] %v8442
          %8555 = vst [vmem:[#allocation2 + $0x238] sm:$0xff] %v8443
          %8556 = vst [vmem:[#allocation2 + $0x240] sm:$0xff] %v8444
          %8557 = vst [vmem:[#allocation2 + $0x248] sm:$0xff] %v8445
          %8558 = vst [vmem:[#allocation2 + $0x250] sm:$0xff] %v8446
          %8559 = vst [vmem:[#allocation2 + $0x258] sm:$0xff] %v8447
          %8560 = vst [vmem:[#allocation2 + $0x260] sm:$0xff] %v8448
          %8561 = vst [vmem:[#allocation2 + $0x268] sm:$0xff] %v8449
          %8562 = vst [vmem:[#allocation2 + $0x270] sm:$0xff] %v8450
          %8563 = vst [vmem:[#allocation2 + $0x278] sm:$0xff] %v8451
          %8564 = vst [vmem:[#allocation2 + $0x280] sm:$0xff] %v8452
          %8565 = vst [vmem:[#allocation2 + $0x288] sm:$0xff] %v8453
          %8566 = vst [vmem:[#allocation2 + $0x290] sm:$0xff] %v8454
          %8567 = vst [vmem:[#allocation2 + $0x298] sm:$0xff] %v8455
          %8568 = vst [vmem:[#allocation2 + $0x2a0] sm:$0xff] %v8456
          %8569 = vst [vmem:[#allocation2 + $0x2a8] sm:$0xff] %v8457
          %8570 = vst [vmem:[#allocation2 + $0x2b0] sm:$0xff] %v8458
          %8571 = vst [vmem:[#allocation2 + $0x2b8] sm:$0xff] %v8459
          %8572 = vst [vmem:[#allocation2 + $0x2c0] sm:$0xff] %v8460
          %8573 = vst [vmem:[#allocation2 + $0x2c8] sm:$0xff] %v8461
          %8574 = vst [vmem:[#allocation2 + $0x2d0] sm:$0xff] %v8462
          %8575 = vst [vmem:[#allocation2 + $0x2d8] sm:$0xff] %v8463
          %8576 = vst [vmem:[#allocation2 + $0x2e0] sm:$0xff] %v8464
          %8577 = vst [vmem:[#allocation2 + $0x2e8] sm:$0xff] %v8465
          %8578 = vst [vmem:[#allocation2 + $0x2f0] sm:$0xff] %v8466
          %8579 = vst [vmem:[#allocation2 + $0x2f8] sm:$0xff] %v8467
          %8580 = vst [vmem:[#allocation2 + $0x300] sm:$0xff] %v8468
          %8581 = vst [vmem:[#allocation2 + $0x308] sm:$0xff] %v8469
          %8582 = vst [vmem:[#allocation2 + $0x310] sm:$0xff] %v8470
          %8583 = vst [vmem:[#allocation2 + $0x318] sm:$0xff] %v8471
          %8584 = vst [vmem:[#allocation2 + $0x320] sm:$0xff] %v8472
          %8585 = vst [vmem:[#allocation2 + $0x328] sm:$0xff] %v8473
          %8586 = vst [vmem:[#allocation2 + $0x330] sm:$0xff] %v8474
          %8587 = vst [vmem:[#allocation2 + $0x338] sm:$0xff] %v8475
          %8588 = vst [vmem:[#allocation2 + $0x340] sm:$0xff] %v8476
          %8589 = vst [vmem:[#allocation2 + $0x348] sm:$0xff] %v8477
          %8590 = vst [vmem:[#allocation2 + $0x350] sm:$0xff] %v8478
          %8591 = vst [vmem:[#allocation2 + $0x358] sm:$0xff] %v8479
          %8592 = vst [vmem:[#allocation2 + $0x360] sm:$0xff] %v8480
          %8593 = vst [vmem:[#allocation2 + $0x368] sm:$0xff] %v8481
          %8594 = vst [vmem:[#allocation2 + $0x370] sm:$0xff] %v8482
          %8595 = vst [vmem:[#allocation2 + $0x378] sm:$0xff] %v8483
          %8596 = vst [vmem:[#allocation3] sm:$0xff] %v8372
          %8597 = vst [vmem:[#allocation3 + $0x8] sm:$0xff] %v8373
          %8598 = vst [vmem:[#allocation3 + $0x10] sm:$0xff] %v8374
          %8599 = vst [vmem:[#allocation3 + $0x18] sm:$0xff] %v8375
          %8600 = vst [vmem:[#allocation3 + $0x20] sm:$0xff] %v8376
          %8601 = vst [vmem:[#allocation3 + $0x28] sm:$0xff] %v8377
          %8602 = vst [vmem:[#allocation3 + $0x30] sm:$0xff] %v8378
          %8603 = vst [vmem:[#allocation3 + $0x38] sm:$0xff] %v8379
          %8604 = vst [vmem:[#allocation3 + $0x40] sm:$0xff] %v8380
          %8605 = vst [vmem:[#allocation3 + $0x48] sm:$0xff] %v8381
          %8606 = vst [vmem:[#allocation3 + $0x50] sm:$0xff] %v8382
          %8607 = vst [vmem:[#allocation3 + $0x58] sm:$0xff] %v8383
          %8608 = vst [vmem:[#allocation3 + $0x60] sm:$0xff] %v8384
          %8609 = vst [vmem:[#allocation3 + $0x68] sm:$0xff] %v8385
          %8610 = vst [vmem:[#allocation3 + $0x70] sm:$0xff] %v8386
          %8611 = vst [vmem:[#allocation3 + $0x78] sm:$0xff] %v8387
          %8612 = vst [vmem:[#allocation3 + $0x80] sm:$0xff] %v8388
          %8613 = vst [vmem:[#allocation3 + $0x88] sm:$0xff] %v8389
          %8614 = vst [vmem:[#allocation3 + $0x90] sm:$0xff] %v8390
          %8615 = vst [vmem:[#allocation3 + $0x98] sm:$0xff] %v8391
          %8616 = vst [vmem:[#allocation3 + $0xa0] sm:$0xff] %v8392
          %8617 = vst [vmem:[#allocation3 + $0xa8] sm:$0xff] %v8393
          %8618 = vst [vmem:[#allocation3 + $0xb0] sm:$0xff] %v8394
          %8619 = vst [vmem:[#allocation3 + $0xb8] sm:$0xff] %v8395
          %8620 = vst [vmem:[#allocation3 + $0xc0] sm:$0xff] %v8396
          %8621 = vst [vmem:[#allocation3 + $0xc8] sm:$0xff] %v8397
          %8622 = vst [vmem:[#allocation3 + $0xd0] sm:$0xff] %v8398
          %8623 = vst [vmem:[#allocation3 + $0xd8] sm:$0xff] %v8399
          %8624 = vst [vmem:[#allocation3 + $0xe0] sm:$0xff] %v8400
          %8625 = vst [vmem:[#allocation3 + $0xe8] sm:$0xff] %v8401
          %8626 = vst [vmem:[#allocation3 + $0xf0] sm:$0xff] %v8402
          %8627 = vst [vmem:[#allocation3 + $0xf8] sm:$0xff] %v8403
          %8628 = vst [vmem:[#allocation3 + $0x100] sm:$0xff] %v8404
          %8629 = vst [vmem:[#allocation3 + $0x108] sm:$0xff] %v8405
          %8630 = vst [vmem:[#allocation3 + $0x110] sm:$0xff] %v8406
          %8631 = vst [vmem:[#allocation3 + $0x118] sm:$0xff] %v8407
          %8632 = vst [vmem:[#allocation3 + $0x120] sm:$0xff] %v8408
          %8633 = vst [vmem:[#allocation3 + $0x128] sm:$0xff] %v8409
          %8634 = vst [vmem:[#allocation3 + $0x130] sm:$0xff] %v8410
          %8635 = vst [vmem:[#allocation3 + $0x138] sm:$0xff] %v8411
          %8636 = vst [vmem:[#allocation3 + $0x140] sm:$0xff] %v8412
          %8637 = vst [vmem:[#allocation3 + $0x148] sm:$0xff] %v8413
          %8638 = vst [vmem:[#allocation3 + $0x150] sm:$0xff] %v8414
          %8639 = vst [vmem:[#allocation3 + $0x158] sm:$0xff] %v8415
          %8640 = vst [vmem:[#allocation3 + $0x160] sm:$0xff] %v8416
          %8641 = vst [vmem:[#allocation3 + $0x168] sm:$0xff] %v8417
          %8642 = vst [vmem:[#allocation3 + $0x170] sm:$0xff] %v8418
          %8643 = vst [vmem:[#allocation3 + $0x178] sm:$0xff] %v8419
          %8644 = vst [vmem:[#allocation3 + $0x180] sm:$0xff] %v8420
          %8645 = vst [vmem:[#allocation3 + $0x188] sm:$0xff] %v8421
          %8646 = vst [vmem:[#allocation3 + $0x190] sm:$0xff] %v8422
          %8647 = vst [vmem:[#allocation3 + $0x198] sm:$0xff] %v8423
          %8648 = vst [vmem:[#allocation3 + $0x1a0] sm:$0xff] %v8424
          %8649 = vst [vmem:[#allocation3 + $0x1a8] sm:$0xff] %v8425
          %8650 = vst [vmem:[#allocation3 + $0x1b0] sm:$0xff] %v8426
          %8651 = vst [vmem:[#allocation3 + $0x1b8] sm:$0xff] %v8427
          %8652 = vst [vmem:[#allocation3 + $0x1c0] sm:$0xff] %v8428
          %8653 = vst [vmem:[#allocation3 + $0x1c8] sm:$0xff] %v8429
          %8654 = vst [vmem:[#allocation3 + $0x1d0] sm:$0xff] %v8430
          %8655 = vst [vmem:[#allocation3 + $0x1d8] sm:$0xff] %v8431
          %8656 = vst [vmem:[#allocation3 + $0x1e0] sm:$0xff] %v8432
          %8657 = vst [vmem:[#allocation3 + $0x1e8] sm:$0xff] %v8433
          %8658 = vst [vmem:[#allocation3 + $0x1f0] sm:$0xff] %v8434
          %8659 = vst [vmem:[#allocation3 + $0x1f8] sm:$0xff] %v8435
          %8660 = vst [vmem:[#allocation3 + $0x200] sm:$0xff] %v8436
          %8661 = vst [vmem:[#allocation3 + $0x208] sm:$0xff] %v8437
          %8662 = vst [vmem:[#allocation3 + $0x210] sm:$0xff] %v8438
          %8663 = vst [vmem:[#allocation3 + $0x218] sm:$0xff] %v8439
          %8664 = vst [vmem:[#allocation3 + $0x220] sm:$0xff] %v8440
          %8665 = vst [vmem:[#allocation3 + $0x228] sm:$0xff] %v8441
          %8666 = vst [vmem:[#allocation3 + $0x230] sm:$0xff] %v8442
          %8667 = vst [vmem:[#allocation3 + $0x238] sm:$0xff] %v8443
          %8668 = vst [vmem:[#allocation3 + $0x240] sm:$0xff] %v8444
          %8669 = vst [vmem:[#allocation3 + $0x248] sm:$0xff] %v8445
          %8670 = vst [vmem:[#allocation3 + $0x250] sm:$0xff] %v8446
          %8671 = vst [vmem:[#allocation3 + $0x258] sm:$0xff] %v8447
          %8672 = vst [vmem:[#allocation3 + $0x260] sm:$0xff] %v8448
          %8673 = vst [vmem:[#allocation3 + $0x268] sm:$0xff] %v8449
          %8674 = vst [vmem:[#allocation3 + $0x270] sm:$0xff] %v8450
          %8675 = vst [vmem:[#allocation3 + $0x278] sm:$0xff] %v8451
          %8676 = vst [vmem:[#allocation3 + $0x280] sm:$0xff] %v8452
          %8677 = vst [vmem:[#allocation3 + $0x288] sm:$0xff] %v8453
          %8678 = vst [vmem:[#allocation3 + $0x290] sm:$0xff] %v8454
          %8679 = vst [vmem:[#allocation3 + $0x298] sm:$0xff] %v8455
          %8680 = vst [vmem:[#allocation3 + $0x2a0] sm:$0xff] %v8456
          %8681 = vst [vmem:[#allocation3 + $0x2a8] sm:$0xff] %v8457
          %8682 = vst [vmem:[#allocation3 + $0x2b0] sm:$0xff] %v8458
          %8683 = vst [vmem:[#allocation3 + $0x2b8] sm:$0xff] %v8459
          %8684 = vst [vmem:[#allocation3 + $0x2c0] sm:$0xff] %v8460
          %8685 = vst [vmem:[#allocation3 + $0x2c8] sm:$0xff] %v8461
          %8686 = vst [vmem:[#allocation3 + $0x2d0] sm:$0xff] %v8462
          %8687 = vst [vmem:[#allocation3 + $0x2d8] sm:$0xff] %v8463
          %8688 = vst [vmem:[#allocation3 + $0x2e0] sm:$0xff] %v8464
          %8689 = vst [vmem:[#allocation3 + $0x2e8] sm:$0xff] %v8465
          %8690 = vst [vmem:[#allocation3 + $0x2f0] sm:$0xff] %v8466
          %8691 = vst [vmem:[#allocation3 + $0x2f8] sm:$0xff] %v8467
          %8692 = vst [vmem:[#allocation3 + $0x300] sm:$0xff] %v8468
          %8693 = vst [vmem:[#allocation3 + $0x308] sm:$0xff] %v8469
          %8694 = vst [vmem:[#allocation3 + $0x310] sm:$0xff] %v8470
          %8695 = vst [vmem:[#allocation3 + $0x318] sm:$0xff] %v8471
          %8696 = vst [vmem:[#allocation3 + $0x320] sm:$0xff] %v8472
          %8697 = vst [vmem:[#allocation3 + $0x328] sm:$0xff] %v8473
          %8698 = vst [vmem:[#allocation3 + $0x330] sm:$0xff] %v8474
          %8699 = vst [vmem:[#allocation3 + $0x338] sm:$0xff] %v8475
          %8700 = vst [vmem:[#allocation3 + $0x340] sm:$0xff] %v8476
          %8701 = vst [vmem:[#allocation3 + $0x348] sm:$0xff] %v8477
          %8702 = vst [vmem:[#allocation3 + $0x350] sm:$0xff] %v8478
          %8703 = vst [vmem:[#allocation3 + $0x358] sm:$0xff] %v8479
          %8704 = vst [vmem:[#allocation3 + $0x360] sm:$0xff] %v8480
          %8705 = vst [vmem:[#allocation3 + $0x368] sm:$0xff] %v8481
          %8706 = vst [vmem:[#allocation3 + $0x370] sm:$0xff] %v8482
          %8707 = vst [vmem:[#allocation3 + $0x378] sm:$0xff] %v8483
        $region92: #{generator_forward.3} parent=51 // pred_fallthru
          _
        %p8708 = scmp.eq.s32.totalorder %s22, 5
        // Predicated region
        $region93: #{generator_forward.3} parent=51 // pred_check
          %p8709 = pneg %p8708
        $region94: #{generator_forward.3} parent=51 // pred_check_branch
          %8711 = sbr.rel (%p8709) target = $region96
        $region95: #{generator_forward.3} parent=51 // pred_region
          %v8712 = vld [vmem:[#allocation2] sm:$0xff]
          %v8713 = vld [vmem:[#allocation2 + $0x8] sm:$0xff]
          %v8714 = vld [vmem:[#allocation2 + $0x10] sm:$0xff]
          %v8715 = vld [vmem:[#allocation2 + $0x18] sm:$0xff]
          %v8716 = vld [vmem:[#allocation2 + $0x20] sm:$0xff]
          %v8717 = vld [vmem:[#allocation2 + $0x28] sm:$0xff]
          %v8718 = vld [vmem:[#allocation2 + $0x30] sm:$0xff]
          %v8719 = vld [vmem:[#allocation2 + $0x38] sm:$0xff]
          %v8720 = vld [vmem:[#allocation2 + $0x40] sm:$0xff]
          %v8721 = vld [vmem:[#allocation2 + $0x48] sm:$0xff]
          %v8722 = vld [vmem:[#allocation2 + $0x50] sm:$0xff]
          %v8723 = vld [vmem:[#allocation2 + $0x58] sm:$0xff]
          %v8724 = vld [vmem:[#allocation2 + $0x60] sm:$0xff]
          %v8725 = vld [vmem:[#allocation2 + $0x68] sm:$0xff]
          %v8726 = vld [vmem:[#allocation2 + $0x70] sm:$0xff]
          %v8727 = vld [vmem:[#allocation2 + $0x78] sm:$0xff]
          %v8728 = vld [vmem:[#allocation2 + $0x80] sm:$0xff]
          %v8729 = vld [vmem:[#allocation2 + $0x88] sm:$0xff]
          %v8730 = vld [vmem:[#allocation2 + $0x90] sm:$0xff]
          %v8731 = vld [vmem:[#allocation2 + $0x98] sm:$0xff]
          %v8732 = vld [vmem:[#allocation2 + $0xa0] sm:$0xff]
          %v8733 = vld [vmem:[#allocation2 + $0xa8] sm:$0xff]
          %v8734 = vld [vmem:[#allocation2 + $0xb0] sm:$0xff]
          %v8735 = vld [vmem:[#allocation2 + $0xb8] sm:$0xff]
          %v8736 = vld [vmem:[#allocation2 + $0xc0] sm:$0xff]
          %v8737 = vld [vmem:[#allocation2 + $0xc8] sm:$0xff]
          %v8738 = vld [vmem:[#allocation2 + $0xd0] sm:$0xff]
          %v8739 = vld [vmem:[#allocation2 + $0xd8] sm:$0xff]
          %v8740 = vld [vmem:[#allocation2 + $0xe0] sm:$0xff]
          %v8741 = vld [vmem:[#allocation2 + $0xe8] sm:$0xff]
          %v8742 = vld [vmem:[#allocation2 + $0xf0] sm:$0xff]
          %v8743 = vld [vmem:[#allocation2 + $0xf8] sm:$0xff]
          %v8744 = vld [vmem:[#allocation2 + $0x100] sm:$0xff]
          %v8745 = vld [vmem:[#allocation2 + $0x108] sm:$0xff]
          %v8746 = vld [vmem:[#allocation2 + $0x110] sm:$0xff]
          %v8747 = vld [vmem:[#allocation2 + $0x118] sm:$0xff]
          %v8748 = vld [vmem:[#allocation2 + $0x120] sm:$0xff]
          %v8749 = vld [vmem:[#allocation2 + $0x128] sm:$0xff]
          %v8750 = vld [vmem:[#allocation2 + $0x130] sm:$0xff]
          %v8751 = vld [vmem:[#allocation2 + $0x138] sm:$0xff]
          %v8752 = vld [vmem:[#allocation2 + $0x140] sm:$0xff]
          %v8753 = vld [vmem:[#allocation2 + $0x148] sm:$0xff]
          %v8754 = vld [vmem:[#allocation2 + $0x150] sm:$0xff]
          %v8755 = vld [vmem:[#allocation2 + $0x158] sm:$0xff]
          %v8756 = vld [vmem:[#allocation2 + $0x160] sm:$0xff]
          %v8757 = vld [vmem:[#allocation2 + $0x168] sm:$0xff]
          %v8758 = vld [vmem:[#allocation2 + $0x170] sm:$0xff]
          %v8759 = vld [vmem:[#allocation2 + $0x178] sm:$0xff]
          %v8760 = vld [vmem:[#allocation2 + $0x180] sm:$0xff]
          %v8761 = vld [vmem:[#allocation2 + $0x188] sm:$0xff]
          %v8762 = vld [vmem:[#allocation2 + $0x190] sm:$0xff]
          %v8763 = vld [vmem:[#allocation2 + $0x198] sm:$0xff]
          %v8764 = vld [vmem:[#allocation2 + $0x1a0] sm:$0xff]
          %v8765 = vld [vmem:[#allocation2 + $0x1a8] sm:$0xff]
          %v8766 = vld [vmem:[#allocation2 + $0x1b0] sm:$0xff]
          %v8767 = vld [vmem:[#allocation2 + $0x1b8] sm:$0xff]
          %v8768 = vld [vmem:[#allocation2 + $0x1c0] sm:$0xff]
          %v8769 = vld [vmem:[#allocation2 + $0x1c8] sm:$0xff]
          %v8770 = vld [vmem:[#allocation2 + $0x1d0] sm:$0xff]
          %v8771 = vld [vmem:[#allocation2 + $0x1d8] sm:$0xff]
          %v8772 = vld [vmem:[#allocation2 + $0x1e0] sm:$0xff]
          %v8773 = vld [vmem:[#allocation2 + $0x1e8] sm:$0xff]
          %v8774 = vld [vmem:[#allocation2 + $0x1f0] sm:$0xff]
          %v8775 = vld [vmem:[#allocation2 + $0x1f8] sm:$0xff]
          %v8776 = vld [vmem:[#allocation2 + $0x200] sm:$0xff]
          %v8777 = vld [vmem:[#allocation2 + $0x208] sm:$0xff]
          %v8778 = vld [vmem:[#allocation2 + $0x210] sm:$0xff]
          %v8779 = vld [vmem:[#allocation2 + $0x218] sm:$0xff]
          %v8780 = vld [vmem:[#allocation2 + $0x220] sm:$0xff]
          %v8781 = vld [vmem:[#allocation2 + $0x228] sm:$0xff]
          %v8782 = vld [vmem:[#allocation2 + $0x230] sm:$0xff]
          %v8783 = vld [vmem:[#allocation2 + $0x238] sm:$0xff]
          %v8784 = vld [vmem:[#allocation2 + $0x240] sm:$0xff]
          %v8785 = vld [vmem:[#allocation2 + $0x248] sm:$0xff]
          %v8786 = vld [vmem:[#allocation2 + $0x250] sm:$0xff]
          %v8787 = vld [vmem:[#allocation2 + $0x258] sm:$0xff]
          %v8788 = vld [vmem:[#allocation2 + $0x260] sm:$0xff]
          %v8789 = vld [vmem:[#allocation2 + $0x268] sm:$0xff]
          %v8790 = vld [vmem:[#allocation2 + $0x270] sm:$0xff]
          %v8791 = vld [vmem:[#allocation2 + $0x278] sm:$0xff]
          %v8792 = vld [vmem:[#allocation2 + $0x280] sm:$0xff]
          %v8793 = vld [vmem:[#allocation2 + $0x288] sm:$0xff]
          %v8794 = vld [vmem:[#allocation2 + $0x290] sm:$0xff]
          %v8795 = vld [vmem:[#allocation2 + $0x298] sm:$0xff]
          %v8796 = vld [vmem:[#allocation2 + $0x2a0] sm:$0xff]
          %v8797 = vld [vmem:[#allocation2 + $0x2a8] sm:$0xff]
          %v8798 = vld [vmem:[#allocation2 + $0x2b0] sm:$0xff]
          %v8799 = vld [vmem:[#allocation2 + $0x2b8] sm:$0xff]
          %v8800 = vld [vmem:[#allocation2 + $0x2c0] sm:$0xff]
          %v8801 = vld [vmem:[#allocation2 + $0x2c8] sm:$0xff]
          %v8802 = vld [vmem:[#allocation2 + $0x2d0] sm:$0xff]
          %v8803 = vld [vmem:[#allocation2 + $0x2d8] sm:$0xff]
          %v8804 = vld [vmem:[#allocation2 + $0x2e0] sm:$0xff]
          %v8805 = vld [vmem:[#allocation2 + $0x2e8] sm:$0xff]
          %v8806 = vld [vmem:[#allocation2 + $0x2f0] sm:$0xff]
          %v8807 = vld [vmem:[#allocation2 + $0x2f8] sm:$0xff]
          %v8808 = vld [vmem:[#allocation2 + $0x300] sm:$0xff]
          %v8809 = vld [vmem:[#allocation2 + $0x308] sm:$0xff]
          %v8810 = vld [vmem:[#allocation2 + $0x310] sm:$0xff]
          %v8811 = vld [vmem:[#allocation2 + $0x318] sm:$0xff]
          %v8812 = vld [vmem:[#allocation2 + $0x320] sm:$0xff]
          %v8813 = vld [vmem:[#allocation2 + $0x328] sm:$0xff]
          %v8814 = vld [vmem:[#allocation2 + $0x330] sm:$0xff]
          %v8815 = vld [vmem:[#allocation2 + $0x338] sm:$0xff]
          %v8816 = vld [vmem:[#allocation2 + $0x340] sm:$0xff]
          %v8817 = vld [vmem:[#allocation2 + $0x348] sm:$0xff]
          %v8818 = vld [vmem:[#allocation2 + $0x350] sm:$0xff]
          %v8819 = vld [vmem:[#allocation2 + $0x358] sm:$0xff]
          %v8820 = vld [vmem:[#allocation2 + $0x360] sm:$0xff]
          %v8821 = vld [vmem:[#allocation2 + $0x368] sm:$0xff]
          %v8822 = vld [vmem:[#allocation2 + $0x370] sm:$0xff]
          %v8823 = vld [vmem:[#allocation2 + $0x378] sm:$0xff]
          %v8824 = vpack.c.bf16 %v8720, %v8712
          %v8825 = vpack.c.bf16 %v8721, %v8713
          %v8826 = vpack.c.bf16 %v8722, %v8714
          %v8827 = vpack.c.bf16 %v8723, %v8715
          %v8828 = vpack.c.bf16 %v8724, %v8716
          %v8829 = vpack.c.bf16 %v8725, %v8717
          %v8830 = vpack.c.bf16 %v8726, %v8718
          %v8831 = vpack.c.bf16 %v8727, %v8719
          %v8832 = vpack.c.bf16 %v8736, %v8728
          %v8833 = vpack.c.bf16 %v8737, %v8729
          %v8834 = vpack.c.bf16 %v8738, %v8730
          %v8835 = vpack.c.bf16 %v8739, %v8731
          %v8836 = vpack.c.bf16 %v8740, %v8732
          %v8837 = vpack.c.bf16 %v8741, %v8733
          %v8838 = vpack.c.bf16 %v8742, %v8734
          %v8839 = vpack.c.bf16 %v8743, %v8735
          %v8840 = vpack.c.bf16 %v8752, %v8744
          %v8841 = vpack.c.bf16 %v8753, %v8745
          %v8842 = vpack.c.bf16 %v8754, %v8746
          %v8843 = vpack.c.bf16 %v8755, %v8747
          %v8844 = vpack.c.bf16 %v8756, %v8748
          %v8845 = vpack.c.bf16 %v8757, %v8749
          %v8846 = vpack.c.bf16 %v8758, %v8750
          %v8847 = vpack.c.bf16 %v8759, %v8751
          %v8848 = vpack.c.bf16 %v8768, %v8760
          %v8849 = vpack.c.bf16 %v8769, %v8761
          %v8850 = vpack.c.bf16 %v8770, %v8762
          %v8851 = vpack.c.bf16 %v8771, %v8763
          %v8852 = vpack.c.bf16 %v8772, %v8764
          %v8853 = vpack.c.bf16 %v8773, %v8765
          %v8854 = vpack.c.bf16 %v8774, %v8766
          %v8855 = vpack.c.bf16 %v8775, %v8767
          %v8856 = vpack.c.bf16 %v8784, %v8776
          %v8857 = vpack.c.bf16 %v8785, %v8777
          %v8858 = vpack.c.bf16 %v8786, %v8778
          %v8859 = vpack.c.bf16 %v8787, %v8779
          %v8860 = vpack.c.bf16 %v8788, %v8780
          %v8861 = vpack.c.bf16 %v8789, %v8781
          %v8862 = vpack.c.bf16 %v8790, %v8782
          %v8863 = vpack.c.bf16 %v8791, %v8783
          %v8864 = vpack.c.bf16 %v8800, %v8792
          %v8865 = vpack.c.bf16 %v8801, %v8793
          %v8866 = vpack.c.bf16 %v8802, %v8794
          %v8867 = vpack.c.bf16 %v8803, %v8795
          %v8868 = vpack.c.bf16 %v8804, %v8796
          %v8869 = vpack.c.bf16 %v8805, %v8797
          %v8870 = vpack.c.bf16 %v8806, %v8798
          %v8871 = vpack.c.bf16 %v8807, %v8799
          %v8872 = vpack.c.bf16 %v8816, %v8808
          %v8873 = vpack.c.bf16 %v8817, %v8809
          %v8874 = vpack.c.bf16 %v8818, %v8810
          %v8875 = vpack.c.bf16 %v8819, %v8811
          %v8876 = vpack.c.bf16 %v8820, %v8812
          %v8877 = vpack.c.bf16 %v8821, %v8813
          %v8878 = vpack.c.bf16 %v8822, %v8814
          %v8879 = vpack.c.bf16 %v8823, %v8815
          %v8880 = vld [vmem:[#allocation11] sm:$0xf]
          %v8881 = vld [vmem:[#allocation11 + $0x4] sm:$0xf]
          %v8882 = vld [vmem:[#allocation11 + $0x8] sm:$0xf]
          %v8883 = vld [vmem:[#allocation11 + $0xc] sm:$0xf]
          %v8884 = vld [vmem:[#allocation11 + $0x10] sm:$0xf]
          %v8885 = vld [vmem:[#allocation11 + $0x14] sm:$0xf]
          %v8886 = vld [vmem:[#allocation11 + $0x18] sm:$0xf]
          %v8887 = vld [vmem:[#allocation11 + $0x1c] sm:$0xf]
          %v8888 = vld [vmem:[#allocation11 + $0x20] sm:$0xf]
          %v8889 = vld [vmem:[#allocation11 + $0x24] sm:$0xf]
          %v8890 = vld [vmem:[#allocation11 + $0x28] sm:$0xf]
          %v8891 = vld [vmem:[#allocation11 + $0x2c] sm:$0xf]
          %v8892 = vld [vmem:[#allocation11 + $0x30] sm:$0xf]
          %v8893 = vld [vmem:[#allocation11 + $0x34] sm:$0xf]
          %v8894 = vld [vmem:[#allocation11 + $0x38] sm:$0xf]
          %v8895 = vld [vmem:[#allocation11 + $0x3c] sm:$0xf]
          %v8896 = vld [vmem:[#allocation11 + $0x40] sm:$0xf]
          %v8897 = vld [vmem:[#allocation11 + $0x44] sm:$0xf]
          %v8898 = vld [vmem:[#allocation11 + $0x48] sm:$0xf]
          %v8899 = vld [vmem:[#allocation11 + $0x4c] sm:$0xf]
          %v8900 = vld [vmem:[#allocation11 + $0x50] sm:$0xf]
          %v8901 = vld [vmem:[#allocation11 + $0x54] sm:$0xf]
          %v8902 = vld [vmem:[#allocation11 + $0x58] sm:$0xf]
          %v8903 = vld [vmem:[#allocation11 + $0x5c] sm:$0xf]
          %v8904 = vld [vmem:[#allocation11 + $0x60] sm:$0xf]
          %v8905 = vld [vmem:[#allocation11 + $0x64] sm:$0xf]
          %v8906 = vld [vmem:[#allocation11 + $0x68] sm:$0xf]
          %v8907 = vld [vmem:[#allocation11 + $0x6c] sm:$0xf]
          %v8908 = vld [vmem:[#allocation11 + $0x70] sm:$0xf]
          %v8909 = vld [vmem:[#allocation11 + $0x74] sm:$0xf]
          %v8910 = vld [vmem:[#allocation11 + $0x78] sm:$0xf]
          %v8911 = vld [vmem:[#allocation11 + $0x7c] sm:$0xf]
          %v8912 = vld [vmem:[#allocation11 + $0x80] sm:$0xf]
          %v8913 = vld [vmem:[#allocation11 + $0x84] sm:$0xf]
          %v8914 = vld [vmem:[#allocation11 + $0x88] sm:$0xf]
          %v8915 = vld [vmem:[#allocation11 + $0x8c] sm:$0xf]
          %v8916 = vld [vmem:[#allocation11 + $0x90] sm:$0xf]
          %v8917 = vld [vmem:[#allocation11 + $0x94] sm:$0xf]
          %v8918 = vld [vmem:[#allocation11 + $0x98] sm:$0xf]
          %v8919 = vld [vmem:[#allocation11 + $0x9c] sm:$0xf]
          %v8920 = vld [vmem:[#allocation11 + $0xa0] sm:$0xf]
          %v8921 = vld [vmem:[#allocation11 + $0xa4] sm:$0xf]
          %v8922 = vld [vmem:[#allocation11 + $0xa8] sm:$0xf]
          %v8923 = vld [vmem:[#allocation11 + $0xac] sm:$0xf]
          %v8924 = vld [vmem:[#allocation11 + $0xb0] sm:$0xf]
          %v8925 = vld [vmem:[#allocation11 + $0xb4] sm:$0xf]
          %v8926 = vld [vmem:[#allocation11 + $0xb8] sm:$0xf]
          %v8927 = vld [vmem:[#allocation11 + $0xbc] sm:$0xf]
          %v8928 = vld [vmem:[#allocation11 + $0xc0] sm:$0xf]
          %v8929 = vld [vmem:[#allocation11 + $0xc4] sm:$0xf]
          %v8930 = vld [vmem:[#allocation11 + $0xc8] sm:$0xf]
          %v8931 = vld [vmem:[#allocation11 + $0xcc] sm:$0xf]
          %v8932 = vld [vmem:[#allocation11 + $0xd0] sm:$0xf]
          %v8933 = vld [vmem:[#allocation11 + $0xd4] sm:$0xf]
          %v8934 = vld [vmem:[#allocation11 + $0xd8] sm:$0xf]
          %v8935 = vld [vmem:[#allocation11 + $0xdc] sm:$0xf]
          %v8936 = vld [vmem:[#allocation11 + $0xe0] sm:$0xf]
          %v8937 = vld [vmem:[#allocation11 + $0xe4] sm:$0xf]
          %v8938 = vld [vmem:[#allocation11 + $0xe8] sm:$0xf]
          %v8939 = vld [vmem:[#allocation11 + $0xec] sm:$0xf]
          %v8940 = vld [vmem:[#allocation11 + $0xf0] sm:$0xf]
          %v8941 = vld [vmem:[#allocation11 + $0xf4] sm:$0xf]
          %v8942 = vld [vmem:[#allocation11 + $0xf8] sm:$0xf]
          %v8943 = vld [vmem:[#allocation11 + $0xfc] sm:$0xf]
          %v8944 = vld [vmem:[#allocation11 + $0x100] sm:$0xf]
          %v8945 = vld [vmem:[#allocation11 + $0x104] sm:$0xf]
          %v8946 = vld [vmem:[#allocation11 + $0x108] sm:$0xf]
          %v8947 = vld [vmem:[#allocation11 + $0x10c] sm:$0xf]
          %v8948 = vld [vmem:[#allocation11 + $0x110] sm:$0xf]
          %v8949 = vld [vmem:[#allocation11 + $0x114] sm:$0xf]
          %v8950 = vld [vmem:[#allocation11 + $0x118] sm:$0xf]
          %v8951 = vld [vmem:[#allocation11 + $0x11c] sm:$0xf]
          %v8952 = vld [vmem:[#allocation11 + $0x120] sm:$0xf]
          %v8953 = vld [vmem:[#allocation11 + $0x124] sm:$0xf]
          %v8954 = vld [vmem:[#allocation11 + $0x128] sm:$0xf]
          %v8955 = vld [vmem:[#allocation11 + $0x12c] sm:$0xf]
          %v8956 = vld [vmem:[#allocation11 + $0x130] sm:$0xf]
          %v8957 = vld [vmem:[#allocation11 + $0x134] sm:$0xf]
          %v8958 = vld [vmem:[#allocation11 + $0x138] sm:$0xf]
          %v8959 = vld [vmem:[#allocation11 + $0x13c] sm:$0xf]
          %v8960 = vld [vmem:[#allocation11 + $0x140] sm:$0xf]
          %v8961 = vld [vmem:[#allocation11 + $0x144] sm:$0xf]
          %v8962 = vld [vmem:[#allocation11 + $0x148] sm:$0xf]
          %v8963 = vld [vmem:[#allocation11 + $0x14c] sm:$0xf]
          %v8964 = vld [vmem:[#allocation11 + $0x150] sm:$0xf]
          %v8965 = vld [vmem:[#allocation11 + $0x154] sm:$0xf]
          %v8966 = vld [vmem:[#allocation11 + $0x158] sm:$0xf]
          %v8967 = vld [vmem:[#allocation11 + $0x15c] sm:$0xf]
          %v8968 = vld [vmem:[#allocation11 + $0x160] sm:$0xf]
          %v8969 = vld [vmem:[#allocation11 + $0x164] sm:$0xf]
          %v8970 = vld [vmem:[#allocation11 + $0x168] sm:$0xf]
          %v8971 = vld [vmem:[#allocation11 + $0x16c] sm:$0xf]
          %v8972 = vld [vmem:[#allocation11 + $0x170] sm:$0xf]
          %v8973 = vld [vmem:[#allocation11 + $0x174] sm:$0xf]
          %v8974 = vld [vmem:[#allocation11 + $0x178] sm:$0xf]
          %v8975 = vld [vmem:[#allocation11 + $0x17c] sm:$0xf]
          %v8976 = vld [vmem:[#allocation11 + $0x180] sm:$0xf]
          %v8977 = vld [vmem:[#allocation11 + $0x184] sm:$0xf]
          %v8978 = vld [vmem:[#allocation11 + $0x188] sm:$0xf]
          %v8979 = vld [vmem:[#allocation11 + $0x18c] sm:$0xf]
          %v8980 = vld [vmem:[#allocation11 + $0x190] sm:$0xf]
          %v8981 = vld [vmem:[#allocation11 + $0x194] sm:$0xf]
          %v8982 = vld [vmem:[#allocation11 + $0x198] sm:$0xf]
          %v8983 = vld [vmem:[#allocation11 + $0x19c] sm:$0xf]
          %v8984 = vld [vmem:[#allocation11 + $0x1a0] sm:$0xf]
          %v8985 = vld [vmem:[#allocation11 + $0x1a4] sm:$0xf]
          %v8986 = vld [vmem:[#allocation11 + $0x1a8] sm:$0xf]
          %v8987 = vld [vmem:[#allocation11 + $0x1ac] sm:$0xf]
          %v8988 = vld [vmem:[#allocation11 + $0x1b0] sm:$0xf]
          %v8989 = vld [vmem:[#allocation11 + $0x1b4] sm:$0xf]
          %v8990 = vld [vmem:[#allocation11 + $0x1b8] sm:$0xf]
          %v8991 = vld [vmem:[#allocation11 + $0x1bc] sm:$0xf]
          %v8992 = vld [vmem:[#allocation11 + $0x1c0] sm:$0xf]
          %v8993 = vld [vmem:[#allocation11 + $0x1c4] sm:$0xf]
          %v8994 = vld [vmem:[#allocation11 + $0x1c8] sm:$0xf]
          %v8995 = vld [vmem:[#allocation11 + $0x1cc] sm:$0xf]
          %v8996 = vld [vmem:[#allocation11 + $0x1d0] sm:$0xf]
          %v8997 = vld [vmem:[#allocation11 + $0x1d4] sm:$0xf]
          %v8998 = vld [vmem:[#allocation11 + $0x1d8] sm:$0xf]
          %v8999 = vld [vmem:[#allocation11 + $0x1dc] sm:$0xf]
          %v9000 = vld [vmem:[#allocation11 + $0x1e0] sm:$0xf]
          %v9001 = vld [vmem:[#allocation11 + $0x1e4] sm:$0xf]
          %v9002 = vld [vmem:[#allocation11 + $0x1e8] sm:$0xf]
          %v9003 = vld [vmem:[#allocation11 + $0x1ec] sm:$0xf]
          %v9004 = vld [vmem:[#allocation11 + $0x1f0] sm:$0xf]
          %v9005 = vld [vmem:[#allocation11 + $0x1f4] sm:$0xf]
          %v9006 = vld [vmem:[#allocation11 + $0x1f8] sm:$0xf]
          %v9007 = vld [vmem:[#allocation11 + $0x1fc] sm:$0xf]
          %v9008 = vld [vmem:[#allocation12] sm:$0x1]
          %v9010 = vlaneseq
          %v9011 = vshrl.u32 %v9010, 7
          %v9012 = vsub.s32 0, %v9011
          %v9013 = vrot.slane %v9008, %v9012
          %v9143 = vunpack.c.l.b16 %v8880
          %v9144 = vunpack.c.l.b16 %v8881
          %v9145 = vunpack.c.l.b16 %v8882
          %v9146 = vunpack.c.l.b16 %v8883
          %v9147 = vunpack.c.l.b16 %v8884
          %v9148 = vunpack.c.l.b16 %v8885
          %v9149 = vunpack.c.l.b16 %v8886
          %v9150 = vunpack.c.l.b16 %v8887
          %v9151 = vunpack.c.l.b16 %v8888
          %v9152 = vunpack.c.l.b16 %v8889
          %v9153 = vunpack.c.l.b16 %v8890
          %v9154 = vunpack.c.l.b16 %v8891
          %v9155 = vunpack.c.l.b16 %v8892
          %v9156 = vunpack.c.l.b16 %v8893
          %v9157 = vunpack.c.l.b16 %v8894
          %v9158 = vunpack.c.l.b16 %v8895
          %v9159 = vunpack.c.l.b16 %v8896
          %v9160 = vunpack.c.l.b16 %v8897
          %v9161 = vunpack.c.l.b16 %v8898
          %v9162 = vunpack.c.l.b16 %v8899
          %v9163 = vunpack.c.l.b16 %v8900
          %v9164 = vunpack.c.l.b16 %v8901
          %v9165 = vunpack.c.l.b16 %v8902
          %v9166 = vunpack.c.l.b16 %v8903
          %v9167 = vunpack.c.l.b16 %v8904
          %v9168 = vunpack.c.l.b16 %v8905
          %v9169 = vunpack.c.l.b16 %v8906
          %v9170 = vunpack.c.l.b16 %v8907
          %v9171 = vunpack.c.l.b16 %v8908
          %v9172 = vunpack.c.l.b16 %v8909
          %v9173 = vunpack.c.l.b16 %v8910
          %v9174 = vunpack.c.l.b16 %v8911
          %v9175 = vunpack.c.l.b16 %v8912
          %v9176 = vunpack.c.l.b16 %v8913
          %v9177 = vunpack.c.l.b16 %v8914
          %v9178 = vunpack.c.l.b16 %v8915
          %v9179 = vunpack.c.l.b16 %v8916
          %v9180 = vunpack.c.l.b16 %v8917
          %v9181 = vunpack.c.l.b16 %v8918
          %v9182 = vunpack.c.l.b16 %v8919
          %v9183 = vunpack.c.l.b16 %v8920
          %v9184 = vunpack.c.l.b16 %v8921
          %v9185 = vunpack.c.l.b16 %v8922
          %v9186 = vunpack.c.l.b16 %v8923
          %v9187 = vunpack.c.l.b16 %v8924
          %v9188 = vunpack.c.l.b16 %v8925
          %v9189 = vunpack.c.l.b16 %v8926
          %v9190 = vunpack.c.l.b16 %v8927
          %v9191 = vunpack.c.l.b16 %v8928
          %v9192 = vunpack.c.l.b16 %v8929
          %v9193 = vunpack.c.l.b16 %v8930
          %v9194 = vunpack.c.l.b16 %v8931
          %v9195 = vunpack.c.l.b16 %v8932
          %v9196 = vunpack.c.l.b16 %v8933
          %v9197 = vunpack.c.l.b16 %v8934
          %v9198 = vunpack.c.l.b16 %v8935
          %v9199 = vunpack.c.l.b16 %v8936
          %v9200 = vunpack.c.l.b16 %v8937
          %v9201 = vunpack.c.l.b16 %v8938
          %v9202 = vunpack.c.l.b16 %v8939
          %v9203 = vunpack.c.l.b16 %v8940
          %v9204 = vunpack.c.l.b16 %v8941
          %v9205 = vunpack.c.l.b16 %v8942
          %v9206 = vunpack.c.l.b16 %v8943
          %v9207 = vunpack.c.l.b16 %v8944
          %v9208 = vunpack.c.l.b16 %v8945
          %v9209 = vunpack.c.l.b16 %v8946
          %v9210 = vunpack.c.l.b16 %v8947
          %v9211 = vunpack.c.l.b16 %v8948
          %v9212 = vunpack.c.l.b16 %v8949
          %v9213 = vunpack.c.l.b16 %v8950
          %v9214 = vunpack.c.l.b16 %v8951
          %v9215 = vunpack.c.l.b16 %v8952
          %v9216 = vunpack.c.l.b16 %v8953
          %v9217 = vunpack.c.l.b16 %v8954
          %v9218 = vunpack.c.l.b16 %v8955
          %v9219 = vunpack.c.l.b16 %v8956
          %v9220 = vunpack.c.l.b16 %v8957
          %v9221 = vunpack.c.l.b16 %v8958
          %v9222 = vunpack.c.l.b16 %v8959
          %v9223 = vunpack.c.l.b16 %v8960
          %v9224 = vunpack.c.l.b16 %v8961
          %v9225 = vunpack.c.l.b16 %v8962
          %v9226 = vunpack.c.l.b16 %v8963
          %v9227 = vunpack.c.l.b16 %v8964
          %v9228 = vunpack.c.l.b16 %v8965
          %v9229 = vunpack.c.l.b16 %v8966
          %v9230 = vunpack.c.l.b16 %v8967
          %v9231 = vunpack.c.l.b16 %v8968
          %v9232 = vunpack.c.l.b16 %v8969
          %v9233 = vunpack.c.l.b16 %v8970
          %v9234 = vunpack.c.l.b16 %v8971
          %v9235 = vunpack.c.l.b16 %v8972
          %v9236 = vunpack.c.l.b16 %v8973
          %v9237 = vunpack.c.l.b16 %v8974
          %v9238 = vunpack.c.l.b16 %v8975
          %v9239 = vunpack.c.l.b16 %v8976
          %v9240 = vunpack.c.l.b16 %v8977
          %v9241 = vunpack.c.l.b16 %v8978
          %v9242 = vunpack.c.l.b16 %v8979
          %v9243 = vunpack.c.l.b16 %v8980
          %v9244 = vunpack.c.l.b16 %v8981
          %v9245 = vunpack.c.l.b16 %v8982
          %v9246 = vunpack.c.l.b16 %v8983
          %v9247 = vunpack.c.l.b16 %v8984
          %v9248 = vunpack.c.l.b16 %v8985
          %v9249 = vunpack.c.l.b16 %v8986
          %v9250 = vunpack.c.l.b16 %v8987
          %v9251 = vunpack.c.l.b16 %v8988
          %v9252 = vunpack.c.l.b16 %v8989
          %v9253 = vunpack.c.l.b16 %v8990
          %v9254 = vunpack.c.l.b16 %v8991
          %v9255 = vunpack.c.l.b16 %v8992
          %v9256 = vunpack.c.l.b16 %v8993
          %v9257 = vunpack.c.l.b16 %v8994
          %v9258 = vunpack.c.l.b16 %v8995
          %v9259 = vunpack.c.l.b16 %v8996
          %v9260 = vunpack.c.l.b16 %v8997
          %v9261 = vunpack.c.l.b16 %v8998
          %v9262 = vunpack.c.l.b16 %v8999
          %v9263 = vunpack.c.l.b16 %v9000
          %v9264 = vunpack.c.l.b16 %v9001
          %v9265 = vunpack.c.l.b16 %v9002
          %v9266 = vunpack.c.l.b16 %v9003
          %v9267 = vunpack.c.l.b16 %v9004
          %v9268 = vunpack.c.l.b16 %v9005
          %v9269 = vunpack.c.l.b16 %v9006
          %v9270 = vunpack.c.l.b16 %v9007
          %v9271 = vpack.c.b16 %v9144, %v9143
          %v9272 = vpack.c.b16 %v9146, %v9145
          %v9273 = vpack.c.b16 %v9148, %v9147
          %v9274 = vpack.c.b16 %v9150, %v9149
          %v9275 = vpack.c.b16 %v9152, %v9151
          %v9276 = vpack.c.b16 %v9154, %v9153
          %v9277 = vpack.c.b16 %v9156, %v9155
          %v9278 = vpack.c.b16 %v9158, %v9157
          %v9279 = vpack.c.b16 %v9160, %v9159
          %v9280 = vpack.c.b16 %v9162, %v9161
          %v9281 = vpack.c.b16 %v9164, %v9163
          %v9282 = vpack.c.b16 %v9166, %v9165
          %v9283 = vpack.c.b16 %v9168, %v9167
          %v9284 = vpack.c.b16 %v9170, %v9169
          %v9285 = vpack.c.b16 %v9172, %v9171
          %v9286 = vpack.c.b16 %v9174, %v9173
          %v9287 = vpack.c.b16 %v9176, %v9175
          %v9288 = vpack.c.b16 %v9178, %v9177
          %v9289 = vpack.c.b16 %v9180, %v9179
          %v9290 = vpack.c.b16 %v9182, %v9181
          %v9291 = vpack.c.b16 %v9184, %v9183
          %v9292 = vpack.c.b16 %v9186, %v9185
          %v9293 = vpack.c.b16 %v9188, %v9187
          %v9294 = vpack.c.b16 %v9190, %v9189
          %v9295 = vpack.c.b16 %v9192, %v9191
          %v9296 = vpack.c.b16 %v9194, %v9193
          %v9297 = vpack.c.b16 %v9196, %v9195
          %v9298 = vpack.c.b16 %v9198, %v9197
          %v9299 = vpack.c.b16 %v9200, %v9199
          %v9300 = vpack.c.b16 %v9202, %v9201
          %v9301 = vpack.c.b16 %v9204, %v9203
          %v9302 = vpack.c.b16 %v9206, %v9205
          %v9303 = vpack.c.b16 %v9208, %v9207
          %v9304 = vpack.c.b16 %v9210, %v9209
          %v9305 = vpack.c.b16 %v9212, %v9211
          %v9306 = vpack.c.b16 %v9214, %v9213
          %v9307 = vpack.c.b16 %v9216, %v9215
          %v9308 = vpack.c.b16 %v9218, %v9217
          %v9309 = vpack.c.b16 %v9220, %v9219
          %v9310 = vpack.c.b16 %v9222, %v9221
          %v9311 = vpack.c.b16 %v9224, %v9223
          %v9312 = vpack.c.b16 %v9226, %v9225
          %v9313 = vpack.c.b16 %v9228, %v9227
          %v9314 = vpack.c.b16 %v9230, %v9229
          %v9315 = vpack.c.b16 %v9232, %v9231
          %v9316 = vpack.c.b16 %v9234, %v9233
          %v9317 = vpack.c.b16 %v9236, %v9235
          %v9318 = vpack.c.b16 %v9238, %v9237
          %v9319 = vpack.c.b16 %v9240, %v9239
          %v9320 = vpack.c.b16 %v9242, %v9241
          %v9321 = vpack.c.b16 %v9244, %v9243
          %v9322 = vpack.c.b16 %v9246, %v9245
          %v9323 = vpack.c.b16 %v9248, %v9247
          %v9324 = vpack.c.b16 %v9250, %v9249
          %v9325 = vpack.c.b16 %v9252, %v9251
          %v9326 = vpack.c.b16 %v9254, %v9253
          %v9327 = vpack.c.b16 %v9256, %v9255
          %v9328 = vpack.c.b16 %v9258, %v9257
          %v9329 = vpack.c.b16 %v9260, %v9259
          %v9330 = vpack.c.b16 %v9262, %v9261
          %v9331 = vpack.c.b16 %v9264, %v9263
          %v9332 = vpack.c.b16 %v9266, %v9265
          %v9333 = vpack.c.b16 %v9268, %v9267
          %v9334 = vpack.c.b16 %v9270, %v9269
          %9399 = vmatprep.subr.bf16.mxu0 0
          %9400 = vmatpush1.bf16.msra.mxu0 %v9271
          %9401 = vmatprep.subr.bf16.mxu0 0
          %9402 = vmatpush1.bf16.msra.mxu0 %v9272
          %9403 = vmatprep.subr.bf16.mxu0 0
          %9404 = vmatpush1.bf16.msra.mxu0 %v9273
          %9405 = vmatprep.subr.bf16.mxu0 0
          %9406 = vmatpush1.bf16.msra.mxu0 %v9274
          %9407 = vmatprep.subr.bf16.mxu0 0
          %9408 = vmatpush1.bf16.msra.mxu0 %v9275
          %9409 = vmatprep.subr.bf16.mxu0 0
          %9410 = vmatpush1.bf16.msra.mxu0 %v9276
          %9411 = vmatprep.subr.bf16.mxu0 0
          %9412 = vmatpush1.bf16.msra.mxu0 %v9277
          %9413 = vmatprep.subr.bf16.mxu0 0
          %9414 = vmatpush1.bf16.msra.mxu0 %v9278
          %9415 = vmatprep.subr.bf16.mxu0 0
          %9416 = vmatpush1.bf16.msra.mxu0 %v9279
          %9417 = vmatprep.subr.bf16.mxu0 0
          %9418 = vmatpush1.bf16.msra.mxu0 %v9280
          %9419 = vmatprep.subr.bf16.mxu0 0
          %9420 = vmatpush1.bf16.msra.mxu0 %v9281
          %9421 = vmatprep.subr.bf16.mxu0 0
          %9422 = vmatpush1.bf16.msra.mxu0 %v9282
          %9423 = vmatprep.subr.bf16.mxu0 0
          %9424 = vmatpush1.bf16.msra.mxu0 %v9283
          %9425 = vmatprep.subr.bf16.mxu0 0
          %9426 = vmatpush1.bf16.msra.mxu0 %v9284
          %9427 = vmatprep.subr.bf16.mxu0 0
          %9428 = vmatpush1.bf16.msra.mxu0 %v9285
          %9429 = vmatprep.subr.bf16.mxu0 0
          %9430 = vmatpush1.bf16.msra.mxu0 %v9286
          %9431 = vmatprep.mubr.bf16.mxu0 %v8825
          %9432 = vmatmul.mubr.bf16.gmra.mrb[0].mxu0 %v8824
          %v9433 = vpop.f32.mrb[0].mxu0
          %v9434 = vadd.f32 %v9013, %v9433
          %v9435 = vpop.f32.mrb[0].mxu0
          %v9436 = vpop.f32.mrb[0].mxu0
          %v9437 = vadd.f32 %v9013, %v9436
          %v9438 = vpop.f32.mrb[0].mxu0
          %9439 = vmatprep.mubr.bf16.mxu0 %v8833
          %9440 = vmatmul.mubr.bf16.gmra.mrb[0].mxu0 %v8832
          %v9441 = vpop.f32.mrb[0].mxu0
          %v9442 = vadd.f32 %v9013, %v9441
          %v9443 = vpop.f32.mrb[0].mxu0
          %v9444 = vpop.f32.mrb[0].mxu0
          %v9445 = vadd.f32 %v9013, %v9444
          %v9446 = vpop.f32.mrb[0].mxu0
          %9447 = vmatprep.mubr.bf16.mxu0 %v8841
          %9448 = vmatmul.mubr.bf16.gmra.mrb[0].mxu0 %v8840
          %v9449 = vpop.f32.mrb[0].mxu0
          %v9450 = vadd.f32 %v9013, %v9449
          %v9451 = vpop.f32.mrb[0].mxu0
          %v9452 = vpop.f32.mrb[0].mxu0
          %v9453 = vadd.f32 %v9013, %v9452
          %v9454 = vpop.f32.mrb[0].mxu0
          %9455 = vmatprep.mubr.bf16.mxu0 %v8849
          %9456 = vmatmul.mubr.bf16.gmra.mrb[0].mxu0 %v8848
          %v9457 = vpop.f32.mrb[0].mxu0
          %v9458 = vadd.f32 %v9013, %v9457
          %v9459 = vpop.f32.mrb[0].mxu0
          %v9460 = vpop.f32.mrb[0].mxu0
          %v9461 = vadd.f32 %v9013, %v9460
          %v9462 = vpop.f32.mrb[0].mxu0
          %9463 = vmatprep.mubr.bf16.mxu0 %v8857
          %9464 = vmatmul.mubr.bf16.gmra.mrb[0].mxu0 %v8856
          %v9465 = vpop.f32.mrb[0].mxu0
          %v9466 = vadd.f32 %v9013, %v9465
          %v9467 = vpop.f32.mrb[0].mxu0
          %v9468 = vpop.f32.mrb[0].mxu0
          %v9469 = vadd.f32 %v9013, %v9468
          %v9470 = vpop.f32.mrb[0].mxu0
          %9471 = vmatprep.mubr.bf16.mxu0 %v8865
          %9472 = vmatmul.mubr.bf16.gmra.mrb[0].mxu0 %v8864
          %v9473 = vpop.f32.mrb[0].mxu0
          %v9474 = vadd.f32 %v9013, %v9473
          %v9475 = vpop.f32.mrb[0].mxu0
          %v9476 = vpop.f32.mrb[0].mxu0
          %v9477 = vadd.f32 %v9013, %v9476
          %v9478 = vpop.f32.mrb[0].mxu0
          %9479 = vmatprep.mubr.bf16.mxu0 %v8873
          %9480 = vmatmul.mubr.bf16.gmra.mrb[0].mxu0 %v8872
          %v9481 = vpop.f32.mrb[0].mxu0
          %v9482 = vadd.f32 %v9013, %v9481
          %v9483 = vpop.f32.mrb[0].mxu0
          %v9484 = vpop.f32.mrb[0].mxu0
          %v9485 = vadd.f32 %v9013, %v9484
          %v9486 = vpop.f32.mrb[0].mxu0
          %9487 = vdwg.mxu0
          %9488 = vmatprep.subr.bf16.mxu0 0
          %9489 = vmatpush1.bf16.msra.mxu0 %v9287
          %9490 = vmatprep.subr.bf16.mxu0 0
          %9491 = vmatpush1.bf16.msra.mxu0 %v9288
          %9492 = vmatprep.subr.bf16.mxu0 0
          %9493 = vmatpush1.bf16.msra.mxu0 %v9289
          %9494 = vmatprep.subr.bf16.mxu0 0
          %9495 = vmatpush1.bf16.msra.mxu0 %v9290
          %9496 = vmatprep.subr.bf16.mxu0 0
          %9497 = vmatpush1.bf16.msra.mxu0 %v9291
          %9498 = vmatprep.subr.bf16.mxu0 0
          %9499 = vmatpush1.bf16.msra.mxu0 %v9292
          %9500 = vmatprep.subr.bf16.mxu0 0
          %9501 = vmatpush1.bf16.msra.mxu0 %v9293
          %9502 = vmatprep.subr.bf16.mxu0 0
          %9503 = vmatpush1.bf16.msra.mxu0 %v9294
          %9504 = vmatprep.subr.bf16.mxu0 0
          %9505 = vmatpush1.bf16.msra.mxu0 %v9295
          %9506 = vmatprep.subr.bf16.mxu0 0
          %9507 = vmatpush1.bf16.msra.mxu0 %v9296
          %9508 = vmatprep.subr.bf16.mxu0 0
          %9509 = vmatpush1.bf16.msra.mxu0 %v9297
          %9510 = vmatprep.subr.bf16.mxu0 0
          %9511 = vmatpush1.bf16.msra.mxu0 %v9298
          %9512 = vmatprep.subr.bf16.mxu0 0
          %9513 = vmatpush1.bf16.msra.mxu0 %v9299
          %9514 = vmatprep.subr.bf16.mxu0 0
          %9515 = vmatpush1.bf16.msra.mxu0 %v9300
          %9516 = vmatprep.subr.bf16.mxu0 0
          %9517 = vmatpush1.bf16.msra.mxu0 %v9301
          %9518 = vmatprep.subr.bf16.mxu0 0
          %9519 = vmatpush1.bf16.msra.mxu0 %v9302
          %9520 = vmatprep.mubr.bf16.mxu0 %v8827
          %9521 = vmatmul.mubr.bf16.gmra.mrb[0].mxu0 %v8826
          %v9522 = vpop.f32.mrb[0].mxu0
          %v9523 = vadd.f32 %v9434, %v9522
          %v9524 = vpop.f32.mrb[0].mxu0
          %v9525 = vpop.f32.mrb[0].mxu0
          %v9526 = vadd.f32 %v9437, %v9525
          %v9527 = vpop.f32.mrb[0].mxu0
          %9528 = vmatprep.mubr.bf16.mxu0 %v8835
          %9529 = vmatmul.mubr.bf16.gmra.mrb[0].mxu0 %v8834
          %v9530 = vpop.f32.mrb[0].mxu0
          %v9531 = vadd.f32 %v9442, %v9530
          %v9532 = vpop.f32.mrb[0].mxu0
          %v9533 = vpop.f32.mrb[0].mxu0
          %v9534 = vadd.f32 %v9445, %v9533
          %v9535 = vpop.f32.mrb[0].mxu0
          %9536 = vmatprep.mubr.bf16.mxu0 %v8843
          %9537 = vmatmul.mubr.bf16.gmra.mrb[0].mxu0 %v8842
          %v9538 = vpop.f32.mrb[0].mxu0
          %v9539 = vadd.f32 %v9450, %v9538
          %v9540 = vpop.f32.mrb[0].mxu0
          %v9541 = vpop.f32.mrb[0].mxu0
          %v9542 = vadd.f32 %v9453, %v9541
          %v9543 = vpop.f32.mrb[0].mxu0
          %9544 = vmatprep.mubr.bf16.mxu0 %v8851
          %9545 = vmatmul.mubr.bf16.gmra.mrb[0].mxu0 %v8850
          %v9546 = vpop.f32.mrb[0].mxu0
          %v9547 = vadd.f32 %v9458, %v9546
          %v9548 = vpop.f32.mrb[0].mxu0
          %v9549 = vpop.f32.mrb[0].mxu0
          %v9550 = vadd.f32 %v9461, %v9549
          %v9551 = vpop.f32.mrb[0].mxu0
          %9552 = vmatprep.mubr.bf16.mxu0 %v8859
          %9553 = vmatmul.mubr.bf16.gmra.mrb[0].mxu0 %v8858
          %v9554 = vpop.f32.mrb[0].mxu0
          %v9555 = vadd.f32 %v9466, %v9554
          %v9556 = vpop.f32.mrb[0].mxu0
          %v9557 = vpop.f32.mrb[0].mxu0
          %v9558 = vadd.f32 %v9469, %v9557
          %v9559 = vpop.f32.mrb[0].mxu0
          %9560 = vmatprep.mubr.bf16.mxu0 %v8867
          %9561 = vmatmul.mubr.bf16.gmra.mrb[0].mxu0 %v8866
          %v9562 = vpop.f32.mrb[0].mxu0
          %v9563 = vadd.f32 %v9474, %v9562
          %v9564 = vpop.f32.mrb[0].mxu0
          %v9565 = vpop.f32.mrb[0].mxu0
          %v9566 = vadd.f32 %v9477, %v9565
          %v9567 = vpop.f32.mrb[0].mxu0
          %9568 = vmatprep.mubr.bf16.mxu0 %v8875
          %9569 = vmatmul.mubr.bf16.gmra.mrb[0].mxu0 %v8874
          %v9570 = vpop.f32.mrb[0].mxu0
          %v9571 = vadd.f32 %v9482, %v9570
          %v9572 = vpop.f32.mrb[0].mxu0
          %v9573 = vpop.f32.mrb[0].mxu0
          %v9574 = vadd.f32 %v9485, %v9573
          %v9575 = vpop.f32.mrb[0].mxu0
          %9576 = vdwg.mxu0
          %9577 = vmatprep.subr.bf16.mxu0 0
          %9578 = vmatpush1.bf16.msra.mxu0 %v9303
          %9579 = vmatprep.subr.bf16.mxu0 0
          %9580 = vmatpush1.bf16.msra.mxu0 %v9304
          %9581 = vmatprep.subr.bf16.mxu0 0
          %9582 = vmatpush1.bf16.msra.mxu0 %v9305
          %9583 = vmatprep.subr.bf16.mxu0 0
          %9584 = vmatpush1.bf16.msra.mxu0 %v9306
          %9585 = vmatprep.subr.bf16.mxu0 0
          %9586 = vmatpush1.bf16.msra.mxu0 %v9307
          %9587 = vmatprep.subr.bf16.mxu0 0
          %9588 = vmatpush1.bf16.msra.mxu0 %v9308
          %9589 = vmatprep.subr.bf16.mxu0 0
          %9590 = vmatpush1.bf16.msra.mxu0 %v9309
          %9591 = vmatprep.subr.bf16.mxu0 0
          %9592 = vmatpush1.bf16.msra.mxu0 %v9310
          %9593 = vmatprep.subr.bf16.mxu0 0
          %9594 = vmatpush1.bf16.msra.mxu0 %v9311
          %9595 = vmatprep.subr.bf16.mxu0 0
          %9596 = vmatpush1.bf16.msra.mxu0 %v9312
          %9597 = vmatprep.subr.bf16.mxu0 0
          %9598 = vmatpush1.bf16.msra.mxu0 %v9313
          %9599 = vmatprep.subr.bf16.mxu0 0
          %9600 = vmatpush1.bf16.msra.mxu0 %v9314
          %9601 = vmatprep.subr.bf16.mxu0 0
          %9602 = vmatpush1.bf16.msra.mxu0 %v9315
          %9603 = vmatprep.subr.bf16.mxu0 0
          %9604 = vmatpush1.bf16.msra.mxu0 %v9316
          %9605 = vmatprep.subr.bf16.mxu0 0
          %9606 = vmatpush1.bf16.msra.mxu0 %v9317
          %9607 = vmatprep.subr.bf16.mxu0 0
          %9608 = vmatpush1.bf16.msra.mxu0 %v9318
          %9609 = vmatprep.mubr.bf16.mxu0 %v8829
          %9610 = vmatmul.mubr.bf16.gmra.mrb[0].mxu0 %v8828
          %v9611 = vpop.f32.mrb[0].mxu0
          %v9612 = vadd.f32 %v9523, %v9611
          %v9613 = vpop.f32.mrb[0].mxu0
          %v9614 = vpop.f32.mrb[0].mxu0
          %v9615 = vadd.f32 %v9526, %v9614
          %v9616 = vpop.f32.mrb[0].mxu0
          %9617 = vmatprep.mubr.bf16.mxu0 %v8837
          %9618 = vmatmul.mubr.bf16.gmra.mrb[0].mxu0 %v8836
          %v9619 = vpop.f32.mrb[0].mxu0
          %v9620 = vadd.f32 %v9531, %v9619
          %v9621 = vpop.f32.mrb[0].mxu0
          %v9622 = vpop.f32.mrb[0].mxu0
          %v9623 = vadd.f32 %v9534, %v9622
          %v9624 = vpop.f32.mrb[0].mxu0
          %9625 = vmatprep.mubr.bf16.mxu0 %v8845
          %9626 = vmatmul.mubr.bf16.gmra.mrb[0].mxu0 %v8844
          %v9627 = vpop.f32.mrb[0].mxu0
          %v9628 = vadd.f32 %v9539, %v9627
          %v9629 = vpop.f32.mrb[0].mxu0
          %v9630 = vpop.f32.mrb[0].mxu0
          %v9631 = vadd.f32 %v9542, %v9630
          %v9632 = vpop.f32.mrb[0].mxu0
          %9633 = vmatprep.mubr.bf16.mxu0 %v8853
          %9634 = vmatmul.mubr.bf16.gmra.mrb[0].mxu0 %v8852
          %v9635 = vpop.f32.mrb[0].mxu0
          %v9636 = vadd.f32 %v9547, %v9635
          %v9637 = vpop.f32.mrb[0].mxu0
          %v9638 = vpop.f32.mrb[0].mxu0
          %v9639 = vadd.f32 %v9550, %v9638
          %v9640 = vpop.f32.mrb[0].mxu0
          %9641 = vmatprep.mubr.bf16.mxu0 %v8861
          %9642 = vmatmul.mubr.bf16.gmra.mrb[0].mxu0 %v8860
          %v9643 = vpop.f32.mrb[0].mxu0
          %v9644 = vadd.f32 %v9555, %v9643
          %v9645 = vpop.f32.mrb[0].mxu0
          %v9646 = vpop.f32.mrb[0].mxu0
          %v9647 = vadd.f32 %v9558, %v9646
          %v9648 = vpop.f32.mrb[0].mxu0
          %9649 = vmatprep.mubr.bf16.mxu0 %v8869
          %9650 = vmatmul.mubr.bf16.gmra.mrb[0].mxu0 %v8868
          %v9651 = vpop.f32.mrb[0].mxu0
          %v9652 = vadd.f32 %v9563, %v9651
          %v9653 = vpop.f32.mrb[0].mxu0
          %v9654 = vpop.f32.mrb[0].mxu0
          %v9655 = vadd.f32 %v9566, %v9654
          %v9656 = vpop.f32.mrb[0].mxu0
          %9657 = vmatprep.mubr.bf16.mxu0 %v8877
          %9658 = vmatmul.mubr.bf16.gmra.mrb[0].mxu0 %v8876
          %v9659 = vpop.f32.mrb[0].mxu0
          %v9660 = vadd.f32 %v9571, %v9659
          %v9661 = vpop.f32.mrb[0].mxu0
          %v9662 = vpop.f32.mrb[0].mxu0
          %v9663 = vadd.f32 %v9574, %v9662
          %v9664 = vpop.f32.mrb[0].mxu0
          %9665 = vdwg.mxu0
          %9666 = vmatprep.subr.bf16.mxu0 0
          %9667 = vmatpush1.bf16.msra.mxu0 %v9319
          %9668 = vmatprep.subr.bf16.mxu0 0
          %9669 = vmatpush1.bf16.msra.mxu0 %v9320
          %9670 = vmatprep.subr.bf16.mxu0 0
          %9671 = vmatpush1.bf16.msra.mxu0 %v9321
          %9672 = vmatprep.subr.bf16.mxu0 0
          %9673 = vmatpush1.bf16.msra.mxu0 %v9322
          %9674 = vmatprep.subr.bf16.mxu0 0
          %9675 = vmatpush1.bf16.msra.mxu0 %v9323
          %9676 = vmatprep.subr.bf16.mxu0 0
          %9677 = vmatpush1.bf16.msra.mxu0 %v9324
          %9678 = vmatprep.subr.bf16.mxu0 0
          %9679 = vmatpush1.bf16.msra.mxu0 %v9325
          %9680 = vmatprep.subr.bf16.mxu0 0
          %9681 = vmatpush1.bf16.msra.mxu0 %v9326
          %9682 = vmatprep.subr.bf16.mxu0 0
          %9683 = vmatpush1.bf16.msra.mxu0 %v9327
          %9684 = vmatprep.subr.bf16.mxu0 0
          %9685 = vmatpush1.bf16.msra.mxu0 %v9328
          %9686 = vmatprep.subr.bf16.mxu0 0
          %9687 = vmatpush1.bf16.msra.mxu0 %v9329
          %9688 = vmatprep.subr.bf16.mxu0 0
          %9689 = vmatpush1.bf16.msra.mxu0 %v9330
          %9690 = vmatprep.subr.bf16.mxu0 0
          %9691 = vmatpush1.bf16.msra.mxu0 %v9331
          %9692 = vmatprep.subr.bf16.mxu0 0
          %9693 = vmatpush1.bf16.msra.mxu0 %v9332
          %9694 = vmatprep.subr.bf16.mxu0 0
          %9695 = vmatpush1.bf16.msra.mxu0 %v9333
          %9696 = vmatprep.subr.bf16.mxu0 0
          %9697 = vmatpush1.bf16.msra.mxu0 %v9334
          %9698 = vmatprep.mubr.bf16.mxu0 %v8831
          %9699 = vmatmul.mubr.bf16.gmra.mrb[0].mxu0 %v8830
          %v9700 = vpop.f32.mrb[0].mxu0
          %v9701 = vadd.f32 %v9612, %v9700
          %v9702 = vpop.f32.mrb[0].mxu0
          %v9703 = vpop.f32.mrb[0].mxu0
          %v9704 = vadd.f32 %v9615, %v9703
          %v9705 = vpop.f32.mrb[0].mxu0
          %9706 = vmatprep.mubr.bf16.mxu0 %v8839
          %9707 = vmatmul.mubr.bf16.gmra.mrb[0].mxu0 %v8838
          %v9708 = vpop.f32.mrb[0].mxu0
          %v9709 = vadd.f32 %v9620, %v9708
          %v9710 = vpop.f32.mrb[0].mxu0
          %v9711 = vpop.f32.mrb[0].mxu0
          %v9712 = vadd.f32 %v9623, %v9711
          %v9713 = vpop.f32.mrb[0].mxu0
          %9714 = vmatprep.mubr.bf16.mxu0 %v8847
          %9715 = vmatmul.mubr.bf16.gmra.mrb[0].mxu0 %v8846
          %v9716 = vpop.f32.mrb[0].mxu0
          %v9717 = vadd.f32 %v9628, %v9716
          %v9718 = vpop.f32.mrb[0].mxu0
          %v9719 = vpop.f32.mrb[0].mxu0
          %v9720 = vadd.f32 %v9631, %v9719
          %v9721 = vpop.f32.mrb[0].mxu0
          %9722 = vmatprep.mubr.bf16.mxu0 %v8855
          %9723 = vmatmul.mubr.bf16.gmra.mrb[0].mxu0 %v8854
          %v9724 = vpop.f32.mrb[0].mxu0
          %v9725 = vadd.f32 %v9636, %v9724
          %v9726 = vpop.f32.mrb[0].mxu0
          %v9727 = vpop.f32.mrb[0].mxu0
          %v9728 = vadd.f32 %v9639, %v9727
          %v9729 = vpop.f32.mrb[0].mxu0
          %9730 = vmatprep.mubr.bf16.mxu0 %v8863
          %9731 = vmatmul.mubr.bf16.gmra.mrb[0].mxu0 %v8862
          %v9732 = vpop.f32.mrb[0].mxu0
          %v9733 = vadd.f32 %v9644, %v9732
          %v9734 = vpop.f32.mrb[0].mxu0
          %v9735 = vpop.f32.mrb[0].mxu0
          %v9736 = vadd.f32 %v9647, %v9735
          %v9737 = vpop.f32.mrb[0].mxu0
          %9738 = vmatprep.mubr.bf16.mxu0 %v8871
          %9739 = vmatmul.mubr.bf16.gmra.mrb[0].mxu0 %v8870
          %v9740 = vpop.f32.mrb[0].mxu0
          %v9741 = vadd.f32 %v9652, %v9740
          %v9742 = vpop.f32.mrb[0].mxu0
          %v9743 = vpop.f32.mrb[0].mxu0
          %v9744 = vadd.f32 %v9655, %v9743
          %v9745 = vpop.f32.mrb[0].mxu0
          %9746 = vmatprep.mubr.bf16.mxu0 %v8879
          %9747 = vmatmul.mubr.bf16.gmra.mrb[0].mxu0 %v8878
          %v9748 = vpop.f32.mrb[0].mxu0
          %v9749 = vadd.f32 %v9660, %v9748
          %v9750 = vpop.f32.mrb[0].mxu0
          %v9751 = vpop.f32.mrb[0].mxu0
          %v9752 = vadd.f32 %v9663, %v9751
          %v9753 = vpop.f32.mrb[0].mxu0
          %9754 = vdwg.mxu0
          %v9755 = vtanh.pop %v9701
          %v9756 = vtanh.pop %v9704
          %v9757 = vtanh.pop %v9709
          %v9758 = vtanh.pop %v9712
          %v9759 = vtanh.pop %v9717
          %v9760 = vtanh.pop %v9720
          %v9761 = vtanh.pop %v9725
          %v9762 = vtanh.pop %v9728
          %v9763 = vtanh.pop %v9733
          %v9764 = vtanh.pop %v9736
          %v9765 = vtanh.pop %v9741
          %v9766 = vtanh.pop %v9744
          %v9767 = vtanh.pop %v9749
          %v9768 = vtanh.pop %v9752
          %9769 = vst [vmem:[%s8] sm:$0xff] %v9755
          %9770 = vst [vmem:[%s8 + $0x8] sm:$0xff] %v9756
          %9771 = vst [vmem:[%s8 + $0x10] sm:$0xff] %v9757
          %9772 = vst [vmem:[%s8 + $0x18] sm:$0xff] %v9758
          %9773 = vst [vmem:[%s8 + $0x20] sm:$0xff] %v9759
          %9774 = vst [vmem:[%s8 + $0x28] sm:$0xff] %v9760
          %9775 = vst [vmem:[%s8 + $0x30] sm:$0xff] %v9761
          %9776 = vst [vmem:[%s8 + $0x38] sm:$0xff] %v9762
          %9777 = vst [vmem:[%s8 + $0x40] sm:$0xff] %v9763
          %9778 = vst [vmem:[%s8 + $0x48] sm:$0xff] %v9764
          %9779 = vst [vmem:[%s8 + $0x50] sm:$0xff] %v9765
          %9780 = vst [vmem:[%s8 + $0x58] sm:$0xff] %v9766
          %9781 = vst [vmem:[%s8 + $0x60] sm:$0xff] %v9767
          %9782 = vst [vmem:[%s8 + $0x68] sm:$0xff] %v9768
        $region96: #{generator_forward.3} parent=51 // pred_fallthru
          _
        // Predicated region
        $region97: #{generator_forward.3} parent=51 // pred_check
          %p9783 = pneg %p218
        $region98: #{generator_forward.3} parent=51 // pred_check_branch
          %9785 = sbr.rel (%p9783) target = $region100
        $region99: #{generator_forward.3} parent=51 // pred_region
          _
        $region100: #{generator_forward.3} parent=51 // pred_fallthru
          _
        // Predicated region
        $region101: #{generator_forward.3} parent=51 // pred_check
          %p9786 = pneg %p218
        $region102: #{generator_forward.3} parent=51 // pred_check_branch
          %9788 = sbr.rel (%p9786) target = $region104
        $region103: #{generator_forward.3} parent=51 // pred_region
          _
        $region104: #{generator_forward.3} parent=51 // pred_fallthru
          _
      $region52: #{generator_forward.3} parent=5 // pred_fallthru
        _
      %p9789 = scmp.le.s32.totalorder 2, %s17
      // Predicated region
      $region105: #{generator_forward.3} parent=5 // pred_check
        %p9790 = pneg %p9789
      $region106: #{generator_forward.3} parent=5 // pred_check_branch
        %9792 = sbr.rel (%p9790) target = $region108
      $region107: #{generator_forward.3} parent=5 // pred_region
        %s9793 = ssub.s32 %s17, 2
      $region108: #{generator_forward.3} parent=5 // pred_fallthru
        _
    $region6: #{generator_forward.3} parent=1 // loop_footer
      %s21 = sadd.s32 1, %s17
    $region7: #{generator_forward.3} parent=1 // loop_footer_branch
      %16 = sbr.rel target = $region3
    $region8: #{generator_forward.3} parent=1 // loop_exit
      _
    %9794 = vsyncpa [#allocation5], 1
    %s9795 = scalar_lea.sflag [#allocation5], 1
    %9796 = vsyncpa %s9795, 1
    %9797 = vsyncpa [#allocation7], 1
    %9798 = vsyncpa [#allocation13], 1

</llo_original>
